<compile_context>
chip_gen: v6e
topology: v6e:2x2x1
jax: 0.10.0
libtpu: 0.0.40
codegen_flags: <defaults>
</compile_context>

<pallas_src>
import math
from functools import partial

import jax
import jax.numpy as jnp
import numpy as np
from jax.experimental import pallas as pl
from jax.experimental.pallas import tpu as pltpu

EPS = 1e-8  # nn.RMSNorm(eps=1e-08)


# --------------------------------------------------------------------------
# Fused block kernel: one grid step = `rows` batch elements
# --------------------------------------------------------------------------
def _block_kernel(x_ref, g_attn_ref, g_ffn_ref, cos_ref, sin_ref, bias_ref,
                  w_attn_ref, w_proj_ref, w_fc_ref, w_proj_mlp_ref,
                  o_ref, y_scr, *, n_head, head_dim, rows):
    C = n_head * head_dim
    R = rows
    T = x_ref.shape[0] // R

    # ---------------- attention branch ----------------
    x = x_ref[...]                                                # [R*T, C] f32
    ms = jnp.mean(x * x, axis=-1, keepdims=True)
    xn = x * jax.lax.rsqrt(ms + EPS) * g_attn_ref[...]

    # One MXU pass: [q*scale | k | v | pairswap(q)*scale | pairswap(k)]
    qkv = jnp.dot(xn.astype(jnp.bfloat16), w_attn_ref[...],
                  preferred_element_type=jnp.float32)             # [R*T, 5C]

    cos = cos_ref[...]                                            # [T, C]
    sin_s = sin_ref[...]                                          # [T, C], sign folded in
    bias = bias_ref[...]                                          # [T, T] additive causal

    for r in range(R):
        rs = slice(r * T, (r + 1) * T)
        # Interleaved RoPE, purely elementwise (pair swap lives in the weight):
        #   out[2i]   = q[2i]  *cos[2i]   - q[2i+1]*sin[2i]
        #   out[2i+1] = q[2i+1]*cos[2i+1] + q[2i]  *sin[2i+1]
        q_bf = (qkv[rs, 0:C] * cos + qkv[rs, 3 * C:4 * C] * sin_s).astype(jnp.bfloat16)
        k_bf = (qkv[rs, C:2 * C] * cos + qkv[rs, 4 * C:5 * C] * sin_s).astype(jnp.bfloat16)
        v_bf = qkv[rs, 2 * C:3 * C].astype(jnp.bfloat16)

        for h in range(n_head):
            sl = slice(h * head_dim, (h + 1) * head_dim)
            s = jax.lax.dot_general(q_bf[:, sl], k_bf[:, sl],
                                    (((1,), (1,)), ((), ())),
                                    preferred_element_type=jnp.float32)   # [T, T]
            s = s + bias                                      # causal mask (additive)
            m = jnp.max(s, axis=-1, keepdims=True)
            p = jnp.exp(s - m)                                # un-normalized probs
            inv = pl.reciprocal(jnp.sum(p, axis=-1, keepdims=True), approx=True)
            yh = jnp.dot(p.astype(jnp.bfloat16), v_bf[:, sl],
                         preferred_element_type=jnp.float32)  # [T, hd]
            y_scr[rs, sl] = (yh * inv).astype(jnp.bfloat16)   # deferred normalization

    # single K=C output projection for all rows / heads
    attn = jnp.dot(y_scr[...], w_proj_ref[...], preferred_element_type=jnp.float32)
    x1 = x_ref[...] + attn                                        # residual 1 (f32)
    o_ref[...] = x1                                               # park residual in VMEM

    # ---------------- MLP branch ----------------
    ms2 = jnp.mean(x1 * x1, axis=-1, keepdims=True)
    hn = (x1 * jax.lax.rsqrt(ms2 + EPS) * g_ffn_ref[...]).astype(jnp.bfloat16)

    # fused c_fc / c_fc2: one [R*T,C] x [C,8C] matmul, lane-aligned split at 4C
    hid = jnp.dot(hn, w_fc_ref[...], preferred_element_type=jnp.float32)   # [R*T, 8C]
    H = 4 * C
    h1 = hid[:, :H]
    h2 = hid[:, H:]
    # exact (erf) GELU, matching torch.nn.functional.gelu default
    g = 0.5 * h1 * (1.0 + jax.lax.erf(h1 * (1.0 / math.sqrt(2.0))))
    gated = (g * h2).astype(jnp.bfloat16)
    mlp = jnp.dot(gated, w_proj_mlp_ref[...], preferred_element_type=jnp.float32)
    o_ref[...] = (o_ref[...] + mlp).astype(o_ref.dtype)          # residual 2


# --------------------------------------------------------------------------
# Wrapper
# --------------------------------------------------------------------------
def block_forward(x, params, n_head):
    B, T, C = x.shape
    head_dim = C // n_head

    # 2 batch rows per step (M = 2T) when B allows, but keep >= 2 grid steps so the
    # ("parallel",) grid axis still feeds both TensorCores on v7x.
    R = 2 if (B % 2 == 0 and B >= 4) else 1
    grid = (B // R,)

    x2 = x.reshape(B * T, C)

    out = pl.pallas_call(
        partial(_block_kernel, n_head=n_head, head_dim=head_dim, rows=R),
        out_shape=jax.ShapeDtypeStruct((B * T, C), x.dtype),
        grid=grid,
        in_specs=[
            pl.BlockSpec((R * T, C), lambda b: (b, 0)),          # x (f32)
            pl.BlockSpec((1, C), lambda b: (0, 0)),              # attn_norm gamma
            pl.BlockSpec((1, C), lambda b: (0, 0)),              # ffn_norm gamma
            pl.BlockSpec((T, C), lambda b: (0, 0)),              # cos table (f32)
            pl.BlockSpec((T, C), lambda b: (0, 0)),              # sign-folded sin table
            pl.BlockSpec((T, T), lambda b: (0, 0)),              # additive causal bias
            pl.BlockSpec((C, 5 * C), lambda b: (0, 0)),          # W_attn extended (bf16)
            pl.BlockSpec((C, C), lambda b: (0, 0)),              # W_proj attn (bf16)
            pl.BlockSpec((C, 8 * C), lambda b: (0, 0)),          # W_fc ++ W_fc2 (bf16)
            pl.BlockSpec((4 * C, C), lambda b: (0, 0)),          # W_proj mlp (bf16)
        ],
        out_specs=pl.BlockSpec((R * T, C), lambda b: (b, 0)),
        scratch_shapes=[pltpu.VMEM((R * T, C), jnp.bfloat16)],   # per-head attn outputs
        compiler_params=pltpu.CompilerParams(
            dimension_semantics=("parallel",)),
        # NOTE: at production C, consider vmem_limit_bytes and single-buffering the
        # grid-invariant weight blocks (pipeline_mode) for v7x's 64 MiB VMEM.
    )(x2, params["attn_norm_g"], params["ffn_norm_g"], params["cos_t"],
      params["sin_signed_t"], params["causal_bias"], params["w_attn_ext"],
      params["w_proj_attn"], params["w_fc_fused"], params["w_proj_mlp"])

    return out.reshape(B, T, C)


# --------------------------------------------------------------------------
# Parameter / table setup (deterministic, one-time glue)
# --------------------------------------------------------------------------
def make_params(key, C, n_head, T):
    head_dim = C // n_head
    ks = jax.random.split(key, 5)

    def lin(k, fan_in, fan_out):
        bound = 1.0 / math.sqrt(fan_in)
        return jax.random.uniform(k, (fan_in, fan_out), jnp.float32, -bound, bound)

    w_attn_f = lin(ks[0], C, 3 * C)
    w_proj_attn_f = lin(ks[1], C, C)
    w_fc_f = lin(ks[2], C, 4 * C)
    w_fc2_f = lin(ks[3], C, 4 * C)
    w_proj_mlp_f = lin(ks[4], 4 * C, C)

    # RoPE cache (matches PyTorch: emb = cat(freqs, freqs), interleaved-pair rotation)
    inv_freq = 1.0 / (10000.0 ** (np.arange(0, head_dim, 2, dtype=np.float32) / head_dim))
    t = np.arange(T, dtype=np.float32)
    freqs = np.outer(t, inv_freq)                         # [T, hd//2]
    emb = np.concatenate([freqs, freqs], axis=-1)         # [T, hd]
    cos_e = np.cos(emb).astype(np.float32)
    sin_e = np.sin(emb).astype(np.float32)
    cos_t = np.tile(cos_e, (1, n_head))                   # [T, C] per-head tiled
    sin_t = np.tile(sin_e, (1, n_head))
    sign = np.where(np.arange(C) % 2 == 0, -1.0, 1.0).astype(np.float32)
    sin_signed_t = sin_t * sign[None, :]                  # even lanes carry -sin

    # additive causal mask
    causal = np.tril(np.ones((T, T), np.float32))
    bias = np.where(causal > 0, 0.0, -1e30).astype(np.float32)

    # Extended attention weight for the kernel:
    #   [ Wq/sqrt(hd) | Wk | Wv | pairswap(Wq)/sqrt(hd) | pairswap(Wk) ]
    scale = 1.0 / math.sqrt(head_dim)
    wq, wk, wv = w_attn_f[:, :C], w_attn_f[:, C:2 * C], w_attn_f[:, 2 * C:]

    def pair_swap_cols(w):        # swap columns (2i, 2i+1)
        return w.reshape(C, C // 2, 2)[:, :, ::-1].reshape(C, C)

    w_attn_ext = jnp.concatenate(
        [wq * scale, wk, wv, pair_swap_cols(wq) * scale, pair_swap_cols(wk)],
        axis=1).astype(jnp.bfloat16)                      # [C, 5C]

    return {
        # kernel params (bf16 weights, MXU-native)
        "w_attn_ext": w_attn_ext,
        "w_proj_attn": w_proj_attn_f.astype(jnp.bfloat16),
        "w_fc_fused": jnp.concatenate([w_fc_f, w_fc2_f], axis=1).astype(jnp.bfloat16),
        "w_proj_mlp": w_proj_mlp_f.astype(jnp.bfloat16),
        "attn_norm_g": jnp.ones((1, C), jnp.float32),     # nn.RMSNorm init = ones
        "ffn_norm_g": jnp.ones((1, C), jnp.float32),
        "cos_t": jnp.asarray(cos_t),
        "sin_signed_t": jnp.asarray(sin_signed_t),
        "causal_bias": jnp.asarray(bias),
        # reference params (canonical PyTorch-style weights)
        "w_attn": w_attn_f.astype(jnp.bfloat16),
        "cos_emb": jnp.asarray(cos_e),
        "sin_emb": jnp.asarray(sin_e),
    }


# --------------------------------------------------------------------------
# Pure-JAX f32 reference (mirrors the PyTorch code; upcasts the bf16 weights)
# --------------------------------------------------------------------------
def reference_block(x, p, n_head):
    B, T, C = x.shape
    hd = C // n_head

    w_attn = p["w_attn"].astype(jnp.float32)
    w_proj_attn = p["w_proj_attn"].astype(jnp.float32)
    w_fused = p["w_fc_fused"].astype(jnp.float32)
    w_fc, w_fc2 = w_fused[:, :4 * C], w_fused[:, 4 * C:]
    w_proj_mlp = p["w_proj_mlp"].astype(jnp.float32)

    def rms(v, g):
        return v * jax.lax.rsqrt(jnp.mean(v * v, -1, keepdims=True) + EPS) * g

    xn = rms(x, p["attn_norm_g"])
    qkv = xn @ w_attn
    q, k, v = jnp.split(qkv, 3, axis=-1)

    def heads(t):
        return t.reshape(B, T, n_head, hd).transpose(0, 2, 1, 3)

    q, k, v = heads(q), heads(k), heads(v)
    cos_e = p["cos_emb"]
    sin_e = p["sin_emb"]

    def rope(t):
        tp = t.reshape(B, n_head, T, hd // 2, 2)
        cp = cos_e.reshape(T, hd // 2, 2)
        sp = sin_e.reshape(T, hd // 2, 2)
        x1, x2 = tp[..., 0], tp[..., 1]
        o0 = x1 * cp[..., 0] - x2 * sp[..., 0]
        o1 = x2 * cp[..., 1] + x1 * sp[..., 1]
        return jnp.stack([o0, o1], -1).reshape(B, n_head, T, hd)

    q, k = rope(q), rope(k)
    s = jnp.einsum("bhqd,bhkd->bhqk", q, k) / math.sqrt(hd)
    mask = jnp.tril(jnp.ones((T, T), bool))
    s = jnp.where(mask, s, -jnp.inf)
    pw = jax.nn.softmax(s, axis=-1)
    y = jnp.einsum("bhqk,bhkd->bhqd", pw, v)
    y = y.transpose(0, 2, 1, 3).reshape(B, T, C)
    x = x + y @ w_proj_attn

    hn = rms(x, p["ffn_norm_g"])
    h1 = hn @ w_fc
    h2 = hn @ w_fc2
    g = 0.5 * h1 * (1.0 + jax.lax.erf(h1 / math.sqrt(2.0)))
    return x + (g * h2) @ w_proj_mlp


# --------------------------------------------------------------------------
if __name__ == "__main__":
    # TODO(synk): the use_cache KV-cache path and the torch.utils.checkpoint wrapper
    # are training/decoding-time mechanics with no forward-math effect; not implemented.
    B, T, C, n_head = 4, 128, 128, 4      # B=4 exercises the 2-rows-per-step path
    key = jax.random.PRNGKey(0)
    kx, kp = jax.random.split(key)
    x = jax.random.normal(kx, (B, T, C), jnp.float32)
    params = make_params(kp, C, n_head, T)

    out = jax.block_until_ready(block_forward(x, params, n_head))

    ref = reference_block(x, params, n_head)
    np.testing.assert_allclose(np.asarray(out), np.asarray(ref), rtol=5e-2, atol=5e-2)

    print("KERNEL_OK")
</pallas_src>

<mosaic_0001>
module attributes {stable_mosaic.version = 11 : i64} {
  func.func @_block_kernel(%arg0: i32, %arg1: memref<256x128xf32, #tpu.memory_space<vmem>>, %arg2: memref<1x128xf32, #tpu.memory_space<vmem>>, %arg3: memref<1x128xf32, #tpu.memory_space<vmem>>, %arg4: memref<128x128xf32, #tpu.memory_space<vmem>>, %arg5: memref<128x128xf32, #tpu.memory_space<vmem>>, %arg6: memref<128x128xf32, #tpu.memory_space<vmem>>, %arg7: memref<128x640xbf16, #tpu.memory_space<vmem>>, %arg8: memref<128x128xbf16, #tpu.memory_space<vmem>>, %arg9: memref<128x1024xbf16, #tpu.memory_space<vmem>>, %arg10: memref<512x128xbf16, #tpu.memory_space<vmem>>, %arg11: memref<256x128xf32, #tpu.memory_space<vmem>>, %arg12: memref<256x128xbf16, #tpu.memory_space<vmem>>) attributes {dimension_semantics = [#tpu.dimension_semantics<parallel>], iteration_bounds = array<i64: 2>, scalar_prefetch = 0 : i64, scratch_operands = 1 : i64, tpu.core_type = #tpu.core_type<tc>, window_params = [{transform_indices = @transform_0, window_bounds = array<i64: 256, 128>}, {pipeline_mode = #tpu.pipeline_mode<synchronous>, transform_indices = @transform_1, window_bounds = array<i64: 1, 128>}, {pipeline_mode = #tpu.pipeline_mode<synchronous>, transform_indices = @transform_2, window_bounds = array<i64: 1, 128>}, {pipeline_mode = #tpu.pipeline_mode<synchronous>, transform_indices = @transform_3, window_bounds = array<i64: 128, 128>}, {pipeline_mode = #tpu.pipeline_mode<synchronous>, transform_indices = @transform_4, window_bounds = array<i64: 128, 128>}, {pipeline_mode = #tpu.pipeline_mode<synchronous>, transform_indices = @transform_5, window_bounds = array<i64: 128, 128>}, {pipeline_mode = #tpu.pipeline_mode<synchronous>, transform_indices = @transform_6, window_bounds = array<i64: 128, 640>}, {pipeline_mode = #tpu.pipeline_mode<synchronous>, transform_indices = @transform_7, window_bounds = array<i64: 128, 128>}, {pipeline_mode = #tpu.pipeline_mode<synchronous>, transform_indices = @transform_8, window_bounds = array<i64: 128, 1024>}, {pipeline_mode = #tpu.pipeline_mode<synchronous>, transform_indices = @transform_9, window_bounds = array<i64: 512, 128>}, {transform_indices = @transform_10, window_bounds = array<i64: 256, 128>}]} {
    %c0 = arith.constant 0 : index
    %c0_0 = arith.constant 0 : index
    %0 = vector.load %arg1[%c0, %c0_0] : memref<256x128xf32, #tpu.memory_space<vmem>>, vector<256x128xf32>
    %1 = arith.mulf %0, %0 : vector<256x128xf32>
    %cst = arith.constant dense<0.000000e+00> : vector<256xf32>
    %2 = vector.multi_reduction <add>, %1, %cst [1] : vector<256x128xf32> to vector<256xf32>
    %3 = vector.shape_cast %2 : vector<256xf32> to vector<256x1xf32>
    %cst_1 = arith.constant 1.280000e+02 : f32
    %4 = vector.broadcast %cst_1 : f32 to vector<256x1xf32>
    %5 = arith.divf %3, %4 : vector<256x1xf32>
    %cst_2 = arith.constant 9.99999993E-9 : f32
    %6 = vector.broadcast %cst_2 : f32 to vector<256x1xf32>
    %7 = arith.addf %5, %6 : vector<256x1xf32>
    %8 = math.rsqrt %7 : vector<256x1xf32>
    %9 = vector.broadcast %8 : vector<256x1xf32> to vector<256x128xf32>
    %10 = arith.mulf %0, %9 : vector<256x128xf32>
    %c0_3 = arith.constant 0 : index
    %c0_4 = arith.constant 0 : index
    %11 = vector.load %arg2[%c0_3, %c0_4] : memref<1x128xf32, #tpu.memory_space<vmem>>, vector<1x128xf32>
    %12 = vector.broadcast %11 : vector<1x128xf32> to vector<256x128xf32>
    %13 = arith.mulf %10, %12 : vector<256x128xf32>
    %14 = arith.truncf %13 : vector<256x128xf32> to vector<256x128xbf16>
    %c0_5 = arith.constant 0 : index
    %c0_6 = arith.constant 0 : index
    %15 = vector.load %arg7[%c0_5, %c0_6] : memref<128x640xbf16, #tpu.memory_space<vmem>>, vector<128x640xbf16>
    %cst_7 = arith.constant dense<0.000000e+00> : vector<256x640xf32>
    %16 = tpu.matmul %14, %15, %cst_7 {dimension_numbers = #tpu.dot_dimension_numbers<[1], [0], [0], [1], [0, 0, 1, 1], [], []>} : vector<256x128xbf16>, vector<128x640xbf16>, vector<256x640xf32> -> vector<256x640xf32>
    %c0_8 = arith.constant 0 : index
    %c0_9 = arith.constant 0 : index
    %17 = vector.load %arg4[%c0_8, %c0_9] : memref<128x128xf32, #tpu.memory_space<vmem>>, vector<128x128xf32>
    %c0_10 = arith.constant 0 : index
    %c0_11 = arith.constant 0 : index
    %18 = vector.load %arg5[%c0_10, %c0_11] : memref<128x128xf32, #tpu.memory_space<vmem>>, vector<128x128xf32>
    %c0_12 = arith.constant 0 : index
    %c0_13 = arith.constant 0 : index
    %19 = vector.load %arg6[%c0_12, %c0_13] : memref<128x128xf32, #tpu.memory_space<vmem>>, vector<128x128xf32>
    %20 = vector.extract_strided_slice %16 {offsets = [0, 0], sizes = [128, 128], strides = [1, 1]} : vector<256x640xf32> to vector<128x128xf32>
    %21 = arith.mulf %20, %17 : vector<128x128xf32>
    %22 = vector.extract_strided_slice %16 {offsets = [0, 384], sizes = [128, 128], strides = [1, 1]} : vector<256x640xf32> to vector<128x128xf32>
    %23 = arith.mulf %22, %18 : vector<128x128xf32>
    %24 = arith.addf %21, %23 : vector<128x128xf32>
    %25 = arith.truncf %24 : vector<128x128xf32> to vector<128x128xbf16>
    %26 = vector.extract_strided_slice %16 {offsets = [0, 128], sizes = [128, 128], strides = [1, 1]} : vector<256x640xf32> to vector<128x128xf32>
    %27 = arith.mulf %26, %17 : vector<128x128xf32>
    %28 = vector.extract_strided_slice %16 {offsets = [0, 512], sizes = [128, 128], strides = [1, 1]} : vector<256x640xf32> to vector<128x128xf32>
    %29 = arith.mulf %28, %18 : vector<128x128xf32>
    %30 = arith.addf %27, %29 : vector<128x128xf32>
    %31 = arith.truncf %30 : vector<128x128xf32> to vector<128x128xbf16>
    %32 = vector.extract_strided_slice %16 {offsets = [0, 256], sizes = [128, 128], strides = [1, 1]} : vector<256x640xf32> to vector<128x128xf32>
    %33 = arith.truncf %32 : vector<128x128xf32> to vector<128x128xbf16>
    %34 = vector.extract_strided_slice %25 {offsets = [0, 0], sizes = [128, 32], strides = [1, 1]} : vector<128x128xbf16> to vector<128x32xbf16>
    %35 = vector.extract_strided_slice %31 {offsets = [0, 0], sizes = [128, 32], strides = [1, 1]} : vector<128x128xbf16> to vector<128x32xbf16>
    %cst_14 = arith.constant dense<0.000000e+00> : vector<128x128xf32>
    %36 = tpu.matmul %34, %35, %cst_14 {dimension_numbers = #tpu.dot_dimension_numbers<[1], [1], [0], [0], [0, 0, 1, 0], [], []>} : vector<128x32xbf16>, vector<128x32xbf16>, vector<128x128xf32> -> vector<128x128xf32>
    %37 = arith.addf %36, %19 : vector<128x128xf32>
    %cst_15 = arith.constant dense<0xFF800000> : vector<128xf32>
    %38 = vector.multi_reduction <maximumf>, %37, %cst_15 [1] : vector<128x128xf32> to vector<128xf32>
    %39 = vector.shape_cast %38 : vector<128xf32> to vector<128x1xf32>
    %40 = vector.broadcast %39 : vector<128x1xf32> to vector<128x128xf32>
    %41 = arith.subf %37, %40 : vector<128x128xf32>
    %42 = math.exp %41 : vector<128x128xf32>
    %cst_16 = arith.constant dense<0.000000e+00> : vector<128xf32>
    %43 = vector.multi_reduction <add>, %42, %cst_16 [1] : vector<128x128xf32> to vector<128xf32>
    %44 = vector.shape_cast %43 : vector<128xf32> to vector<128x1xf32>
    %45 = tpu.reciprocal %44 {approx = true} : vector<128x1xf32> -> vector<128x1xf32>
    %46 = arith.truncf %42 : vector<128x128xf32> to vector<128x128xbf16>
    %47 = vector.extract_strided_slice %33 {offsets = [0, 0], sizes = [128, 32], strides = [1, 1]} : vector<128x128xbf16> to vector<128x32xbf16>
    %cst_17 = arith.constant dense<0.000000e+00> : vector<128x32xf32>
    %48 = tpu.matmul %46, %47, %cst_17 {dimension_numbers = #tpu.dot_dimension_numbers<[1], [0], [0], [1], [0, 0, 1, 1], [], []>} : vector<128x128xbf16>, vector<128x32xbf16>, vector<128x32xf32> -> vector<128x32xf32>
    %49 = vector.broadcast %45 : vector<128x1xf32> to vector<128x32xf32>
    %50 = arith.mulf %48, %49 : vector<128x32xf32>
    %51 = arith.truncf %50 : vector<128x32xf32> to vector<128x32xbf16>
    %c0_18 = arith.constant 0 : index
    %c0_19 = arith.constant 0 : index
    %52 = vector.load %arg12[%c0_18, %c0_19] : memref<256x128xbf16, #tpu.memory_space<vmem>>, vector<128x32xbf16>
    tpu.vector_store %arg12[%c0_18, %c0_19], %51 {strides = array<i32>} : memref<256x128xbf16, #tpu.memory_space<vmem>>, vector<128x32xbf16>,
    %53 = vector.extract_strided_slice %25 {offsets = [0, 32], sizes = [128, 32], strides = [1, 1]} : vector<128x128xbf16> to vector<128x32xbf16>
    %54 = vector.extract_strided_slice %31 {offsets = [0, 32], sizes = [128, 32], strides = [1, 1]} : vector<128x128xbf16> to vector<128x32xbf16>
    %cst_20 = arith.constant dense<0.000000e+00> : vector<128x128xf32>
    %55 = tpu.matmul %53, %54, %cst_20 {dimension_numbers = #tpu.dot_dimension_numbers<[1], [1], [0], [0], [0, 0, 1, 0], [], []>} : vector<128x32xbf16>, vector<128x32xbf16>, vector<128x128xf32> -> vector<128x128xf32>
    %56 = arith.addf %55, %19 : vector<128x128xf32>
    %cst_21 = arith.constant dense<0xFF800000> : vector<128xf32>
    %57 = vector.multi_reduction <maximumf>, %56, %cst_21 [1] : vector<128x128xf32> to vector<128xf32>
    %58 = vector.shape_cast %57 : vector<128xf32> to vector<128x1xf32>
    %59 = vector.broadcast %58 : vector<128x1xf32> to vector<128x128xf32>
    %60 = arith.subf %56, %59 : vector<128x128xf32>
    %61 = math.exp %60 : vector<128x128xf32>
    %cst_22 = arith.constant dense<0.000000e+00> : vector<128xf32>
    %62 = vector.multi_reduction <add>, %61, %cst_22 [1] : vector<128x128xf32> to vector<128xf32>
    %63 = vector.shape_cast %62 : vector<128xf32> to vector<128x1xf32>
    %64 = tpu.reciprocal %63 {approx = true} : vector<128x1xf32> -> vector<128x1xf32>
    %65 = arith.truncf %61 : vector<128x128xf32> to vector<128x128xbf16>
    %66 = vector.extract_strided_slice %33 {offsets = [0, 32], sizes = [128, 32], strides = [1, 1]} : vector<128x128xbf16> to vector<128x32xbf16>
    %cst_23 = arith.constant dense<0.000000e+00> : vector<128x32xf32>
    %67 = tpu.matmul %65, %66, %cst_23 {dimension_numbers = #tpu.dot_dimension_numbers<[1], [0], [0], [1], [0, 0, 1, 1], [], []>} : vector<128x128xbf16>, vector<128x32xbf16>, vector<128x32xf32> -> vector<128x32xf32>
    %68 = vector.broadcast %64 : vector<128x1xf32> to vector<128x32xf32>
    %69 = arith.mulf %67, %68 : vector<128x32xf32>
    %70 = arith.truncf %69 : vector<128x32xf32> to vector<128x32xbf16>
    %c0_24 = arith.constant 0 : index
    %c32 = arith.constant 32 : index
    %71 = vector.load %arg12[%c0_24, %c32] : memref<256x128xbf16, #tpu.memory_space<vmem>>, vector<128x32xbf16>
    tpu.vector_store %arg12[%c0_24, %c32], %70 {strides = array<i32>} : memref<256x128xbf16, #tpu.memory_space<vmem>>, vector<128x32xbf16>,
    %72 = vector.extract_strided_slice %25 {offsets = [0, 64], sizes = [128, 32], strides = [1, 1]} : vector<128x128xbf16> to vector<128x32xbf16>
    %73 = vector.extract_strided_slice %31 {offsets = [0, 64], sizes = [128, 32], strides = [1, 1]} : vector<128x128xbf16> to vector<128x32xbf16>
    %cst_25 = arith.constant dense<0.000000e+00> : vector<128x128xf32>
    %74 = tpu.matmul %72, %73, %cst_25 {dimension_numbers = #tpu.dot_dimension_numbers<[1], [1], [0], [0], [0, 0, 1, 0], [], []>} : vector<128x32xbf16>, vector<128x32xbf16>, vector<128x128xf32> -> vector<128x128xf32>
    %75 = arith.addf %74, %19 : vector<128x128xf32>
    %cst_26 = arith.constant dense<0xFF800000> : vector<128xf32>
    %76 = vector.multi_reduction <maximumf>, %75, %cst_26 [1] : vector<128x128xf32> to vector<128xf32>
    %77 = vector.shape_cast %76 : vector<128xf32> to vector<128x1xf32>
    %78 = vector.broadcast %77 : vector<128x1xf32> to vector<128x128xf32>
    %79 = arith.subf %75, %78 : vector<128x128xf32>
    %80 = math.exp %79 : vector<128x128xf32>
    %cst_27 = arith.constant dense<0.000000e+00> : vector<128xf32>
    %81 = vector.multi_reduction <add>, %80, %cst_27 [1] : vector<128x128xf32> to vector<128xf32>
    %82 = vector.shape_cast %81 : vector<128xf32> to vector<128x1xf32>
    %83 = tpu.reciprocal %82 {approx = true} : vector<128x1xf32> -> vector<128x1xf32>
    %84 = arith.truncf %80 : vector<128x128xf32> to vector<128x128xbf16>
    %85 = vector.extract_strided_slice %33 {offsets = [0, 64], sizes = [128, 32], strides = [1, 1]} : vector<128x128xbf16> to vector<128x32xbf16>
    %cst_28 = arith.constant dense<0.000000e+00> : vector<128x32xf32>
    %86 = tpu.matmul %84, %85, %cst_28 {dimension_numbers = #tpu.dot_dimension_numbers<[1], [0], [0], [1], [0, 0, 1, 1], [], []>} : vector<128x128xbf16>, vector<128x32xbf16>, vector<128x32xf32> -> vector<128x32xf32>
    %87 = vector.broadcast %83 : vector<128x1xf32> to vector<128x32xf32>
    %88 = arith.mulf %86, %87 : vector<128x32xf32>
    %89 = arith.truncf %88 : vector<128x32xf32> to vector<128x32xbf16>
    %c0_29 = arith.constant 0 : index
    %c64 = arith.constant 64 : index
    %90 = vector.load %arg12[%c0_29, %c64] : memref<256x128xbf16, #tpu.memory_space<vmem>>, vector<128x32xbf16>
    tpu.vector_store %arg12[%c0_29, %c64], %89 {strides = array<i32>} : memref<256x128xbf16, #tpu.memory_space<vmem>>, vector<128x32xbf16>,
    %91 = vector.extract_strided_slice %25 {offsets = [0, 96], sizes = [128, 32], strides = [1, 1]} : vector<128x128xbf16> to vector<128x32xbf16>
    %92 = vector.extract_strided_slice %31 {offsets = [0, 96], sizes = [128, 32], strides = [1, 1]} : vector<128x128xbf16> to vector<128x32xbf16>
    %cst_30 = arith.constant dense<0.000000e+00> : vector<128x128xf32>
    %93 = tpu.matmul %91, %92, %cst_30 {dimension_numbers = #tpu.dot_dimension_numbers<[1], [1], [0], [0], [0, 0, 1, 0], [], []>} : vector<128x32xbf16>, vector<128x32xbf16>, vector<128x128xf32> -> vector<128x128xf32>
    %94 = arith.addf %93, %19 : vector<128x128xf32>
    %cst_31 = arith.constant dense<0xFF800000> : vector<128xf32>
    %95 = vector.multi_reduction <maximumf>, %94, %cst_31 [1] : vector<128x128xf32> to vector<128xf32>
    %96 = vector.shape_cast %95 : vector<128xf32> to vector<128x1xf32>
    %97 = vector.broadcast %96 : vector<128x1xf32> to vector<128x128xf32>
    %98 = arith.subf %94, %97 : vector<128x128xf32>
    %99 = math.exp %98 : vector<128x128xf32>
    %cst_32 = arith.constant dense<0.000000e+00> : vector<128xf32>
    %100 = vector.multi_reduction <add>, %99, %cst_32 [1] : vector<128x128xf32> to vector<128xf32>
    %101 = vector.shape_cast %100 : vector<128xf32> to vector<128x1xf32>
    %102 = tpu.reciprocal %101 {approx = true} : vector<128x1xf32> -> vector<128x1xf32>
    %103 = arith.truncf %99 : vector<128x128xf32> to vector<128x128xbf16>
    %104 = vector.extract_strided_slice %33 {offsets = [0, 96], sizes = [128, 32], strides = [1, 1]} : vector<128x128xbf16> to vector<128x32xbf16>
    %cst_33 = arith.constant dense<0.000000e+00> : vector<128x32xf32>
    %105 = tpu.matmul %103, %104, %cst_33 {dimension_numbers = #tpu.dot_dimension_numbers<[1], [0], [0], [1], [0, 0, 1, 1], [], []>} : vector<128x128xbf16>, vector<128x32xbf16>, vector<128x32xf32> -> vector<128x32xf32>
    %106 = vector.broadcast %102 : vector<128x1xf32> to vector<128x32xf32>
    %107 = arith.mulf %105, %106 : vector<128x32xf32>
    %108 = arith.truncf %107 : vector<128x32xf32> to vector<128x32xbf16>
    %c0_34 = arith.constant 0 : index
    %c96 = arith.constant 96 : index
    %109 = vector.load %arg12[%c0_34, %c96] : memref<256x128xbf16, #tpu.memory_space<vmem>>, vector<128x32xbf16>
    tpu.vector_store %arg12[%c0_34, %c96], %108 {strides = array<i32>} : memref<256x128xbf16, #tpu.memory_space<vmem>>, vector<128x32xbf16>,
    %110 = vector.extract_strided_slice %16 {offsets = [128, 0], sizes = [128, 128], strides = [1, 1]} : vector<256x640xf32> to vector<128x128xf32>
    %111 = arith.mulf %110, %17 : vector<128x128xf32>
    %112 = vector.extract_strided_slice %16 {offsets = [128, 384], sizes = [128, 128], strides = [1, 1]} : vector<256x640xf32> to vector<128x128xf32>
    %113 = arith.mulf %112, %18 : vector<128x128xf32>
    %114 = arith.addf %111, %113 : vector<128x128xf32>
    %115 = arith.truncf %114 : vector<128x128xf32> to vector<128x128xbf16>
    %116 = vector.extract_strided_slice %16 {offsets = [128, 128], sizes = [128, 128], strides = [1, 1]} : vector<256x640xf32> to vector<128x128xf32>
    %117 = arith.mulf %116, %17 : vector<128x128xf32>
    %118 = vector.extract_strided_slice %16 {offsets = [128, 512], sizes = [128, 128], strides = [1, 1]} : vector<256x640xf32> to vector<128x128xf32>
    %119 = arith.mulf %118, %18 : vector<128x128xf32>
    %120 = arith.addf %117, %119 : vector<128x128xf32>
    %121 = arith.truncf %120 : vector<128x128xf32> to vector<128x128xbf16>
    %122 = vector.extract_strided_slice %16 {offsets = [128, 256], sizes = [128, 128], strides = [1, 1]} : vector<256x640xf32> to vector<128x128xf32>
    %123 = arith.truncf %122 : vector<128x128xf32> to vector<128x128xbf16>
    %124 = vector.extract_strided_slice %115 {offsets = [0, 0], sizes = [128, 32], strides = [1, 1]} : vector<128x128xbf16> to vector<128x32xbf16>
    %125 = vector.extract_strided_slice %121 {offsets = [0, 0], sizes = [128, 32], strides = [1, 1]} : vector<128x128xbf16> to vector<128x32xbf16>
    %cst_35 = arith.constant dense<0.000000e+00> : vector<128x128xf32>
    %126 = tpu.matmul %124, %125, %cst_35 {dimension_numbers = #tpu.dot_dimension_numbers<[1], [1], [0], [0], [0, 0, 1, 0], [], []>} : vector<128x32xbf16>, vector<128x32xbf16>, vector<128x128xf32> -> vector<128x128xf32>
    %127 = arith.addf %126, %19 : vector<128x128xf32>
    %cst_36 = arith.constant dense<0xFF800000> : vector<128xf32>
    %128 = vector.multi_reduction <maximumf>, %127, %cst_36 [1] : vector<128x128xf32> to vector<128xf32>
    %129 = vector.shape_cast %128 : vector<128xf32> to vector<128x1xf32>
    %130 = vector.broadcast %129 : vector<128x1xf32> to vector<128x128xf32>
    %131 = arith.subf %127, %130 : vector<128x128xf32>
    %132 = math.exp %131 : vector<128x128xf32>
    %cst_37 = arith.constant dense<0.000000e+00> : vector<128xf32>
    %133 = vector.multi_reduction <add>, %132, %cst_37 [1] : vector<128x128xf32> to vector<128xf32>
    %134 = vector.shape_cast %133 : vector<128xf32> to vector<128x1xf32>
    %135 = tpu.reciprocal %134 {approx = true} : vector<128x1xf32> -> vector<128x1xf32>
    %136 = arith.truncf %132 : vector<128x128xf32> to vector<128x128xbf16>
    %137 = vector.extract_strided_slice %123 {offsets = [0, 0], sizes = [128, 32], strides = [1, 1]} : vector<128x128xbf16> to vector<128x32xbf16>
    %cst_38 = arith.constant dense<0.000000e+00> : vector<128x32xf32>
    %138 = tpu.matmul %136, %137, %cst_38 {dimension_numbers = #tpu.dot_dimension_numbers<[1], [0], [0], [1], [0, 0, 1, 1], [], []>} : vector<128x128xbf16>, vector<128x32xbf16>, vector<128x32xf32> -> vector<128x32xf32>
    %139 = vector.broadcast %135 : vector<128x1xf32> to vector<128x32xf32>
    %140 = arith.mulf %138, %139 : vector<128x32xf32>
    %141 = arith.truncf %140 : vector<128x32xf32> to vector<128x32xbf16>
    %c128 = arith.constant 128 : index
    %c0_39 = arith.constant 0 : index
    %142 = vector.load %arg12[%c128, %c0_39] : memref<256x128xbf16, #tpu.memory_space<vmem>>, vector<128x32xbf16>
    tpu.vector_store %arg12[%c128, %c0_39], %141 {strides = array<i32>} : memref<256x128xbf16, #tpu.memory_space<vmem>>, vector<128x32xbf16>,
    %143 = vector.extract_strided_slice %115 {offsets = [0, 32], sizes = [128, 32], strides = [1, 1]} : vector<128x128xbf16> to vector<128x32xbf16>
    %144 = vector.extract_strided_slice %121 {offsets = [0, 32], sizes = [128, 32], strides = [1, 1]} : vector<128x128xbf16> to vector<128x32xbf16>
    %cst_40 = arith.constant dense<0.000000e+00> : vector<128x128xf32>
    %145 = tpu.matmul %143, %144, %cst_40 {dimension_numbers = #tpu.dot_dimension_numbers<[1], [1], [0], [0], [0, 0, 1, 0], [], []>} : vector<128x32xbf16>, vector<128x32xbf16>, vector<128x128xf32> -> vector<128x128xf32>
    %146 = arith.addf %145, %19 : vector<128x128xf32>
    %cst_41 = arith.constant dense<0xFF800000> : vector<128xf32>
    %147 = vector.multi_reduction <maximumf>, %146, %cst_41 [1] : vector<128x128xf32> to vector<128xf32>
    %148 = vector.shape_cast %147 : vector<128xf32> to vector<128x1xf32>
    %149 = vector.broadcast %148 : vector<128x1xf32> to vector<128x128xf32>
    %150 = arith.subf %146, %149 : vector<128x128xf32>
    %151 = math.exp %150 : vector<128x128xf32>
    %cst_42 = arith.constant dense<0.000000e+00> : vector<128xf32>
    %152 = vector.multi_reduction <add>, %151, %cst_42 [1] : vector<128x128xf32> to vector<128xf32>
    %153 = vector.shape_cast %152 : vector<128xf32> to vector<128x1xf32>
    %154 = tpu.reciprocal %153 {approx = true} : vector<128x1xf32> -> vector<128x1xf32>
    %155 = arith.truncf %151 : vector<128x128xf32> to vector<128x128xbf16>
    %156 = vector.extract_strided_slice %123 {offsets = [0, 32], sizes = [128, 32], strides = [1, 1]} : vector<128x128xbf16> to vector<128x32xbf16>
    %cst_43 = arith.constant dense<0.000000e+00> : vector<128x32xf32>
    %157 = tpu.matmul %155, %156, %cst_43 {dimension_numbers = #tpu.dot_dimension_numbers<[1], [0], [0], [1], [0, 0, 1, 1], [], []>} : vector<128x128xbf16>, vector<128x32xbf16>, vector<128x32xf32> -> vector<128x32xf32>
    %158 = vector.broadcast %154 : vector<128x1xf32> to vector<128x32xf32>
    %159 = arith.mulf %157, %158 : vector<128x32xf32>
    %160 = arith.truncf %159 : vector<128x32xf32> to vector<128x32xbf16>
    %c128_44 = arith.constant 128 : index
    %c32_45 = arith.constant 32 : index
    %161 = vector.load %arg12[%c128_44, %c32_45] : memref<256x128xbf16, #tpu.memory_space<vmem>>, vector<128x32xbf16>
    tpu.vector_store %arg12[%c128_44, %c32_45], %160 {strides = array<i32>} : memref<256x128xbf16, #tpu.memory_space<vmem>>, vector<128x32xbf16>,
    %162 = vector.extract_strided_slice %115 {offsets = [0, 64], sizes = [128, 32], strides = [1, 1]} : vector<128x128xbf16> to vector<128x32xbf16>
    %163 = vector.extract_strided_slice %121 {offsets = [0, 64], sizes = [128, 32], strides = [1, 1]} : vector<128x128xbf16> to vector<128x32xbf16>
    %cst_46 = arith.constant dense<0.000000e+00> : vector<128x128xf32>
    %164 = tpu.matmul %162, %163, %cst_46 {dimension_numbers = #tpu.dot_dimension_numbers<[1], [1], [0], [0], [0, 0, 1, 0], [], []>} : vector<128x32xbf16>, vector<128x32xbf16>, vector<128x128xf32> -> vector<128x128xf32>
    %165 = arith.addf %164, %19 : vector<128x128xf32>
    %cst_47 = arith.constant dense<0xFF800000> : vector<128xf32>
    %166 = vector.multi_reduction <maximumf>, %165, %cst_47 [1] : vector<128x128xf32> to vector<128xf32>
    %167 = vector.shape_cast %166 : vector<128xf32> to vector<128x1xf32>
    %168 = vector.broadcast %167 : vector<128x1xf32> to vector<128x128xf32>
    %169 = arith.subf %165, %168 : vector<128x128xf32>
    %170 = math.exp %169 : vector<128x128xf32>
    %cst_48 = arith.constant dense<0.000000e+00> : vector<128xf32>
    %171 = vector.multi_reduction <add>, %170, %cst_48 [1] : vector<128x128xf32> to vector<128xf32>
    %172 = vector.shape_cast %171 : vector<128xf32> to vector<128x1xf32>
    %173 = tpu.reciprocal %172 {approx = true} : vector<128x1xf32> -> vector<128x1xf32>
    %174 = arith.truncf %170 : vector<128x128xf32> to vector<128x128xbf16>
    %175 = vector.extract_strided_slice %123 {offsets = [0, 64], sizes = [128, 32], strides = [1, 1]} : vector<128x128xbf16> to vector<128x32xbf16>
    %cst_49 = arith.constant dense<0.000000e+00> : vector<128x32xf32>
    %176 = tpu.matmul %174, %175, %cst_49 {dimension_numbers = #tpu.dot_dimension_numbers<[1], [0], [0], [1], [0, 0, 1, 1], [], []>} : vector<128x128xbf16>, vector<128x32xbf16>, vector<128x32xf32> -> vector<128x32xf32>
    %177 = vector.broadcast %173 : vector<128x1xf32> to vector<128x32xf32>
    %178 = arith.mulf %176, %177 : vector<128x32xf32>
    %179 = arith.truncf %178 : vector<128x32xf32> to vector<128x32xbf16>
    %c128_50 = arith.constant 128 : index
    %c64_51 = arith.constant 64 : index
    %180 = vector.load %arg12[%c128_50, %c64_51] : memref<256x128xbf16, #tpu.memory_space<vmem>>, vector<128x32xbf16>
    tpu.vector_store %arg12[%c128_50, %c64_51], %179 {strides = array<i32>} : memref<256x128xbf16, #tpu.memory_space<vmem>>, vector<128x32xbf16>,
    %181 = vector.extract_strided_slice %115 {offsets = [0, 96], sizes = [128, 32], strides = [1, 1]} : vector<128x128xbf16> to vector<128x32xbf16>
    %182 = vector.extract_strided_slice %121 {offsets = [0, 96], sizes = [128, 32], strides = [1, 1]} : vector<128x128xbf16> to vector<128x32xbf16>
    %cst_52 = arith.constant dense<0.000000e+00> : vector<128x128xf32>
    %183 = tpu.matmul %181, %182, %cst_52 {dimension_numbers = #tpu.dot_dimension_numbers<[1], [1], [0], [0], [0, 0, 1, 0], [], []>} : vector<128x32xbf16>, vector<128x32xbf16>, vector<128x128xf32> -> vector<128x128xf32>
    %184 = arith.addf %183, %19 : vector<128x128xf32>
    %cst_53 = arith.constant dense<0xFF800000> : vector<128xf32>
    %185 = vector.multi_reduction <maximumf>, %184, %cst_53 [1] : vector<128x128xf32> to vector<128xf32>
    %186 = vector.shape_cast %185 : vector<128xf32> to vector<128x1xf32>
    %187 = vector.broadcast %186 : vector<128x1xf32> to vector<128x128xf32>
    %188 = arith.subf %184, %187 : vector<128x128xf32>
    %189 = math.exp %188 : vector<128x128xf32>
    %cst_54 = arith.constant dense<0.000000e+00> : vector<128xf32>
    %190 = vector.multi_reduction <add>, %189, %cst_54 [1] : vector<128x128xf32> to vector<128xf32>
    %191 = vector.shape_cast %190 : vector<128xf32> to vector<128x1xf32>
    %192 = tpu.reciprocal %191 {approx = true} : vector<128x1xf32> -> vector<128x1xf32>
    %193 = arith.truncf %189 : vector<128x128xf32> to vector<128x128xbf16>
    %194 = vector.extract_strided_slice %123 {offsets = [0, 96], sizes = [128, 32], strides = [1, 1]} : vector<128x128xbf16> to vector<128x32xbf16>
    %cst_55 = arith.constant dense<0.000000e+00> : vector<128x32xf32>
    %195 = tpu.matmul %193, %194, %cst_55 {dimension_numbers = #tpu.dot_dimension_numbers<[1], [0], [0], [1], [0, 0, 1, 1], [], []>} : vector<128x128xbf16>, vector<128x32xbf16>, vector<128x32xf32> -> vector<128x32xf32>
    %196 = vector.broadcast %192 : vector<128x1xf32> to vector<128x32xf32>
    %197 = arith.mulf %195, %196 : vector<128x32xf32>
    %198 = arith.truncf %197 : vector<128x32xf32> to vector<128x32xbf16>
    %c128_56 = arith.constant 128 : index
    %c96_57 = arith.constant 96 : index
    %199 = vector.load %arg12[%c128_56, %c96_57] : memref<256x128xbf16, #tpu.memory_space<vmem>>, vector<128x32xbf16>
    tpu.vector_store %arg12[%c128_56, %c96_57], %198 {strides = array<i32>} : memref<256x128xbf16, #tpu.memory_space<vmem>>, vector<128x32xbf16>,
    %c0_58 = arith.constant 0 : index
    %c0_59 = arith.constant 0 : index
    %200 = vector.load %arg12[%c0_58, %c0_59] : memref<256x128xbf16, #tpu.memory_space<vmem>>, vector<256x128xbf16>
    %c0_60 = arith.constant 0 : index
    %c0_61 = arith.constant 0 : index
    %201 = vector.load %arg8[%c0_60, %c0_61] : memref<128x128xbf16, #tpu.memory_space<vmem>>, vector<128x128xbf16>
    %cst_62 = arith.constant dense<0.000000e+00> : vector<256x128xf32>
    %202 = tpu.matmul %200, %201, %cst_62 {dimension_numbers = #tpu.dot_dimension_numbers<[1], [0], [0], [1], [0, 0, 1, 1], [], []>} : vector<256x128xbf16>, vector<128x128xbf16>, vector<256x128xf32> -> vector<256x128xf32>
    %c0_63 = arith.constant 0 : index
    %c0_64 = arith.constant 0 : index
    %203 = vector.load %arg1[%c0_63, %c0_64] : memref<256x128xf32, #tpu.memory_space<vmem>>, vector<256x128xf32>
    %204 = arith.addf %203, %202 : vector<256x128xf32>
    %c0_65 = arith.constant 0 : index
    %c0_66 = arith.constant 0 : index
    %205 = vector.load %arg11[%c0_65, %c0_66] : memref<256x128xf32, #tpu.memory_space<vmem>>, vector<256x128xf32>
    tpu.vector_store %arg11[%c0_65, %c0_66], %204 {strides = array<i32>} : memref<256x128xf32, #tpu.memory_space<vmem>>, vector<256x128xf32>,
    %206 = arith.mulf %204, %204 : vector<256x128xf32>
    %cst_67 = arith.constant dense<0.000000e+00> : vector<256xf32>
    %207 = vector.multi_reduction <add>, %206, %cst_67 [1] : vector<256x128xf32> to vector<256xf32>
    %208 = vector.shape_cast %207 : vector<256xf32> to vector<256x1xf32>
    %cst_68 = arith.constant 1.280000e+02 : f32
    %209 = vector.broadcast %cst_68 : f32 to vector<256x1xf32>
    %210 = arith.divf %208, %209 : vector<256x1xf32>
    %cst_69 = arith.constant 9.99999993E-9 : f32
    %211 = vector.broadcast %cst_69 : f32 to vector<256x1xf32>
    %212 = arith.addf %210, %211 : vector<256x1xf32>
    %213 = math.rsqrt %212 : vector<256x1xf32>
    %214 = vector.broadcast %213 : vector<256x1xf32> to vector<256x128xf32>
    %215 = arith.mulf %204, %214 : vector<256x128xf32>
    %c0_70 = arith.constant 0 : index
    %c0_71 = arith.constant 0 : index
    %216 = vector.load %arg3[%c0_70, %c0_71] : memref<1x128xf32, #tpu.memory_space<vmem>>, vector<1x128xf32>
    %217 = vector.broadcast %216 : vector<1x128xf32> to vector<256x128xf32>
    %218 = arith.mulf %215, %217 : vector<256x128xf32>
    %219 = arith.truncf %218 : vector<256x128xf32> to vector<256x128xbf16>
    %c0_72 = arith.constant 0 : index
    %c0_73 = arith.constant 0 : index
    %220 = vector.load %arg9[%c0_72, %c0_73] : memref<128x1024xbf16, #tpu.memory_space<vmem>>, vector<128x1024xbf16>
    %cst_74 = arith.constant dense<0.000000e+00> : vector<256x1024xf32>
    %221 = tpu.matmul %219, %220, %cst_74 {dimension_numbers = #tpu.dot_dimension_numbers<[1], [0], [0], [1], [0, 0, 1, 1], [], []>} : vector<256x128xbf16>, vector<128x1024xbf16>, vector<256x1024xf32> -> vector<256x1024xf32>
    %222 = vector.extract_strided_slice %221 {offsets = [0, 0], sizes = [256, 512], strides = [1, 1]} : vector<256x1024xf32> to vector<256x512xf32>
    %223 = vector.extract_strided_slice %221 {offsets = [0, 512], sizes = [256, 512], strides = [1, 1]} : vector<256x1024xf32> to vector<256x512xf32>
    %cst_75 = arith.constant 5.000000e-01 : f32
    %224 = vector.broadcast %cst_75 : f32 to vector<256x512xf32>
    %225 = arith.mulf %224, %222 : vector<256x512xf32>
    %cst_76 = arith.constant 0.707106769 : f32
    %226 = vector.broadcast %cst_76 : f32 to vector<256x512xf32>
    %227 = arith.mulf %222, %226 : vector<256x512xf32>
    %228 = math.erf %227 : vector<256x512xf32>
    %cst_77 = arith.constant 1.000000e+00 : f32
    %229 = vector.broadcast %cst_77 : f32 to vector<256x512xf32>
    %230 = arith.addf %229, %228 : vector<256x512xf32>
    %231 = arith.mulf %225, %230 : vector<256x512xf32>
    %232 = arith.mulf %231, %223 : vector<256x512xf32>
    %233 = arith.truncf %232 : vector<256x512xf32> to vector<256x512xbf16>
    %c0_78 = arith.constant 0 : index
    %c0_79 = arith.constant 0 : index
    %234 = vector.load %arg10[%c0_78, %c0_79] : memref<512x128xbf16, #tpu.memory_space<vmem>>, vector<512x128xbf16>
    %cst_80 = arith.constant dense<0.000000e+00> : vector<256x128xf32>
    %235 = tpu.matmul %233, %234, %cst_80 {dimension_numbers = #tpu.dot_dimension_numbers<[1], [0], [0], [1], [0, 0, 1, 1], [], []>} : vector<256x512xbf16>, vector<512x128xbf16>, vector<256x128xf32> -> vector<256x128xf32>
    %c0_81 = arith.constant 0 : index
    %c0_82 = arith.constant 0 : index
    %236 = vector.load %arg11[%c0_81, %c0_82] : memref<256x128xf32, #tpu.memory_space<vmem>>, vector<256x128xf32>
    %237 = arith.addf %236, %235 : vector<256x128xf32>
    %c0_83 = arith.constant 0 : index
    %c0_84 = arith.constant 0 : index
    %238 = vector.load %arg11[%c0_83, %c0_84] : memref<256x128xf32, #tpu.memory_space<vmem>>, vector<256x128xf32>
    tpu.vector_store %arg11[%c0_83, %c0_84], %237 {strides = array<i32>} : memref<256x128xf32, #tpu.memory_space<vmem>>, vector<256x128xf32>,
    return
  }
  func.func @transform_0(%arg0: i32) -> (i32, i32) {
    %c0_i32 = arith.constant 0 : i32
    %c0_i32_0 = arith.constant 0 : i32
    return %arg0, %c0_i32 : i32, i32
  }
  func.func @transform_1(%arg0: i32) -> (i32, i32) {
    %c0_i32 = arith.constant 0 : i32
    %c0_i32_0 = arith.constant 0 : i32
    %c0_i32_1 = arith.constant 0 : i32
    return %c0_i32, %c0_i32_0 : i32, i32
  }
  func.func @transform_2(%arg0: i32) -> (i32, i32) {
    %c0_i32 = arith.constant 0 : i32
    %c0_i32_0 = arith.constant 0 : i32
    %c0_i32_1 = arith.constant 0 : i32
    return %c0_i32, %c0_i32_0 : i32, i32
  }
  func.func @transform_3(%arg0: i32) -> (i32, i32) {
    %c0_i32 = arith.constant 0 : i32
    %c0_i32_0 = arith.constant 0 : i32
    %c0_i32_1 = arith.constant 0 : i32
    return %c0_i32, %c0_i32_0 : i32, i32
  }
  func.func @transform_4(%arg0: i32) -> (i32, i32) {
    %c0_i32 = arith.constant 0 : i32
    %c0_i32_0 = arith.constant 0 : i32
    %c0_i32_1 = arith.constant 0 : i32
    return %c0_i32, %c0_i32_0 : i32, i32
  }
  func.func @transform_5(%arg0: i32) -> (i32, i32) {
    %c0_i32 = arith.constant 0 : i32
    %c0_i32_0 = arith.constant 0 : i32
    %c0_i32_1 = arith.constant 0 : i32
    return %c0_i32, %c0_i32_0 : i32, i32
  }
  func.func @transform_6(%arg0: i32) -> (i32, i32) {
    %c0_i32 = arith.constant 0 : i32
    %c0_i32_0 = arith.constant 0 : i32
    %c0_i32_1 = arith.constant 0 : i32
    return %c0_i32, %c0_i32_0 : i32, i32
  }
  func.func @transform_7(%arg0: i32) -> (i32, i32) {
    %c0_i32 = arith.constant 0 : i32
    %c0_i32_0 = arith.constant 0 : i32
    %c0_i32_1 = arith.constant 0 : i32
    return %c0_i32, %c0_i32_0 : i32, i32
  }
  func.func @transform_8(%arg0: i32) -> (i32, i32) {
    %c0_i32 = arith.constant 0 : i32
    %c0_i32_0 = arith.constant 0 : i32
    %c0_i32_1 = arith.constant 0 : i32
    return %c0_i32, %c0_i32_0 : i32, i32
  }
  func.func @transform_9(%arg0: i32) -> (i32, i32) {
    %c0_i32 = arith.constant 0 : i32
    %c0_i32_0 = arith.constant 0 : i32
    %c0_i32_1 = arith.constant 0 : i32
    return %c0_i32, %c0_i32_0 : i32, i32
  }
  func.func @transform_10(%arg0: i32) -> (i32, i32) {
    %c0_i32 = arith.constant 0 : i32
    %c0_i32_0 = arith.constant 0 : i32
    return %arg0, %c0_i32 : i32, i32
  }
}

</mosaic_0001>

<llo_original>
// kernel: tpu_custom_call.1
$region0: #{tpu_custom_call.1}
  #allocation0 [shape = 'u32[]', space=smem, size = 0x4, offset = 0x4, fixed_abs, tag = 'smem constant byte address 0x4 - core index']
  #allocation1 [shape = 'u32[144,128]{1,0:T(1,128)}', space=vmem, size = 0x12000, scoped, tag = 'internal scratch']
  #allocation2 [shape = 'bf16[256,128]{1,0:T(8,128)(2,1)}', space=vmem, size = 0x10000, scoped, tag = 'scratch operand']
  %s0 = inlined_call_operand.hbm [shape: f32[512,128], index: 0, kind: input, shape index: {}]
  %s1 = inlined_call_operand.vmem [shape: f32[1,128], index: 1, kind: input, shape index: {}]
  %s2 = inlined_call_operand.vmem [shape: f32[1,128], index: 2, kind: input, shape index: {}]
  %s3 = inlined_call_operand.hbm [shape: f32[128,128], index: 3, kind: input, shape index: {}]
  %s4 = inlined_call_operand.hbm [shape: f32[128,128], index: 4, kind: input, shape index: {}]
  %s5 = inlined_call_operand.hbm [shape: f32[128,128], index: 5, kind: input, shape index: {}]
  %s6 = inlined_call_operand.hbm [shape: bf16[128,640], index: 6, kind: input, shape index: {}]
  %s7 = inlined_call_operand.hbm [shape: bf16[128,128], index: 7, kind: input, shape index: {}]
  %s8 = inlined_call_operand.hbm [shape: bf16[128,1024], index: 8, kind: input, shape index: {}]
  %s9 = inlined_call_operand.hbm [shape: bf16[512,128], index: 9, kind: input, shape index: {}]
  %s10 = inlined_call_operand.hbm [shape: f32[512,128], index: 10, kind: output, shape index: {}]
  %s11 = sld [smem:[#allocation0]]
  $region105: #{tpu_custom_call.1} parent=0
    _
  %s13 = ssub.s32 1, %s11
  %s14 = scalar_select 0, %s13, %s11
  $region1: #{tpu_custom_call.1} parent=0
    #allocation3 [shape = 'u8[262144]{0}', space=vmem, size = 0x40000, scoped, tag = 'input window, operand 0']
    #allocation4 [shape = 's32[2]{0}', space=sflag, size = 0x8, scoped, tag = 'scoped memory for tpu_custom_call.1']
    #allocation5 [shape = 's32[2]{0}', space=sflag, size = 0x8, scoped, tag = 'scoped memory for tpu_custom_call.1']
    #allocation6 [shape = 'u8[65536]{0}', space=vmem, size = 0x10000, scoped, tag = 'input window, operand 3, single buffered']
    #allocation7 [shape = 's32[1]{0}', space=sflag, size = 0x4, scoped, tag = 'scoped memory for tpu_custom_call.1']
    #allocation8 [shape = 'u8[65536]{0}', space=vmem, size = 0x10000, scoped, tag = 'input window, operand 4, single buffered']
    #allocation9 [shape = 'u8[65536]{0}', space=vmem, size = 0x10000, scoped, tag = 'input window, operand 5, single buffered']
    #allocation10 [shape = 's32[1]{0}', space=sflag, size = 0x4, scoped, tag = 'scoped memory for tpu_custom_call.1']
    #allocation11 [shape = 'u8[163840]{0}', space=vmem, size = 0x28000, scoped, tag = 'input window, operand 6, single buffered']
    #allocation12 [shape = 'u8[32768]{0}', space=vmem, size = 0x8000, scoped, tag = 'input window, operand 7, single buffered']
    #allocation13 [shape = 's32[1]{0}', space=sflag, size = 0x4, scoped, tag = 'scoped memory for tpu_custom_call.1']
    #allocation14 [shape = 'u8[262144]{0}', space=vmem, size = 0x40000, scoped, tag = 'input window, operand 8, single buffered']
    #allocation15 [shape = 'u8[131072]{0}', space=vmem, size = 0x20000, scoped, tag = 'input window, operand 9, single buffered']
    #allocation16 [shape = 's32[1]{0}', space=sflag, size = 0x4, scoped, tag = 'scoped memory for tpu_custom_call.1']
    #allocation17 [shape = 'u8[262144]{0}', space=vmem, size = 0x40000, scoped, tag = 'output window, operand 0']
    %15 = vsyncpa [#allocation4], 0
    %s16 = scalar_lea.sflag [#allocation4], 1
    %17 = vsyncpa %s16, 0
    %18 = vsyncpa [#allocation7], 0
    %19 = vsyncpa [#allocation10], 0
    %20 = vsyncpa [#allocation13], 0
    %21 = vsyncpa [#allocation16], 0
    %22 = vsyncpa [#allocation5], 0
    %s23 = scalar_lea.sflag [#allocation5], 1
    %24 = vsyncpa %s23, 0
    loop: start=0, step=1, limit=4
    $region2: #{tpu_custom_call.1} parent=1 // loop_pre_header
      _
    $region3: #{tpu_custom_call.1} parent=1 // loop_header
      %s26 = sphi 0, %s30
      %p27 = scmp.ge.s32.totalorder %s26, 4
      %s36 = sphi 0, %s38
      %s39 = sphi 0, %s36
      %s40 = sphi 0, %s39
      %s56 = sphi 0, %s40
      %s60 = sphi 0, %s60
      %s62 = sphi 0, %s60
      %s63 = sphi 0, %s62
      %s77 = sphi 0, %s63
      %s81 = sphi 0, %s81
      %s83 = sphi 0, %s81
      %s84 = sphi 0, %s83
      %s98 = sphi 0, %s84
      %s102 = sphi 0, %s102
      %s104 = sphi 0, %s102
      %s105 = sphi 0, %s104
      %s119 = sphi 0, %s105
      %s123 = sphi 0, %s123
      %s125 = sphi 0, %s123
      %s126 = sphi 0, %s125
      %s140 = sphi 0, %s126
      %s144 = sphi 0, %s144
      %s146 = sphi 0, %s144
      %s147 = sphi 0, %s146
      %s161 = sphi 0, %s147
      %s165 = sphi 0, %s165
      %s167 = sphi 0, %s165
      %s168 = sphi 0, %s167
      %s182 = sphi 0, %s168
      %s186 = sphi 0, %s186
      %s188 = sphi 0, %s186
      %s189 = sphi 0, %s188
      %s203 = sphi 0, %s189
      %s207 = sphi 0, %s207
      %s209 = sphi 0, %s207
      %s210 = sphi 0, %s209
      %s224 = sphi 0, %s210
      %s228 = sphi 0, %s228
      %s230 = sphi 0, %s228
      %s231 = sphi 0, %s230
      %s245 = sphi 0, %s231
      %s251 = sphi 0, %s253
      %s254 = sphi 0, %s251
      %s255 = sphi 0, %s254
      %s271 = sphi 0, %s255
    $region4: #{tpu_custom_call.1} parent=1 // loop_header_branch
      %29 = sbr.rel (%p27) target = $region8
    $region5: #{tpu_custom_call.1} parent=1 // loop_body
      %s31 = ssub.s32 %s26, 1
      %s32 = ssub.s32 %s26, 2
      %s33 = sadd.s32 %s26, 1
      %s34 = ssub.s32 %s26, %s33
      %p35 = scmp.eq.s32.totalorder %s34, 0
      %s37 = sadd.s32 %s36, 1
      %s38 = scalar_select %p35, %s36, %s37
      %p41 = pneg %p35
      %p42 = scmp.eq.s32.totalorder %s26, 1
      %p43 = por %p41, %p42
      %p44 = scmp.ne.s32.totalorder %s36, %s39
      %p45 = scmp.eq.s32.totalorder %s26, 0
      %p46 = por %p44, %p45
      %p47 = scmp.ne.s32.totalorder %s36, %s39
      %p48 = scmp.eq.s32.totalorder %s31, 1
      %p49 = por %p47, %p48
      %p50 = scmp.ne.s32.totalorder %s39, %s40
      %p51 = scmp.eq.s32.totalorder %s31, 0
      %p52 = por %p50, %p51
      %p53 = scmp.ne.s32.totalorder %s39, %s40
      %p54 = scmp.eq.s32.totalorder %s32, 1
      %p55 = por %p53, %p54
      %p57 = scmp.ne.s32.totalorder %s40, %s56
      %p58 = scmp.eq.s32.totalorder %s32, 0
      %p59 = por %p57, %p58
      %s61 = sadd.s32 %s60, 1
      %p64 = scmp.eq.s32.totalorder %s26, 1
      %p65 = scmp.ne.s32.totalorder %s60, %s62
      %p66 = scmp.eq.s32.totalorder %s26, 0
      %p67 = por %p65, %p66
      %p68 = scmp.ne.s32.totalorder %s60, %s62
      %p69 = scmp.eq.s32.totalorder %s31, 1
      %p70 = por %p68, %p69
      %p71 = scmp.ne.s32.totalorder %s62, %s63
      %p72 = scmp.eq.s32.totalorder %s31, 0
      %p73 = por %p71, %p72
      %p74 = scmp.ne.s32.totalorder %s62, %s63
      %p75 = scmp.eq.s32.totalorder %s32, 1
      %p76 = por %p74, %p75
      %p78 = scmp.ne.s32.totalorder %s63, %s77
      %p79 = scmp.eq.s32.totalorder %s32, 0
      %p80 = por %p78, %p79
      %s82 = sadd.s32 %s81, 1
      %p85 = scmp.eq.s32.totalorder %s26, 1
      %p86 = scmp.ne.s32.totalorder %s81, %s83
      %p87 = scmp.eq.s32.totalorder %s26, 0
      %p88 = por %p86, %p87
      %p89 = scmp.ne.s32.totalorder %s81, %s83
      %p90 = scmp.eq.s32.totalorder %s31, 1
      %p91 = por %p89, %p90
      %p92 = scmp.ne.s32.totalorder %s83, %s84
      %p93 = scmp.eq.s32.totalorder %s31, 0
      %p94 = por %p92, %p93
      %p95 = scmp.ne.s32.totalorder %s83, %s84
      %p96 = scmp.eq.s32.totalorder %s32, 1
      %p97 = por %p95, %p96
      %p99 = scmp.ne.s32.totalorder %s84, %s98
      %p100 = scmp.eq.s32.totalorder %s32, 0
      %p101 = por %p99, %p100
      %s103 = sadd.s32 %s102, 1
      %p106 = scmp.eq.s32.totalorder %s26, 1
      %p107 = scmp.ne.s32.totalorder %s102, %s104
      %p108 = scmp.eq.s32.totalorder %s26, 0
      %p109 = por %p107, %p108
      %p110 = scmp.ne.s32.totalorder %s102, %s104
      %p111 = scmp.eq.s32.totalorder %s31, 1
      %p112 = por %p110, %p111
      %p113 = scmp.ne.s32.totalorder %s104, %s105
      %p114 = scmp.eq.s32.totalorder %s31, 0
      %p115 = por %p113, %p114
      %p116 = scmp.ne.s32.totalorder %s104, %s105
      %p117 = scmp.eq.s32.totalorder %s32, 1
      %p118 = por %p116, %p117
      %p120 = scmp.ne.s32.totalorder %s105, %s119
      %p121 = scmp.eq.s32.totalorder %s32, 0
      %p122 = por %p120, %p121
      %s124 = sadd.s32 %s123, 1
      %p127 = scmp.eq.s32.totalorder %s26, 1
      %p128 = scmp.ne.s32.totalorder %s123, %s125
      %p129 = scmp.eq.s32.totalorder %s26, 0
      %p130 = por %p128, %p129
      %p131 = scmp.ne.s32.totalorder %s123, %s125
      %p132 = scmp.eq.s32.totalorder %s31, 1
      %p133 = por %p131, %p132
      %p134 = scmp.ne.s32.totalorder %s125, %s126
      %p135 = scmp.eq.s32.totalorder %s31, 0
      %p136 = por %p134, %p135
      %p137 = scmp.ne.s32.totalorder %s125, %s126
      %p138 = scmp.eq.s32.totalorder %s32, 1
      %p139 = por %p137, %p138
      %p141 = scmp.ne.s32.totalorder %s126, %s140
      %p142 = scmp.eq.s32.totalorder %s32, 0
      %p143 = por %p141, %p142
      %s145 = sadd.s32 %s144, 1
      %p148 = scmp.eq.s32.totalorder %s26, 1
      %p149 = scmp.ne.s32.totalorder %s144, %s146
      %p150 = scmp.eq.s32.totalorder %s26, 0
      %p151 = por %p149, %p150
      %p152 = scmp.ne.s32.totalorder %s144, %s146
      %p153 = scmp.eq.s32.totalorder %s31, 1
      %p154 = por %p152, %p153
      %p155 = scmp.ne.s32.totalorder %s146, %s147
      %p156 = scmp.eq.s32.totalorder %s31, 0
      %p157 = por %p155, %p156
      %p158 = scmp.ne.s32.totalorder %s146, %s147
      %p159 = scmp.eq.s32.totalorder %s32, 1
      %p160 = por %p158, %p159
      %p162 = scmp.ne.s32.totalorder %s147, %s161
      %p163 = scmp.eq.s32.totalorder %s32, 0
      %p164 = por %p162, %p163
      %s166 = sadd.s32 %s165, 1
      %p169 = scmp.eq.s32.totalorder %s26, 1
      %p170 = scmp.ne.s32.totalorder %s165, %s167
      %p171 = scmp.eq.s32.totalorder %s26, 0
      %p172 = por %p170, %p171
      %p173 = scmp.ne.s32.totalorder %s165, %s167
      %p174 = scmp.eq.s32.totalorder %s31, 1
      %p175 = por %p173, %p174
      %p176 = scmp.ne.s32.totalorder %s167, %s168
      %p177 = scmp.eq.s32.totalorder %s31, 0
      %p178 = por %p176, %p177
      %p179 = scmp.ne.s32.totalorder %s167, %s168
      %p180 = scmp.eq.s32.totalorder %s32, 1
      %p181 = por %p179, %p180
      %p183 = scmp.ne.s32.totalorder %s168, %s182
      %p184 = scmp.eq.s32.totalorder %s32, 0
      %p185 = por %p183, %p184
      %s187 = sadd.s32 %s186, 1
      %p190 = scmp.eq.s32.totalorder %s26, 1
      %p191 = scmp.ne.s32.totalorder %s186, %s188
      %p192 = scmp.eq.s32.totalorder %s26, 0
      %p193 = por %p191, %p192
      %p194 = scmp.ne.s32.totalorder %s186, %s188
      %p195 = scmp.eq.s32.totalorder %s31, 1
      %p196 = por %p194, %p195
      %p197 = scmp.ne.s32.totalorder %s188, %s189
      %p198 = scmp.eq.s32.totalorder %s31, 0
      %p199 = por %p197, %p198
      %p200 = scmp.ne.s32.totalorder %s188, %s189
      %p201 = scmp.eq.s32.totalorder %s32, 1
      %p202 = por %p200, %p201
      %p204 = scmp.ne.s32.totalorder %s189, %s203
      %p205 = scmp.eq.s32.totalorder %s32, 0
      %p206 = por %p204, %p205
      %s208 = sadd.s32 %s207, 1
      %p211 = scmp.eq.s32.totalorder %s26, 1
      %p212 = scmp.ne.s32.totalorder %s207, %s209
      %p213 = scmp.eq.s32.totalorder %s26, 0
      %p214 = por %p212, %p213
      %p215 = scmp.ne.s32.totalorder %s207, %s209
      %p216 = scmp.eq.s32.totalorder %s31, 1
      %p217 = por %p215, %p216
      %p218 = scmp.ne.s32.totalorder %s209, %s210
      %p219 = scmp.eq.s32.totalorder %s31, 0
      %p220 = por %p218, %p219
      %p221 = scmp.ne.s32.totalorder %s209, %s210
      %p222 = scmp.eq.s32.totalorder %s32, 1
      %p223 = por %p221, %p222
      %p225 = scmp.ne.s32.totalorder %s210, %s224
      %p226 = scmp.eq.s32.totalorder %s32, 0
      %p227 = por %p225, %p226
      %s229 = sadd.s32 %s228, 1
      %p232 = scmp.eq.s32.totalorder %s26, 1
      %p233 = scmp.ne.s32.totalorder %s228, %s230
      %p234 = scmp.eq.s32.totalorder %s26, 0
      %p235 = por %p233, %p234
      %p236 = scmp.ne.s32.totalorder %s228, %s230
      %p237 = scmp.eq.s32.totalorder %s31, 1
      %p238 = por %p236, %p237
      %p239 = scmp.ne.s32.totalorder %s230, %s231
      %p240 = scmp.eq.s32.totalorder %s31, 0
      %p241 = por %p239, %p240
      %p242 = scmp.ne.s32.totalorder %s230, %s231
      %p243 = scmp.eq.s32.totalorder %s32, 1
      %p244 = por %p242, %p243
      %p246 = scmp.ne.s32.totalorder %s231, %s245
      %p247 = scmp.eq.s32.totalorder %s32, 0
      %p248 = por %p246, %p247
      %s249 = ssub.s32 %s26, %s33
      %p250 = scmp.eq.s32.totalorder %s249, 0
      %s252 = sadd.s32 %s251, 1
      %s253 = scalar_select %p250, %s251, %s252
      %p256 = pneg %p250
      %p257 = scmp.eq.s32.totalorder %s26, 1
      %p258 = por %p256, %p257
      %p259 = scmp.ne.s32.totalorder %s251, %s254
      %p260 = scmp.eq.s32.totalorder %s26, 0
      %p261 = por %p259, %p260
      %p262 = scmp.ne.s32.totalorder %s251, %s254
      %p263 = scmp.eq.s32.totalorder %s31, 1
      %p264 = por %p262, %p263
      %p265 = scmp.ne.s32.totalorder %s254, %s255
      %p266 = scmp.eq.s32.totalorder %s31, 0
      %p267 = por %p265, %p266
      %p268 = scmp.ne.s32.totalorder %s254, %s255
      %p269 = scmp.eq.s32.totalorder %s32, 1
      %p270 = por %p268, %p269
      %p272 = scmp.ne.s32.totalorder %s255, %s271
      %p273 = scmp.eq.s32.totalorder %s32, 0
      %p274 = por %p272, %p273
      %p275 = scmp.le.s32.totalorder 1, %s26
      %p276 = scmp.lt.s32.totalorder %s26, 3
      %p277 = pnand %p275, %p276
      %p278 = pneg %p277
      // Predicated region
      $region9: #{tpu_custom_call.1} parent=5 // pred_check
        _
      $region10: #{tpu_custom_call.1} parent=5 // pred_check_branch
        %280 = sbr.rel (%p277) target = $region12
      $region11: #{tpu_custom_call.1} parent=5 // pred_region
        %s281 = ssub.s32 %s26, 1
        // Predicated region
        $region13: #{tpu_custom_call.1} parent=11 // pred_check
          %p282 = pneg %p73
        $region14: #{tpu_custom_call.1} parent=11 // pred_check_branch
          %284 = sbr.rel (%p282) target = $region16
        $region15: #{tpu_custom_call.1} parent=11 // pred_region
          _
        $region16: #{tpu_custom_call.1} parent=11 // pred_fallthru
          _
        // Predicated region
        $region17: #{tpu_custom_call.1} parent=11 // pred_check
          %p285 = pneg %p94
        $region18: #{tpu_custom_call.1} parent=11 // pred_check_branch
          %287 = sbr.rel (%p285) target = $region20
        $region19: #{tpu_custom_call.1} parent=11 // pred_region
          _
        $region20: #{tpu_custom_call.1} parent=11 // pred_fallthru
          _
        // Predicated region
        $region21: #{tpu_custom_call.1} parent=11 // pred_check
          %p288 = pneg %p115
        $region22: #{tpu_custom_call.1} parent=11 // pred_check_branch
          %290 = sbr.rel (%p288) target = $region24
        $region23: #{tpu_custom_call.1} parent=11 // pred_region
          %s292 = ssub.s32 2048, 2048
          %293 = vsyncadd [#allocation7], %s292
          %s294 = sshll.u32 [#allocation6], 4
          %s295 = int_to_ptr.vmem [resolvable:$true] %s294
          %300 = dma.hbm_to_vmem [thread:$0]  %s3, 2048, %s295, [#allocation7], 128, 128, 8
        $region24: #{tpu_custom_call.1} parent=11 // pred_fallthru
          _
        // Predicated region
        $region25: #{tpu_custom_call.1} parent=11 // pred_check
          %p301 = pneg %p136
        $region26: #{tpu_custom_call.1} parent=11 // pred_check_branch
          %303 = sbr.rel (%p301) target = $region28
        $region27: #{tpu_custom_call.1} parent=11 // pred_region
          %s305 = ssub.s32 2048, 2048
          %306 = vsyncadd [#allocation7], %s305
          %s307 = sshll.u32 [#allocation8], 4
          %s308 = int_to_ptr.vmem [resolvable:$true] %s307
          %313 = dma.hbm_to_vmem [thread:$0]  %s4, 2048, %s308, [#allocation7], 128, 128, 8
        $region28: #{tpu_custom_call.1} parent=11 // pred_fallthru
          _
        // Predicated region
        $region29: #{tpu_custom_call.1} parent=11 // pred_check
          %p314 = pneg %p157
        $region30: #{tpu_custom_call.1} parent=11 // pred_check_branch
          %316 = sbr.rel (%p314) target = $region32
        $region31: #{tpu_custom_call.1} parent=11 // pred_region
          %s318 = ssub.s32 2048, 2048
          %319 = vsyncadd [#allocation10], %s318
          %s320 = sshll.u32 [#allocation9], 4
          %s321 = int_to_ptr.vmem [resolvable:$true] %s320
          %326 = dma.hbm_to_vmem [thread:$0]  %s5, 2048, %s321, [#allocation10], 128, 128, 8
        $region32: #{tpu_custom_call.1} parent=11 // pred_fallthru
          _
        // Predicated region
        $region33: #{tpu_custom_call.1} parent=11 // pred_check
          %p327 = pneg %p178
        $region34: #{tpu_custom_call.1} parent=11 // pred_check_branch
          %329 = sbr.rel (%p327) target = $region36
        $region35: #{tpu_custom_call.1} parent=11 // pred_region
          %s331 = ssub.s32 5120, 5120
          %332 = vsyncadd [#allocation10], %s331
          %s333 = sshll.u32 [#allocation11], 4
          %s334 = int_to_ptr.vmem [resolvable:$true] %s333
          %339 = dma.hbm_to_vmem [thread:$0]  %s6, 5120, %s334, [#allocation10], 320, 320, 20
        $region36: #{tpu_custom_call.1} parent=11 // pred_fallthru
          _
        // Predicated region
        $region37: #{tpu_custom_call.1} parent=11 // pred_check
          %p340 = pneg %p199
        $region38: #{tpu_custom_call.1} parent=11 // pred_check_branch
          %342 = sbr.rel (%p340) target = $region40
        $region39: #{tpu_custom_call.1} parent=11 // pred_region
          %s344 = ssub.s32 1024, 1024
          %345 = vsyncadd [#allocation13], %s344
          %s346 = sshll.u32 [#allocation12], 4
          %s347 = int_to_ptr.vmem [resolvable:$true] %s346
          %352 = dma.hbm_to_vmem [thread:$0]  %s7, 1024, %s347, [#allocation13], 64, 64, 4
        $region40: #{tpu_custom_call.1} parent=11 // pred_fallthru
          _
        // Predicated region
        $region41: #{tpu_custom_call.1} parent=11 // pred_check
          %p353 = pneg %p220
        $region42: #{tpu_custom_call.1} parent=11 // pred_check_branch
          %355 = sbr.rel (%p353) target = $region44
        $region43: #{tpu_custom_call.1} parent=11 // pred_region
          %s357 = ssub.s32 8192, 8192
          %358 = vsyncadd [#allocation13], %s357
          %s359 = sshll.u32 [#allocation14], 4
          %s360 = int_to_ptr.vmem [resolvable:$true] %s359
          %365 = dma.hbm_to_vmem [thread:$0]  %s8, 8192, %s360, [#allocation13], 512, 512, 32
        $region44: #{tpu_custom_call.1} parent=11 // pred_fallthru
          _
        // Predicated region
        $region45: #{tpu_custom_call.1} parent=11 // pred_check
          %p366 = pneg %p241
        $region46: #{tpu_custom_call.1} parent=11 // pred_check_branch
          %368 = sbr.rel (%p366) target = $region48
        $region47: #{tpu_custom_call.1} parent=11 // pred_region
          %s370 = ssub.s32 4096, 4096
          %371 = vsyncadd [#allocation16], %s370
          %s372 = sshll.u32 [#allocation15], 4
          %s373 = int_to_ptr.vmem [resolvable:$true] %s372
          %378 = dma.hbm_to_vmem [thread:$0]  %s9, 4096, %s373, [#allocation16], 64, 64, 4
        $region48: #{tpu_custom_call.1} parent=11 // pred_fallthru
          _
      $region12: #{tpu_custom_call.1} parent=5 // pred_fallthru
        _
      %p379 = scmp.lt.s32.totalorder %s26, 2
      // Predicated region
      $region49: #{tpu_custom_call.1} parent=5 // pred_check
        %p380 = pneg %p379
      $region50: #{tpu_custom_call.1} parent=5 // pred_check_branch
        %382 = sbr.rel (%p380) target = $region52
      $region51: #{tpu_custom_call.1} parent=5 // pred_region
        // Predicated region
        $region53: #{tpu_custom_call.1} parent=51 // pred_check
          %p383 = pneg %p46
        $region54: #{tpu_custom_call.1} parent=51 // pred_check_branch
          %385 = sbr.rel (%p383) target = $region56
        $region55: #{tpu_custom_call.1} parent=51 // pred_region
          %s386 = sand.u32 %s36, 1
          %s387 = scalar_lea.sflag [#allocation4], %s386
          %s388 = sand.u32 %s36, 1
          %s389 = smul.addr %s388, 256
          %s390 = scalar_lea.vmem [#allocation3], %s389
          %s391 = smul.u32 32, %s26
          %s393 = ssub.s32 4096, 4096
          %394 = vsyncadd %s387, %s393
          %s395 = smul.addr %s391, 128
          %s396 = scalar_lea.hbm %s0, %s395
          %s397 = sshll.u32 %s390, 4
          %s398 = int_to_ptr.vmem [resolvable:$true] %s397
          %403 = dma.hbm_to_vmem [thread:$0]  %s396, 4096, %s398, %s387, 128, 128, 8
        $region56: #{tpu_custom_call.1} parent=51 // pred_fallthru
          _
      $region52: #{tpu_custom_call.1} parent=5 // pred_fallthru
        _
      %p404 = scmp.le.s32.totalorder 1, %s26
      %p405 = scmp.lt.s32.totalorder %s26, 3
      %p406 = pnand %p404, %p405
      %p407 = pneg %p406
      // Predicated region
      $region57: #{tpu_custom_call.1} parent=5 // pred_check
        _
      $region58: #{tpu_custom_call.1} parent=5 // pred_check_branch
        %409 = sbr.rel (%p406) target = $region60
      $region59: #{tpu_custom_call.1} parent=5 // pred_region
        %s410 = ssub.s32 %s26, 1
        %s411 = sand.u32 %s39, 1
        %s412 = scalar_lea.sflag [#allocation4], %s411
        %s413 = sand.u32 %s39, 1
        %s414 = smul.addr %s413, 256
        %s415 = scalar_lea.vmem [#allocation3], %s414
        // Predicated region
        $region61: #{tpu_custom_call.1} parent=59 // pred_check
          %p416 = pneg %p52
        $region62: #{tpu_custom_call.1} parent=59 // pred_check_branch
          %418 = sbr.rel (%p416) target = $region64
        $region63: #{tpu_custom_call.1} parent=59 // pred_region
          %419 = dma.done %s412, 4096
        $region64: #{tpu_custom_call.1} parent=59 // pred_fallthru
          _
        // Predicated region
        $region65: #{tpu_custom_call.1} parent=59 // pred_check
          %p420 = pneg %p115
        $region66: #{tpu_custom_call.1} parent=59 // pred_check_branch
          %422 = sbr.rel (%p420) target = $region68
        $region67: #{tpu_custom_call.1} parent=59 // pred_region
          %423 = dma.done [#allocation7], 2048
        $region68: #{tpu_custom_call.1} parent=59 // pred_fallthru
          _
        // Predicated region
        $region69: #{tpu_custom_call.1} parent=59 // pred_check
          %p424 = pneg %p136
        $region70: #{tpu_custom_call.1} parent=59 // pred_check_branch
          %426 = sbr.rel (%p424) target = $region72
        $region71: #{tpu_custom_call.1} parent=59 // pred_region
          %427 = dma.done [#allocation7], 2048
        $region72: #{tpu_custom_call.1} parent=59 // pred_fallthru
          _
        // Predicated region
        $region73: #{tpu_custom_call.1} parent=59 // pred_check
          %p428 = pneg %p157
        $region74: #{tpu_custom_call.1} parent=59 // pred_check_branch
          %430 = sbr.rel (%p428) target = $region76
        $region75: #{tpu_custom_call.1} parent=59 // pred_region
          %431 = dma.done [#allocation10], 2048
        $region76: #{tpu_custom_call.1} parent=59 // pred_fallthru
          _
        // Predicated region
        $region77: #{tpu_custom_call.1} parent=59 // pred_check
          %p432 = pneg %p178
        $region78: #{tpu_custom_call.1} parent=59 // pred_check_branch
          %434 = sbr.rel (%p432) target = $region80
        $region79: #{tpu_custom_call.1} parent=59 // pred_region
          %435 = dma.done [#allocation10], 5120
        $region80: #{tpu_custom_call.1} parent=59 // pred_fallthru
          _
        // Predicated region
        $region81: #{tpu_custom_call.1} parent=59 // pred_check
          %p436 = pneg %p199
        $region82: #{tpu_custom_call.1} parent=59 // pred_check_branch
          %438 = sbr.rel (%p436) target = $region84
        $region83: #{tpu_custom_call.1} parent=59 // pred_region
          %439 = dma.done [#allocation13], 1024
        $region84: #{tpu_custom_call.1} parent=59 // pred_fallthru
          _
        // Predicated region
        $region85: #{tpu_custom_call.1} parent=59 // pred_check
          %p440 = pneg %p220
        $region86: #{tpu_custom_call.1} parent=59 // pred_check_branch
          %442 = sbr.rel (%p440) target = $region88
        $region87: #{tpu_custom_call.1} parent=59 // pred_region
          %443 = dma.done [#allocation13], 8192
        $region88: #{tpu_custom_call.1} parent=59 // pred_fallthru
          _
        // Predicated region
        $region89: #{tpu_custom_call.1} parent=59 // pred_check
          %p444 = pneg %p241
        $region90: #{tpu_custom_call.1} parent=59 // pred_check_branch
          %446 = sbr.rel (%p444) target = $region92
        $region91: #{tpu_custom_call.1} parent=59 // pred_region
          %447 = dma.done [#allocation16], 4096
        $region92: #{tpu_custom_call.1} parent=59 // pred_fallthru
          _
        %s448 = sand.u32 %s39, 1
        %s449 = scalar_lea.sflag [#allocation4], %s448
        %s450 = sand.u32 %s39, 1
        %s451 = smul.addr %s450, 256
        %s452 = scalar_lea.vmem [#allocation3], %s451
        %p453 = pneg %p52
        %p454 = pneg %p49
        %p455 = pneg %p73
        %p456 = pneg %p70
        %p457 = pneg %p94
        %p458 = pneg %p91
        %p459 = pneg %p115
        %p460 = pneg %p112
        %p461 = pneg %p136
        %p462 = pneg %p133
        %p463 = pneg %p157
        %p464 = pneg %p154
        %p465 = pneg %p178
        %p466 = pneg %p175
        %p467 = pneg %p199
        %p468 = pneg %p196
        %p469 = pneg %p220
        %p470 = pneg %p217
        %p471 = pneg %p241
        %p472 = pneg %p238
        %p473 = pneg %p267
        %p474 = pneg %p264
        %s475 = sand.u32 %s254, 1
        %s476 = scalar_lea.sflag [#allocation5], %s475
        %s477 = sand.u32 %s254, 1
        %s478 = smul.addr %s477, 256
        %s479 = scalar_lea.vmem [#allocation17], %s478
        %s480 = smul.u32 32, %s31
        %s481 = smul.u32 32, %s31
        %v483 = vld [vmem:[%s415] sm:$0xff]
        %v484 = vld [vmem:[%s415 + $0x8] sm:$0xff]
        %v485 = vld [vmem:[%s415 + $0x10] sm:$0xff]
        %v486 = vld [vmem:[%s415 + $0x18] sm:$0xff]
        %v487 = vld [vmem:[%s415 + $0x20] sm:$0xff]
        %v488 = vld [vmem:[%s415 + $0x28] sm:$0xff]
        %v489 = vld [vmem:[%s415 + $0x30] sm:$0xff]
        %v490 = vld [vmem:[%s415 + $0x38] sm:$0xff]
        %v491 = vld [vmem:[%s415 + $0x40] sm:$0xff]
        %v492 = vld [vmem:[%s415 + $0x48] sm:$0xff]
        %v493 = vld [vmem:[%s415 + $0x50] sm:$0xff]
        %v494 = vld [vmem:[%s415 + $0x58] sm:$0xff]
        %v495 = vld [vmem:[%s415 + $0x60] sm:$0xff]
        %v496 = vld [vmem:[%s415 + $0x68] sm:$0xff]
        %v497 = vld [vmem:[%s415 + $0x70] sm:$0xff]
        %v498 = vld [vmem:[%s415 + $0x78] sm:$0xff]
        %v499 = vld [vmem:[%s415 + $0x80] sm:$0xff]
        %v500 = vld [vmem:[%s415 + $0x88] sm:$0xff]
        %v501 = vld [vmem:[%s415 + $0x90] sm:$0xff]
        %v502 = vld [vmem:[%s415 + $0x98] sm:$0xff]
        %v503 = vld [vmem:[%s415 + $0xa0] sm:$0xff]
        %v504 = vld [vmem:[%s415 + $0xa8] sm:$0xff]
        %v505 = vld [vmem:[%s415 + $0xb0] sm:$0xff]
        %v506 = vld [vmem:[%s415 + $0xb8] sm:$0xff]
        %v507 = vld [vmem:[%s415 + $0xc0] sm:$0xff]
        %v508 = vld [vmem:[%s415 + $0xc8] sm:$0xff]
        %v509 = vld [vmem:[%s415 + $0xd0] sm:$0xff]
        %v510 = vld [vmem:[%s415 + $0xd8] sm:$0xff]
        %v511 = vld [vmem:[%s415 + $0xe0] sm:$0xff]
        %v512 = vld [vmem:[%s415 + $0xe8] sm:$0xff]
        %v513 = vld [vmem:[%s415 + $0xf0] sm:$0xff]
        %v514 = vld [vmem:[%s415 + $0xf8] sm:$0xff]
        %v515 = vmul.f32 %v483, %v483
        %v516 = vmul.f32 %v484, %v484
        %v517 = vmul.f32 %v485, %v485
        %v518 = vmul.f32 %v486, %v486
        %v519 = vmul.f32 %v487, %v487
        %v520 = vmul.f32 %v488, %v488
        %v521 = vmul.f32 %v489, %v489
        %v522 = vmul.f32 %v490, %v490
        %v523 = vmul.f32 %v491, %v491
        %v524 = vmul.f32 %v492, %v492
        %v525 = vmul.f32 %v493, %v493
        %v526 = vmul.f32 %v494, %v494
        %v527 = vmul.f32 %v495, %v495
        %v528 = vmul.f32 %v496, %v496
        %v529 = vmul.f32 %v497, %v497
        %v530 = vmul.f32 %v498, %v498
        %v531 = vmul.f32 %v499, %v499
        %v532 = vmul.f32 %v500, %v500
        %v533 = vmul.f32 %v501, %v501
        %v534 = vmul.f32 %v502, %v502
        %v535 = vmul.f32 %v503, %v503
        %v536 = vmul.f32 %v504, %v504
        %v537 = vmul.f32 %v505, %v505
        %v538 = vmul.f32 %v506, %v506
        %v539 = vmul.f32 %v507, %v507
        %v540 = vmul.f32 %v508, %v508
        %v541 = vmul.f32 %v509, %v509
        %v542 = vmul.f32 %v510, %v510
        %v543 = vmul.f32 %v511, %v511
        %v544 = vmul.f32 %v512, %v512
        %v545 = vmul.f32 %v513, %v513
        %v546 = vmul.f32 %v514, %v514
        %547 = vadd.xlane.f32.xlu0 %v515
        %v548 = vpop.xlane.xlu0 %547
        %549 = vadd.xlane.f32.xlu0 %v516
        %v550 = vpop.xlane.xlu0 %549
        %551 = vadd.xlane.f32.xlu0 %v517
        %v552 = vpop.xlane.xlu0 %551
        %553 = vadd.xlane.f32.xlu0 %v518
        %v554 = vpop.xlane.xlu0 %553
        %555 = vadd.xlane.f32.xlu0 %v519
        %v556 = vpop.xlane.xlu0 %555
        %557 = vadd.xlane.f32.xlu0 %v520
        %v558 = vpop.xlane.xlu0 %557
        %559 = vadd.xlane.f32.xlu0 %v521
        %v560 = vpop.xlane.xlu0 %559
        %561 = vadd.xlane.f32.xlu0 %v522
        %v562 = vpop.xlane.xlu0 %561
        %563 = vadd.xlane.f32.xlu0 %v523
        %v564 = vpop.xlane.xlu0 %563
        %565 = vadd.xlane.f32.xlu0 %v524
        %v566 = vpop.xlane.xlu0 %565
        %567 = vadd.xlane.f32.xlu0 %v525
        %v568 = vpop.xlane.xlu0 %567
        %569 = vadd.xlane.f32.xlu0 %v526
        %v570 = vpop.xlane.xlu0 %569
        %571 = vadd.xlane.f32.xlu0 %v527
        %v572 = vpop.xlane.xlu0 %571
        %573 = vadd.xlane.f32.xlu0 %v528
        %v574 = vpop.xlane.xlu0 %573
        %575 = vadd.xlane.f32.xlu0 %v529
        %v576 = vpop.xlane.xlu0 %575
        %577 = vadd.xlane.f32.xlu0 %v530
        %v578 = vpop.xlane.xlu0 %577
        %579 = vadd.xlane.f32.xlu0 %v531
        %v580 = vpop.xlane.xlu0 %579
        %581 = vadd.xlane.f32.xlu0 %v532
        %v582 = vpop.xlane.xlu0 %581
        %583 = vadd.xlane.f32.xlu0 %v533
        %v584 = vpop.xlane.xlu0 %583
        %585 = vadd.xlane.f32.xlu0 %v534
        %v586 = vpop.xlane.xlu0 %585
        %587 = vadd.xlane.f32.xlu0 %v535
        %v588 = vpop.xlane.xlu0 %587
        %589 = vadd.xlane.f32.xlu0 %v536
        %v590 = vpop.xlane.xlu0 %589
        %591 = vadd.xlane.f32.xlu0 %v537
        %v592 = vpop.xlane.xlu0 %591
        %593 = vadd.xlane.f32.xlu0 %v538
        %v594 = vpop.xlane.xlu0 %593
        %595 = vadd.xlane.f32.xlu0 %v539
        %v596 = vpop.xlane.xlu0 %595
        %597 = vadd.xlane.f32.xlu0 %v540
        %v598 = vpop.xlane.xlu0 %597
        %599 = vadd.xlane.f32.xlu0 %v541
        %v600 = vpop.xlane.xlu0 %599
        %601 = vadd.xlane.f32.xlu0 %v542
        %v602 = vpop.xlane.xlu0 %601
        %603 = vadd.xlane.f32.xlu0 %v543
        %v604 = vpop.xlane.xlu0 %603
        %605 = vadd.xlane.f32.xlu0 %v544
        %v606 = vpop.xlane.xlu0 %605
        %607 = vadd.xlane.f32.xlu0 %v545
        %v608 = vpop.xlane.xlu0 %607
        %609 = vadd.xlane.f32.xlu0 %v546
        %v610 = vpop.xlane.xlu0 %609
        %v611 = vrcp.pop 128.0
        %v612 = vmul.f32 %v548, %v611
        %v613 = vmul.f32 %v550, %v611
        %v614 = vmul.f32 %v552, %v611
        %v615 = vmul.f32 %v554, %v611
        %v616 = vmul.f32 %v556, %v611
        %v617 = vmul.f32 %v558, %v611
        %v618 = vmul.f32 %v560, %v611
        %v619 = vmul.f32 %v562, %v611
        %v620 = vmul.f32 %v564, %v611
        %v621 = vmul.f32 %v566, %v611
        %v622 = vmul.f32 %v568, %v611
        %v623 = vmul.f32 %v570, %v611
        %v624 = vmul.f32 %v572, %v611
        %v625 = vmul.f32 %v574, %v611
        %v626 = vmul.f32 %v576, %v611
        %v627 = vmul.f32 %v578, %v611
        %v628 = vmul.f32 %v580, %v611
        %v629 = vmul.f32 %v582, %v611
        %v630 = vmul.f32 %v584, %v611
        %v631 = vmul.f32 %v586, %v611
        %v632 = vmul.f32 %v588, %v611
        %v633 = vmul.f32 %v590, %v611
        %v634 = vmul.f32 %v592, %v611
        %v635 = vmul.f32 %v594, %v611
        %v636 = vmul.f32 %v596, %v611
        %v637 = vmul.f32 %v598, %v611
        %v638 = vmul.f32 %v600, %v611
        %v639 = vmul.f32 %v602, %v611
        %v640 = vmul.f32 %v604, %v611
        %v641 = vmul.f32 %v606, %v611
        %v642 = vmul.f32 %v608, %v611
        %v643 = vmul.f32 %v610, %v611
        %v644 = vadd.f32 %v612, 1e-08
        %v645 = vadd.f32 %v613, 1e-08
        %v646 = vadd.f32 %v614, 1e-08
        %v647 = vadd.f32 %v615, 1e-08
        %v648 = vadd.f32 %v616, 1e-08
        %v649 = vadd.f32 %v617, 1e-08
        %v650 = vadd.f32 %v618, 1e-08
        %v651 = vadd.f32 %v619, 1e-08
        %v652 = vadd.f32 %v620, 1e-08
        %v653 = vadd.f32 %v621, 1e-08
        %v654 = vadd.f32 %v622, 1e-08
        %v655 = vadd.f32 %v623, 1e-08
        %v656 = vadd.f32 %v624, 1e-08
        %v657 = vadd.f32 %v625, 1e-08
        %v658 = vadd.f32 %v626, 1e-08
        %v659 = vadd.f32 %v627, 1e-08
        %v660 = vadd.f32 %v628, 1e-08
        %v661 = vadd.f32 %v629, 1e-08
        %v662 = vadd.f32 %v630, 1e-08
        %v663 = vadd.f32 %v631, 1e-08
        %v664 = vadd.f32 %v632, 1e-08
        %v665 = vadd.f32 %v633, 1e-08
        %v666 = vadd.f32 %v634, 1e-08
        %v667 = vadd.f32 %v635, 1e-08
        %v668 = vadd.f32 %v636, 1e-08
        %v669 = vadd.f32 %v637, 1e-08
        %v670 = vadd.f32 %v638, 1e-08
        %v671 = vadd.f32 %v639, 1e-08
        %v672 = vadd.f32 %v640, 1e-08
        %v673 = vadd.f32 %v641, 1e-08
        %v674 = vadd.f32 %v642, 1e-08
        %v675 = vadd.f32 %v643, 1e-08
        %v676 = vrsqrt.pop %v644
        %v677 = vrsqrt.pop %v645
        %v678 = vrsqrt.pop %v646
        %v679 = vrsqrt.pop %v647
        %v680 = vrsqrt.pop %v648
        %v681 = vrsqrt.pop %v649
        %v682 = vrsqrt.pop %v650
        %v683 = vrsqrt.pop %v651
        %v684 = vrsqrt.pop %v652
        %v685 = vrsqrt.pop %v653
        %v686 = vrsqrt.pop %v654
        %v687 = vrsqrt.pop %v655
        %v688 = vrsqrt.pop %v656
        %v689 = vrsqrt.pop %v657
        %v690 = vrsqrt.pop %v658
        %v691 = vrsqrt.pop %v659
        %v692 = vrsqrt.pop %v660
        %v693 = vrsqrt.pop %v661
        %v694 = vrsqrt.pop %v662
        %v695 = vrsqrt.pop %v663
        %v696 = vrsqrt.pop %v664
        %v697 = vrsqrt.pop %v665
        %v698 = vrsqrt.pop %v666
        %v699 = vrsqrt.pop %v667
        %v700 = vrsqrt.pop %v668
        %v701 = vrsqrt.pop %v669
        %v702 = vrsqrt.pop %v670
        %v703 = vrsqrt.pop %v671
        %v704 = vrsqrt.pop %v672
        %v705 = vrsqrt.pop %v673
        %v706 = vrsqrt.pop %v674
        %v707 = vrsqrt.pop %v675
        %v708 = vmul.f32 %v483, %v676
        %v709 = vmul.f32 %v484, %v677
        %v710 = vmul.f32 %v485, %v678
        %v711 = vmul.f32 %v486, %v679
        %v712 = vmul.f32 %v487, %v680
        %v713 = vmul.f32 %v488, %v681
        %v714 = vmul.f32 %v489, %v682
        %v715 = vmul.f32 %v490, %v683
        %v716 = vmul.f32 %v491, %v684
        %v717 = vmul.f32 %v492, %v685
        %v718 = vmul.f32 %v493, %v686
        %v719 = vmul.f32 %v494, %v687
        %v720 = vmul.f32 %v495, %v688
        %v721 = vmul.f32 %v496, %v689
        %v722 = vmul.f32 %v497, %v690
        %v723 = vmul.f32 %v498, %v691
        %v724 = vmul.f32 %v499, %v692
        %v725 = vmul.f32 %v500, %v693
        %v726 = vmul.f32 %v501, %v694
        %v727 = vmul.f32 %v502, %v695
        %v728 = vmul.f32 %v503, %v696
        %v729 = vmul.f32 %v504, %v697
        %v730 = vmul.f32 %v505, %v698
        %v731 = vmul.f32 %v506, %v699
        %v732 = vmul.f32 %v507, %v700
        %v733 = vmul.f32 %v508, %v701
        %v734 = vmul.f32 %v509, %v702
        %v735 = vmul.f32 %v510, %v703
        %v736 = vmul.f32 %v511, %v704
        %v737 = vmul.f32 %v512, %v705
        %v738 = vmul.f32 %v513, %v706
        %v739 = vmul.f32 %v514, %v707
        %v740 = vld [vmem:[%s1] sm:$0x1]
        %v742 = vlaneseq
        %v743 = vshrl.u32 %v742, 7
        %v744 = vsub.s32 0, %v743
        %v745 = vrot.slane %v740, %v744
        %v747 = vmul.f32 %v708, %v745
        %v748 = vmul.f32 %v709, %v745
        %v749 = vmul.f32 %v710, %v745
        %v750 = vmul.f32 %v711, %v745
        %v751 = vmul.f32 %v712, %v745
        %v752 = vmul.f32 %v713, %v745
        %v753 = vmul.f32 %v714, %v745
        %v754 = vmul.f32 %v715, %v745
        %v755 = vmul.f32 %v716, %v745
        %v756 = vmul.f32 %v717, %v745
        %v757 = vmul.f32 %v718, %v745
        %v758 = vmul.f32 %v719, %v745
        %v759 = vmul.f32 %v720, %v745
        %v760 = vmul.f32 %v721, %v745
        %v761 = vmul.f32 %v722, %v745
        %v762 = vmul.f32 %v723, %v745
        %v763 = vmul.f32 %v724, %v745
        %v764 = vmul.f32 %v725, %v745
        %v765 = vmul.f32 %v726, %v745
        %v766 = vmul.f32 %v727, %v745
        %v767 = vmul.f32 %v728, %v745
        %v768 = vmul.f32 %v729, %v745
        %v769 = vmul.f32 %v730, %v745
        %v770 = vmul.f32 %v731, %v745
        %v771 = vmul.f32 %v732, %v745
        %v772 = vmul.f32 %v733, %v745
        %v773 = vmul.f32 %v734, %v745
        %v774 = vmul.f32 %v735, %v745
        %v775 = vmul.f32 %v736, %v745
        %v776 = vmul.f32 %v737, %v745
        %v777 = vmul.f32 %v738, %v745
        %v778 = vmul.f32 %v739, %v745
        %v779 = vpack.c.bf16 %v748, %v747
        %v780 = vpack.c.bf16 %v750, %v749
        %v781 = vpack.c.bf16 %v752, %v751
        %v782 = vpack.c.bf16 %v754, %v753
        %v783 = vpack.c.bf16 %v756, %v755
        %v784 = vpack.c.bf16 %v758, %v757
        %v785 = vpack.c.bf16 %v760, %v759
        %v786 = vpack.c.bf16 %v762, %v761
        %v787 = vpack.c.bf16 %v764, %v763
        %v788 = vpack.c.bf16 %v766, %v765
        %v789 = vpack.c.bf16 %v768, %v767
        %v790 = vpack.c.bf16 %v770, %v769
        %v791 = vpack.c.bf16 %v772, %v771
        %v792 = vpack.c.bf16 %v774, %v773
        %v793 = vpack.c.bf16 %v776, %v775
        %v794 = vpack.c.bf16 %v778, %v777
        %v795 = vld [vmem:[#allocation11] sm:$0xff]
        %v796 = vld [vmem:[#allocation11 + $0x8] sm:$0xff]
        %v797 = vld [vmem:[#allocation11 + $0x10] sm:$0xf]
        %v798 = vld [vmem:[#allocation11 + $0x14] sm:$0xff]
        %v799 = vld [vmem:[#allocation11 + $0x1c] sm:$0xff]
        %v800 = vld [vmem:[#allocation11 + $0x24] sm:$0xf]
        %v801 = vld [vmem:[#allocation11 + $0x28] sm:$0xff]
        %v802 = vld [vmem:[#allocation11 + $0x30] sm:$0xff]
        %v803 = vld [vmem:[#allocation11 + $0x38] sm:$0xf]
        %v804 = vld [vmem:[#allocation11 + $0x3c] sm:$0xff]
        %v805 = vld [vmem:[#allocation11 + $0x44] sm:$0xff]
        %v806 = vld [vmem:[#allocation11 + $0x4c] sm:$0xf]
        %v807 = vld [vmem:[#allocation11 + $0x50] sm:$0xff]
        %v808 = vld [vmem:[#allocation11 + $0x58] sm:$0xff]
        %v809 = vld [vmem:[#allocation11 + $0x60] sm:$0xf]
        %v810 = vld [vmem:[#allocation11 + $0x64] sm:$0xff]
        %v811 = vld [vmem:[#allocation11 + $0x6c] sm:$0xff]
        %v812 = vld [vmem:[#allocation11 + $0x74] sm:$0xf]
        %v813 = vld [vmem:[#allocation11 + $0x78] sm:$0xff]
        %v814 = vld [vmem:[#allocation11 + $0x80] sm:$0xff]
        %v815 = vld [vmem:[#allocation11 + $0x88] sm:$0xf]
        %v816 = vld [vmem:[#allocation11 + $0x8c] sm:$0xff]
        %v817 = vld [vmem:[#allocation11 + $0x94] sm:$0xff]
        %v818 = vld [vmem:[#allocation11 + $0x9c] sm:$0xf]
        %v819 = vld [vmem:[#allocation11 + $0xa0] sm:$0xff]
        %v820 = vld [vmem:[#allocation11 + $0xa8] sm:$0xff]
        %v821 = vld [vmem:[#allocation11 + $0xb0] sm:$0xf]
        %v822 = vld [vmem:[#allocation11 + $0xb4] sm:$0xff]
        %v823 = vld [vmem:[#allocation11 + $0xbc] sm:$0xff]
        %v824 = vld [vmem:[#allocation11 + $0xc4] sm:$0xf]
        %v825 = vld [vmem:[#allocation11 + $0xc8] sm:$0xff]
        %v826 = vld [vmem:[#allocation11 + $0xd0] sm:$0xff]
        %v827 = vld [vmem:[#allocation11 + $0xd8] sm:$0xf]
        %v828 = vld [vmem:[#allocation11 + $0xdc] sm:$0xff]
        %v829 = vld [vmem:[#allocation11 + $0xe4] sm:$0xff]
        %v830 = vld [vmem:[#allocation11 + $0xec] sm:$0xf]
        %v831 = vld [vmem:[#allocation11 + $0xf0] sm:$0xff]
        %v832 = vld [vmem:[#allocation11 + $0xf8] sm:$0xff]
        %v833 = vld [vmem:[#allocation11 + $0x100] sm:$0xf]
        %v834 = vld [vmem:[#allocation11 + $0x104] sm:$0xff]
        %v835 = vld [vmem:[#allocation11 + $0x10c] sm:$0xff]
        %v836 = vld [vmem:[#allocation11 + $0x114] sm:$0xf]
        %v837 = vld [vmem:[#allocation11 + $0x118] sm:$0xff]
        %v838 = vld [vmem:[#allocation11 + $0x120] sm:$0xff]
        %v839 = vld [vmem:[#allocation11 + $0x128] sm:$0xf]
        %v840 = vld [vmem:[#allocation11 + $0x12c] sm:$0xff]
        %v841 = vld [vmem:[#allocation11 + $0x134] sm:$0xff]
        %v842 = vld [vmem:[#allocation11 + $0x13c] sm:$0xf]
        %v891 = vunpack.c.l.b16 %v795
        %v892 = vunpack.c.h.b16 %v795
        %v893 = vunpack.c.l.b16 %v796
        %v894 = vunpack.c.h.b16 %v796
        %v895 = vunpack.c.l.b16 %v797
        %v896 = vunpack.c.l.b16 %v798
        %v897 = vunpack.c.h.b16 %v798
        %v898 = vunpack.c.l.b16 %v799
        %v899 = vunpack.c.h.b16 %v799
        %v900 = vunpack.c.l.b16 %v800
        %v901 = vunpack.c.l.b16 %v801
        %v902 = vunpack.c.h.b16 %v801
        %v903 = vunpack.c.l.b16 %v802
        %v904 = vunpack.c.h.b16 %v802
        %v905 = vunpack.c.l.b16 %v803
        %v906 = vunpack.c.l.b16 %v804
        %v907 = vunpack.c.h.b16 %v804
        %v908 = vunpack.c.l.b16 %v805
        %v909 = vunpack.c.h.b16 %v805
        %v910 = vunpack.c.l.b16 %v806
        %v911 = vunpack.c.l.b16 %v807
        %v912 = vunpack.c.h.b16 %v807
        %v913 = vunpack.c.l.b16 %v808
        %v914 = vunpack.c.h.b16 %v808
        %v915 = vunpack.c.l.b16 %v809
        %v916 = vunpack.c.l.b16 %v810
        %v917 = vunpack.c.h.b16 %v810
        %v918 = vunpack.c.l.b16 %v811
        %v919 = vunpack.c.h.b16 %v811
        %v920 = vunpack.c.l.b16 %v812
        %v921 = vunpack.c.l.b16 %v813
        %v922 = vunpack.c.h.b16 %v813
        %v923 = vunpack.c.l.b16 %v814
        %v924 = vunpack.c.h.b16 %v814
        %v925 = vunpack.c.l.b16 %v815
        %v926 = vunpack.c.l.b16 %v816
        %v927 = vunpack.c.h.b16 %v816
        %v928 = vunpack.c.l.b16 %v817
        %v929 = vunpack.c.h.b16 %v817
        %v930 = vunpack.c.l.b16 %v818
        %v931 = vunpack.c.l.b16 %v819
        %v932 = vunpack.c.h.b16 %v819
        %v933 = vunpack.c.l.b16 %v820
        %v934 = vunpack.c.h.b16 %v820
        %v935 = vunpack.c.l.b16 %v821
        %v936 = vunpack.c.l.b16 %v822
        %v937 = vunpack.c.h.b16 %v822
        %v938 = vunpack.c.l.b16 %v823
        %v939 = vunpack.c.h.b16 %v823
        %v940 = vunpack.c.l.b16 %v824
        %v941 = vunpack.c.l.b16 %v825
        %v942 = vunpack.c.h.b16 %v825
        %v943 = vunpack.c.l.b16 %v826
        %v944 = vunpack.c.h.b16 %v826
        %v945 = vunpack.c.l.b16 %v827
        %v946 = vunpack.c.l.b16 %v828
        %v947 = vunpack.c.h.b16 %v828
        %v948 = vunpack.c.l.b16 %v829
        %v949 = vunpack.c.h.b16 %v829
        %v950 = vunpack.c.l.b16 %v830
        %v951 = vunpack.c.l.b16 %v831
        %v952 = vunpack.c.h.b16 %v831
        %v953 = vunpack.c.l.b16 %v832
        %v954 = vunpack.c.h.b16 %v832
        %v955 = vunpack.c.l.b16 %v833
        %v956 = vunpack.c.l.b16 %v834
        %v957 = vunpack.c.h.b16 %v834
        %v958 = vunpack.c.l.b16 %v835
        %v959 = vunpack.c.h.b16 %v835
        %v960 = vunpack.c.l.b16 %v836
        %v961 = vunpack.c.l.b16 %v837
        %v962 = vunpack.c.h.b16 %v837
        %v963 = vunpack.c.l.b16 %v838
        %v964 = vunpack.c.h.b16 %v838
        %v965 = vunpack.c.l.b16 %v839
        %v966 = vunpack.c.l.b16 %v840
        %v967 = vunpack.c.h.b16 %v840
        %v968 = vunpack.c.l.b16 %v841
        %v969 = vunpack.c.h.b16 %v841
        %v970 = vunpack.c.l.b16 %v842
        %v971 = vpack.c.b16 %v896, %v891
        %v972 = vpack.c.b16 %v897, %v892
        %v973 = vpack.c.b16 %v898, %v893
        %v974 = vpack.c.b16 %v899, %v894
        %v975 = vpack.c.b16 %v900, %v895
        %v976 = vpack.c.b16 %v906, %v901
        %v977 = vpack.c.b16 %v907, %v902
        %v978 = vpack.c.b16 %v908, %v903
        %v979 = vpack.c.b16 %v909, %v904
        %v980 = vpack.c.b16 %v910, %v905
        %v981 = vpack.c.b16 %v916, %v911
        %v982 = vpack.c.b16 %v917, %v912
        %v983 = vpack.c.b16 %v918, %v913
        %v984 = vpack.c.b16 %v919, %v914
        %v985 = vpack.c.b16 %v920, %v915
        %v986 = vpack.c.b16 %v926, %v921
        %v987 = vpack.c.b16 %v927, %v922
        %v988 = vpack.c.b16 %v928, %v923
        %v989 = vpack.c.b16 %v929, %v924
        %v990 = vpack.c.b16 %v930, %v925
        %v991 = vpack.c.b16 %v936, %v931
        %v992 = vpack.c.b16 %v937, %v932
        %v993 = vpack.c.b16 %v938, %v933
        %v994 = vpack.c.b16 %v939, %v934
        %v995 = vpack.c.b16 %v940, %v935
        %v996 = vpack.c.b16 %v946, %v941
        %v997 = vpack.c.b16 %v947, %v942
        %v998 = vpack.c.b16 %v948, %v943
        %v999 = vpack.c.b16 %v949, %v944
        %v1000 = vpack.c.b16 %v950, %v945
        %v1001 = vpack.c.b16 %v956, %v951
        %v1002 = vpack.c.b16 %v957, %v952
        %v1003 = vpack.c.b16 %v958, %v953
        %v1004 = vpack.c.b16 %v959, %v954
        %v1005 = vpack.c.b16 %v960, %v955
        %v1006 = vpack.c.b16 %v966, %v961
        %v1007 = vpack.c.b16 %v967, %v962
        %v1008 = vpack.c.b16 %v968, %v963
        %v1009 = vpack.c.b16 %v969, %v964
        %v1010 = vpack.c.b16 %v970, %v965
        %1051 = vmatprep.subr.bf16.mxu0 %v1007
        %1052 = vmatpush1.bf16.msra.mxu0 %v1006
        %1053 = vmatprep.subr.bf16.mxu0 %v1002
        %1054 = vmatpush1.bf16.msra.mxu0 %v1001
        %1055 = vmatprep.subr.bf16.mxu0 %v997
        %1056 = vmatpush1.bf16.msra.mxu0 %v996
        %1057 = vmatprep.subr.bf16.mxu0 %v992
        %1058 = vmatpush1.bf16.msra.mxu0 %v991
        %1059 = vmatprep.subr.bf16.mxu0 %v987
        %1060 = vmatpush1.bf16.msra.mxu0 %v986
        %1061 = vmatprep.subr.bf16.mxu0 %v982
        %1062 = vmatpush1.bf16.msra.mxu0 %v981
        %1063 = vmatprep.subr.bf16.mxu0 %v977
        %1064 = vmatpush1.bf16.msra.mxu0 %v976
        %1065 = vmatprep.subr.bf16.mxu0 %v972
        %1066 = vmatpush1.bf16.msra.mxu0 %v971
        %1067 = vmatprep.subr.bf16.mxu0 0
        %1068 = vmatpush2.bf16.msra.mxu0 0
        %1069 = vmatprep.subr.bf16.mxu0 0
        %1070 = vmatpush2.bf16.msra.mxu0 0
        %1071 = vmatprep.subr.bf16.mxu0 0
        %1072 = vmatpush2.bf16.msra.mxu0 0
        %1073 = vmatprep.subr.bf16.mxu0 0
        %1074 = vmatpush2.bf16.msra.mxu0 0
        %1075 = vmatprep.subr.bf16.mxu0 0
        %1076 = vmatpush2.bf16.msra.mxu0 0
        %1077 = vmatprep.subr.bf16.mxu0 0
        %1078 = vmatpush2.bf16.msra.mxu0 0
        %1079 = vmatprep.subr.bf16.mxu0 0
        %1080 = vmatpush2.bf16.msra.mxu0 0
        %1081 = vmatprep.subr.bf16.mxu0 0
        %1082 = vmatpush2.bf16.msra.mxu0 0
        %1083 = vmatprep.mubr.bf16.mxu0 0
        %1084 = vmatmul.mubr.bf16.gmra.mxu0 %v779
        %v1085 = vpop.f32.mrf.mxu0
        %v1086 = vadd.f32 0.0, %v1085
        %v1087 = vpop.f32.mrf.mxu0
        %v1088 = vadd.f32 0.0, %v1087
        %v1089 = vpop.f32.mrf.mxu0
        %v1090 = vadd.f32 0.0, %v1089
        %v1091 = vpop.f32.mrf.mxu0
        %v1092 = vadd.f32 0.0, %v1091
        %1093 = vmatprep.mubr.bf16.mxu0 0
        %1094 = vmatmul.mubr.bf16.gmra.mxu0 %v780
        %v1095 = vpop.f32.mrf.mxu0
        %v1096 = vadd.f32 0.0, %v1095
        %v1097 = vpop.f32.mrf.mxu0
        %v1098 = vadd.f32 0.0, %v1097
        %v1099 = vpop.f32.mrf.mxu0
        %v1100 = vadd.f32 0.0, %v1099
        %v1101 = vpop.f32.mrf.mxu0
        %v1102 = vadd.f32 0.0, %v1101
        %1103 = vmatprep.mubr.bf16.mxu0 0
        %1104 = vmatmul.mubr.bf16.gmra.mxu0 %v781
        %v1105 = vpop.f32.mrf.mxu0
        %v1106 = vadd.f32 0.0, %v1105
        %v1107 = vpop.f32.mrf.mxu0
        %v1108 = vadd.f32 0.0, %v1107
        %v1109 = vpop.f32.mrf.mxu0
        %v1110 = vadd.f32 0.0, %v1109
        %v1111 = vpop.f32.mrf.mxu0
        %v1112 = vadd.f32 0.0, %v1111
        %1113 = vmatprep.mubr.bf16.mxu0 0
        %1114 = vmatmul.mubr.bf16.gmra.mxu0 %v782
        %v1115 = vpop.f32.mrf.mxu0
        %v1116 = vadd.f32 0.0, %v1115
        %v1117 = vpop.f32.mrf.mxu0
        %v1118 = vadd.f32 0.0, %v1117
        %v1119 = vpop.f32.mrf.mxu0
        %v1120 = vadd.f32 0.0, %v1119
        %v1121 = vpop.f32.mrf.mxu0
        %v1122 = vadd.f32 0.0, %v1121
        %1123 = vmatprep.mubr.bf16.mxu0 0
        %1124 = vmatmul.mubr.bf16.gmra.mxu0 %v783
        %v1125 = vpop.f32.mrf.mxu0
        %v1126 = vadd.f32 0.0, %v1125
        %v1127 = vpop.f32.mrf.mxu0
        %v1128 = vadd.f32 0.0, %v1127
        %v1129 = vpop.f32.mrf.mxu0
        %v1130 = vadd.f32 0.0, %v1129
        %v1131 = vpop.f32.mrf.mxu0
        %v1132 = vadd.f32 0.0, %v1131
        %1133 = vmatprep.mubr.bf16.mxu0 0
        %1134 = vmatmul.mubr.bf16.gmra.mxu0 %v784
        %v1135 = vpop.f32.mrf.mxu0
        %v1136 = vadd.f32 0.0, %v1135
        %v1137 = vpop.f32.mrf.mxu0
        %v1138 = vadd.f32 0.0, %v1137
        %v1139 = vpop.f32.mrf.mxu0
        %v1140 = vadd.f32 0.0, %v1139
        %v1141 = vpop.f32.mrf.mxu0
        %v1142 = vadd.f32 0.0, %v1141
        %1143 = vmatprep.mubr.bf16.mxu0 0
        %1144 = vmatmul.mubr.bf16.gmra.mxu0 %v785
        %v1145 = vpop.f32.mrf.mxu0
        %v1146 = vadd.f32 0.0, %v1145
        %v1147 = vpop.f32.mrf.mxu0
        %v1148 = vadd.f32 0.0, %v1147
        %v1149 = vpop.f32.mrf.mxu0
        %v1150 = vadd.f32 0.0, %v1149
        %v1151 = vpop.f32.mrf.mxu0
        %v1152 = vadd.f32 0.0, %v1151
        %1153 = vmatprep.mubr.bf16.mxu0 0
        %1154 = vmatmul.mubr.bf16.gmra.mxu0 %v786
        %v1155 = vpop.f32.mrf.mxu0
        %v1156 = vadd.f32 0.0, %v1155
        %v1157 = vpop.f32.mrf.mxu0
        %v1158 = vadd.f32 0.0, %v1157
        %v1159 = vpop.f32.mrf.mxu0
        %v1160 = vadd.f32 0.0, %v1159
        %v1161 = vpop.f32.mrf.mxu0
        %v1162 = vadd.f32 0.0, %v1161
        %1163 = vmatprep.mubr.bf16.mxu0 0
        %1164 = vmatmul.mubr.bf16.gmra.mxu0 %v787
        %v1165 = vpop.f32.mrf.mxu0
        %v1166 = vadd.f32 0.0, %v1165
        %v1167 = vpop.f32.mrf.mxu0
        %v1168 = vadd.f32 0.0, %v1167
        %v1169 = vpop.f32.mrf.mxu0
        %v1170 = vadd.f32 0.0, %v1169
        %v1171 = vpop.f32.mrf.mxu0
        %v1172 = vadd.f32 0.0, %v1171
        %1173 = vmatprep.mubr.bf16.mxu0 0
        %1174 = vmatmul.mubr.bf16.gmra.mxu0 %v788
        %v1175 = vpop.f32.mrf.mxu0
        %v1176 = vadd.f32 0.0, %v1175
        %v1177 = vpop.f32.mrf.mxu0
        %v1178 = vadd.f32 0.0, %v1177
        %v1179 = vpop.f32.mrf.mxu0
        %v1180 = vadd.f32 0.0, %v1179
        %v1181 = vpop.f32.mrf.mxu0
        %v1182 = vadd.f32 0.0, %v1181
        %1183 = vmatprep.mubr.bf16.mxu0 0
        %1184 = vmatmul.mubr.bf16.gmra.mxu0 %v789
        %v1185 = vpop.f32.mrf.mxu0
        %v1186 = vadd.f32 0.0, %v1185
        %v1187 = vpop.f32.mrf.mxu0
        %v1188 = vadd.f32 0.0, %v1187
        %v1189 = vpop.f32.mrf.mxu0
        %v1190 = vadd.f32 0.0, %v1189
        %v1191 = vpop.f32.mrf.mxu0
        %v1192 = vadd.f32 0.0, %v1191
        %1193 = vmatprep.mubr.bf16.mxu0 0
        %1194 = vmatmul.mubr.bf16.gmra.mxu0 %v790
        %v1195 = vpop.f32.mrf.mxu0
        %v1196 = vadd.f32 0.0, %v1195
        %v1197 = vpop.f32.mrf.mxu0
        %v1198 = vadd.f32 0.0, %v1197
        %v1199 = vpop.f32.mrf.mxu0
        %v1200 = vadd.f32 0.0, %v1199
        %v1201 = vpop.f32.mrf.mxu0
        %v1202 = vadd.f32 0.0, %v1201
        %1203 = vmatprep.mubr.bf16.mxu0 0
        %1204 = vmatmul.mubr.bf16.gmra.mxu0 %v791
        %v1205 = vpop.f32.mrf.mxu0
        %v1206 = vadd.f32 0.0, %v1205
        %v1207 = vpop.f32.mrf.mxu0
        %v1208 = vadd.f32 0.0, %v1207
        %v1209 = vpop.f32.mrf.mxu0
        %v1210 = vadd.f32 0.0, %v1209
        %v1211 = vpop.f32.mrf.mxu0
        %v1212 = vadd.f32 0.0, %v1211
        %1213 = vmatprep.mubr.bf16.mxu0 0
        %1214 = vmatmul.mubr.bf16.gmra.mxu0 %v792
        %v1215 = vpop.f32.mrf.mxu0
        %v1216 = vadd.f32 0.0, %v1215
        %v1217 = vpop.f32.mrf.mxu0
        %v1218 = vadd.f32 0.0, %v1217
        %v1219 = vpop.f32.mrf.mxu0
        %v1220 = vadd.f32 0.0, %v1219
        %v1221 = vpop.f32.mrf.mxu0
        %v1222 = vadd.f32 0.0, %v1221
        %1223 = vmatprep.mubr.bf16.mxu0 0
        %1224 = vmatmul.mubr.bf16.gmra.mxu0 %v793
        %v1225 = vpop.f32.mrf.mxu0
        %v1226 = vadd.f32 0.0, %v1225
        %v1227 = vpop.f32.mrf.mxu0
        %v1228 = vadd.f32 0.0, %v1227
        %v1229 = vpop.f32.mrf.mxu0
        %v1230 = vadd.f32 0.0, %v1229
        %v1231 = vpop.f32.mrf.mxu0
        %v1232 = vadd.f32 0.0, %v1231
        %1233 = vmatprep.mubr.bf16.mxu0 0
        %1234 = vmatmul.mubr.bf16.gmra.mxu0 %v794
        %v1235 = vpop.f32.mrf.mxu0
        %v1236 = vadd.f32 0.0, %v1235
        %v1237 = vpop.f32.mrf.mxu0
        %v1238 = vadd.f32 0.0, %v1237
        %v1239 = vpop.f32.mrf.mxu0
        %v1240 = vadd.f32 0.0, %v1239
        %v1241 = vpop.f32.mrf.mxu0
        %v1242 = vadd.f32 0.0, %v1241
        %1243 = vdwg.mxu0
        %1244 = vmatprep.subr.bf16.mxu0 %v1009
        %1245 = vmatpush1.bf16.msra.mxu0 %v1008
        %1246 = vmatprep.subr.bf16.mxu0 %v1004
        %1247 = vmatpush1.bf16.msra.mxu0 %v1003
        %1248 = vmatprep.subr.bf16.mxu0 %v999
        %1249 = vmatpush1.bf16.msra.mxu0 %v998
        %1250 = vmatprep.subr.bf16.mxu0 %v994
        %1251 = vmatpush1.bf16.msra.mxu0 %v993
        %1252 = vmatprep.subr.bf16.mxu0 %v989
        %1253 = vmatpush1.bf16.msra.mxu0 %v988
        %1254 = vmatprep.subr.bf16.mxu0 %v984
        %1255 = vmatpush1.bf16.msra.mxu0 %v983
        %1256 = vmatprep.subr.bf16.mxu0 %v979
        %1257 = vmatpush1.bf16.msra.mxu0 %v978
        %1258 = vmatprep.subr.bf16.mxu0 %v974
        %1259 = vmatpush1.bf16.msra.mxu0 %v973
        %1260 = vmatprep.subr.bf16.mxu0 0
        %1261 = vmatpush2.bf16.msra.mxu0 0
        %1262 = vmatprep.subr.bf16.mxu0 0
        %1263 = vmatpush2.bf16.msra.mxu0 0
        %1264 = vmatprep.subr.bf16.mxu0 0
        %1265 = vmatpush2.bf16.msra.mxu0 0
        %1266 = vmatprep.subr.bf16.mxu0 0
        %1267 = vmatpush2.bf16.msra.mxu0 0
        %1268 = vmatprep.subr.bf16.mxu0 0
        %1269 = vmatpush2.bf16.msra.mxu0 0
        %1270 = vmatprep.subr.bf16.mxu0 0
        %1271 = vmatpush2.bf16.msra.mxu0 0
        %1272 = vmatprep.subr.bf16.mxu0 0
        %1273 = vmatpush2.bf16.msra.mxu0 0
        %1274 = vmatprep.subr.bf16.mxu0 0
        %1275 = vmatpush2.bf16.msra.mxu0 0
        %1276 = vmatprep.mubr.bf16.mxu0 0
        %1277 = vmatmul.mubr.bf16.gmra.mxu0 %v779
        %v1278 = vpop.f32.mrf.mxu0
        %v1279 = vadd.f32 0.0, %v1278
        %v1280 = vpop.f32.mrf.mxu0
        %v1281 = vadd.f32 0.0, %v1280
        %v1282 = vpop.f32.mrf.mxu0
        %v1283 = vadd.f32 0.0, %v1282
        %v1284 = vpop.f32.mrf.mxu0
        %v1285 = vadd.f32 0.0, %v1284
        %1286 = vmatprep.mubr.bf16.mxu0 0
        %1287 = vmatmul.mubr.bf16.gmra.mxu0 %v780
        %v1288 = vpop.f32.mrf.mxu0
        %v1289 = vadd.f32 0.0, %v1288
        %v1290 = vpop.f32.mrf.mxu0
        %v1291 = vadd.f32 0.0, %v1290
        %v1292 = vpop.f32.mrf.mxu0
        %v1293 = vadd.f32 0.0, %v1292
        %v1294 = vpop.f32.mrf.mxu0
        %v1295 = vadd.f32 0.0, %v1294
        %1296 = vmatprep.mubr.bf16.mxu0 0
        %1297 = vmatmul.mubr.bf16.gmra.mxu0 %v781
        %v1298 = vpop.f32.mrf.mxu0
        %v1299 = vadd.f32 0.0, %v1298
        %v1300 = vpop.f32.mrf.mxu0
        %v1301 = vadd.f32 0.0, %v1300
        %v1302 = vpop.f32.mrf.mxu0
        %v1303 = vadd.f32 0.0, %v1302
        %v1304 = vpop.f32.mrf.mxu0
        %v1305 = vadd.f32 0.0, %v1304
        %1306 = vmatprep.mubr.bf16.mxu0 0
        %1307 = vmatmul.mubr.bf16.gmra.mxu0 %v782
        %v1308 = vpop.f32.mrf.mxu0
        %v1309 = vadd.f32 0.0, %v1308
        %v1310 = vpop.f32.mrf.mxu0
        %v1311 = vadd.f32 0.0, %v1310
        %v1312 = vpop.f32.mrf.mxu0
        %v1313 = vadd.f32 0.0, %v1312
        %v1314 = vpop.f32.mrf.mxu0
        %v1315 = vadd.f32 0.0, %v1314
        %1316 = vmatprep.mubr.bf16.mxu0 0
        %1317 = vmatmul.mubr.bf16.gmra.mxu0 %v783
        %v1318 = vpop.f32.mrf.mxu0
        %v1319 = vadd.f32 0.0, %v1318
        %v1320 = vpop.f32.mrf.mxu0
        %v1321 = vadd.f32 0.0, %v1320
        %v1322 = vpop.f32.mrf.mxu0
        %v1323 = vadd.f32 0.0, %v1322
        %v1324 = vpop.f32.mrf.mxu0
        %v1325 = vadd.f32 0.0, %v1324
        %1326 = vmatprep.mubr.bf16.mxu0 0
        %1327 = vmatmul.mubr.bf16.gmra.mxu0 %v784
        %v1328 = vpop.f32.mrf.mxu0
        %v1329 = vadd.f32 0.0, %v1328
        %v1330 = vpop.f32.mrf.mxu0
        %v1331 = vadd.f32 0.0, %v1330
        %v1332 = vpop.f32.mrf.mxu0
        %v1333 = vadd.f32 0.0, %v1332
        %v1334 = vpop.f32.mrf.mxu0
        %v1335 = vadd.f32 0.0, %v1334
        %1336 = vmatprep.mubr.bf16.mxu0 0
        %1337 = vmatmul.mubr.bf16.gmra.mxu0 %v785
        %v1338 = vpop.f32.mrf.mxu0
        %v1339 = vadd.f32 0.0, %v1338
        %v1340 = vpop.f32.mrf.mxu0
        %v1341 = vadd.f32 0.0, %v1340
        %v1342 = vpop.f32.mrf.mxu0
        %v1343 = vadd.f32 0.0, %v1342
        %v1344 = vpop.f32.mrf.mxu0
        %v1345 = vadd.f32 0.0, %v1344
        %1346 = vmatprep.mubr.bf16.mxu0 0
        %1347 = vmatmul.mubr.bf16.gmra.mxu0 %v786
        %v1348 = vpop.f32.mrf.mxu0
        %v1349 = vadd.f32 0.0, %v1348
        %v1350 = vpop.f32.mrf.mxu0
        %v1351 = vadd.f32 0.0, %v1350
        %v1352 = vpop.f32.mrf.mxu0
        %v1353 = vadd.f32 0.0, %v1352
        %v1354 = vpop.f32.mrf.mxu0
        %v1355 = vadd.f32 0.0, %v1354
        %1356 = vmatprep.mubr.bf16.mxu0 0
        %1357 = vmatmul.mubr.bf16.gmra.mxu0 %v787
        %v1358 = vpop.f32.mrf.mxu0
        %v1359 = vadd.f32 0.0, %v1358
        %v1360 = vpop.f32.mrf.mxu0
        %v1361 = vadd.f32 0.0, %v1360
        %v1362 = vpop.f32.mrf.mxu0
        %v1363 = vadd.f32 0.0, %v1362
        %v1364 = vpop.f32.mrf.mxu0
        %v1365 = vadd.f32 0.0, %v1364
        %1366 = vmatprep.mubr.bf16.mxu0 0
        %1367 = vmatmul.mubr.bf16.gmra.mxu0 %v788
        %v1368 = vpop.f32.mrf.mxu0
        %v1369 = vadd.f32 0.0, %v1368
        %v1370 = vpop.f32.mrf.mxu0
        %v1371 = vadd.f32 0.0, %v1370
        %v1372 = vpop.f32.mrf.mxu0
        %v1373 = vadd.f32 0.0, %v1372
        %v1374 = vpop.f32.mrf.mxu0
        %v1375 = vadd.f32 0.0, %v1374
        %1376 = vmatprep.mubr.bf16.mxu0 0
        %1377 = vmatmul.mubr.bf16.gmra.mxu0 %v789
        %v1378 = vpop.f32.mrf.mxu0
        %v1379 = vadd.f32 0.0, %v1378
        %v1380 = vpop.f32.mrf.mxu0
        %v1381 = vadd.f32 0.0, %v1380
        %v1382 = vpop.f32.mrf.mxu0
        %v1383 = vadd.f32 0.0, %v1382
        %v1384 = vpop.f32.mrf.mxu0
        %v1385 = vadd.f32 0.0, %v1384
        %1386 = vmatprep.mubr.bf16.mxu0 0
        %1387 = vmatmul.mubr.bf16.gmra.mxu0 %v790
        %v1388 = vpop.f32.mrf.mxu0
        %v1389 = vadd.f32 0.0, %v1388
        %v1390 = vpop.f32.mrf.mxu0
        %v1391 = vadd.f32 0.0, %v1390
        %v1392 = vpop.f32.mrf.mxu0
        %v1393 = vadd.f32 0.0, %v1392
        %v1394 = vpop.f32.mrf.mxu0
        %v1395 = vadd.f32 0.0, %v1394
        %1396 = vmatprep.mubr.bf16.mxu0 0
        %1397 = vmatmul.mubr.bf16.gmra.mxu0 %v791
        %v1398 = vpop.f32.mrf.mxu0
        %v1399 = vadd.f32 0.0, %v1398
        %v1400 = vpop.f32.mrf.mxu0
        %v1401 = vadd.f32 0.0, %v1400
        %v1402 = vpop.f32.mrf.mxu0
        %v1403 = vadd.f32 0.0, %v1402
        %v1404 = vpop.f32.mrf.mxu0
        %v1405 = vadd.f32 0.0, %v1404
        %1406 = vmatprep.mubr.bf16.mxu0 0
        %1407 = vmatmul.mubr.bf16.gmra.mxu0 %v792
        %v1408 = vpop.f32.mrf.mxu0
        %v1409 = vadd.f32 0.0, %v1408
        %v1410 = vpop.f32.mrf.mxu0
        %v1411 = vadd.f32 0.0, %v1410
        %v1412 = vpop.f32.mrf.mxu0
        %v1413 = vadd.f32 0.0, %v1412
        %v1414 = vpop.f32.mrf.mxu0
        %v1415 = vadd.f32 0.0, %v1414
        %1416 = vmatprep.mubr.bf16.mxu0 0
        %1417 = vmatmul.mubr.bf16.gmra.mxu0 %v793
        %v1418 = vpop.f32.mrf.mxu0
        %v1419 = vadd.f32 0.0, %v1418
        %v1420 = vpop.f32.mrf.mxu0
        %v1421 = vadd.f32 0.0, %v1420
        %v1422 = vpop.f32.mrf.mxu0
        %v1423 = vadd.f32 0.0, %v1422
        %v1424 = vpop.f32.mrf.mxu0
        %v1425 = vadd.f32 0.0, %v1424
        %1426 = vmatprep.mubr.bf16.mxu0 0
        %1427 = vmatmul.mubr.bf16.gmra.mxu0 %v794
        %v1428 = vpop.f32.mrf.mxu0
        %v1429 = vadd.f32 0.0, %v1428
        %v1430 = vpop.f32.mrf.mxu0
        %v1431 = vadd.f32 0.0, %v1430
        %v1432 = vpop.f32.mrf.mxu0
        %v1433 = vadd.f32 0.0, %v1432
        %v1434 = vpop.f32.mrf.mxu0
        %v1435 = vadd.f32 0.0, %v1434
        %1436 = vdwg.mxu0
        %1437 = vmatprep.subr.bf16.mxu0 0
        %1438 = vmatpush1.bf16.msra.mxu0 %v1010
        %1439 = vmatprep.subr.bf16.mxu0 0
        %1440 = vmatpush1.bf16.msra.mxu0 %v1005
        %1441 = vmatprep.subr.bf16.mxu0 0
        %1442 = vmatpush1.bf16.msra.mxu0 %v1000
        %1443 = vmatprep.subr.bf16.mxu0 0
        %1444 = vmatpush1.bf16.msra.mxu0 %v995
        %1445 = vmatprep.subr.bf16.mxu0 0
        %1446 = vmatpush1.bf16.msra.mxu0 %v990
        %1447 = vmatprep.subr.bf16.mxu0 0
        %1448 = vmatpush1.bf16.msra.mxu0 %v985
        %1449 = vmatprep.subr.bf16.mxu0 0
        %1450 = vmatpush1.bf16.msra.mxu0 %v980
        %1451 = vmatprep.subr.bf16.mxu0 0
        %1452 = vmatpush1.bf16.msra.mxu0 %v975
        %1453 = vmatprep.subr.bf16.mxu0 0
        %1454 = vmatpush2.bf16.msra.mxu0 0
        %1455 = vmatprep.subr.bf16.mxu0 0
        %1456 = vmatpush2.bf16.msra.mxu0 0
        %1457 = vmatprep.subr.bf16.mxu0 0
        %1458 = vmatpush2.bf16.msra.mxu0 0
        %1459 = vmatprep.subr.bf16.mxu0 0
        %1460 = vmatpush2.bf16.msra.mxu0 0
        %1461 = vmatprep.subr.bf16.mxu0 0
        %1462 = vmatpush2.bf16.msra.mxu0 0
        %1463 = vmatprep.subr.bf16.mxu0 0
        %1464 = vmatpush2.bf16.msra.mxu0 0
        %1465 = vmatprep.subr.bf16.mxu0 0
        %1466 = vmatpush2.bf16.msra.mxu0 0
        %1467 = vmatprep.subr.bf16.mxu0 0
        %1468 = vmatpush2.bf16.msra.mxu0 0
        %1469 = vmatprep.mubr.bf16.mxu0 0
        %1470 = vmatmul.mubr.bf16.gmra.mxu0 %v779
        %v1471 = vpop.f32.mrf.mxu0
        %v1472 = vadd.f32 0.0, %v1471
        %v1473 = vpop.f32.mrf.mxu0
        %v1474 = vpop.f32.mrf.mxu0
        %v1475 = vadd.f32 0.0, %v1474
        %v1476 = vpop.f32.mrf.mxu0
        %1477 = vmatprep.mubr.bf16.mxu0 0
        %1478 = vmatmul.mubr.bf16.gmra.mxu0 %v780
        %v1479 = vpop.f32.mrf.mxu0
        %v1480 = vadd.f32 0.0, %v1479
        %v1481 = vpop.f32.mrf.mxu0
        %v1482 = vpop.f32.mrf.mxu0
        %v1483 = vadd.f32 0.0, %v1482
        %v1484 = vpop.f32.mrf.mxu0
        %1485 = vmatprep.mubr.bf16.mxu0 0
        %1486 = vmatmul.mubr.bf16.gmra.mxu0 %v781
        %v1487 = vpop.f32.mrf.mxu0
        %v1488 = vadd.f32 0.0, %v1487
        %v1489 = vpop.f32.mrf.mxu0
        %v1490 = vpop.f32.mrf.mxu0
        %v1491 = vadd.f32 0.0, %v1490
        %v1492 = vpop.f32.mrf.mxu0
        %1493 = vmatprep.mubr.bf16.mxu0 0
        %1494 = vmatmul.mubr.bf16.gmra.mxu0 %v782
        %v1495 = vpop.f32.mrf.mxu0
        %v1496 = vadd.f32 0.0, %v1495
        %v1497 = vpop.f32.mrf.mxu0
        %v1498 = vpop.f32.mrf.mxu0
        %v1499 = vadd.f32 0.0, %v1498
        %v1500 = vpop.f32.mrf.mxu0
        %1501 = vmatprep.mubr.bf16.mxu0 0
        %1502 = vmatmul.mubr.bf16.gmra.mxu0 %v783
        %v1503 = vpop.f32.mrf.mxu0
        %v1504 = vadd.f32 0.0, %v1503
        %v1505 = vpop.f32.mrf.mxu0
        %v1506 = vpop.f32.mrf.mxu0
        %v1507 = vadd.f32 0.0, %v1506
        %v1508 = vpop.f32.mrf.mxu0
        %1509 = vmatprep.mubr.bf16.mxu0 0
        %1510 = vmatmul.mubr.bf16.gmra.mxu0 %v784
        %v1511 = vpop.f32.mrf.mxu0
        %v1512 = vadd.f32 0.0, %v1511
        %v1513 = vpop.f32.mrf.mxu0
        %v1514 = vpop.f32.mrf.mxu0
        %v1515 = vadd.f32 0.0, %v1514
        %v1516 = vpop.f32.mrf.mxu0
        %1517 = vmatprep.mubr.bf16.mxu0 0
        %1518 = vmatmul.mubr.bf16.gmra.mxu0 %v785
        %v1519 = vpop.f32.mrf.mxu0
        %v1520 = vadd.f32 0.0, %v1519
        %v1521 = vpop.f32.mrf.mxu0
        %v1522 = vpop.f32.mrf.mxu0
        %v1523 = vadd.f32 0.0, %v1522
        %v1524 = vpop.f32.mrf.mxu0
        %1525 = vmatprep.mubr.bf16.mxu0 0
        %1526 = vmatmul.mubr.bf16.gmra.mxu0 %v786
        %v1527 = vpop.f32.mrf.mxu0
        %v1528 = vadd.f32 0.0, %v1527
        %v1529 = vpop.f32.mrf.mxu0
        %v1530 = vpop.f32.mrf.mxu0
        %v1531 = vadd.f32 0.0, %v1530
        %v1532 = vpop.f32.mrf.mxu0
        %1533 = vmatprep.mubr.bf16.mxu0 0
        %1534 = vmatmul.mubr.bf16.gmra.mxu0 %v787
        %v1535 = vpop.f32.mrf.mxu0
        %v1536 = vadd.f32 0.0, %v1535
        %v1537 = vpop.f32.mrf.mxu0
        %v1538 = vpop.f32.mrf.mxu0
        %v1539 = vadd.f32 0.0, %v1538
        %v1540 = vpop.f32.mrf.mxu0
        %1541 = vmatprep.mubr.bf16.mxu0 0
        %1542 = vmatmul.mubr.bf16.gmra.mxu0 %v788
        %v1543 = vpop.f32.mrf.mxu0
        %v1544 = vadd.f32 0.0, %v1543
        %v1545 = vpop.f32.mrf.mxu0
        %v1546 = vpop.f32.mrf.mxu0
        %v1547 = vadd.f32 0.0, %v1546
        %v1548 = vpop.f32.mrf.mxu0
        %1549 = vmatprep.mubr.bf16.mxu0 0
        %1550 = vmatmul.mubr.bf16.gmra.mxu0 %v789
        %v1551 = vpop.f32.mrf.mxu0
        %v1552 = vadd.f32 0.0, %v1551
        %v1553 = vpop.f32.mrf.mxu0
        %v1554 = vpop.f32.mrf.mxu0
        %v1555 = vadd.f32 0.0, %v1554
        %v1556 = vpop.f32.mrf.mxu0
        %1557 = vmatprep.mubr.bf16.mxu0 0
        %1558 = vmatmul.mubr.bf16.gmra.mxu0 %v790
        %v1559 = vpop.f32.mrf.mxu0
        %v1560 = vadd.f32 0.0, %v1559
        %v1561 = vpop.f32.mrf.mxu0
        %v1562 = vpop.f32.mrf.mxu0
        %v1563 = vadd.f32 0.0, %v1562
        %v1564 = vpop.f32.mrf.mxu0
        %1565 = vmatprep.mubr.bf16.mxu0 0
        %1566 = vmatmul.mubr.bf16.gmra.mxu0 %v791
        %v1567 = vpop.f32.mrf.mxu0
        %v1568 = vadd.f32 0.0, %v1567
        %v1569 = vpop.f32.mrf.mxu0
        %v1570 = vpop.f32.mrf.mxu0
        %v1571 = vadd.f32 0.0, %v1570
        %v1572 = vpop.f32.mrf.mxu0
        %1573 = vmatprep.mubr.bf16.mxu0 0
        %1574 = vmatmul.mubr.bf16.gmra.mxu0 %v792
        %v1575 = vpop.f32.mrf.mxu0
        %v1576 = vadd.f32 0.0, %v1575
        %v1577 = vpop.f32.mrf.mxu0
        %v1578 = vpop.f32.mrf.mxu0
        %v1579 = vadd.f32 0.0, %v1578
        %v1580 = vpop.f32.mrf.mxu0
        %1581 = vmatprep.mubr.bf16.mxu0 0
        %1582 = vmatmul.mubr.bf16.gmra.mxu0 %v793
        %v1583 = vpop.f32.mrf.mxu0
        %v1584 = vadd.f32 0.0, %v1583
        %v1585 = vpop.f32.mrf.mxu0
        %v1586 = vpop.f32.mrf.mxu0
        %v1587 = vadd.f32 0.0, %v1586
        %v1588 = vpop.f32.mrf.mxu0
        %1589 = vmatprep.mubr.bf16.mxu0 0
        %1590 = vmatmul.mubr.bf16.gmra.mxu0 %v794
        %v1591 = vpop.f32.mrf.mxu0
        %v1592 = vadd.f32 0.0, %v1591
        %v1593 = vpop.f32.mrf.mxu0
        %v1594 = vpop.f32.mrf.mxu0
        %v1595 = vadd.f32 0.0, %v1594
        %v1596 = vpop.f32.mrf.mxu0
        %1597 = vdwg.mxu0
        %v1598 = vld [vmem:[#allocation6] sm:$0xff]
        %v1599 = vld [vmem:[#allocation6 + $0x8] sm:$0xff]
        %v1600 = vld [vmem:[#allocation6 + $0x10] sm:$0xff]
        %v1601 = vld [vmem:[#allocation6 + $0x18] sm:$0xff]
        %v1602 = vld [vmem:[#allocation6 + $0x20] sm:$0xff]
        %v1603 = vld [vmem:[#allocation6 + $0x28] sm:$0xff]
        %v1604 = vld [vmem:[#allocation6 + $0x30] sm:$0xff]
        %v1605 = vld [vmem:[#allocation6 + $0x38] sm:$0xff]
        %v1606 = vld [vmem:[#allocation6 + $0x40] sm:$0xff]
        %v1607 = vld [vmem:[#allocation6 + $0x48] sm:$0xff]
        %v1608 = vld [vmem:[#allocation6 + $0x50] sm:$0xff]
        %v1609 = vld [vmem:[#allocation6 + $0x58] sm:$0xff]
        %v1610 = vld [vmem:[#allocation6 + $0x60] sm:$0xff]
        %v1611 = vld [vmem:[#allocation6 + $0x68] sm:$0xff]
        %v1612 = vld [vmem:[#allocation6 + $0x70] sm:$0xff]
        %v1613 = vld [vmem:[#allocation6 + $0x78] sm:$0xff]
        %v1614 = vld [vmem:[#allocation8] sm:$0xff]
        %v1615 = vld [vmem:[#allocation8 + $0x8] sm:$0xff]
        %v1616 = vld [vmem:[#allocation8 + $0x10] sm:$0xff]
        %v1617 = vld [vmem:[#allocation8 + $0x18] sm:$0xff]
        %v1618 = vld [vmem:[#allocation8 + $0x20] sm:$0xff]
        %v1619 = vld [vmem:[#allocation8 + $0x28] sm:$0xff]
        %v1620 = vld [vmem:[#allocation8 + $0x30] sm:$0xff]
        %v1621 = vld [vmem:[#allocation8 + $0x38] sm:$0xff]
        %v1622 = vld [vmem:[#allocation8 + $0x40] sm:$0xff]
        %v1623 = vld [vmem:[#allocation8 + $0x48] sm:$0xff]
        %v1624 = vld [vmem:[#allocation8 + $0x50] sm:$0xff]
        %v1625 = vld [vmem:[#allocation8 + $0x58] sm:$0xff]
        %v1626 = vld [vmem:[#allocation8 + $0x60] sm:$0xff]
        %v1627 = vld [vmem:[#allocation8 + $0x68] sm:$0xff]
        %v1628 = vld [vmem:[#allocation8 + $0x70] sm:$0xff]
        %v1629 = vld [vmem:[#allocation8 + $0x78] sm:$0xff]
        %v1630 = vld [vmem:[#allocation9] sm:$0xff]
        %v1631 = vld [vmem:[#allocation9 + $0x8] sm:$0xff]
        %v1632 = vld [vmem:[#allocation9 + $0x10] sm:$0xff]
        %v1633 = vld [vmem:[#allocation9 + $0x18] sm:$0xff]
        %v1634 = vld [vmem:[#allocation9 + $0x20] sm:$0xff]
        %v1635 = vld [vmem:[#allocation9 + $0x28] sm:$0xff]
        %v1636 = vld [vmem:[#allocation9 + $0x30] sm:$0xff]
        %v1637 = vld [vmem:[#allocation9 + $0x38] sm:$0xff]
        %v1638 = vld [vmem:[#allocation9 + $0x40] sm:$0xff]
        %v1639 = vld [vmem:[#allocation9 + $0x48] sm:$0xff]
        %v1640 = vld [vmem:[#allocation9 + $0x50] sm:$0xff]
        %v1641 = vld [vmem:[#allocation9 + $0x58] sm:$0xff]
        %v1642 = vld [vmem:[#allocation9 + $0x60] sm:$0xff]
        %v1643 = vld [vmem:[#allocation9 + $0x68] sm:$0xff]
        %v1644 = vld [vmem:[#allocation9 + $0x70] sm:$0xff]
        %v1645 = vld [vmem:[#allocation9 + $0x78] sm:$0xff]
        %v1646 = vmul.f32 %v1086, %v1598
        %v1647 = vmul.f32 %v1090, %v1599
        %v1648 = vmul.f32 %v1096, %v1600
        %v1649 = vmul.f32 %v1100, %v1601
        %v1650 = vmul.f32 %v1106, %v1602
        %v1651 = vmul.f32 %v1110, %v1603
        %v1652 = vmul.f32 %v1116, %v1604
        %v1653 = vmul.f32 %v1120, %v1605
        %v1654 = vmul.f32 %v1126, %v1606
        %v1655 = vmul.f32 %v1130, %v1607
        %v1656 = vmul.f32 %v1136, %v1608
        %v1657 = vmul.f32 %v1140, %v1609
        %v1658 = vmul.f32 %v1146, %v1610
        %v1659 = vmul.f32 %v1150, %v1611
        %v1660 = vmul.f32 %v1156, %v1612
        %v1661 = vmul.f32 %v1160, %v1613
        %v1662 = vmul.f32 %v1281, %v1614
        %v1663 = vmul.f32 %v1285, %v1615
        %v1664 = vmul.f32 %v1291, %v1616
        %v1665 = vmul.f32 %v1295, %v1617
        %v1666 = vmul.f32 %v1301, %v1618
        %v1667 = vmul.f32 %v1305, %v1619
        %v1668 = vmul.f32 %v1311, %v1620
        %v1669 = vmul.f32 %v1315, %v1621
        %v1670 = vmul.f32 %v1321, %v1622
        %v1671 = vmul.f32 %v1325, %v1623
        %v1672 = vmul.f32 %v1331, %v1624
        %v1673 = vmul.f32 %v1335, %v1625
        %v1674 = vmul.f32 %v1341, %v1626
        %v1675 = vmul.f32 %v1345, %v1627
        %v1676 = vmul.f32 %v1351, %v1628
        %v1677 = vmul.f32 %v1355, %v1629
        %v1678 = vadd.f32 %v1646, %v1662
        %v1679 = vadd.f32 %v1647, %v1663
        %v1680 = vadd.f32 %v1648, %v1664
        %v1681 = vadd.f32 %v1649, %v1665
        %v1682 = vadd.f32 %v1650, %v1666
        %v1683 = vadd.f32 %v1651, %v1667
        %v1684 = vadd.f32 %v1652, %v1668
        %v1685 = vadd.f32 %v1653, %v1669
        %v1686 = vadd.f32 %v1654, %v1670
        %v1687 = vadd.f32 %v1655, %v1671
        %v1688 = vadd.f32 %v1656, %v1672
        %v1689 = vadd.f32 %v1657, %v1673
        %v1690 = vadd.f32 %v1658, %v1674
        %v1691 = vadd.f32 %v1659, %v1675
        %v1692 = vadd.f32 %v1660, %v1676
        %v1693 = vadd.f32 %v1661, %v1677
        %v1694 = vpack.c.bf16 %v1679, %v1678
        %v1695 = vpack.c.bf16 %v1681, %v1680
        %v1696 = vpack.c.bf16 %v1683, %v1682
        %v1697 = vpack.c.bf16 %v1685, %v1684
        %v1698 = vpack.c.bf16 %v1687, %v1686
        %v1699 = vpack.c.bf16 %v1689, %v1688
        %v1700 = vpack.c.bf16 %v1691, %v1690
        %v1701 = vpack.c.bf16 %v1693, %v1692
        %v1702 = vmul.f32 %v1088, %v1598
        %v1703 = vmul.f32 %v1092, %v1599
        %v1704 = vmul.f32 %v1098, %v1600
        %v1705 = vmul.f32 %v1102, %v1601
        %v1706 = vmul.f32 %v1108, %v1602
        %v1707 = vmul.f32 %v1112, %v1603
        %v1708 = vmul.f32 %v1118, %v1604
        %v1709 = vmul.f32 %v1122, %v1605
        %v1710 = vmul.f32 %v1128, %v1606
        %v1711 = vmul.f32 %v1132, %v1607
        %v1712 = vmul.f32 %v1138, %v1608
        %v1713 = vmul.f32 %v1142, %v1609
        %v1714 = vmul.f32 %v1148, %v1610
        %v1715 = vmul.f32 %v1152, %v1611
        %v1716 = vmul.f32 %v1158, %v1612
        %v1717 = vmul.f32 %v1162, %v1613
        %v1718 = vmul.f32 %v1472, %v1614
        %v1719 = vmul.f32 %v1475, %v1615
        %v1720 = vmul.f32 %v1480, %v1616
        %v1721 = vmul.f32 %v1483, %v1617
        %v1722 = vmul.f32 %v1488, %v1618
        %v1723 = vmul.f32 %v1491, %v1619
        %v1724 = vmul.f32 %v1496, %v1620
        %v1725 = vmul.f32 %v1499, %v1621
        %v1726 = vmul.f32 %v1504, %v1622
        %v1727 = vmul.f32 %v1507, %v1623
        %v1728 = vmul.f32 %v1512, %v1624
        %v1729 = vmul.f32 %v1515, %v1625
        %v1730 = vmul.f32 %v1520, %v1626
        %v1731 = vmul.f32 %v1523, %v1627
        %v1732 = vmul.f32 %v1528, %v1628
        %v1733 = vmul.f32 %v1531, %v1629
        %v1734 = vadd.f32 %v1702, %v1718
        %v1735 = vadd.f32 %v1703, %v1719
        %v1736 = vadd.f32 %v1704, %v1720
        %v1737 = vadd.f32 %v1705, %v1721
        %v1738 = vadd.f32 %v1706, %v1722
        %v1739 = vadd.f32 %v1707, %v1723
        %v1740 = vadd.f32 %v1708, %v1724
        %v1741 = vadd.f32 %v1709, %v1725
        %v1742 = vadd.f32 %v1710, %v1726
        %v1743 = vadd.f32 %v1711, %v1727
        %v1744 = vadd.f32 %v1712, %v1728
        %v1745 = vadd.f32 %v1713, %v1729
        %v1746 = vadd.f32 %v1714, %v1730
        %v1747 = vadd.f32 %v1715, %v1731
        %v1748 = vadd.f32 %v1716, %v1732
        %v1749 = vadd.f32 %v1717, %v1733
        %v1750 = vpack.c.bf16 %v1735, %v1734
        %v1751 = vpack.c.bf16 %v1737, %v1736
        %v1752 = vpack.c.bf16 %v1739, %v1738
        %v1753 = vpack.c.bf16 %v1741, %v1740
        %v1754 = vpack.c.bf16 %v1743, %v1742
        %v1755 = vpack.c.bf16 %v1745, %v1744
        %v1756 = vpack.c.bf16 %v1747, %v1746
        %v1757 = vpack.c.bf16 %v1749, %v1748
        %v1758 = vpack.c.bf16 %v1283, %v1279
        %v1759 = vpack.c.bf16 %v1293, %v1289
        %v1760 = vpack.c.bf16 %v1303, %v1299
        %v1761 = vpack.c.bf16 %v1313, %v1309
        %v1762 = vpack.c.bf16 %v1323, %v1319
        %v1763 = vpack.c.bf16 %v1333, %v1329
        %v1764 = vpack.c.bf16 %v1343, %v1339
        %v1765 = vpack.c.bf16 %v1353, %v1349
        %vm1766 = vcmask 261120
        %v1768 = vsel %vm1766, %v1694, 0
        %v1771 = vsel %vm1766, %v1695, 0
        %v1774 = vsel %vm1766, %v1696, 0
        %v1777 = vsel %vm1766, %v1697, 0
        %v1780 = vsel %vm1766, %v1698, 0
        %v1783 = vsel %vm1766, %v1699, 0
        %v1786 = vsel %vm1766, %v1700, 0
        %v1789 = vsel %vm1766, %v1701, 0
        %v1792 = vsel %vm1766, %v1750, 0
        %v1795 = vsel %vm1766, %v1751, 0
        %v1798 = vsel %vm1766, %v1752, 0
        %v1801 = vsel %vm1766, %v1753, 0
        %v1804 = vsel %vm1766, %v1754, 0
        %v1807 = vsel %vm1766, %v1755, 0
        %v1810 = vsel %vm1766, %v1756, 0
        %v1813 = vsel %vm1766, %v1757, 0
        %1815 = vmatprep.subr.bf16.mxu0 0
        %1816 = vmatpush1.bf16.xpose.msra.mxu0 %v1813
        %1817 = vmatprep.subr.bf16.mxu0 0
        %1818 = vmatpush1.bf16.xpose.msra.mxu0 %v1810
        %1819 = vmatprep.subr.bf16.mxu0 0
        %1820 = vmatpush1.bf16.xpose.msra.mxu0 %v1807
        %1821 = vmatprep.subr.bf16.mxu0 0
        %1822 = vmatpush1.bf16.xpose.msra.mxu0 %v1804
        %1823 = vmatprep.subr.bf16.mxu0 0
        %1824 = vmatpush1.bf16.xpose.msra.mxu0 %v1801
        %1825 = vmatprep.subr.bf16.mxu0 0
        %1826 = vmatpush1.bf16.xpose.msra.mxu0 %v1798
        %1827 = vmatprep.subr.bf16.mxu0 0
        %1828 = vmatpush1.bf16.xpose.msra.mxu0 %v1795
        %1829 = vmatprep.subr.bf16.mxu0 0
        %1830 = vmatpush1.bf16.xpose.msra.mxu0 %v1792
        %1831 = vmatprep.subr.bf16.mxu0 0
        %1832 = vmatpush2.bf16.xpose.msra.mxu0 0
        %1833 = vmatprep.subr.bf16.mxu0 0
        %1834 = vmatpush2.bf16.xpose.msra.mxu0 0
        %1835 = vmatprep.subr.bf16.mxu0 0
        %1836 = vmatpush2.bf16.xpose.msra.mxu0 0
        %1837 = vmatprep.subr.bf16.mxu0 0
        %1838 = vmatpush2.bf16.xpose.msra.mxu0 0
        %1839 = vmatprep.subr.bf16.mxu0 0
        %1840 = vmatpush2.bf16.xpose.msra.mxu0 0
        %1841 = vmatprep.subr.bf16.mxu0 0
        %1842 = vmatpush2.bf16.xpose.msra.mxu0 0
        %1843 = vmatprep.subr.bf16.mxu0 0
        %1844 = vmatpush2.bf16.xpose.msra.mxu0 0
        %1845 = vmatprep.subr.bf16.mxu0 0
        %1846 = vmatpush2.bf16.xpose.msra.mxu0 0
        %1847 = vmatprep.mubr.bf16.mxu0 0
        %1848 = vmatmul.mubr.bf16.gmra.mxu0 %v1768
        %v1849 = vpop.f32.mrf.mxu0
        %v1850 = vadd.f32 %v1630, %v1849
        %v1851 = vpop.f32.mrf.mxu0
        %v1852 = vpop.f32.mrf.mxu0
        %v1853 = vadd.f32 %v1631, %v1852
        %v1854 = vpop.f32.mrf.mxu0
        %1855 = vmatprep.mubr.bf16.mxu0 0
        %1856 = vmatmul.mubr.bf16.gmra.mxu0 %v1771
        %v1857 = vpop.f32.mrf.mxu0
        %v1858 = vadd.f32 %v1632, %v1857
        %v1859 = vpop.f32.mrf.mxu0
        %v1860 = vpop.f32.mrf.mxu0
        %v1861 = vadd.f32 %v1633, %v1860
        %v1862 = vpop.f32.mrf.mxu0
        %1863 = vmatprep.mubr.bf16.mxu0 0
        %1864 = vmatmul.mubr.bf16.gmra.mxu0 %v1774
        %v1865 = vpop.f32.mrf.mxu0
        %v1866 = vadd.f32 %v1634, %v1865
        %v1867 = vpop.f32.mrf.mxu0
        %v1868 = vpop.f32.mrf.mxu0
        %v1869 = vadd.f32 %v1635, %v1868
        %v1870 = vpop.f32.mrf.mxu0
        %1871 = vmatprep.mubr.bf16.mxu0 0
        %1872 = vmatmul.mubr.bf16.gmra.mxu0 %v1777
        %v1873 = vpop.f32.mrf.mxu0
        %v1874 = vadd.f32 %v1636, %v1873
        %v1875 = vpop.f32.mrf.mxu0
        %v1876 = vpop.f32.mrf.mxu0
        %v1877 = vadd.f32 %v1637, %v1876
        %v1878 = vpop.f32.mrf.mxu0
        %1879 = vmatprep.mubr.bf16.mxu0 0
        %1880 = vmatmul.mubr.bf16.gmra.mxu0 %v1780
        %v1881 = vpop.f32.mrf.mxu0
        %v1882 = vadd.f32 %v1638, %v1881
        %v1883 = vpop.f32.mrf.mxu0
        %v1884 = vpop.f32.mrf.mxu0
        %v1885 = vadd.f32 %v1639, %v1884
        %v1886 = vpop.f32.mrf.mxu0
        %1887 = vmatprep.mubr.bf16.mxu0 0
        %1888 = vmatmul.mubr.bf16.gmra.mxu0 %v1783
        %v1889 = vpop.f32.mrf.mxu0
        %v1890 = vadd.f32 %v1640, %v1889
        %v1891 = vpop.f32.mrf.mxu0
        %v1892 = vpop.f32.mrf.mxu0
        %v1893 = vadd.f32 %v1641, %v1892
        %v1894 = vpop.f32.mrf.mxu0
        %1895 = vmatprep.mubr.bf16.mxu0 0
        %1896 = vmatmul.mubr.bf16.gmra.mxu0 %v1786
        %v1897 = vpop.f32.mrf.mxu0
        %v1898 = vadd.f32 %v1642, %v1897
        %v1899 = vpop.f32.mrf.mxu0
        %v1900 = vpop.f32.mrf.mxu0
        %v1901 = vadd.f32 %v1643, %v1900
        %v1902 = vpop.f32.mrf.mxu0
        %1903 = vmatprep.mubr.bf16.mxu0 0
        %1904 = vmatmul.mubr.bf16.gmra.mxu0 %v1789
        %v1905 = vpop.f32.mrf.mxu0
        %v1906 = vadd.f32 %v1644, %v1905
        %v1907 = vpop.f32.mrf.mxu0
        %v1908 = vpop.f32.mrf.mxu0
        %v1909 = vadd.f32 %v1645, %v1908
        %v1910 = vpop.f32.mrf.mxu0
        %1911 = vdwg.mxu0
        %1912 = vmax.xlane.f32.xlu0 %v1850
        %v1913 = vpop.xlane.xlu0 %1912
        %1914 = vmax.xlane.f32.xlu0 %v1853
        %v1915 = vpop.xlane.xlu0 %1914
        %1916 = vmax.xlane.f32.xlu0 %v1858
        %v1917 = vpop.xlane.xlu0 %1916
        %1918 = vmax.xlane.f32.xlu0 %v1861
        %v1919 = vpop.xlane.xlu0 %1918
        %1920 = vmax.xlane.f32.xlu0 %v1866
        %v1921 = vpop.xlane.xlu0 %1920
        %1922 = vmax.xlane.f32.xlu0 %v1869
        %v1923 = vpop.xlane.xlu0 %1922
        %1924 = vmax.xlane.f32.xlu0 %v1874
        %v1925 = vpop.xlane.xlu0 %1924
        %1926 = vmax.xlane.f32.xlu0 %v1877
        %v1927 = vpop.xlane.xlu0 %1926
        %1928 = vmax.xlane.f32.xlu0 %v1882
        %v1929 = vpop.xlane.xlu0 %1928
        %1930 = vmax.xlane.f32.xlu0 %v1885
        %v1931 = vpop.xlane.xlu0 %1930
        %1932 = vmax.xlane.f32.xlu0 %v1890
        %v1933 = vpop.xlane.xlu0 %1932
        %1934 = vmax.xlane.f32.xlu0 %v1893
        %v1935 = vpop.xlane.xlu0 %1934
        %1936 = vmax.xlane.f32.xlu0 %v1898
        %v1937 = vpop.xlane.xlu0 %1936
        %1938 = vmax.xlane.f32.xlu0 %v1901
        %v1939 = vpop.xlane.xlu0 %1938
        %1940 = vmax.xlane.f32.xlu0 %v1906
        %v1941 = vpop.xlane.xlu0 %1940
        %1942 = vmax.xlane.f32.xlu0 %v1909
        %v1943 = vpop.xlane.xlu0 %1942
        %v1944 = vsub.f32 %v1850, %v1913
        %v1945 = vsub.f32 %v1853, %v1915
        %v1946 = vsub.f32 %v1858, %v1917
        %v1947 = vsub.f32 %v1861, %v1919
        %v1948 = vsub.f32 %v1866, %v1921
        %v1949 = vsub.f32 %v1869, %v1923
        %v1950 = vsub.f32 %v1874, %v1925
        %v1951 = vsub.f32 %v1877, %v1927
        %v1952 = vsub.f32 %v1882, %v1929
        %v1953 = vsub.f32 %v1885, %v1931
        %v1954 = vsub.f32 %v1890, %v1933
        %v1955 = vsub.f32 %v1893, %v1935
        %v1956 = vsub.f32 %v1898, %v1937
        %v1957 = vsub.f32 %v1901, %v1939
        %v1958 = vsub.f32 %v1906, %v1941
        %v1959 = vsub.f32 %v1909, %v1943
        %v1960 = vmul.f32 %v1944, 1.442695
        %v1961 = vpow.pop %v1960
        %v1962 = vmul.f32 %v1945, 1.442695
        %v1963 = vpow.pop %v1962
        %v1964 = vmul.f32 %v1946, 1.442695
        %v1965 = vpow.pop %v1964
        %v1966 = vmul.f32 %v1947, 1.442695
        %v1967 = vpow.pop %v1966
        %v1968 = vmul.f32 %v1948, 1.442695
        %v1969 = vpow.pop %v1968
        %v1970 = vmul.f32 %v1949, 1.442695
        %v1971 = vpow.pop %v1970
        %v1972 = vmul.f32 %v1950, 1.442695
        %v1973 = vpow.pop %v1972
        %v1974 = vmul.f32 %v1951, 1.442695
        %v1975 = vpow.pop %v1974
        %v1976 = vmul.f32 %v1952, 1.442695
        %v1977 = vpow.pop %v1976
        %v1978 = vmul.f32 %v1953, 1.442695
        %v1979 = vpow.pop %v1978
        %v1980 = vmul.f32 %v1954, 1.442695
        %v1981 = vpow.pop %v1980
        %v1982 = vmul.f32 %v1955, 1.442695
        %v1983 = vpow.pop %v1982
        %v1984 = vmul.f32 %v1956, 1.442695
        %v1985 = vpow.pop %v1984
        %v1986 = vmul.f32 %v1957, 1.442695
        %v1987 = vpow.pop %v1986
        %v1988 = vmul.f32 %v1958, 1.442695
        %v1989 = vpow.pop %v1988
        %v1990 = vmul.f32 %v1959, 1.442695
        %v1991 = vpow.pop %v1990
        %1992 = vadd.xlane.f32.xlu0 %v1961
        %v1993 = vpop.xlane.xlu0 %1992
        %1994 = vadd.xlane.f32.xlu0 %v1963
        %v1995 = vpop.xlane.xlu0 %1994
        %1996 = vadd.xlane.f32.xlu0 %v1965
        %v1997 = vpop.xlane.xlu0 %1996
        %1998 = vadd.xlane.f32.xlu0 %v1967
        %v1999 = vpop.xlane.xlu0 %1998
        %2000 = vadd.xlane.f32.xlu0 %v1969
        %v2001 = vpop.xlane.xlu0 %2000
        %2002 = vadd.xlane.f32.xlu0 %v1971
        %v2003 = vpop.xlane.xlu0 %2002
        %2004 = vadd.xlane.f32.xlu0 %v1973
        %v2005 = vpop.xlane.xlu0 %2004
        %2006 = vadd.xlane.f32.xlu0 %v1975
        %v2007 = vpop.xlane.xlu0 %2006
        %2008 = vadd.xlane.f32.xlu0 %v1977
        %v2009 = vpop.xlane.xlu0 %2008
        %2010 = vadd.xlane.f32.xlu0 %v1979
        %v2011 = vpop.xlane.xlu0 %2010
        %2012 = vadd.xlane.f32.xlu0 %v1981
        %v2013 = vpop.xlane.xlu0 %2012
        %2014 = vadd.xlane.f32.xlu0 %v1983
        %v2015 = vpop.xlane.xlu0 %2014
        %2016 = vadd.xlane.f32.xlu0 %v1985
        %v2017 = vpop.xlane.xlu0 %2016
        %2018 = vadd.xlane.f32.xlu0 %v1987
        %v2019 = vpop.xlane.xlu0 %2018
        %2020 = vadd.xlane.f32.xlu0 %v1989
        %v2021 = vpop.xlane.xlu0 %2020
        %2022 = vadd.xlane.f32.xlu0 %v1991
        %v2023 = vpop.xlane.xlu0 %2022
        %v2024 = vrcp.pop %v1993
        %v2025 = vrcp.pop %v1995
        %v2026 = vrcp.pop %v1997
        %v2027 = vrcp.pop %v1999
        %v2028 = vrcp.pop %v2001
        %v2029 = vrcp.pop %v2003
        %v2030 = vrcp.pop %v2005
        %v2031 = vrcp.pop %v2007
        %v2032 = vrcp.pop %v2009
        %v2033 = vrcp.pop %v2011
        %v2034 = vrcp.pop %v2013
        %v2035 = vrcp.pop %v2015
        %v2036 = vrcp.pop %v2017
        %v2037 = vrcp.pop %v2019
        %v2038 = vrcp.pop %v2021
        %v2039 = vrcp.pop %v2023
        %v2040 = vpack.c.bf16 %v1963, %v1961
        %v2041 = vpack.c.bf16 %v1967, %v1965
        %v2042 = vpack.c.bf16 %v1971, %v1969
        %v2043 = vpack.c.bf16 %v1975, %v1973
        %v2044 = vpack.c.bf16 %v1979, %v1977
        %v2045 = vpack.c.bf16 %v1983, %v1981
        %v2046 = vpack.c.bf16 %v1987, %v1985
        %v2047 = vpack.c.bf16 %v1991, %v1989
        %2048 = vmatprep.subr.bf16.mxu0 0
        %2049 = vmatpush1.bf16.msra.mxu0 %v1765
        %2050 = vmatprep.subr.bf16.mxu0 0
        %2051 = vmatpush1.bf16.msra.mxu0 %v1764
        %2052 = vmatprep.subr.bf16.mxu0 0
        %2053 = vmatpush1.bf16.msra.mxu0 %v1763
        %2054 = vmatprep.subr.bf16.mxu0 0
        %2055 = vmatpush1.bf16.msra.mxu0 %v1762
        %2056 = vmatprep.subr.bf16.mxu0 0
        %2057 = vmatpush1.bf16.msra.mxu0 %v1761
        %2058 = vmatprep.subr.bf16.mxu0 0
        %2059 = vmatpush1.bf16.msra.mxu0 %v1760
        %2060 = vmatprep.subr.bf16.mxu0 0
        %2061 = vmatpush1.bf16.msra.mxu0 %v1759
        %2062 = vmatprep.subr.bf16.mxu0 0
        %2063 = vmatpush1.bf16.msra.mxu0 %v1758
        %2064 = vmatprep.subr.bf16.mxu0 0
        %2065 = vmatpush2.bf16.msra.mxu0 0
        %2066 = vmatprep.subr.bf16.mxu0 0
        %2067 = vmatpush2.bf16.msra.mxu0 0
        %2068 = vmatprep.subr.bf16.mxu0 0
        %2069 = vmatpush2.bf16.msra.mxu0 0
        %2070 = vmatprep.subr.bf16.mxu0 0
        %2071 = vmatpush2.bf16.msra.mxu0 0
        %2072 = vmatprep.subr.bf16.mxu0 0
        %2073 = vmatpush2.bf16.msra.mxu0 0
        %2074 = vmatprep.subr.bf16.mxu0 0
        %2075 = vmatpush2.bf16.msra.mxu0 0
        %2076 = vmatprep.subr.bf16.mxu0 0
        %2077 = vmatpush2.bf16.msra.mxu0 0
        %2078 = vmatprep.subr.bf16.mxu0 0
        %2079 = vmatpush2.bf16.msra.mxu0 0
        %2080 = vmatprep.mubr.bf16.mxu0 0
        %2081 = vmatmul.mubr.bf16.gmra.mxu0 %v2040
        %v2082 = vpop.f32.mrf.mxu0
        %v2083 = vadd.f32 0.0, %v2082
        %v2084 = vpop.f32.mrf.mxu0
        %v2085 = vpop.f32.mrf.mxu0
        %v2086 = vadd.f32 0.0, %v2085
        %v2087 = vpop.f32.mrf.mxu0
        %2088 = vmatprep.mubr.bf16.mxu0 0
        %2089 = vmatmul.mubr.bf16.gmra.mxu0 %v2041
        %v2090 = vpop.f32.mrf.mxu0
        %v2091 = vadd.f32 0.0, %v2090
        %v2092 = vpop.f32.mrf.mxu0
        %v2093 = vpop.f32.mrf.mxu0
        %v2094 = vadd.f32 0.0, %v2093
        %v2095 = vpop.f32.mrf.mxu0
        %2096 = vmatprep.mubr.bf16.mxu0 0
        %2097 = vmatmul.mubr.bf16.gmra.mxu0 %v2042
        %v2098 = vpop.f32.mrf.mxu0
        %v2099 = vadd.f32 0.0, %v2098
        %v2100 = vpop.f32.mrf.mxu0
        %v2101 = vpop.f32.mrf.mxu0
        %v2102 = vadd.f32 0.0, %v2101
        %v2103 = vpop.f32.mrf.mxu0
        %2104 = vmatprep.mubr.bf16.mxu0 0
        %2105 = vmatmul.mubr.bf16.gmra.mxu0 %v2043
        %v2106 = vpop.f32.mrf.mxu0
        %v2107 = vadd.f32 0.0, %v2106
        %v2108 = vpop.f32.mrf.mxu0
        %v2109 = vpop.f32.mrf.mxu0
        %v2110 = vadd.f32 0.0, %v2109
        %v2111 = vpop.f32.mrf.mxu0
        %2112 = vmatprep.mubr.bf16.mxu0 0
        %2113 = vmatmul.mubr.bf16.gmra.mxu0 %v2044
        %v2114 = vpop.f32.mrf.mxu0
        %v2115 = vadd.f32 0.0, %v2114
        %v2116 = vpop.f32.mrf.mxu0
        %v2117 = vpop.f32.mrf.mxu0
        %v2118 = vadd.f32 0.0, %v2117
        %v2119 = vpop.f32.mrf.mxu0
        %2120 = vmatprep.mubr.bf16.mxu0 0
        %2121 = vmatmul.mubr.bf16.gmra.mxu0 %v2045
        %v2122 = vpop.f32.mrf.mxu0
        %v2123 = vadd.f32 0.0, %v2122
        %v2124 = vpop.f32.mrf.mxu0
        %v2125 = vpop.f32.mrf.mxu0
        %v2126 = vadd.f32 0.0, %v2125
        %v2127 = vpop.f32.mrf.mxu0
        %2128 = vmatprep.mubr.bf16.mxu0 0
        %2129 = vmatmul.mubr.bf16.gmra.mxu0 %v2046
        %v2130 = vpop.f32.mrf.mxu0
        %v2131 = vadd.f32 0.0, %v2130
        %v2132 = vpop.f32.mrf.mxu0
        %v2133 = vpop.f32.mrf.mxu0
        %v2134 = vadd.f32 0.0, %v2133
        %v2135 = vpop.f32.mrf.mxu0
        %2136 = vmatprep.mubr.bf16.mxu0 0
        %2137 = vmatmul.mubr.bf16.gmra.mxu0 %v2047
        %v2138 = vpop.f32.mrf.mxu0
        %v2139 = vadd.f32 0.0, %v2138
        %v2140 = vpop.f32.mrf.mxu0
        %v2141 = vpop.f32.mrf.mxu0
        %v2142 = vadd.f32 0.0, %v2141
        %v2143 = vpop.f32.mrf.mxu0
        %2144 = vdwg.mxu0
        %v2145 = vmul.f32 %v2083, %v2024
        %v2146 = vmul.f32 %v2086, %v2025
        %v2147 = vmul.f32 %v2091, %v2026
        %v2148 = vmul.f32 %v2094, %v2027
        %v2149 = vmul.f32 %v2099, %v2028
        %v2150 = vmul.f32 %v2102, %v2029
        %v2151 = vmul.f32 %v2107, %v2030
        %v2152 = vmul.f32 %v2110, %v2031
        %v2153 = vmul.f32 %v2115, %v2032
        %v2154 = vmul.f32 %v2118, %v2033
        %v2155 = vmul.f32 %v2123, %v2034
        %v2156 = vmul.f32 %v2126, %v2035
        %v2157 = vmul.f32 %v2131, %v2036
        %v2158 = vmul.f32 %v2134, %v2037
        %v2159 = vmul.f32 %v2139, %v2038
        %v2160 = vmul.f32 %v2142, %v2039
        %v2161 = vpack.c.bf16 %v2146, %v2145
        %v2162 = vpack.c.bf16 %v2148, %v2147
        %v2163 = vpack.c.bf16 %v2150, %v2149
        %v2164 = vpack.c.bf16 %v2152, %v2151
        %v2165 = vpack.c.bf16 %v2154, %v2153
        %v2166 = vpack.c.bf16 %v2156, %v2155
        %v2167 = vpack.c.bf16 %v2158, %v2157
        %v2168 = vpack.c.bf16 %v2160, %v2159
        %v2177 = vunpack.c.l.b16 %v2161
        %v2178 = vunpack.c.h.b16 %v2161
        %v2179 = vunpack.c.l.b16 %v2162
        %v2180 = vunpack.c.h.b16 %v2162
        %v2181 = vunpack.c.l.b16 %v2163
        %v2182 = vunpack.c.h.b16 %v2163
        %v2183 = vunpack.c.l.b16 %v2164
        %v2184 = vunpack.c.h.b16 %v2164
        %v2185 = vunpack.c.l.b16 %v2165
        %v2186 = vunpack.c.h.b16 %v2165
        %v2187 = vunpack.c.l.b16 %v2166
        %v2188 = vunpack.c.h.b16 %v2166
        %v2189 = vunpack.c.l.b16 %v2167
        %v2190 = vunpack.c.h.b16 %v2167
        %v2191 = vunpack.c.l.b16 %v2168
        %v2192 = vunpack.c.h.b16 %v2168
        %v2193 = vpack.c.b16 %v2177, %v2177
        %v2194 = vpack.c.b16 %v2178, %v2178
        %v2195 = vpack.c.b16 %v2179, %v2179
        %v2196 = vpack.c.b16 %v2180, %v2180
        %v2197 = vpack.c.b16 %v2181, %v2181
        %v2198 = vpack.c.b16 %v2182, %v2182
        %v2199 = vpack.c.b16 %v2183, %v2183
        %v2200 = vpack.c.b16 %v2184, %v2184
        %v2201 = vpack.c.b16 %v2185, %v2185
        %v2202 = vpack.c.b16 %v2186, %v2186
        %v2203 = vpack.c.b16 %v2187, %v2187
        %v2204 = vpack.c.b16 %v2188, %v2188
        %v2205 = vpack.c.b16 %v2189, %v2189
        %v2206 = vpack.c.b16 %v2190, %v2190
        %v2207 = vpack.c.b16 %v2191, %v2191
        %v2208 = vpack.c.b16 %v2192, %v2192
        %vm2225 = vcmask 257024
        %2226 = vst.msk [vmem:[#allocation2] sm:$0xf] %vm2225, %v2193
        %2227 = vst.msk [vmem:[#allocation2 + $0x4] sm:$0xf] %vm2225, %v2194
        %2228 = vst.msk [vmem:[#allocation2 + $0x8] sm:$0xf] %vm2225, %v2195
        %2229 = vst.msk [vmem:[#allocation2 + $0xc] sm:$0xf] %vm2225, %v2196
        %2230 = vst.msk [vmem:[#allocation2 + $0x10] sm:$0xf] %vm2225, %v2197
        %2231 = vst.msk [vmem:[#allocation2 + $0x14] sm:$0xf] %vm2225, %v2198
        %2232 = vst.msk [vmem:[#allocation2 + $0x18] sm:$0xf] %vm2225, %v2199
        %2233 = vst.msk [vmem:[#allocation2 + $0x1c] sm:$0xf] %vm2225, %v2200
        %2234 = vst.msk [vmem:[#allocation2 + $0x20] sm:$0xf] %vm2225, %v2201
        %2235 = vst.msk [vmem:[#allocation2 + $0x24] sm:$0xf] %vm2225, %v2202
        %2236 = vst.msk [vmem:[#allocation2 + $0x28] sm:$0xf] %vm2225, %v2203
        %2237 = vst.msk [vmem:[#allocation2 + $0x2c] sm:$0xf] %vm2225, %v2204
        %2238 = vst.msk [vmem:[#allocation2 + $0x30] sm:$0xf] %vm2225, %v2205
        %2239 = vst.msk [vmem:[#allocation2 + $0x34] sm:$0xf] %vm2225, %v2206
        %2240 = vst.msk [vmem:[#allocation2 + $0x38] sm:$0xf] %vm2225, %v2207
        %2241 = vst.msk [vmem:[#allocation2 + $0x3c] sm:$0xf] %vm2225, %v2208
        %2250 = vrot.lane.b32.xlu0 %v1694, 96
        %v2251 = vpop.permute.xlu0 %2250
        %2252 = vrot.lane.b32.xlu0 %v1695, 96
        %v2253 = vpop.permute.xlu0 %2252
        %2254 = vrot.lane.b32.xlu0 %v1696, 96
        %v2255 = vpop.permute.xlu0 %2254
        %2256 = vrot.lane.b32.xlu0 %v1697, 96
        %v2257 = vpop.permute.xlu0 %2256
        %2258 = vrot.lane.b32.xlu0 %v1698, 96
        %v2259 = vpop.permute.xlu0 %2258
        %2260 = vrot.lane.b32.xlu0 %v1699, 96
        %v2261 = vpop.permute.xlu0 %2260
        %2262 = vrot.lane.b32.xlu0 %v1700, 96
        %v2263 = vpop.permute.xlu0 %2262
        %2264 = vrot.lane.b32.xlu0 %v1701, 96
        %v2265 = vpop.permute.xlu0 %2264
        %2274 = vrot.lane.b32.xlu0 %v1750, 96
        %v2275 = vpop.permute.xlu0 %2274
        %2276 = vrot.lane.b32.xlu0 %v1751, 96
        %v2277 = vpop.permute.xlu0 %2276
        %2278 = vrot.lane.b32.xlu0 %v1752, 96
        %v2279 = vpop.permute.xlu0 %2278
        %2280 = vrot.lane.b32.xlu0 %v1753, 96
        %v2281 = vpop.permute.xlu0 %2280
        %2282 = vrot.lane.b32.xlu0 %v1754, 96
        %v2283 = vpop.permute.xlu0 %2282
        %2284 = vrot.lane.b32.xlu0 %v1755, 96
        %v2285 = vpop.permute.xlu0 %2284
        %2286 = vrot.lane.b32.xlu0 %v1756, 96
        %v2287 = vpop.permute.xlu0 %2286
        %2288 = vrot.lane.b32.xlu0 %v1757, 96
        %v2289 = vpop.permute.xlu0 %2288
        %v2291 = vsel %vm1766, %v2251, 0
        %v2294 = vsel %vm1766, %v2253, 0
        %v2297 = vsel %vm1766, %v2255, 0
        %v2300 = vsel %vm1766, %v2257, 0
        %v2303 = vsel %vm1766, %v2259, 0
        %v2306 = vsel %vm1766, %v2261, 0
        %v2309 = vsel %vm1766, %v2263, 0
        %v2312 = vsel %vm1766, %v2265, 0
        %v2315 = vsel %vm1766, %v2275, 0
        %v2318 = vsel %vm1766, %v2277, 0
        %v2321 = vsel %vm1766, %v2279, 0
        %v2324 = vsel %vm1766, %v2281, 0
        %v2327 = vsel %vm1766, %v2283, 0
        %v2330 = vsel %vm1766, %v2285, 0
        %v2333 = vsel %vm1766, %v2287, 0
        %v2336 = vsel %vm1766, %v2289, 0
        %2338 = vmatprep.subr.bf16.mxu0 0
        %2339 = vmatpush1.bf16.xpose.msra.mxu0 %v2336
        %2340 = vmatprep.subr.bf16.mxu0 0
        %2341 = vmatpush1.bf16.xpose.msra.mxu0 %v2333
        %2342 = vmatprep.subr.bf16.mxu0 0
        %2343 = vmatpush1.bf16.xpose.msra.mxu0 %v2330
        %2344 = vmatprep.subr.bf16.mxu0 0
        %2345 = vmatpush1.bf16.xpose.msra.mxu0 %v2327
        %2346 = vmatprep.subr.bf16.mxu0 0
        %2347 = vmatpush1.bf16.xpose.msra.mxu0 %v2324
        %2348 = vmatprep.subr.bf16.mxu0 0
        %2349 = vmatpush1.bf16.xpose.msra.mxu0 %v2321
        %2350 = vmatprep.subr.bf16.mxu0 0
        %2351 = vmatpush1.bf16.xpose.msra.mxu0 %v2318
        %2352 = vmatprep.subr.bf16.mxu0 0
        %2353 = vmatpush1.bf16.xpose.msra.mxu0 %v2315
        %2354 = vmatprep.subr.bf16.mxu0 0
        %2355 = vmatpush2.bf16.xpose.msra.mxu0 0
        %2356 = vmatprep.subr.bf16.mxu0 0
        %2357 = vmatpush2.bf16.xpose.msra.mxu0 0
        %2358 = vmatprep.subr.bf16.mxu0 0
        %2359 = vmatpush2.bf16.xpose.msra.mxu0 0
        %2360 = vmatprep.subr.bf16.mxu0 0
        %2361 = vmatpush2.bf16.xpose.msra.mxu0 0
        %2362 = vmatprep.subr.bf16.mxu0 0
        %2363 = vmatpush2.bf16.xpose.msra.mxu0 0
        %2364 = vmatprep.subr.bf16.mxu0 0
        %2365 = vmatpush2.bf16.xpose.msra.mxu0 0
        %2366 = vmatprep.subr.bf16.mxu0 0
        %2367 = vmatpush2.bf16.xpose.msra.mxu0 0
        %2368 = vmatprep.subr.bf16.mxu0 0
        %2369 = vmatpush2.bf16.xpose.msra.mxu0 0
        %2370 = vmatprep.mubr.bf16.mxu0 0
        %2371 = vmatmul.mubr.bf16.gmra.mxu0 %v2291
        %v2372 = vpop.f32.mrf.mxu0
        %v2373 = vadd.f32 %v1630, %v2372
        %v2374 = vpop.f32.mrf.mxu0
        %v2375 = vpop.f32.mrf.mxu0
        %v2376 = vadd.f32 %v1631, %v2375
        %v2377 = vpop.f32.mrf.mxu0
        %2378 = vmatprep.mubr.bf16.mxu0 0
        %2379 = vmatmul.mubr.bf16.gmra.mxu0 %v2294
        %v2380 = vpop.f32.mrf.mxu0
        %v2381 = vadd.f32 %v1632, %v2380
        %v2382 = vpop.f32.mrf.mxu0
        %v2383 = vpop.f32.mrf.mxu0
        %v2384 = vadd.f32 %v1633, %v2383
        %v2385 = vpop.f32.mrf.mxu0
        %2386 = vmatprep.mubr.bf16.mxu0 0
        %2387 = vmatmul.mubr.bf16.gmra.mxu0 %v2297
        %v2388 = vpop.f32.mrf.mxu0
        %v2389 = vadd.f32 %v1634, %v2388
        %v2390 = vpop.f32.mrf.mxu0
        %v2391 = vpop.f32.mrf.mxu0
        %v2392 = vadd.f32 %v1635, %v2391
        %v2393 = vpop.f32.mrf.mxu0
        %2394 = vmatprep.mubr.bf16.mxu0 0
        %2395 = vmatmul.mubr.bf16.gmra.mxu0 %v2300
        %v2396 = vpop.f32.mrf.mxu0
        %v2397 = vadd.f32 %v1636, %v2396
        %v2398 = vpop.f32.mrf.mxu0
        %v2399 = vpop.f32.mrf.mxu0
        %v2400 = vadd.f32 %v1637, %v2399
        %v2401 = vpop.f32.mrf.mxu0
        %2402 = vmatprep.mubr.bf16.mxu0 0
        %2403 = vmatmul.mubr.bf16.gmra.mxu0 %v2303
        %v2404 = vpop.f32.mrf.mxu0
        %v2405 = vadd.f32 %v1638, %v2404
        %v2406 = vpop.f32.mrf.mxu0
        %v2407 = vpop.f32.mrf.mxu0
        %v2408 = vadd.f32 %v1639, %v2407
        %v2409 = vpop.f32.mrf.mxu0
        %2410 = vmatprep.mubr.bf16.mxu0 0
        %2411 = vmatmul.mubr.bf16.gmra.mxu0 %v2306
        %v2412 = vpop.f32.mrf.mxu0
        %v2413 = vadd.f32 %v1640, %v2412
        %v2414 = vpop.f32.mrf.mxu0
        %v2415 = vpop.f32.mrf.mxu0
        %v2416 = vadd.f32 %v1641, %v2415
        %v2417 = vpop.f32.mrf.mxu0
        %2418 = vmatprep.mubr.bf16.mxu0 0
        %2419 = vmatmul.mubr.bf16.gmra.mxu0 %v2309
        %v2420 = vpop.f32.mrf.mxu0
        %v2421 = vadd.f32 %v1642, %v2420
        %v2422 = vpop.f32.mrf.mxu0
        %v2423 = vpop.f32.mrf.mxu0
        %v2424 = vadd.f32 %v1643, %v2423
        %v2425 = vpop.f32.mrf.mxu0
        %2426 = vmatprep.mubr.bf16.mxu0 0
        %2427 = vmatmul.mubr.bf16.gmra.mxu0 %v2312
        %v2428 = vpop.f32.mrf.mxu0
        %v2429 = vadd.f32 %v1644, %v2428
        %v2430 = vpop.f32.mrf.mxu0
        %v2431 = vpop.f32.mrf.mxu0
        %v2432 = vadd.f32 %v1645, %v2431
        %v2433 = vpop.f32.mrf.mxu0
        %2434 = vdwg.mxu0
        %2435 = vmax.xlane.f32.xlu0 %v2373
        %v2436 = vpop.xlane.xlu0 %2435
        %2437 = vmax.xlane.f32.xlu0 %v2376
        %v2438 = vpop.xlane.xlu0 %2437
        %2439 = vmax.xlane.f32.xlu0 %v2381
        %v2440 = vpop.xlane.xlu0 %2439
        %2441 = vmax.xlane.f32.xlu0 %v2384
        %v2442 = vpop.xlane.xlu0 %2441
        %2443 = vmax.xlane.f32.xlu0 %v2389
        %v2444 = vpop.xlane.xlu0 %2443
        %2445 = vmax.xlane.f32.xlu0 %v2392
        %v2446 = vpop.xlane.xlu0 %2445
        %2447 = vmax.xlane.f32.xlu0 %v2397
        %v2448 = vpop.xlane.xlu0 %2447
        %2449 = vmax.xlane.f32.xlu0 %v2400
        %v2450 = vpop.xlane.xlu0 %2449
        %2451 = vmax.xlane.f32.xlu0 %v2405
        %v2452 = vpop.xlane.xlu0 %2451
        %2453 = vmax.xlane.f32.xlu0 %v2408
        %v2454 = vpop.xlane.xlu0 %2453
        %2455 = vmax.xlane.f32.xlu0 %v2413
        %v2456 = vpop.xlane.xlu0 %2455
        %2457 = vmax.xlane.f32.xlu0 %v2416
        %v2458 = vpop.xlane.xlu0 %2457
        %2459 = vmax.xlane.f32.xlu0 %v2421
        %v2460 = vpop.xlane.xlu0 %2459
        %2461 = vmax.xlane.f32.xlu0 %v2424
        %v2462 = vpop.xlane.xlu0 %2461
        %2463 = vmax.xlane.f32.xlu0 %v2429
        %v2464 = vpop.xlane.xlu0 %2463
        %2465 = vmax.xlane.f32.xlu0 %v2432
        %v2466 = vpop.xlane.xlu0 %2465
        %v2467 = vsub.f32 %v2373, %v2436
        %v2468 = vsub.f32 %v2376, %v2438
        %v2469 = vsub.f32 %v2381, %v2440
        %v2470 = vsub.f32 %v2384, %v2442
        %v2471 = vsub.f32 %v2389, %v2444
        %v2472 = vsub.f32 %v2392, %v2446
        %v2473 = vsub.f32 %v2397, %v2448
        %v2474 = vsub.f32 %v2400, %v2450
        %v2475 = vsub.f32 %v2405, %v2452
        %v2476 = vsub.f32 %v2408, %v2454
        %v2477 = vsub.f32 %v2413, %v2456
        %v2478 = vsub.f32 %v2416, %v2458
        %v2479 = vsub.f32 %v2421, %v2460
        %v2480 = vsub.f32 %v2424, %v2462
        %v2481 = vsub.f32 %v2429, %v2464
        %v2482 = vsub.f32 %v2432, %v2466
        %v2483 = vmul.f32 %v2467, 1.442695
        %v2484 = vpow.pop %v2483
        %v2485 = vmul.f32 %v2468, 1.442695
        %v2486 = vpow.pop %v2485
        %v2487 = vmul.f32 %v2469, 1.442695
        %v2488 = vpow.pop %v2487
        %v2489 = vmul.f32 %v2470, 1.442695
        %v2490 = vpow.pop %v2489
        %v2491 = vmul.f32 %v2471, 1.442695
        %v2492 = vpow.pop %v2491
        %v2493 = vmul.f32 %v2472, 1.442695
        %v2494 = vpow.pop %v2493
        %v2495 = vmul.f32 %v2473, 1.442695
        %v2496 = vpow.pop %v2495
        %v2497 = vmul.f32 %v2474, 1.442695
        %v2498 = vpow.pop %v2497
        %v2499 = vmul.f32 %v2475, 1.442695
        %v2500 = vpow.pop %v2499
        %v2501 = vmul.f32 %v2476, 1.442695
        %v2502 = vpow.pop %v2501
        %v2503 = vmul.f32 %v2477, 1.442695
        %v2504 = vpow.pop %v2503
        %v2505 = vmul.f32 %v2478, 1.442695
        %v2506 = vpow.pop %v2505
        %v2507 = vmul.f32 %v2479, 1.442695
        %v2508 = vpow.pop %v2507
        %v2509 = vmul.f32 %v2480, 1.442695
        %v2510 = vpow.pop %v2509
        %v2511 = vmul.f32 %v2481, 1.442695
        %v2512 = vpow.pop %v2511
        %v2513 = vmul.f32 %v2482, 1.442695
        %v2514 = vpow.pop %v2513
        %2515 = vadd.xlane.f32.xlu0 %v2484
        %v2516 = vpop.xlane.xlu0 %2515
        %2517 = vadd.xlane.f32.xlu0 %v2486
        %v2518 = vpop.xlane.xlu0 %2517
        %2519 = vadd.xlane.f32.xlu0 %v2488
        %v2520 = vpop.xlane.xlu0 %2519
        %2521 = vadd.xlane.f32.xlu0 %v2490
        %v2522 = vpop.xlane.xlu0 %2521
        %2523 = vadd.xlane.f32.xlu0 %v2492
        %v2524 = vpop.xlane.xlu0 %2523
        %2525 = vadd.xlane.f32.xlu0 %v2494
        %v2526 = vpop.xlane.xlu0 %2525
        %2527 = vadd.xlane.f32.xlu0 %v2496
        %v2528 = vpop.xlane.xlu0 %2527
        %2529 = vadd.xlane.f32.xlu0 %v2498
        %v2530 = vpop.xlane.xlu0 %2529
        %2531 = vadd.xlane.f32.xlu0 %v2500
        %v2532 = vpop.xlane.xlu0 %2531
        %2533 = vadd.xlane.f32.xlu0 %v2502
        %v2534 = vpop.xlane.xlu0 %2533
        %2535 = vadd.xlane.f32.xlu0 %v2504
        %v2536 = vpop.xlane.xlu0 %2535
        %2537 = vadd.xlane.f32.xlu0 %v2506
        %v2538 = vpop.xlane.xlu0 %2537
        %2539 = vadd.xlane.f32.xlu0 %v2508
        %v2540 = vpop.xlane.xlu0 %2539
        %2541 = vadd.xlane.f32.xlu0 %v2510
        %v2542 = vpop.xlane.xlu0 %2541
        %2543 = vadd.xlane.f32.xlu0 %v2512
        %v2544 = vpop.xlane.xlu0 %2543
        %2545 = vadd.xlane.f32.xlu0 %v2514
        %v2546 = vpop.xlane.xlu0 %2545
        %v2547 = vrcp.pop %v2516
        %v2548 = vrcp.pop %v2518
        %v2549 = vrcp.pop %v2520
        %v2550 = vrcp.pop %v2522
        %v2551 = vrcp.pop %v2524
        %v2552 = vrcp.pop %v2526
        %v2553 = vrcp.pop %v2528
        %v2554 = vrcp.pop %v2530
        %v2555 = vrcp.pop %v2532
        %v2556 = vrcp.pop %v2534
        %v2557 = vrcp.pop %v2536
        %v2558 = vrcp.pop %v2538
        %v2559 = vrcp.pop %v2540
        %v2560 = vrcp.pop %v2542
        %v2561 = vrcp.pop %v2544
        %v2562 = vrcp.pop %v2546
        %v2563 = vpack.c.bf16 %v2486, %v2484
        %v2564 = vpack.c.bf16 %v2490, %v2488
        %v2565 = vpack.c.bf16 %v2494, %v2492
        %v2566 = vpack.c.bf16 %v2498, %v2496
        %v2567 = vpack.c.bf16 %v2502, %v2500
        %v2568 = vpack.c.bf16 %v2506, %v2504
        %v2569 = vpack.c.bf16 %v2510, %v2508
        %v2570 = vpack.c.bf16 %v2514, %v2512
        %2579 = vrot.lane.b32.xlu0 %v1758, 96
        %v2580 = vpop.permute.xlu0 %2579
        %2581 = vrot.lane.b32.xlu0 %v1759, 96
        %v2582 = vpop.permute.xlu0 %2581
        %2583 = vrot.lane.b32.xlu0 %v1760, 96
        %v2584 = vpop.permute.xlu0 %2583
        %2585 = vrot.lane.b32.xlu0 %v1761, 96
        %v2586 = vpop.permute.xlu0 %2585
        %2587 = vrot.lane.b32.xlu0 %v1762, 96
        %v2588 = vpop.permute.xlu0 %2587
        %2589 = vrot.lane.b32.xlu0 %v1763, 96
        %v2590 = vpop.permute.xlu0 %2589
        %2591 = vrot.lane.b32.xlu0 %v1764, 96
        %v2592 = vpop.permute.xlu0 %2591
        %2593 = vrot.lane.b32.xlu0 %v1765, 96
        %v2594 = vpop.permute.xlu0 %2593
        %2603 = vmatprep.subr.bf16.mxu0 0
        %2604 = vmatpush1.bf16.msra.mxu0 %v2594
        %2605 = vmatprep.subr.bf16.mxu0 0
        %2606 = vmatpush1.bf16.msra.mxu0 %v2592
        %2607 = vmatprep.subr.bf16.mxu0 0
        %2608 = vmatpush1.bf16.msra.mxu0 %v2590
        %2609 = vmatprep.subr.bf16.mxu0 0
        %2610 = vmatpush1.bf16.msra.mxu0 %v2588
        %2611 = vmatprep.subr.bf16.mxu0 0
        %2612 = vmatpush1.bf16.msra.mxu0 %v2586
        %2613 = vmatprep.subr.bf16.mxu0 0
        %2614 = vmatpush1.bf16.msra.mxu0 %v2584
        %2615 = vmatprep.subr.bf16.mxu0 0
        %2616 = vmatpush1.bf16.msra.mxu0 %v2582
        %2617 = vmatprep.subr.bf16.mxu0 0
        %2618 = vmatpush1.bf16.msra.mxu0 %v2580
        %2619 = vmatprep.subr.bf16.mxu0 0
        %2620 = vmatpush2.bf16.msra.mxu0 0
        %2621 = vmatprep.subr.bf16.mxu0 0
        %2622 = vmatpush2.bf16.msra.mxu0 0
        %2623 = vmatprep.subr.bf16.mxu0 0
        %2624 = vmatpush2.bf16.msra.mxu0 0
        %2625 = vmatprep.subr.bf16.mxu0 0
        %2626 = vmatpush2.bf16.msra.mxu0 0
        %2627 = vmatprep.subr.bf16.mxu0 0
        %2628 = vmatpush2.bf16.msra.mxu0 0
        %2629 = vmatprep.subr.bf16.mxu0 0
        %2630 = vmatpush2.bf16.msra.mxu0 0
        %2631 = vmatprep.subr.bf16.mxu0 0
        %2632 = vmatpush2.bf16.msra.mxu0 0
        %2633 = vmatprep.subr.bf16.mxu0 0
        %2634 = vmatpush2.bf16.msra.mxu0 0
        %2635 = vmatprep.mubr.bf16.mxu0 0
        %2636 = vmatmul.mubr.bf16.gmra.mxu0 %v2563
        %v2637 = vpop.f32.mrf.mxu0
        %v2638 = vadd.f32 0.0, %v2637
        %v2639 = vpop.f32.mrf.mxu0
        %v2640 = vpop.f32.mrf.mxu0
        %v2641 = vadd.f32 0.0, %v2640
        %v2642 = vpop.f32.mrf.mxu0
        %2643 = vmatprep.mubr.bf16.mxu0 0
        %2644 = vmatmul.mubr.bf16.gmra.mxu0 %v2564
        %v2645 = vpop.f32.mrf.mxu0
        %v2646 = vadd.f32 0.0, %v2645
        %v2647 = vpop.f32.mrf.mxu0
        %v2648 = vpop.f32.mrf.mxu0
        %v2649 = vadd.f32 0.0, %v2648
        %v2650 = vpop.f32.mrf.mxu0
        %2651 = vmatprep.mubr.bf16.mxu0 0
        %2652 = vmatmul.mubr.bf16.gmra.mxu0 %v2565
        %v2653 = vpop.f32.mrf.mxu0
        %v2654 = vadd.f32 0.0, %v2653
        %v2655 = vpop.f32.mrf.mxu0
        %v2656 = vpop.f32.mrf.mxu0
        %v2657 = vadd.f32 0.0, %v2656
        %v2658 = vpop.f32.mrf.mxu0
        %2659 = vmatprep.mubr.bf16.mxu0 0
        %2660 = vmatmul.mubr.bf16.gmra.mxu0 %v2566
        %v2661 = vpop.f32.mrf.mxu0
        %v2662 = vadd.f32 0.0, %v2661
        %v2663 = vpop.f32.mrf.mxu0
        %v2664 = vpop.f32.mrf.mxu0
        %v2665 = vadd.f32 0.0, %v2664
        %v2666 = vpop.f32.mrf.mxu0
        %2667 = vmatprep.mubr.bf16.mxu0 0
        %2668 = vmatmul.mubr.bf16.gmra.mxu0 %v2567
        %v2669 = vpop.f32.mrf.mxu0
        %v2670 = vadd.f32 0.0, %v2669
        %v2671 = vpop.f32.mrf.mxu0
        %v2672 = vpop.f32.mrf.mxu0
        %v2673 = vadd.f32 0.0, %v2672
        %v2674 = vpop.f32.mrf.mxu0
        %2675 = vmatprep.mubr.bf16.mxu0 0
        %2676 = vmatmul.mubr.bf16.gmra.mxu0 %v2568
        %v2677 = vpop.f32.mrf.mxu0
        %v2678 = vadd.f32 0.0, %v2677
        %v2679 = vpop.f32.mrf.mxu0
        %v2680 = vpop.f32.mrf.mxu0
        %v2681 = vadd.f32 0.0, %v2680
        %v2682 = vpop.f32.mrf.mxu0
        %2683 = vmatprep.mubr.bf16.mxu0 0
        %2684 = vmatmul.mubr.bf16.gmra.mxu0 %v2569
        %v2685 = vpop.f32.mrf.mxu0
        %v2686 = vadd.f32 0.0, %v2685
        %v2687 = vpop.f32.mrf.mxu0
        %v2688 = vpop.f32.mrf.mxu0
        %v2689 = vadd.f32 0.0, %v2688
        %v2690 = vpop.f32.mrf.mxu0
        %2691 = vmatprep.mubr.bf16.mxu0 0
        %2692 = vmatmul.mubr.bf16.gmra.mxu0 %v2570
        %v2693 = vpop.f32.mrf.mxu0
        %v2694 = vadd.f32 0.0, %v2693
        %v2695 = vpop.f32.mrf.mxu0
        %v2696 = vpop.f32.mrf.mxu0
        %v2697 = vadd.f32 0.0, %v2696
        %v2698 = vpop.f32.mrf.mxu0
        %2699 = vdwg.mxu0
        %v2700 = vmul.f32 %v2638, %v2547
        %v2701 = vmul.f32 %v2641, %v2548
        %v2702 = vmul.f32 %v2646, %v2549
        %v2703 = vmul.f32 %v2649, %v2550
        %v2704 = vmul.f32 %v2654, %v2551
        %v2705 = vmul.f32 %v2657, %v2552
        %v2706 = vmul.f32 %v2662, %v2553
        %v2707 = vmul.f32 %v2665, %v2554
        %v2708 = vmul.f32 %v2670, %v2555
        %v2709 = vmul.f32 %v2673, %v2556
        %v2710 = vmul.f32 %v2678, %v2557
        %v2711 = vmul.f32 %v2681, %v2558
        %v2712 = vmul.f32 %v2686, %v2559
        %v2713 = vmul.f32 %v2689, %v2560
        %v2714 = vmul.f32 %v2694, %v2561
        %v2715 = vmul.f32 %v2697, %v2562
        %v2716 = vpack.c.bf16 %v2701, %v2700
        %v2717 = vpack.c.bf16 %v2703, %v2702
        %v2718 = vpack.c.bf16 %v2705, %v2704
        %v2719 = vpack.c.bf16 %v2707, %v2706
        %v2720 = vpack.c.bf16 %v2709, %v2708
        %v2721 = vpack.c.bf16 %v2711, %v2710
        %v2722 = vpack.c.bf16 %v2713, %v2712
        %v2723 = vpack.c.bf16 %v2715, %v2714
        %v2732 = vunpack.c.l.b16 %v2716
        %v2733 = vunpack.c.h.b16 %v2716
        %v2734 = vunpack.c.l.b16 %v2717
        %v2735 = vunpack.c.h.b16 %v2717
        %v2736 = vunpack.c.l.b16 %v2718
        %v2737 = vunpack.c.h.b16 %v2718
        %v2738 = vunpack.c.l.b16 %v2719
        %v2739 = vunpack.c.h.b16 %v2719
        %v2740 = vunpack.c.l.b16 %v2720
        %v2741 = vunpack.c.h.b16 %v2720
        %v2742 = vunpack.c.l.b16 %v2721
        %v2743 = vunpack.c.h.b16 %v2721
        %v2744 = vunpack.c.l.b16 %v2722
        %v2745 = vunpack.c.h.b16 %v2722
        %v2746 = vunpack.c.l.b16 %v2723
        %v2747 = vunpack.c.h.b16 %v2723
        %v2748 = vpack.c.b16 %v2732, %v2732
        %v2749 = vpack.c.b16 %v2733, %v2733
        %v2750 = vpack.c.b16 %v2734, %v2734
        %v2751 = vpack.c.b16 %v2735, %v2735
        %v2752 = vpack.c.b16 %v2736, %v2736
        %v2753 = vpack.c.b16 %v2737, %v2737
        %v2754 = vpack.c.b16 %v2738, %v2738
        %v2755 = vpack.c.b16 %v2739, %v2739
        %v2756 = vpack.c.b16 %v2740, %v2740
        %v2757 = vpack.c.b16 %v2741, %v2741
        %v2758 = vpack.c.b16 %v2742, %v2742
        %v2759 = vpack.c.b16 %v2743, %v2743
        %v2760 = vpack.c.b16 %v2744, %v2744
        %v2761 = vpack.c.b16 %v2745, %v2745
        %v2762 = vpack.c.b16 %v2746, %v2746
        %v2763 = vpack.c.b16 %v2747, %v2747
        %2764 = vrot.lane.b32.xlu0 %v2748, 32
        %v2765 = vpop.permute.xlu0 %2764
        %2766 = vrot.lane.b32.xlu0 %v2749, 32
        %v2767 = vpop.permute.xlu0 %2766
        %2768 = vrot.lane.b32.xlu0 %v2750, 32
        %v2769 = vpop.permute.xlu0 %2768
        %2770 = vrot.lane.b32.xlu0 %v2751, 32
        %v2771 = vpop.permute.xlu0 %2770
        %2772 = vrot.lane.b32.xlu0 %v2752, 32
        %v2773 = vpop.permute.xlu0 %2772
        %2774 = vrot.lane.b32.xlu0 %v2753, 32
        %v2775 = vpop.permute.xlu0 %2774
        %2776 = vrot.lane.b32.xlu0 %v2754, 32
        %v2777 = vpop.permute.xlu0 %2776
        %2778 = vrot.lane.b32.xlu0 %v2755, 32
        %v2779 = vpop.permute.xlu0 %2778
        %2780 = vrot.lane.b32.xlu0 %v2756, 32
        %v2781 = vpop.permute.xlu0 %2780
        %2782 = vrot.lane.b32.xlu0 %v2757, 32
        %v2783 = vpop.permute.xlu0 %2782
        %2784 = vrot.lane.b32.xlu0 %v2758, 32
        %v2785 = vpop.permute.xlu0 %2784
        %2786 = vrot.lane.b32.xlu0 %v2759, 32
        %v2787 = vpop.permute.xlu0 %2786
        %2788 = vrot.lane.b32.xlu0 %v2760, 32
        %v2789 = vpop.permute.xlu0 %2788
        %2790 = vrot.lane.b32.xlu0 %v2761, 32
        %v2791 = vpop.permute.xlu0 %2790
        %2792 = vrot.lane.b32.xlu0 %v2762, 32
        %v2793 = vpop.permute.xlu0 %2792
        %2794 = vrot.lane.b32.xlu0 %v2763, 32
        %v2795 = vpop.permute.xlu0 %2794
        %vm2812 = vcmask 519424
        %2813 = vst.msk [vmem:[#allocation2] sm:$0xf] %vm2812, %v2765
        %2814 = vst.msk [vmem:[#allocation2 + $0x4] sm:$0xf] %vm2812, %v2767
        %2815 = vst.msk [vmem:[#allocation2 + $0x8] sm:$0xf] %vm2812, %v2769
        %2816 = vst.msk [vmem:[#allocation2 + $0xc] sm:$0xf] %vm2812, %v2771
        %2817 = vst.msk [vmem:[#allocation2 + $0x10] sm:$0xf] %vm2812, %v2773
        %2818 = vst.msk [vmem:[#allocation2 + $0x14] sm:$0xf] %vm2812, %v2775
        %2819 = vst.msk [vmem:[#allocation2 + $0x18] sm:$0xf] %vm2812, %v2777
        %2820 = vst.msk [vmem:[#allocation2 + $0x1c] sm:$0xf] %vm2812, %v2779
        %2821 = vst.msk [vmem:[#allocation2 + $0x20] sm:$0xf] %vm2812, %v2781
        %2822 = vst.msk [vmem:[#allocation2 + $0x24] sm:$0xf] %vm2812, %v2783
        %2823 = vst.msk [vmem:[#allocation2 + $0x28] sm:$0xf] %vm2812, %v2785
        %2824 = vst.msk [vmem:[#allocation2 + $0x2c] sm:$0xf] %vm2812, %v2787
        %2825 = vst.msk [vmem:[#allocation2 + $0x30] sm:$0xf] %vm2812, %v2789
        %2826 = vst.msk [vmem:[#allocation2 + $0x34] sm:$0xf] %vm2812, %v2791
        %2827 = vst.msk [vmem:[#allocation2 + $0x38] sm:$0xf] %vm2812, %v2793
        %2828 = vst.msk [vmem:[#allocation2 + $0x3c] sm:$0xf] %vm2812, %v2795
        %2829 = vrot.lane.b32.xlu0 %v1694, 64
        %v2830 = vpop.permute.xlu0 %2829
        %2831 = vrot.lane.b32.xlu0 %v1695, 64
        %v2832 = vpop.permute.xlu0 %2831
        %2833 = vrot.lane.b32.xlu0 %v1696, 64
        %v2834 = vpop.permute.xlu0 %2833
        %2835 = vrot.lane.b32.xlu0 %v1697, 64
        %v2836 = vpop.permute.xlu0 %2835
        %2837 = vrot.lane.b32.xlu0 %v1698, 64
        %v2838 = vpop.permute.xlu0 %2837
        %2839 = vrot.lane.b32.xlu0 %v1699, 64
        %v2840 = vpop.permute.xlu0 %2839
        %2841 = vrot.lane.b32.xlu0 %v1700, 64
        %v2842 = vpop.permute.xlu0 %2841
        %2843 = vrot.lane.b32.xlu0 %v1701, 64
        %v2844 = vpop.permute.xlu0 %2843
        %2845 = vrot.lane.b32.xlu0 %v1750, 64
        %v2846 = vpop.permute.xlu0 %2845
        %2847 = vrot.lane.b32.xlu0 %v1751, 64
        %v2848 = vpop.permute.xlu0 %2847
        %2849 = vrot.lane.b32.xlu0 %v1752, 64
        %v2850 = vpop.permute.xlu0 %2849
        %2851 = vrot.lane.b32.xlu0 %v1753, 64
        %v2852 = vpop.permute.xlu0 %2851
        %2853 = vrot.lane.b32.xlu0 %v1754, 64
        %v2854 = vpop.permute.xlu0 %2853
        %2855 = vrot.lane.b32.xlu0 %v1755, 64
        %v2856 = vpop.permute.xlu0 %2855
        %2857 = vrot.lane.b32.xlu0 %v1756, 64
        %v2858 = vpop.permute.xlu0 %2857
        %2859 = vrot.lane.b32.xlu0 %v1757, 64
        %v2860 = vpop.permute.xlu0 %2859
        %v2862 = vsel %vm1766, %v2830, 0
        %v2865 = vsel %vm1766, %v2832, 0
        %v2868 = vsel %vm1766, %v2834, 0
        %v2871 = vsel %vm1766, %v2836, 0
        %v2874 = vsel %vm1766, %v2838, 0
        %v2877 = vsel %vm1766, %v2840, 0
        %v2880 = vsel %vm1766, %v2842, 0
        %v2883 = vsel %vm1766, %v2844, 0
        %v2886 = vsel %vm1766, %v2846, 0
        %v2889 = vsel %vm1766, %v2848, 0
        %v2892 = vsel %vm1766, %v2850, 0
        %v2895 = vsel %vm1766, %v2852, 0
        %v2898 = vsel %vm1766, %v2854, 0
        %v2901 = vsel %vm1766, %v2856, 0
        %v2904 = vsel %vm1766, %v2858, 0
        %v2907 = vsel %vm1766, %v2860, 0
        %2909 = vmatprep.subr.bf16.mxu0 0
        %2910 = vmatpush1.bf16.xpose.msra.mxu0 %v2907
        %2911 = vmatprep.subr.bf16.mxu0 0
        %2912 = vmatpush1.bf16.xpose.msra.mxu0 %v2904
        %2913 = vmatprep.subr.bf16.mxu0 0
        %2914 = vmatpush1.bf16.xpose.msra.mxu0 %v2901
        %2915 = vmatprep.subr.bf16.mxu0 0
        %2916 = vmatpush1.bf16.xpose.msra.mxu0 %v2898
        %2917 = vmatprep.subr.bf16.mxu0 0
        %2918 = vmatpush1.bf16.xpose.msra.mxu0 %v2895
        %2919 = vmatprep.subr.bf16.mxu0 0
        %2920 = vmatpush1.bf16.xpose.msra.mxu0 %v2892
        %2921 = vmatprep.subr.bf16.mxu0 0
        %2922 = vmatpush1.bf16.xpose.msra.mxu0 %v2889
        %2923 = vmatprep.subr.bf16.mxu0 0
        %2924 = vmatpush1.bf16.xpose.msra.mxu0 %v2886
        %2925 = vmatprep.subr.bf16.mxu0 0
        %2926 = vmatpush2.bf16.xpose.msra.mxu0 0
        %2927 = vmatprep.subr.bf16.mxu0 0
        %2928 = vmatpush2.bf16.xpose.msra.mxu0 0
        %2929 = vmatprep.subr.bf16.mxu0 0
        %2930 = vmatpush2.bf16.xpose.msra.mxu0 0
        %2931 = vmatprep.subr.bf16.mxu0 0
        %2932 = vmatpush2.bf16.xpose.msra.mxu0 0
        %2933 = vmatprep.subr.bf16.mxu0 0
        %2934 = vmatpush2.bf16.xpose.msra.mxu0 0
        %2935 = vmatprep.subr.bf16.mxu0 0
        %2936 = vmatpush2.bf16.xpose.msra.mxu0 0
        %2937 = vmatprep.subr.bf16.mxu0 0
        %2938 = vmatpush2.bf16.xpose.msra.mxu0 0
        %2939 = vmatprep.subr.bf16.mxu0 0
        %2940 = vmatpush2.bf16.xpose.msra.mxu0 0
        %2941 = vmatprep.mubr.bf16.mxu0 0
        %2942 = vmatmul.mubr.bf16.gmra.mxu0 %v2862
        %v2943 = vpop.f32.mrf.mxu0
        %v2944 = vadd.f32 %v1630, %v2943
        %v2945 = vpop.f32.mrf.mxu0
        %v2946 = vpop.f32.mrf.mxu0
        %v2947 = vadd.f32 %v1631, %v2946
        %v2948 = vpop.f32.mrf.mxu0
        %2949 = vmatprep.mubr.bf16.mxu0 0
        %2950 = vmatmul.mubr.bf16.gmra.mxu0 %v2865
        %v2951 = vpop.f32.mrf.mxu0
        %v2952 = vadd.f32 %v1632, %v2951
        %v2953 = vpop.f32.mrf.mxu0
        %v2954 = vpop.f32.mrf.mxu0
        %v2955 = vadd.f32 %v1633, %v2954
        %v2956 = vpop.f32.mrf.mxu0
        %2957 = vmatprep.mubr.bf16.mxu0 0
        %2958 = vmatmul.mubr.bf16.gmra.mxu0 %v2868
        %v2959 = vpop.f32.mrf.mxu0
        %v2960 = vadd.f32 %v1634, %v2959
        %v2961 = vpop.f32.mrf.mxu0
        %v2962 = vpop.f32.mrf.mxu0
        %v2963 = vadd.f32 %v1635, %v2962
        %v2964 = vpop.f32.mrf.mxu0
        %2965 = vmatprep.mubr.bf16.mxu0 0
        %2966 = vmatmul.mubr.bf16.gmra.mxu0 %v2871
        %v2967 = vpop.f32.mrf.mxu0
        %v2968 = vadd.f32 %v1636, %v2967
        %v2969 = vpop.f32.mrf.mxu0
        %v2970 = vpop.f32.mrf.mxu0
        %v2971 = vadd.f32 %v1637, %v2970
        %v2972 = vpop.f32.mrf.mxu0
        %2973 = vmatprep.mubr.bf16.mxu0 0
        %2974 = vmatmul.mubr.bf16.gmra.mxu0 %v2874
        %v2975 = vpop.f32.mrf.mxu0
        %v2976 = vadd.f32 %v1638, %v2975
        %v2977 = vpop.f32.mrf.mxu0
        %v2978 = vpop.f32.mrf.mxu0
        %v2979 = vadd.f32 %v1639, %v2978
        %v2980 = vpop.f32.mrf.mxu0
        %2981 = vmatprep.mubr.bf16.mxu0 0
        %2982 = vmatmul.mubr.bf16.gmra.mxu0 %v2877
        %v2983 = vpop.f32.mrf.mxu0
        %v2984 = vadd.f32 %v1640, %v2983
        %v2985 = vpop.f32.mrf.mxu0
        %v2986 = vpop.f32.mrf.mxu0
        %v2987 = vadd.f32 %v1641, %v2986
        %v2988 = vpop.f32.mrf.mxu0
        %2989 = vmatprep.mubr.bf16.mxu0 0
        %2990 = vmatmul.mubr.bf16.gmra.mxu0 %v2880
        %v2991 = vpop.f32.mrf.mxu0
        %v2992 = vadd.f32 %v1642, %v2991
        %v2993 = vpop.f32.mrf.mxu0
        %v2994 = vpop.f32.mrf.mxu0
        %v2995 = vadd.f32 %v1643, %v2994
        %v2996 = vpop.f32.mrf.mxu0
        %2997 = vmatprep.mubr.bf16.mxu0 0
        %2998 = vmatmul.mubr.bf16.gmra.mxu0 %v2883
        %v2999 = vpop.f32.mrf.mxu0
        %v3000 = vadd.f32 %v1644, %v2999
        %v3001 = vpop.f32.mrf.mxu0
        %v3002 = vpop.f32.mrf.mxu0
        %v3003 = vadd.f32 %v1645, %v3002
        %v3004 = vpop.f32.mrf.mxu0
        %3005 = vdwg.mxu0
        %3006 = vmax.xlane.f32.xlu0 %v2944
        %v3007 = vpop.xlane.xlu0 %3006
        %3008 = vmax.xlane.f32.xlu0 %v2947
        %v3009 = vpop.xlane.xlu0 %3008
        %3010 = vmax.xlane.f32.xlu0 %v2952
        %v3011 = vpop.xlane.xlu0 %3010
        %3012 = vmax.xlane.f32.xlu0 %v2955
        %v3013 = vpop.xlane.xlu0 %3012
        %3014 = vmax.xlane.f32.xlu0 %v2960
        %v3015 = vpop.xlane.xlu0 %3014
        %3016 = vmax.xlane.f32.xlu0 %v2963
        %v3017 = vpop.xlane.xlu0 %3016
        %3018 = vmax.xlane.f32.xlu0 %v2968
        %v3019 = vpop.xlane.xlu0 %3018
        %3020 = vmax.xlane.f32.xlu0 %v2971
        %v3021 = vpop.xlane.xlu0 %3020
        %3022 = vmax.xlane.f32.xlu0 %v2976
        %v3023 = vpop.xlane.xlu0 %3022
        %3024 = vmax.xlane.f32.xlu0 %v2979
        %v3025 = vpop.xlane.xlu0 %3024
        %3026 = vmax.xlane.f32.xlu0 %v2984
        %v3027 = vpop.xlane.xlu0 %3026
        %3028 = vmax.xlane.f32.xlu0 %v2987
        %v3029 = vpop.xlane.xlu0 %3028
        %3030 = vmax.xlane.f32.xlu0 %v2992
        %v3031 = vpop.xlane.xlu0 %3030
        %3032 = vmax.xlane.f32.xlu0 %v2995
        %v3033 = vpop.xlane.xlu0 %3032
        %3034 = vmax.xlane.f32.xlu0 %v3000
        %v3035 = vpop.xlane.xlu0 %3034
        %3036 = vmax.xlane.f32.xlu0 %v3003
        %v3037 = vpop.xlane.xlu0 %3036
        %v3038 = vsub.f32 %v2944, %v3007
        %v3039 = vsub.f32 %v2947, %v3009
        %v3040 = vsub.f32 %v2952, %v3011
        %v3041 = vsub.f32 %v2955, %v3013
        %v3042 = vsub.f32 %v2960, %v3015
        %v3043 = vsub.f32 %v2963, %v3017
        %v3044 = vsub.f32 %v2968, %v3019
        %v3045 = vsub.f32 %v2971, %v3021
        %v3046 = vsub.f32 %v2976, %v3023
        %v3047 = vsub.f32 %v2979, %v3025
        %v3048 = vsub.f32 %v2984, %v3027
        %v3049 = vsub.f32 %v2987, %v3029
        %v3050 = vsub.f32 %v2992, %v3031
        %v3051 = vsub.f32 %v2995, %v3033
        %v3052 = vsub.f32 %v3000, %v3035
        %v3053 = vsub.f32 %v3003, %v3037
        %v3054 = vmul.f32 %v3038, 1.442695
        %v3055 = vpow.pop %v3054
        %v3056 = vmul.f32 %v3039, 1.442695
        %v3057 = vpow.pop %v3056
        %v3058 = vmul.f32 %v3040, 1.442695
        %v3059 = vpow.pop %v3058
        %v3060 = vmul.f32 %v3041, 1.442695
        %v3061 = vpow.pop %v3060
        %v3062 = vmul.f32 %v3042, 1.442695
        %v3063 = vpow.pop %v3062
        %v3064 = vmul.f32 %v3043, 1.442695
        %v3065 = vpow.pop %v3064
        %v3066 = vmul.f32 %v3044, 1.442695
        %v3067 = vpow.pop %v3066
        %v3068 = vmul.f32 %v3045, 1.442695
        %v3069 = vpow.pop %v3068
        %v3070 = vmul.f32 %v3046, 1.442695
        %v3071 = vpow.pop %v3070
        %v3072 = vmul.f32 %v3047, 1.442695
        %v3073 = vpow.pop %v3072
        %v3074 = vmul.f32 %v3048, 1.442695
        %v3075 = vpow.pop %v3074
        %v3076 = vmul.f32 %v3049, 1.442695
        %v3077 = vpow.pop %v3076
        %v3078 = vmul.f32 %v3050, 1.442695
        %v3079 = vpow.pop %v3078
        %v3080 = vmul.f32 %v3051, 1.442695
        %v3081 = vpow.pop %v3080
        %v3082 = vmul.f32 %v3052, 1.442695
        %v3083 = vpow.pop %v3082
        %v3084 = vmul.f32 %v3053, 1.442695
        %v3085 = vpow.pop %v3084
        %3086 = vadd.xlane.f32.xlu0 %v3055
        %v3087 = vpop.xlane.xlu0 %3086
        %3088 = vadd.xlane.f32.xlu0 %v3057
        %v3089 = vpop.xlane.xlu0 %3088
        %3090 = vadd.xlane.f32.xlu0 %v3059
        %v3091 = vpop.xlane.xlu0 %3090
        %3092 = vadd.xlane.f32.xlu0 %v3061
        %v3093 = vpop.xlane.xlu0 %3092
        %3094 = vadd.xlane.f32.xlu0 %v3063
        %v3095 = vpop.xlane.xlu0 %3094
        %3096 = vadd.xlane.f32.xlu0 %v3065
        %v3097 = vpop.xlane.xlu0 %3096
        %3098 = vadd.xlane.f32.xlu0 %v3067
        %v3099 = vpop.xlane.xlu0 %3098
        %3100 = vadd.xlane.f32.xlu0 %v3069
        %v3101 = vpop.xlane.xlu0 %3100
        %3102 = vadd.xlane.f32.xlu0 %v3071
        %v3103 = vpop.xlane.xlu0 %3102
        %3104 = vadd.xlane.f32.xlu0 %v3073
        %v3105 = vpop.xlane.xlu0 %3104
        %3106 = vadd.xlane.f32.xlu0 %v3075
        %v3107 = vpop.xlane.xlu0 %3106
        %3108 = vadd.xlane.f32.xlu0 %v3077
        %v3109 = vpop.xlane.xlu0 %3108
        %3110 = vadd.xlane.f32.xlu0 %v3079
        %v3111 = vpop.xlane.xlu0 %3110
        %3112 = vadd.xlane.f32.xlu0 %v3081
        %v3113 = vpop.xlane.xlu0 %3112
        %3114 = vadd.xlane.f32.xlu0 %v3083
        %v3115 = vpop.xlane.xlu0 %3114
        %3116 = vadd.xlane.f32.xlu0 %v3085
        %v3117 = vpop.xlane.xlu0 %3116
        %v3118 = vrcp.pop %v3087
        %v3119 = vrcp.pop %v3089
        %v3120 = vrcp.pop %v3091
        %v3121 = vrcp.pop %v3093
        %v3122 = vrcp.pop %v3095
        %v3123 = vrcp.pop %v3097
        %v3124 = vrcp.pop %v3099
        %v3125 = vrcp.pop %v3101
        %v3126 = vrcp.pop %v3103
        %v3127 = vrcp.pop %v3105
        %v3128 = vrcp.pop %v3107
        %v3129 = vrcp.pop %v3109
        %v3130 = vrcp.pop %v3111
        %v3131 = vrcp.pop %v3113
        %v3132 = vrcp.pop %v3115
        %v3133 = vrcp.pop %v3117
        %v3134 = vpack.c.bf16 %v3057, %v3055
        %v3135 = vpack.c.bf16 %v3061, %v3059
        %v3136 = vpack.c.bf16 %v3065, %v3063
        %v3137 = vpack.c.bf16 %v3069, %v3067
        %v3138 = vpack.c.bf16 %v3073, %v3071
        %v3139 = vpack.c.bf16 %v3077, %v3075
        %v3140 = vpack.c.bf16 %v3081, %v3079
        %v3141 = vpack.c.bf16 %v3085, %v3083
        %3142 = vrot.lane.b32.xlu0 %v1758, 64
        %v3143 = vpop.permute.xlu0 %3142
        %3144 = vrot.lane.b32.xlu0 %v1759, 64
        %v3145 = vpop.permute.xlu0 %3144
        %3146 = vrot.lane.b32.xlu0 %v1760, 64
        %v3147 = vpop.permute.xlu0 %3146
        %3148 = vrot.lane.b32.xlu0 %v1761, 64
        %v3149 = vpop.permute.xlu0 %3148
        %3150 = vrot.lane.b32.xlu0 %v1762, 64
        %v3151 = vpop.permute.xlu0 %3150
        %3152 = vrot.lane.b32.xlu0 %v1763, 64
        %v3153 = vpop.permute.xlu0 %3152
        %3154 = vrot.lane.b32.xlu0 %v1764, 64
        %v3155 = vpop.permute.xlu0 %3154
        %3156 = vrot.lane.b32.xlu0 %v1765, 64
        %v3157 = vpop.permute.xlu0 %3156
        %3166 = vmatprep.subr.bf16.mxu0 0
        %3167 = vmatpush1.bf16.msra.mxu0 %v3157
        %3168 = vmatprep.subr.bf16.mxu0 0
        %3169 = vmatpush1.bf16.msra.mxu0 %v3155
        %3170 = vmatprep.subr.bf16.mxu0 0
        %3171 = vmatpush1.bf16.msra.mxu0 %v3153
        %3172 = vmatprep.subr.bf16.mxu0 0
        %3173 = vmatpush1.bf16.msra.mxu0 %v3151
        %3174 = vmatprep.subr.bf16.mxu0 0
        %3175 = vmatpush1.bf16.msra.mxu0 %v3149
        %3176 = vmatprep.subr.bf16.mxu0 0
        %3177 = vmatpush1.bf16.msra.mxu0 %v3147
        %3178 = vmatprep.subr.bf16.mxu0 0
        %3179 = vmatpush1.bf16.msra.mxu0 %v3145
        %3180 = vmatprep.subr.bf16.mxu0 0
        %3181 = vmatpush1.bf16.msra.mxu0 %v3143
        %3182 = vmatprep.subr.bf16.mxu0 0
        %3183 = vmatpush2.bf16.msra.mxu0 0
        %3184 = vmatprep.subr.bf16.mxu0 0
        %3185 = vmatpush2.bf16.msra.mxu0 0
        %3186 = vmatprep.subr.bf16.mxu0 0
        %3187 = vmatpush2.bf16.msra.mxu0 0
        %3188 = vmatprep.subr.bf16.mxu0 0
        %3189 = vmatpush2.bf16.msra.mxu0 0
        %3190 = vmatprep.subr.bf16.mxu0 0
        %3191 = vmatpush2.bf16.msra.mxu0 0
        %3192 = vmatprep.subr.bf16.mxu0 0
        %3193 = vmatpush2.bf16.msra.mxu0 0
        %3194 = vmatprep.subr.bf16.mxu0 0
        %3195 = vmatpush2.bf16.msra.mxu0 0
        %3196 = vmatprep.subr.bf16.mxu0 0
        %3197 = vmatpush2.bf16.msra.mxu0 0
        %3198 = vmatprep.mubr.bf16.mxu0 0
        %3199 = vmatmul.mubr.bf16.gmra.mxu0 %v3134
        %v3200 = vpop.f32.mrf.mxu0
        %v3201 = vadd.f32 0.0, %v3200
        %v3202 = vpop.f32.mrf.mxu0
        %v3203 = vpop.f32.mrf.mxu0
        %v3204 = vadd.f32 0.0, %v3203
        %v3205 = vpop.f32.mrf.mxu0
        %3206 = vmatprep.mubr.bf16.mxu0 0
        %3207 = vmatmul.mubr.bf16.gmra.mxu0 %v3135
        %v3208 = vpop.f32.mrf.mxu0
        %v3209 = vadd.f32 0.0, %v3208
        %v3210 = vpop.f32.mrf.mxu0
        %v3211 = vpop.f32.mrf.mxu0
        %v3212 = vadd.f32 0.0, %v3211
        %v3213 = vpop.f32.mrf.mxu0
        %3214 = vmatprep.mubr.bf16.mxu0 0
        %3215 = vmatmul.mubr.bf16.gmra.mxu0 %v3136
        %v3216 = vpop.f32.mrf.mxu0
        %v3217 = vadd.f32 0.0, %v3216
        %v3218 = vpop.f32.mrf.mxu0
        %v3219 = vpop.f32.mrf.mxu0
        %v3220 = vadd.f32 0.0, %v3219
        %v3221 = vpop.f32.mrf.mxu0
        %3222 = vmatprep.mubr.bf16.mxu0 0
        %3223 = vmatmul.mubr.bf16.gmra.mxu0 %v3137
        %v3224 = vpop.f32.mrf.mxu0
        %v3225 = vadd.f32 0.0, %v3224
        %v3226 = vpop.f32.mrf.mxu0
        %v3227 = vpop.f32.mrf.mxu0
        %v3228 = vadd.f32 0.0, %v3227
        %v3229 = vpop.f32.mrf.mxu0
        %3230 = vmatprep.mubr.bf16.mxu0 0
        %3231 = vmatmul.mubr.bf16.gmra.mxu0 %v3138
        %v3232 = vpop.f32.mrf.mxu0
        %v3233 = vadd.f32 0.0, %v3232
        %v3234 = vpop.f32.mrf.mxu0
        %v3235 = vpop.f32.mrf.mxu0
        %v3236 = vadd.f32 0.0, %v3235
        %v3237 = vpop.f32.mrf.mxu0
        %3238 = vmatprep.mubr.bf16.mxu0 0
        %3239 = vmatmul.mubr.bf16.gmra.mxu0 %v3139
        %v3240 = vpop.f32.mrf.mxu0
        %v3241 = vadd.f32 0.0, %v3240
        %v3242 = vpop.f32.mrf.mxu0
        %v3243 = vpop.f32.mrf.mxu0
        %v3244 = vadd.f32 0.0, %v3243
        %v3245 = vpop.f32.mrf.mxu0
        %3246 = vmatprep.mubr.bf16.mxu0 0
        %3247 = vmatmul.mubr.bf16.gmra.mxu0 %v3140
        %v3248 = vpop.f32.mrf.mxu0
        %v3249 = vadd.f32 0.0, %v3248
        %v3250 = vpop.f32.mrf.mxu0
        %v3251 = vpop.f32.mrf.mxu0
        %v3252 = vadd.f32 0.0, %v3251
        %v3253 = vpop.f32.mrf.mxu0
        %3254 = vmatprep.mubr.bf16.mxu0 0
        %3255 = vmatmul.mubr.bf16.gmra.mxu0 %v3141
        %v3256 = vpop.f32.mrf.mxu0
        %v3257 = vadd.f32 0.0, %v3256
        %v3258 = vpop.f32.mrf.mxu0
        %v3259 = vpop.f32.mrf.mxu0
        %v3260 = vadd.f32 0.0, %v3259
        %v3261 = vpop.f32.mrf.mxu0
        %3262 = vdwg.mxu0
        %v3263 = vmul.f32 %v3201, %v3118
        %v3264 = vmul.f32 %v3204, %v3119
        %v3265 = vmul.f32 %v3209, %v3120
        %v3266 = vmul.f32 %v3212, %v3121
        %v3267 = vmul.f32 %v3217, %v3122
        %v3268 = vmul.f32 %v3220, %v3123
        %v3269 = vmul.f32 %v3225, %v3124
        %v3270 = vmul.f32 %v3228, %v3125
        %v3271 = vmul.f32 %v3233, %v3126
        %v3272 = vmul.f32 %v3236, %v3127
        %v3273 = vmul.f32 %v3241, %v3128
        %v3274 = vmul.f32 %v3244, %v3129
        %v3275 = vmul.f32 %v3249, %v3130
        %v3276 = vmul.f32 %v3252, %v3131
        %v3277 = vmul.f32 %v3257, %v3132
        %v3278 = vmul.f32 %v3260, %v3133
        %v3279 = vpack.c.bf16 %v3264, %v3263
        %v3280 = vpack.c.bf16 %v3266, %v3265
        %v3281 = vpack.c.bf16 %v3268, %v3267
        %v3282 = vpack.c.bf16 %v3270, %v3269
        %v3283 = vpack.c.bf16 %v3272, %v3271
        %v3284 = vpack.c.bf16 %v3274, %v3273
        %v3285 = vpack.c.bf16 %v3276, %v3275
        %v3286 = vpack.c.bf16 %v3278, %v3277
        %v3295 = vunpack.c.l.b16 %v3279
        %v3296 = vunpack.c.h.b16 %v3279
        %v3297 = vunpack.c.l.b16 %v3280
        %v3298 = vunpack.c.h.b16 %v3280
        %v3299 = vunpack.c.l.b16 %v3281
        %v3300 = vunpack.c.h.b16 %v3281
        %v3301 = vunpack.c.l.b16 %v3282
        %v3302 = vunpack.c.h.b16 %v3282
        %v3303 = vunpack.c.l.b16 %v3283
        %v3304 = vunpack.c.h.b16 %v3283
        %v3305 = vunpack.c.l.b16 %v3284
        %v3306 = vunpack.c.h.b16 %v3284
        %v3307 = vunpack.c.l.b16 %v3285
        %v3308 = vunpack.c.h.b16 %v3285
        %v3309 = vunpack.c.l.b16 %v3286
        %v3310 = vunpack.c.h.b16 %v3286
        %v3311 = vpack.c.b16 %v3295, %v3295
        %v3312 = vpack.c.b16 %v3296, %v3296
        %v3313 = vpack.c.b16 %v3297, %v3297
        %v3314 = vpack.c.b16 %v3298, %v3298
        %v3315 = vpack.c.b16 %v3299, %v3299
        %v3316 = vpack.c.b16 %v3300, %v3300
        %v3317 = vpack.c.b16 %v3301, %v3301
        %v3318 = vpack.c.b16 %v3302, %v3302
        %v3319 = vpack.c.b16 %v3303, %v3303
        %v3320 = vpack.c.b16 %v3304, %v3304
        %v3321 = vpack.c.b16 %v3305, %v3305
        %v3322 = vpack.c.b16 %v3306, %v3306
        %v3323 = vpack.c.b16 %v3307, %v3307
        %v3324 = vpack.c.b16 %v3308, %v3308
        %v3325 = vpack.c.b16 %v3309, %v3309
        %v3326 = vpack.c.b16 %v3310, %v3310
        %3327 = vrot.lane.b32.xlu0 %v3311, 64
        %v3328 = vpop.permute.xlu0 %3327
        %3329 = vrot.lane.b32.xlu0 %v3312, 64
        %v3330 = vpop.permute.xlu0 %3329
        %3331 = vrot.lane.b32.xlu0 %v3313, 64
        %v3332 = vpop.permute.xlu0 %3331
        %3333 = vrot.lane.b32.xlu0 %v3314, 64
        %v3334 = vpop.permute.xlu0 %3333
        %3335 = vrot.lane.b32.xlu0 %v3315, 64
        %v3336 = vpop.permute.xlu0 %3335
        %3337 = vrot.lane.b32.xlu0 %v3316, 64
        %v3338 = vpop.permute.xlu0 %3337
        %3339 = vrot.lane.b32.xlu0 %v3317, 64
        %v3340 = vpop.permute.xlu0 %3339
        %3341 = vrot.lane.b32.xlu0 %v3318, 64
        %v3342 = vpop.permute.xlu0 %3341
        %3343 = vrot.lane.b32.xlu0 %v3319, 64
        %v3344 = vpop.permute.xlu0 %3343
        %3345 = vrot.lane.b32.xlu0 %v3320, 64
        %v3346 = vpop.permute.xlu0 %3345
        %3347 = vrot.lane.b32.xlu0 %v3321, 64
        %v3348 = vpop.permute.xlu0 %3347
        %3349 = vrot.lane.b32.xlu0 %v3322, 64
        %v3350 = vpop.permute.xlu0 %3349
        %3351 = vrot.lane.b32.xlu0 %v3323, 64
        %v3352 = vpop.permute.xlu0 %3351
        %3353 = vrot.lane.b32.xlu0 %v3324, 64
        %v3354 = vpop.permute.xlu0 %3353
        %3355 = vrot.lane.b32.xlu0 %v3325, 64
        %v3356 = vpop.permute.xlu0 %3355
        %3357 = vrot.lane.b32.xlu0 %v3326, 64
        %v3358 = vpop.permute.xlu0 %3357
        %vm3375 = vcmask 781824
        %3376 = vst.msk [vmem:[#allocation2] sm:$0xf] %vm3375, %v3328
        %3377 = vst.msk [vmem:[#allocation2 + $0x4] sm:$0xf] %vm3375, %v3330
        %3378 = vst.msk [vmem:[#allocation2 + $0x8] sm:$0xf] %vm3375, %v3332
        %3379 = vst.msk [vmem:[#allocation2 + $0xc] sm:$0xf] %vm3375, %v3334
        %3380 = vst.msk [vmem:[#allocation2 + $0x10] sm:$0xf] %vm3375, %v3336
        %3381 = vst.msk [vmem:[#allocation2 + $0x14] sm:$0xf] %vm3375, %v3338
        %3382 = vst.msk [vmem:[#allocation2 + $0x18] sm:$0xf] %vm3375, %v3340
        %3383 = vst.msk [vmem:[#allocation2 + $0x1c] sm:$0xf] %vm3375, %v3342
        %3384 = vst.msk [vmem:[#allocation2 + $0x20] sm:$0xf] %vm3375, %v3344
        %3385 = vst.msk [vmem:[#allocation2 + $0x24] sm:$0xf] %vm3375, %v3346
        %3386 = vst.msk [vmem:[#allocation2 + $0x28] sm:$0xf] %vm3375, %v3348
        %3387 = vst.msk [vmem:[#allocation2 + $0x2c] sm:$0xf] %vm3375, %v3350
        %3388 = vst.msk [vmem:[#allocation2 + $0x30] sm:$0xf] %vm3375, %v3352
        %3389 = vst.msk [vmem:[#allocation2 + $0x34] sm:$0xf] %vm3375, %v3354
        %3390 = vst.msk [vmem:[#allocation2 + $0x38] sm:$0xf] %vm3375, %v3356
        %3391 = vst.msk [vmem:[#allocation2 + $0x3c] sm:$0xf] %vm3375, %v3358
        %3392 = vrot.lane.b32.xlu0 %v1694, 32
        %v3393 = vpop.permute.xlu0 %3392
        %3394 = vrot.lane.b32.xlu0 %v1695, 32
        %v3395 = vpop.permute.xlu0 %3394
        %3396 = vrot.lane.b32.xlu0 %v1696, 32
        %v3397 = vpop.permute.xlu0 %3396
        %3398 = vrot.lane.b32.xlu0 %v1697, 32
        %v3399 = vpop.permute.xlu0 %3398
        %3400 = vrot.lane.b32.xlu0 %v1698, 32
        %v3401 = vpop.permute.xlu0 %3400
        %3402 = vrot.lane.b32.xlu0 %v1699, 32
        %v3403 = vpop.permute.xlu0 %3402
        %3404 = vrot.lane.b32.xlu0 %v1700, 32
        %v3405 = vpop.permute.xlu0 %3404
        %3406 = vrot.lane.b32.xlu0 %v1701, 32
        %v3407 = vpop.permute.xlu0 %3406
        %3408 = vrot.lane.b32.xlu0 %v1750, 32
        %v3409 = vpop.permute.xlu0 %3408
        %3410 = vrot.lane.b32.xlu0 %v1751, 32
        %v3411 = vpop.permute.xlu0 %3410
        %3412 = vrot.lane.b32.xlu0 %v1752, 32
        %v3413 = vpop.permute.xlu0 %3412
        %3414 = vrot.lane.b32.xlu0 %v1753, 32
        %v3415 = vpop.permute.xlu0 %3414
        %3416 = vrot.lane.b32.xlu0 %v1754, 32
        %v3417 = vpop.permute.xlu0 %3416
        %3418 = vrot.lane.b32.xlu0 %v1755, 32
        %v3419 = vpop.permute.xlu0 %3418
        %3420 = vrot.lane.b32.xlu0 %v1756, 32
        %v3421 = vpop.permute.xlu0 %3420
        %3422 = vrot.lane.b32.xlu0 %v1757, 32
        %v3423 = vpop.permute.xlu0 %3422
        %v3425 = vsel %vm1766, %v3393, 0
        %v3428 = vsel %vm1766, %v3395, 0
        %v3431 = vsel %vm1766, %v3397, 0
        %v3434 = vsel %vm1766, %v3399, 0
        %v3437 = vsel %vm1766, %v3401, 0
        %v3440 = vsel %vm1766, %v3403, 0
        %v3443 = vsel %vm1766, %v3405, 0
        %v3446 = vsel %vm1766, %v3407, 0
        %v3449 = vsel %vm1766, %v3409, 0
        %v3452 = vsel %vm1766, %v3411, 0
        %v3455 = vsel %vm1766, %v3413, 0
        %v3458 = vsel %vm1766, %v3415, 0
        %v3461 = vsel %vm1766, %v3417, 0
        %v3464 = vsel %vm1766, %v3419, 0
        %v3467 = vsel %vm1766, %v3421, 0
        %v3470 = vsel %vm1766, %v3423, 0
        %3472 = vmatprep.subr.bf16.mxu0 0
        %3473 = vmatpush1.bf16.xpose.msra.mxu0 %v3470
        %3474 = vmatprep.subr.bf16.mxu0 0
        %3475 = vmatpush1.bf16.xpose.msra.mxu0 %v3467
        %3476 = vmatprep.subr.bf16.mxu0 0
        %3477 = vmatpush1.bf16.xpose.msra.mxu0 %v3464
        %3478 = vmatprep.subr.bf16.mxu0 0
        %3479 = vmatpush1.bf16.xpose.msra.mxu0 %v3461
        %3480 = vmatprep.subr.bf16.mxu0 0
        %3481 = vmatpush1.bf16.xpose.msra.mxu0 %v3458
        %3482 = vmatprep.subr.bf16.mxu0 0
        %3483 = vmatpush1.bf16.xpose.msra.mxu0 %v3455
        %3484 = vmatprep.subr.bf16.mxu0 0
        %3485 = vmatpush1.bf16.xpose.msra.mxu0 %v3452
        %3486 = vmatprep.subr.bf16.mxu0 0
        %3487 = vmatpush1.bf16.xpose.msra.mxu0 %v3449
        %3488 = vmatprep.subr.bf16.mxu0 0
        %3489 = vmatpush2.bf16.xpose.msra.mxu0 0
        %3490 = vmatprep.subr.bf16.mxu0 0
        %3491 = vmatpush2.bf16.xpose.msra.mxu0 0
        %3492 = vmatprep.subr.bf16.mxu0 0
        %3493 = vmatpush2.bf16.xpose.msra.mxu0 0
        %3494 = vmatprep.subr.bf16.mxu0 0
        %3495 = vmatpush2.bf16.xpose.msra.mxu0 0
        %3496 = vmatprep.subr.bf16.mxu0 0
        %3497 = vmatpush2.bf16.xpose.msra.mxu0 0
        %3498 = vmatprep.subr.bf16.mxu0 0
        %3499 = vmatpush2.bf16.xpose.msra.mxu0 0
        %3500 = vmatprep.subr.bf16.mxu0 0
        %3501 = vmatpush2.bf16.xpose.msra.mxu0 0
        %3502 = vmatprep.subr.bf16.mxu0 0
        %3503 = vmatpush2.bf16.xpose.msra.mxu0 0
        %3504 = vmatprep.mubr.bf16.mxu0 0
        %3505 = vmatmul.mubr.bf16.gmra.mxu0 %v3425
        %v3506 = vpop.f32.mrf.mxu0
        %v3507 = vadd.f32 %v1630, %v3506
        %v3508 = vpop.f32.mrf.mxu0
        %v3509 = vpop.f32.mrf.mxu0
        %v3510 = vadd.f32 %v1631, %v3509
        %v3511 = vpop.f32.mrf.mxu0
        %3512 = vmatprep.mubr.bf16.mxu0 0
        %3513 = vmatmul.mubr.bf16.gmra.mxu0 %v3428
        %v3514 = vpop.f32.mrf.mxu0
        %v3515 = vadd.f32 %v1632, %v3514
        %v3516 = vpop.f32.mrf.mxu0
        %v3517 = vpop.f32.mrf.mxu0
        %v3518 = vadd.f32 %v1633, %v3517
        %v3519 = vpop.f32.mrf.mxu0
        %3520 = vmatprep.mubr.bf16.mxu0 0
        %3521 = vmatmul.mubr.bf16.gmra.mxu0 %v3431
        %v3522 = vpop.f32.mrf.mxu0
        %v3523 = vadd.f32 %v1634, %v3522
        %v3524 = vpop.f32.mrf.mxu0
        %v3525 = vpop.f32.mrf.mxu0
        %v3526 = vadd.f32 %v1635, %v3525
        %v3527 = vpop.f32.mrf.mxu0
        %3528 = vmatprep.mubr.bf16.mxu0 0
        %3529 = vmatmul.mubr.bf16.gmra.mxu0 %v3434
        %v3530 = vpop.f32.mrf.mxu0
        %v3531 = vadd.f32 %v1636, %v3530
        %v3532 = vpop.f32.mrf.mxu0
        %v3533 = vpop.f32.mrf.mxu0
        %v3534 = vadd.f32 %v1637, %v3533
        %v3535 = vpop.f32.mrf.mxu0
        %3536 = vmatprep.mubr.bf16.mxu0 0
        %3537 = vmatmul.mubr.bf16.gmra.mxu0 %v3437
        %v3538 = vpop.f32.mrf.mxu0
        %v3539 = vadd.f32 %v1638, %v3538
        %v3540 = vpop.f32.mrf.mxu0
        %v3541 = vpop.f32.mrf.mxu0
        %v3542 = vadd.f32 %v1639, %v3541
        %v3543 = vpop.f32.mrf.mxu0
        %3544 = vmatprep.mubr.bf16.mxu0 0
        %3545 = vmatmul.mubr.bf16.gmra.mxu0 %v3440
        %v3546 = vpop.f32.mrf.mxu0
        %v3547 = vadd.f32 %v1640, %v3546
        %v3548 = vpop.f32.mrf.mxu0
        %v3549 = vpop.f32.mrf.mxu0
        %v3550 = vadd.f32 %v1641, %v3549
        %v3551 = vpop.f32.mrf.mxu0
        %3552 = vmatprep.mubr.bf16.mxu0 0
        %3553 = vmatmul.mubr.bf16.gmra.mxu0 %v3443
        %v3554 = vpop.f32.mrf.mxu0
        %v3555 = vadd.f32 %v1642, %v3554
        %v3556 = vpop.f32.mrf.mxu0
        %v3557 = vpop.f32.mrf.mxu0
        %v3558 = vadd.f32 %v1643, %v3557
        %v3559 = vpop.f32.mrf.mxu0
        %3560 = vmatprep.mubr.bf16.mxu0 0
        %3561 = vmatmul.mubr.bf16.gmra.mxu0 %v3446
        %v3562 = vpop.f32.mrf.mxu0
        %v3563 = vadd.f32 %v1644, %v3562
        %v3564 = vpop.f32.mrf.mxu0
        %v3565 = vpop.f32.mrf.mxu0
        %v3566 = vadd.f32 %v1645, %v3565
        %v3567 = vpop.f32.mrf.mxu0
        %3568 = vdwg.mxu0
        %3569 = vmax.xlane.f32.xlu0 %v3507
        %v3570 = vpop.xlane.xlu0 %3569
        %3571 = vmax.xlane.f32.xlu0 %v3510
        %v3572 = vpop.xlane.xlu0 %3571
        %3573 = vmax.xlane.f32.xlu0 %v3515
        %v3574 = vpop.xlane.xlu0 %3573
        %3575 = vmax.xlane.f32.xlu0 %v3518
        %v3576 = vpop.xlane.xlu0 %3575
        %3577 = vmax.xlane.f32.xlu0 %v3523
        %v3578 = vpop.xlane.xlu0 %3577
        %3579 = vmax.xlane.f32.xlu0 %v3526
        %v3580 = vpop.xlane.xlu0 %3579
        %3581 = vmax.xlane.f32.xlu0 %v3531
        %v3582 = vpop.xlane.xlu0 %3581
        %3583 = vmax.xlane.f32.xlu0 %v3534
        %v3584 = vpop.xlane.xlu0 %3583
        %3585 = vmax.xlane.f32.xlu0 %v3539
        %v3586 = vpop.xlane.xlu0 %3585
        %3587 = vmax.xlane.f32.xlu0 %v3542
        %v3588 = vpop.xlane.xlu0 %3587
        %3589 = vmax.xlane.f32.xlu0 %v3547
        %v3590 = vpop.xlane.xlu0 %3589
        %3591 = vmax.xlane.f32.xlu0 %v3550
        %v3592 = vpop.xlane.xlu0 %3591
        %3593 = vmax.xlane.f32.xlu0 %v3555
        %v3594 = vpop.xlane.xlu0 %3593
        %3595 = vmax.xlane.f32.xlu0 %v3558
        %v3596 = vpop.xlane.xlu0 %3595
        %3597 = vmax.xlane.f32.xlu0 %v3563
        %v3598 = vpop.xlane.xlu0 %3597
        %3599 = vmax.xlane.f32.xlu0 %v3566
        %v3600 = vpop.xlane.xlu0 %3599
        %v3601 = vsub.f32 %v3507, %v3570
        %v3602 = vsub.f32 %v3510, %v3572
        %v3603 = vsub.f32 %v3515, %v3574
        %v3604 = vsub.f32 %v3518, %v3576
        %v3605 = vsub.f32 %v3523, %v3578
        %v3606 = vsub.f32 %v3526, %v3580
        %v3607 = vsub.f32 %v3531, %v3582
        %v3608 = vsub.f32 %v3534, %v3584
        %v3609 = vsub.f32 %v3539, %v3586
        %v3610 = vsub.f32 %v3542, %v3588
        %v3611 = vsub.f32 %v3547, %v3590
        %v3612 = vsub.f32 %v3550, %v3592
        %v3613 = vsub.f32 %v3555, %v3594
        %v3614 = vsub.f32 %v3558, %v3596
        %v3615 = vsub.f32 %v3563, %v3598
        %v3616 = vsub.f32 %v3566, %v3600
        %v3617 = vmul.f32 %v3601, 1.442695
        %v3618 = vpow.pop %v3617
        %v3619 = vmul.f32 %v3602, 1.442695
        %v3620 = vpow.pop %v3619
        %v3621 = vmul.f32 %v3603, 1.442695
        %v3622 = vpow.pop %v3621
        %v3623 = vmul.f32 %v3604, 1.442695
        %v3624 = vpow.pop %v3623
        %v3625 = vmul.f32 %v3605, 1.442695
        %v3626 = vpow.pop %v3625
        %v3627 = vmul.f32 %v3606, 1.442695
        %v3628 = vpow.pop %v3627
        %v3629 = vmul.f32 %v3607, 1.442695
        %v3630 = vpow.pop %v3629
        %v3631 = vmul.f32 %v3608, 1.442695
        %v3632 = vpow.pop %v3631
        %v3633 = vmul.f32 %v3609, 1.442695
        %v3634 = vpow.pop %v3633
        %v3635 = vmul.f32 %v3610, 1.442695
        %v3636 = vpow.pop %v3635
        %v3637 = vmul.f32 %v3611, 1.442695
        %v3638 = vpow.pop %v3637
        %v3639 = vmul.f32 %v3612, 1.442695
        %v3640 = vpow.pop %v3639
        %v3641 = vmul.f32 %v3613, 1.442695
        %v3642 = vpow.pop %v3641
        %v3643 = vmul.f32 %v3614, 1.442695
        %v3644 = vpow.pop %v3643
        %v3645 = vmul.f32 %v3615, 1.442695
        %v3646 = vpow.pop %v3645
        %v3647 = vmul.f32 %v3616, 1.442695
        %v3648 = vpow.pop %v3647
        %3649 = vadd.xlane.f32.xlu0 %v3618
        %v3650 = vpop.xlane.xlu0 %3649
        %3651 = vadd.xlane.f32.xlu0 %v3620
        %v3652 = vpop.xlane.xlu0 %3651
        %3653 = vadd.xlane.f32.xlu0 %v3622
        %v3654 = vpop.xlane.xlu0 %3653
        %3655 = vadd.xlane.f32.xlu0 %v3624
        %v3656 = vpop.xlane.xlu0 %3655
        %3657 = vadd.xlane.f32.xlu0 %v3626
        %v3658 = vpop.xlane.xlu0 %3657
        %3659 = vadd.xlane.f32.xlu0 %v3628
        %v3660 = vpop.xlane.xlu0 %3659
        %3661 = vadd.xlane.f32.xlu0 %v3630
        %v3662 = vpop.xlane.xlu0 %3661
        %3663 = vadd.xlane.f32.xlu0 %v3632
        %v3664 = vpop.xlane.xlu0 %3663
        %3665 = vadd.xlane.f32.xlu0 %v3634
        %v3666 = vpop.xlane.xlu0 %3665
        %3667 = vadd.xlane.f32.xlu0 %v3636
        %v3668 = vpop.xlane.xlu0 %3667
        %3669 = vadd.xlane.f32.xlu0 %v3638
        %v3670 = vpop.xlane.xlu0 %3669
        %3671 = vadd.xlane.f32.xlu0 %v3640
        %v3672 = vpop.xlane.xlu0 %3671
        %3673 = vadd.xlane.f32.xlu0 %v3642
        %v3674 = vpop.xlane.xlu0 %3673
        %3675 = vadd.xlane.f32.xlu0 %v3644
        %v3676 = vpop.xlane.xlu0 %3675
        %3677 = vadd.xlane.f32.xlu0 %v3646
        %v3678 = vpop.xlane.xlu0 %3677
        %3679 = vadd.xlane.f32.xlu0 %v3648
        %v3680 = vpop.xlane.xlu0 %3679
        %v3681 = vrcp.pop %v3650
        %v3682 = vrcp.pop %v3652
        %v3683 = vrcp.pop %v3654
        %v3684 = vrcp.pop %v3656
        %v3685 = vrcp.pop %v3658
        %v3686 = vrcp.pop %v3660
        %v3687 = vrcp.pop %v3662
        %v3688 = vrcp.pop %v3664
        %v3689 = vrcp.pop %v3666
        %v3690 = vrcp.pop %v3668
        %v3691 = vrcp.pop %v3670
        %v3692 = vrcp.pop %v3672
        %v3693 = vrcp.pop %v3674
        %v3694 = vrcp.pop %v3676
        %v3695 = vrcp.pop %v3678
        %v3696 = vrcp.pop %v3680
        %v3697 = vpack.c.bf16 %v3620, %v3618
        %v3698 = vpack.c.bf16 %v3624, %v3622
        %v3699 = vpack.c.bf16 %v3628, %v3626
        %v3700 = vpack.c.bf16 %v3632, %v3630
        %v3701 = vpack.c.bf16 %v3636, %v3634
        %v3702 = vpack.c.bf16 %v3640, %v3638
        %v3703 = vpack.c.bf16 %v3644, %v3642
        %v3704 = vpack.c.bf16 %v3648, %v3646
        %3705 = vrot.lane.b32.xlu0 %v1758, 32
        %v3706 = vpop.permute.xlu0 %3705
        %3707 = vrot.lane.b32.xlu0 %v1759, 32
        %v3708 = vpop.permute.xlu0 %3707
        %3709 = vrot.lane.b32.xlu0 %v1760, 32
        %v3710 = vpop.permute.xlu0 %3709
        %3711 = vrot.lane.b32.xlu0 %v1761, 32
        %v3712 = vpop.permute.xlu0 %3711
        %3713 = vrot.lane.b32.xlu0 %v1762, 32
        %v3714 = vpop.permute.xlu0 %3713
        %3715 = vrot.lane.b32.xlu0 %v1763, 32
        %v3716 = vpop.permute.xlu0 %3715
        %3717 = vrot.lane.b32.xlu0 %v1764, 32
        %v3718 = vpop.permute.xlu0 %3717
        %3719 = vrot.lane.b32.xlu0 %v1765, 32
        %v3720 = vpop.permute.xlu0 %3719
        %3729 = vmatprep.subr.bf16.mxu0 0
        %3730 = vmatpush1.bf16.msra.mxu0 %v3720
        %3731 = vmatprep.subr.bf16.mxu0 0
        %3732 = vmatpush1.bf16.msra.mxu0 %v3718
        %3733 = vmatprep.subr.bf16.mxu0 0
        %3734 = vmatpush1.bf16.msra.mxu0 %v3716
        %3735 = vmatprep.subr.bf16.mxu0 0
        %3736 = vmatpush1.bf16.msra.mxu0 %v3714
        %3737 = vmatprep.subr.bf16.mxu0 0
        %3738 = vmatpush1.bf16.msra.mxu0 %v3712
        %3739 = vmatprep.subr.bf16.mxu0 0
        %3740 = vmatpush1.bf16.msra.mxu0 %v3710
        %3741 = vmatprep.subr.bf16.mxu0 0
        %3742 = vmatpush1.bf16.msra.mxu0 %v3708
        %3743 = vmatprep.subr.bf16.mxu0 0
        %3744 = vmatpush1.bf16.msra.mxu0 %v3706
        %3745 = vmatprep.subr.bf16.mxu0 0
        %3746 = vmatpush2.bf16.msra.mxu0 0
        %3747 = vmatprep.subr.bf16.mxu0 0
        %3748 = vmatpush2.bf16.msra.mxu0 0
        %3749 = vmatprep.subr.bf16.mxu0 0
        %3750 = vmatpush2.bf16.msra.mxu0 0
        %3751 = vmatprep.subr.bf16.mxu0 0
        %3752 = vmatpush2.bf16.msra.mxu0 0
        %3753 = vmatprep.subr.bf16.mxu0 0
        %3754 = vmatpush2.bf16.msra.mxu0 0
        %3755 = vmatprep.subr.bf16.mxu0 0
        %3756 = vmatpush2.bf16.msra.mxu0 0
        %3757 = vmatprep.subr.bf16.mxu0 0
        %3758 = vmatpush2.bf16.msra.mxu0 0
        %3759 = vmatprep.subr.bf16.mxu0 0
        %3760 = vmatpush2.bf16.msra.mxu0 0
        %3761 = vmatprep.mubr.bf16.mxu0 0
        %3762 = vmatmul.mubr.bf16.gmra.mxu0 %v3697
        %v3763 = vpop.f32.mrf.mxu0
        %v3764 = vadd.f32 0.0, %v3763
        %v3765 = vpop.f32.mrf.mxu0
        %v3766 = vpop.f32.mrf.mxu0
        %v3767 = vadd.f32 0.0, %v3766
        %v3768 = vpop.f32.mrf.mxu0
        %3769 = vmatprep.mubr.bf16.mxu0 0
        %3770 = vmatmul.mubr.bf16.gmra.mxu0 %v3698
        %v3771 = vpop.f32.mrf.mxu0
        %v3772 = vadd.f32 0.0, %v3771
        %v3773 = vpop.f32.mrf.mxu0
        %v3774 = vpop.f32.mrf.mxu0
        %v3775 = vadd.f32 0.0, %v3774
        %v3776 = vpop.f32.mrf.mxu0
        %3777 = vmatprep.mubr.bf16.mxu0 0
        %3778 = vmatmul.mubr.bf16.gmra.mxu0 %v3699
        %v3779 = vpop.f32.mrf.mxu0
        %v3780 = vadd.f32 0.0, %v3779
        %v3781 = vpop.f32.mrf.mxu0
        %v3782 = vpop.f32.mrf.mxu0
        %v3783 = vadd.f32 0.0, %v3782
        %v3784 = vpop.f32.mrf.mxu0
        %3785 = vmatprep.mubr.bf16.mxu0 0
        %3786 = vmatmul.mubr.bf16.gmra.mxu0 %v3700
        %v3787 = vpop.f32.mrf.mxu0
        %v3788 = vadd.f32 0.0, %v3787
        %v3789 = vpop.f32.mrf.mxu0
        %v3790 = vpop.f32.mrf.mxu0
        %v3791 = vadd.f32 0.0, %v3790
        %v3792 = vpop.f32.mrf.mxu0
        %3793 = vmatprep.mubr.bf16.mxu0 0
        %3794 = vmatmul.mubr.bf16.gmra.mxu0 %v3701
        %v3795 = vpop.f32.mrf.mxu0
        %v3796 = vadd.f32 0.0, %v3795
        %v3797 = vpop.f32.mrf.mxu0
        %v3798 = vpop.f32.mrf.mxu0
        %v3799 = vadd.f32 0.0, %v3798
        %v3800 = vpop.f32.mrf.mxu0
        %3801 = vmatprep.mubr.bf16.mxu0 0
        %3802 = vmatmul.mubr.bf16.gmra.mxu0 %v3702
        %v3803 = vpop.f32.mrf.mxu0
        %v3804 = vadd.f32 0.0, %v3803
        %v3805 = vpop.f32.mrf.mxu0
        %v3806 = vpop.f32.mrf.mxu0
        %v3807 = vadd.f32 0.0, %v3806
        %v3808 = vpop.f32.mrf.mxu0
        %3809 = vmatprep.mubr.bf16.mxu0 0
        %3810 = vmatmul.mubr.bf16.gmra.mxu0 %v3703
        %v3811 = vpop.f32.mrf.mxu0
        %v3812 = vadd.f32 0.0, %v3811
        %v3813 = vpop.f32.mrf.mxu0
        %v3814 = vpop.f32.mrf.mxu0
        %v3815 = vadd.f32 0.0, %v3814
        %v3816 = vpop.f32.mrf.mxu0
        %3817 = vmatprep.mubr.bf16.mxu0 0
        %3818 = vmatmul.mubr.bf16.gmra.mxu0 %v3704
        %v3819 = vpop.f32.mrf.mxu0
        %v3820 = vadd.f32 0.0, %v3819
        %v3821 = vpop.f32.mrf.mxu0
        %v3822 = vpop.f32.mrf.mxu0
        %v3823 = vadd.f32 0.0, %v3822
        %v3824 = vpop.f32.mrf.mxu0
        %3825 = vdwg.mxu0
        %v3826 = vmul.f32 %v3764, %v3681
        %v3827 = vmul.f32 %v3767, %v3682
        %v3828 = vmul.f32 %v3772, %v3683
        %v3829 = vmul.f32 %v3775, %v3684
        %v3830 = vmul.f32 %v3780, %v3685
        %v3831 = vmul.f32 %v3783, %v3686
        %v3832 = vmul.f32 %v3788, %v3687
        %v3833 = vmul.f32 %v3791, %v3688
        %v3834 = vmul.f32 %v3796, %v3689
        %v3835 = vmul.f32 %v3799, %v3690
        %v3836 = vmul.f32 %v3804, %v3691
        %v3837 = vmul.f32 %v3807, %v3692
        %v3838 = vmul.f32 %v3812, %v3693
        %v3839 = vmul.f32 %v3815, %v3694
        %v3840 = vmul.f32 %v3820, %v3695
        %v3841 = vmul.f32 %v3823, %v3696
        %v3842 = vpack.c.bf16 %v3827, %v3826
        %v3843 = vpack.c.bf16 %v3829, %v3828
        %v3844 = vpack.c.bf16 %v3831, %v3830
        %v3845 = vpack.c.bf16 %v3833, %v3832
        %v3846 = vpack.c.bf16 %v3835, %v3834
        %v3847 = vpack.c.bf16 %v3837, %v3836
        %v3848 = vpack.c.bf16 %v3839, %v3838
        %v3849 = vpack.c.bf16 %v3841, %v3840
        %v3858 = vunpack.c.l.b16 %v3842
        %v3859 = vunpack.c.h.b16 %v3842
        %v3860 = vunpack.c.l.b16 %v3843
        %v3861 = vunpack.c.h.b16 %v3843
        %v3862 = vunpack.c.l.b16 %v3844
        %v3863 = vunpack.c.h.b16 %v3844
        %v3864 = vunpack.c.l.b16 %v3845
        %v3865 = vunpack.c.h.b16 %v3845
        %v3866 = vunpack.c.l.b16 %v3846
        %v3867 = vunpack.c.h.b16 %v3846
        %v3868 = vunpack.c.l.b16 %v3847
        %v3869 = vunpack.c.h.b16 %v3847
        %v3870 = vunpack.c.l.b16 %v3848
        %v3871 = vunpack.c.h.b16 %v3848
        %v3872 = vunpack.c.l.b16 %v3849
        %v3873 = vunpack.c.h.b16 %v3849
        %v3874 = vpack.c.b16 %v3858, %v3858
        %v3875 = vpack.c.b16 %v3859, %v3859
        %v3876 = vpack.c.b16 %v3860, %v3860
        %v3877 = vpack.c.b16 %v3861, %v3861
        %v3878 = vpack.c.b16 %v3862, %v3862
        %v3879 = vpack.c.b16 %v3863, %v3863
        %v3880 = vpack.c.b16 %v3864, %v3864
        %v3881 = vpack.c.b16 %v3865, %v3865
        %v3882 = vpack.c.b16 %v3866, %v3866
        %v3883 = vpack.c.b16 %v3867, %v3867
        %v3884 = vpack.c.b16 %v3868, %v3868
        %v3885 = vpack.c.b16 %v3869, %v3869
        %v3886 = vpack.c.b16 %v3870, %v3870
        %v3887 = vpack.c.b16 %v3871, %v3871
        %v3888 = vpack.c.b16 %v3872, %v3872
        %v3889 = vpack.c.b16 %v3873, %v3873
        %3890 = vrot.lane.b32.xlu0 %v3874, 96
        %v3891 = vpop.permute.xlu0 %3890
        %3892 = vrot.lane.b32.xlu0 %v3875, 96
        %v3893 = vpop.permute.xlu0 %3892
        %3894 = vrot.lane.b32.xlu0 %v3876, 96
        %v3895 = vpop.permute.xlu0 %3894
        %3896 = vrot.lane.b32.xlu0 %v3877, 96
        %v3897 = vpop.permute.xlu0 %3896
        %3898 = vrot.lane.b32.xlu0 %v3878, 96
        %v3899 = vpop.permute.xlu0 %3898
        %3900 = vrot.lane.b32.xlu0 %v3879, 96
        %v3901 = vpop.permute.xlu0 %3900
        %3902 = vrot.lane.b32.xlu0 %v3880, 96
        %v3903 = vpop.permute.xlu0 %3902
        %3904 = vrot.lane.b32.xlu0 %v3881, 96
        %v3905 = vpop.permute.xlu0 %3904
        %3906 = vrot.lane.b32.xlu0 %v3882, 96
        %v3907 = vpop.permute.xlu0 %3906
        %3908 = vrot.lane.b32.xlu0 %v3883, 96
        %v3909 = vpop.permute.xlu0 %3908
        %3910 = vrot.lane.b32.xlu0 %v3884, 96
        %v3911 = vpop.permute.xlu0 %3910
        %3912 = vrot.lane.b32.xlu0 %v3885, 96
        %v3913 = vpop.permute.xlu0 %3912
        %3914 = vrot.lane.b32.xlu0 %v3886, 96
        %v3915 = vpop.permute.xlu0 %3914
        %3916 = vrot.lane.b32.xlu0 %v3887, 96
        %v3917 = vpop.permute.xlu0 %3916
        %3918 = vrot.lane.b32.xlu0 %v3888, 96
        %v3919 = vpop.permute.xlu0 %3918
        %3920 = vrot.lane.b32.xlu0 %v3889, 96
        %v3921 = vpop.permute.xlu0 %3920
        %vm3938 = vcmask 1044224
        %3939 = vst.msk [vmem:[#allocation2] sm:$0xf] %vm3938, %v3891
        %3940 = vst.msk [vmem:[#allocation2 + $0x4] sm:$0xf] %vm3938, %v3893
        %3941 = vst.msk [vmem:[#allocation2 + $0x8] sm:$0xf] %vm3938, %v3895
        %3942 = vst.msk [vmem:[#allocation2 + $0xc] sm:$0xf] %vm3938, %v3897
        %3943 = vst.msk [vmem:[#allocation2 + $0x10] sm:$0xf] %vm3938, %v3899
        %3944 = vst.msk [vmem:[#allocation2 + $0x14] sm:$0xf] %vm3938, %v3901
        %3945 = vst.msk [vmem:[#allocation2 + $0x18] sm:$0xf] %vm3938, %v3903
        %3946 = vst.msk [vmem:[#allocation2 + $0x1c] sm:$0xf] %vm3938, %v3905
        %3947 = vst.msk [vmem:[#allocation2 + $0x20] sm:$0xf] %vm3938, %v3907
        %3948 = vst.msk [vmem:[#allocation2 + $0x24] sm:$0xf] %vm3938, %v3909
        %3949 = vst.msk [vmem:[#allocation2 + $0x28] sm:$0xf] %vm3938, %v3911
        %3950 = vst.msk [vmem:[#allocation2 + $0x2c] sm:$0xf] %vm3938, %v3913
        %3951 = vst.msk [vmem:[#allocation2 + $0x30] sm:$0xf] %vm3938, %v3915
        %3952 = vst.msk [vmem:[#allocation2 + $0x34] sm:$0xf] %vm3938, %v3917
        %3953 = vst.msk [vmem:[#allocation2 + $0x38] sm:$0xf] %vm3938, %v3919
        %3954 = vst.msk [vmem:[#allocation2 + $0x3c] sm:$0xf] %vm3938, %v3921
        %v3955 = vmul.f32 %v1166, %v1598
        %v3956 = vmul.f32 %v1170, %v1599
        %v3957 = vmul.f32 %v1176, %v1600
        %v3958 = vmul.f32 %v1180, %v1601
        %v3959 = vmul.f32 %v1186, %v1602
        %v3960 = vmul.f32 %v1190, %v1603
        %v3961 = vmul.f32 %v1196, %v1604
        %v3962 = vmul.f32 %v1200, %v1605
        %v3963 = vmul.f32 %v1206, %v1606
        %v3964 = vmul.f32 %v1210, %v1607
        %v3965 = vmul.f32 %v1216, %v1608
        %v3966 = vmul.f32 %v1220, %v1609
        %v3967 = vmul.f32 %v1226, %v1610
        %v3968 = vmul.f32 %v1230, %v1611
        %v3969 = vmul.f32 %v1236, %v1612
        %v3970 = vmul.f32 %v1240, %v1613
        %v3971 = vmul.f32 %v1361, %v1614
        %v3972 = vmul.f32 %v1365, %v1615
        %v3973 = vmul.f32 %v1371, %v1616
        %v3974 = vmul.f32 %v1375, %v1617
        %v3975 = vmul.f32 %v1381, %v1618
        %v3976 = vmul.f32 %v1385, %v1619
        %v3977 = vmul.f32 %v1391, %v1620
        %v3978 = vmul.f32 %v1395, %v1621
        %v3979 = vmul.f32 %v1401, %v1622
        %v3980 = vmul.f32 %v1405, %v1623
        %v3981 = vmul.f32 %v1411, %v1624
        %v3982 = vmul.f32 %v1415, %v1625
        %v3983 = vmul.f32 %v1421, %v1626
        %v3984 = vmul.f32 %v1425, %v1627
        %v3985 = vmul.f32 %v1431, %v1628
        %v3986 = vmul.f32 %v1435, %v1629
        %v3987 = vadd.f32 %v3955, %v3971
        %v3988 = vadd.f32 %v3956, %v3972
        %v3989 = vadd.f32 %v3957, %v3973
        %v3990 = vadd.f32 %v3958, %v3974
        %v3991 = vadd.f32 %v3959, %v3975
        %v3992 = vadd.f32 %v3960, %v3976
        %v3993 = vadd.f32 %v3961, %v3977
        %v3994 = vadd.f32 %v3962, %v3978
        %v3995 = vadd.f32 %v3963, %v3979
        %v3996 = vadd.f32 %v3964, %v3980
        %v3997 = vadd.f32 %v3965, %v3981
        %v3998 = vadd.f32 %v3966, %v3982
        %v3999 = vadd.f32 %v3967, %v3983
        %v4000 = vadd.f32 %v3968, %v3984
        %v4001 = vadd.f32 %v3969, %v3985
        %v4002 = vadd.f32 %v3970, %v3986
        %v4003 = vpack.c.bf16 %v3988, %v3987
        %v4004 = vpack.c.bf16 %v3990, %v3989
        %v4005 = vpack.c.bf16 %v3992, %v3991
        %v4006 = vpack.c.bf16 %v3994, %v3993
        %v4007 = vpack.c.bf16 %v3996, %v3995
        %v4008 = vpack.c.bf16 %v3998, %v3997
        %v4009 = vpack.c.bf16 %v4000, %v3999
        %v4010 = vpack.c.bf16 %v4002, %v4001
        %v4011 = vmul.f32 %v1168, %v1598
        %v4012 = vmul.f32 %v1172, %v1599
        %v4013 = vmul.f32 %v1178, %v1600
        %v4014 = vmul.f32 %v1182, %v1601
        %v4015 = vmul.f32 %v1188, %v1602
        %v4016 = vmul.f32 %v1192, %v1603
        %v4017 = vmul.f32 %v1198, %v1604
        %v4018 = vmul.f32 %v1202, %v1605
        %v4019 = vmul.f32 %v1208, %v1606
        %v4020 = vmul.f32 %v1212, %v1607
        %v4021 = vmul.f32 %v1218, %v1608
        %v4022 = vmul.f32 %v1222, %v1609
        %v4023 = vmul.f32 %v1228, %v1610
        %v4024 = vmul.f32 %v1232, %v1611
        %v4025 = vmul.f32 %v1238, %v1612
        %v4026 = vmul.f32 %v1242, %v1613
        %v4027 = vmul.f32 %v1536, %v1614
        %v4028 = vmul.f32 %v1539, %v1615
        %v4029 = vmul.f32 %v1544, %v1616
        %v4030 = vmul.f32 %v1547, %v1617
        %v4031 = vmul.f32 %v1552, %v1618
        %v4032 = vmul.f32 %v1555, %v1619
        %v4033 = vmul.f32 %v1560, %v1620
        %v4034 = vmul.f32 %v1563, %v1621
        %v4035 = vmul.f32 %v1568, %v1622
        %v4036 = vmul.f32 %v1571, %v1623
        %v4037 = vmul.f32 %v1576, %v1624
        %v4038 = vmul.f32 %v1579, %v1625
        %v4039 = vmul.f32 %v1584, %v1626
        %v4040 = vmul.f32 %v1587, %v1627
        %v4041 = vmul.f32 %v1592, %v1628
        %v4042 = vmul.f32 %v1595, %v1629
        %v4043 = vadd.f32 %v4011, %v4027
        %v4044 = vadd.f32 %v4012, %v4028
        %v4045 = vadd.f32 %v4013, %v4029
        %v4046 = vadd.f32 %v4014, %v4030
        %v4047 = vadd.f32 %v4015, %v4031
        %v4048 = vadd.f32 %v4016, %v4032
        %v4049 = vadd.f32 %v4017, %v4033
        %v4050 = vadd.f32 %v4018, %v4034
        %v4051 = vadd.f32 %v4019, %v4035
        %v4052 = vadd.f32 %v4020, %v4036
        %v4053 = vadd.f32 %v4021, %v4037
        %v4054 = vadd.f32 %v4022, %v4038
        %v4055 = vadd.f32 %v4023, %v4039
        %v4056 = vadd.f32 %v4024, %v4040
        %v4057 = vadd.f32 %v4025, %v4041
        %v4058 = vadd.f32 %v4026, %v4042
        %v4059 = vpack.c.bf16 %v4044, %v4043
        %v4060 = vpack.c.bf16 %v4046, %v4045
        %v4061 = vpack.c.bf16 %v4048, %v4047
        %v4062 = vpack.c.bf16 %v4050, %v4049
        %v4063 = vpack.c.bf16 %v4052, %v4051
        %v4064 = vpack.c.bf16 %v4054, %v4053
        %v4065 = vpack.c.bf16 %v4056, %v4055
        %v4066 = vpack.c.bf16 %v4058, %v4057
        %v4067 = vpack.c.bf16 %v1363, %v1359
        %v4068 = vpack.c.bf16 %v1373, %v1369
        %v4069 = vpack.c.bf16 %v1383, %v1379
        %v4070 = vpack.c.bf16 %v1393, %v1389
        %v4071 = vpack.c.bf16 %v1403, %v1399
        %v4072 = vpack.c.bf16 %v1413, %v1409
        %v4073 = vpack.c.bf16 %v1423, %v1419
        %v4074 = vpack.c.bf16 %v1433, %v1429
        %v4076 = vsel %vm1766, %v4003, 0
        %v4079 = vsel %vm1766, %v4004, 0
        %v4082 = vsel %vm1766, %v4005, 0
        %v4085 = vsel %vm1766, %v4006, 0
        %v4088 = vsel %vm1766, %v4007, 0
        %v4091 = vsel %vm1766, %v4008, 0
        %v4094 = vsel %vm1766, %v4009, 0
        %v4097 = vsel %vm1766, %v4010, 0
        %v4100 = vsel %vm1766, %v4059, 0
        %v4103 = vsel %vm1766, %v4060, 0
        %v4106 = vsel %vm1766, %v4061, 0
        %v4109 = vsel %vm1766, %v4062, 0
        %v4112 = vsel %vm1766, %v4063, 0
        %v4115 = vsel %vm1766, %v4064, 0
        %v4118 = vsel %vm1766, %v4065, 0
        %v4121 = vsel %vm1766, %v4066, 0
        %4123 = vmatprep.subr.bf16.mxu0 0
        %4124 = vmatpush1.bf16.xpose.msra.mxu0 %v4121
        %4125 = vmatprep.subr.bf16.mxu0 0
        %4126 = vmatpush1.bf16.xpose.msra.mxu0 %v4118
        %4127 = vmatprep.subr.bf16.mxu0 0
        %4128 = vmatpush1.bf16.xpose.msra.mxu0 %v4115
        %4129 = vmatprep.subr.bf16.mxu0 0
        %4130 = vmatpush1.bf16.xpose.msra.mxu0 %v4112
        %4131 = vmatprep.subr.bf16.mxu0 0
        %4132 = vmatpush1.bf16.xpose.msra.mxu0 %v4109
        %4133 = vmatprep.subr.bf16.mxu0 0
        %4134 = vmatpush1.bf16.xpose.msra.mxu0 %v4106
        %4135 = vmatprep.subr.bf16.mxu0 0
        %4136 = vmatpush1.bf16.xpose.msra.mxu0 %v4103
        %4137 = vmatprep.subr.bf16.mxu0 0
        %4138 = vmatpush1.bf16.xpose.msra.mxu0 %v4100
        %4139 = vmatprep.subr.bf16.mxu0 0
        %4140 = vmatpush2.bf16.xpose.msra.mxu0 0
        %4141 = vmatprep.subr.bf16.mxu0 0
        %4142 = vmatpush2.bf16.xpose.msra.mxu0 0
        %4143 = vmatprep.subr.bf16.mxu0 0
        %4144 = vmatpush2.bf16.xpose.msra.mxu0 0
        %4145 = vmatprep.subr.bf16.mxu0 0
        %4146 = vmatpush2.bf16.xpose.msra.mxu0 0
        %4147 = vmatprep.subr.bf16.mxu0 0
        %4148 = vmatpush2.bf16.xpose.msra.mxu0 0
        %4149 = vmatprep.subr.bf16.mxu0 0
        %4150 = vmatpush2.bf16.xpose.msra.mxu0 0
        %4151 = vmatprep.subr.bf16.mxu0 0
        %4152 = vmatpush2.bf16.xpose.msra.mxu0 0
        %4153 = vmatprep.subr.bf16.mxu0 0
        %4154 = vmatpush2.bf16.xpose.msra.mxu0 0
        %4155 = vmatprep.mubr.bf16.mxu0 0
        %4156 = vmatmul.mubr.bf16.gmra.mxu0 %v4076
        %v4157 = vpop.f32.mrf.mxu0
        %v4158 = vadd.f32 %v1630, %v4157
        %v4159 = vpop.f32.mrf.mxu0
        %v4160 = vpop.f32.mrf.mxu0
        %v4161 = vadd.f32 %v1631, %v4160
        %v4162 = vpop.f32.mrf.mxu0
        %4163 = vmatprep.mubr.bf16.mxu0 0
        %4164 = vmatmul.mubr.bf16.gmra.mxu0 %v4079
        %v4165 = vpop.f32.mrf.mxu0
        %v4166 = vadd.f32 %v1632, %v4165
        %v4167 = vpop.f32.mrf.mxu0
        %v4168 = vpop.f32.mrf.mxu0
        %v4169 = vadd.f32 %v1633, %v4168
        %v4170 = vpop.f32.mrf.mxu0
        %4171 = vmatprep.mubr.bf16.mxu0 0
        %4172 = vmatmul.mubr.bf16.gmra.mxu0 %v4082
        %v4173 = vpop.f32.mrf.mxu0
        %v4174 = vadd.f32 %v1634, %v4173
        %v4175 = vpop.f32.mrf.mxu0
        %v4176 = vpop.f32.mrf.mxu0
        %v4177 = vadd.f32 %v1635, %v4176
        %v4178 = vpop.f32.mrf.mxu0
        %4179 = vmatprep.mubr.bf16.mxu0 0
        %4180 = vmatmul.mubr.bf16.gmra.mxu0 %v4085
        %v4181 = vpop.f32.mrf.mxu0
        %v4182 = vadd.f32 %v1636, %v4181
        %v4183 = vpop.f32.mrf.mxu0
        %v4184 = vpop.f32.mrf.mxu0
        %v4185 = vadd.f32 %v1637, %v4184
        %v4186 = vpop.f32.mrf.mxu0
        %4187 = vmatprep.mubr.bf16.mxu0 0
        %4188 = vmatmul.mubr.bf16.gmra.mxu0 %v4088
        %v4189 = vpop.f32.mrf.mxu0
        %v4190 = vadd.f32 %v1638, %v4189
        %v4191 = vpop.f32.mrf.mxu0
        %v4192 = vpop.f32.mrf.mxu0
        %v4193 = vadd.f32 %v1639, %v4192
        %v4194 = vpop.f32.mrf.mxu0
        %4195 = vmatprep.mubr.bf16.mxu0 0
        %4196 = vmatmul.mubr.bf16.gmra.mxu0 %v4091
        %v4197 = vpop.f32.mrf.mxu0
        %v4198 = vadd.f32 %v1640, %v4197
        %v4199 = vpop.f32.mrf.mxu0
        %v4200 = vpop.f32.mrf.mxu0
        %v4201 = vadd.f32 %v1641, %v4200
        %v4202 = vpop.f32.mrf.mxu0
        %4203 = vmatprep.mubr.bf16.mxu0 0
        %4204 = vmatmul.mubr.bf16.gmra.mxu0 %v4094
        %v4205 = vpop.f32.mrf.mxu0
        %v4206 = vadd.f32 %v1642, %v4205
        %v4207 = vpop.f32.mrf.mxu0
        %v4208 = vpop.f32.mrf.mxu0
        %v4209 = vadd.f32 %v1643, %v4208
        %v4210 = vpop.f32.mrf.mxu0
        %4211 = vmatprep.mubr.bf16.mxu0 0
        %4212 = vmatmul.mubr.bf16.gmra.mxu0 %v4097
        %v4213 = vpop.f32.mrf.mxu0
        %v4214 = vadd.f32 %v1644, %v4213
        %v4215 = vpop.f32.mrf.mxu0
        %v4216 = vpop.f32.mrf.mxu0
        %v4217 = vadd.f32 %v1645, %v4216
        %v4218 = vpop.f32.mrf.mxu0
        %4219 = vdwg.mxu0
        %4220 = vmax.xlane.f32.xlu0 %v4158
        %v4221 = vpop.xlane.xlu0 %4220
        %4222 = vmax.xlane.f32.xlu0 %v4161
        %v4223 = vpop.xlane.xlu0 %4222
        %4224 = vmax.xlane.f32.xlu0 %v4166
        %v4225 = vpop.xlane.xlu0 %4224
        %4226 = vmax.xlane.f32.xlu0 %v4169
        %v4227 = vpop.xlane.xlu0 %4226
        %4228 = vmax.xlane.f32.xlu0 %v4174
        %v4229 = vpop.xlane.xlu0 %4228
        %4230 = vmax.xlane.f32.xlu0 %v4177
        %v4231 = vpop.xlane.xlu0 %4230
        %4232 = vmax.xlane.f32.xlu0 %v4182
        %v4233 = vpop.xlane.xlu0 %4232
        %4234 = vmax.xlane.f32.xlu0 %v4185
        %v4235 = vpop.xlane.xlu0 %4234
        %4236 = vmax.xlane.f32.xlu0 %v4190
        %v4237 = vpop.xlane.xlu0 %4236
        %4238 = vmax.xlane.f32.xlu0 %v4193
        %v4239 = vpop.xlane.xlu0 %4238
        %4240 = vmax.xlane.f32.xlu0 %v4198
        %v4241 = vpop.xlane.xlu0 %4240
        %4242 = vmax.xlane.f32.xlu0 %v4201
        %v4243 = vpop.xlane.xlu0 %4242
        %4244 = vmax.xlane.f32.xlu0 %v4206
        %v4245 = vpop.xlane.xlu0 %4244
        %4246 = vmax.xlane.f32.xlu0 %v4209
        %v4247 = vpop.xlane.xlu0 %4246
        %4248 = vmax.xlane.f32.xlu0 %v4214
        %v4249 = vpop.xlane.xlu0 %4248
        %4250 = vmax.xlane.f32.xlu0 %v4217
        %v4251 = vpop.xlane.xlu0 %4250
        %v4252 = vsub.f32 %v4158, %v4221
        %v4253 = vsub.f32 %v4161, %v4223
        %v4254 = vsub.f32 %v4166, %v4225
        %v4255 = vsub.f32 %v4169, %v4227
        %v4256 = vsub.f32 %v4174, %v4229
        %v4257 = vsub.f32 %v4177, %v4231
        %v4258 = vsub.f32 %v4182, %v4233
        %v4259 = vsub.f32 %v4185, %v4235
        %v4260 = vsub.f32 %v4190, %v4237
        %v4261 = vsub.f32 %v4193, %v4239
        %v4262 = vsub.f32 %v4198, %v4241
        %v4263 = vsub.f32 %v4201, %v4243
        %v4264 = vsub.f32 %v4206, %v4245
        %v4265 = vsub.f32 %v4209, %v4247
        %v4266 = vsub.f32 %v4214, %v4249
        %v4267 = vsub.f32 %v4217, %v4251
        %v4268 = vmul.f32 %v4252, 1.442695
        %v4269 = vpow.pop %v4268
        %v4270 = vmul.f32 %v4253, 1.442695
        %v4271 = vpow.pop %v4270
        %v4272 = vmul.f32 %v4254, 1.442695
        %v4273 = vpow.pop %v4272
        %v4274 = vmul.f32 %v4255, 1.442695
        %v4275 = vpow.pop %v4274
        %v4276 = vmul.f32 %v4256, 1.442695
        %v4277 = vpow.pop %v4276
        %v4278 = vmul.f32 %v4257, 1.442695
        %v4279 = vpow.pop %v4278
        %v4280 = vmul.f32 %v4258, 1.442695
        %v4281 = vpow.pop %v4280
        %v4282 = vmul.f32 %v4259, 1.442695
        %v4283 = vpow.pop %v4282
        %v4284 = vmul.f32 %v4260, 1.442695
        %v4285 = vpow.pop %v4284
        %v4286 = vmul.f32 %v4261, 1.442695
        %v4287 = vpow.pop %v4286
        %v4288 = vmul.f32 %v4262, 1.442695
        %v4289 = vpow.pop %v4288
        %v4290 = vmul.f32 %v4263, 1.442695
        %v4291 = vpow.pop %v4290
        %v4292 = vmul.f32 %v4264, 1.442695
        %v4293 = vpow.pop %v4292
        %v4294 = vmul.f32 %v4265, 1.442695
        %v4295 = vpow.pop %v4294
        %v4296 = vmul.f32 %v4266, 1.442695
        %v4297 = vpow.pop %v4296
        %v4298 = vmul.f32 %v4267, 1.442695
        %v4299 = vpow.pop %v4298
        %4300 = vadd.xlane.f32.xlu0 %v4269
        %v4301 = vpop.xlane.xlu0 %4300
        %4302 = vadd.xlane.f32.xlu0 %v4271
        %v4303 = vpop.xlane.xlu0 %4302
        %4304 = vadd.xlane.f32.xlu0 %v4273
        %v4305 = vpop.xlane.xlu0 %4304
        %4306 = vadd.xlane.f32.xlu0 %v4275
        %v4307 = vpop.xlane.xlu0 %4306
        %4308 = vadd.xlane.f32.xlu0 %v4277
        %v4309 = vpop.xlane.xlu0 %4308
        %4310 = vadd.xlane.f32.xlu0 %v4279
        %v4311 = vpop.xlane.xlu0 %4310
        %4312 = vadd.xlane.f32.xlu0 %v4281
        %v4313 = vpop.xlane.xlu0 %4312
        %4314 = vadd.xlane.f32.xlu0 %v4283
        %v4315 = vpop.xlane.xlu0 %4314
        %4316 = vadd.xlane.f32.xlu0 %v4285
        %v4317 = vpop.xlane.xlu0 %4316
        %4318 = vadd.xlane.f32.xlu0 %v4287
        %v4319 = vpop.xlane.xlu0 %4318
        %4320 = vadd.xlane.f32.xlu0 %v4289
        %v4321 = vpop.xlane.xlu0 %4320
        %4322 = vadd.xlane.f32.xlu0 %v4291
        %v4323 = vpop.xlane.xlu0 %4322
        %4324 = vadd.xlane.f32.xlu0 %v4293
        %v4325 = vpop.xlane.xlu0 %4324
        %4326 = vadd.xlane.f32.xlu0 %v4295
        %v4327 = vpop.xlane.xlu0 %4326
        %4328 = vadd.xlane.f32.xlu0 %v4297
        %v4329 = vpop.xlane.xlu0 %4328
        %4330 = vadd.xlane.f32.xlu0 %v4299
        %v4331 = vpop.xlane.xlu0 %4330
        %v4332 = vrcp.pop %v4301
        %v4333 = vrcp.pop %v4303
        %v4334 = vrcp.pop %v4305
        %v4335 = vrcp.pop %v4307
        %v4336 = vrcp.pop %v4309
        %v4337 = vrcp.pop %v4311
        %v4338 = vrcp.pop %v4313
        %v4339 = vrcp.pop %v4315
        %v4340 = vrcp.pop %v4317
        %v4341 = vrcp.pop %v4319
        %v4342 = vrcp.pop %v4321
        %v4343 = vrcp.pop %v4323
        %v4344 = vrcp.pop %v4325
        %v4345 = vrcp.pop %v4327
        %v4346 = vrcp.pop %v4329
        %v4347 = vrcp.pop %v4331
        %v4348 = vpack.c.bf16 %v4271, %v4269
        %v4349 = vpack.c.bf16 %v4275, %v4273
        %v4350 = vpack.c.bf16 %v4279, %v4277
        %v4351 = vpack.c.bf16 %v4283, %v4281
        %v4352 = vpack.c.bf16 %v4287, %v4285
        %v4353 = vpack.c.bf16 %v4291, %v4289
        %v4354 = vpack.c.bf16 %v4295, %v4293
        %v4355 = vpack.c.bf16 %v4299, %v4297
        %4356 = vmatprep.subr.bf16.mxu0 0
        %4357 = vmatpush1.bf16.msra.mxu0 %v4074
        %4358 = vmatprep.subr.bf16.mxu0 0
        %4359 = vmatpush1.bf16.msra.mxu0 %v4073
        %4360 = vmatprep.subr.bf16.mxu0 0
        %4361 = vmatpush1.bf16.msra.mxu0 %v4072
        %4362 = vmatprep.subr.bf16.mxu0 0
        %4363 = vmatpush1.bf16.msra.mxu0 %v4071
        %4364 = vmatprep.subr.bf16.mxu0 0
        %4365 = vmatpush1.bf16.msra.mxu0 %v4070
        %4366 = vmatprep.subr.bf16.mxu0 0
        %4367 = vmatpush1.bf16.msra.mxu0 %v4069
        %4368 = vmatprep.subr.bf16.mxu0 0
        %4369 = vmatpush1.bf16.msra.mxu0 %v4068
        %4370 = vmatprep.subr.bf16.mxu0 0
        %4371 = vmatpush1.bf16.msra.mxu0 %v4067
        %4372 = vmatprep.subr.bf16.mxu0 0
        %4373 = vmatpush2.bf16.msra.mxu0 0
        %4374 = vmatprep.subr.bf16.mxu0 0
        %4375 = vmatpush2.bf16.msra.mxu0 0
        %4376 = vmatprep.subr.bf16.mxu0 0
        %4377 = vmatpush2.bf16.msra.mxu0 0
        %4378 = vmatprep.subr.bf16.mxu0 0
        %4379 = vmatpush2.bf16.msra.mxu0 0
        %4380 = vmatprep.subr.bf16.mxu0 0
        %4381 = vmatpush2.bf16.msra.mxu0 0
        %4382 = vmatprep.subr.bf16.mxu0 0
        %4383 = vmatpush2.bf16.msra.mxu0 0
        %4384 = vmatprep.subr.bf16.mxu0 0
        %4385 = vmatpush2.bf16.msra.mxu0 0
        %4386 = vmatprep.subr.bf16.mxu0 0
        %4387 = vmatpush2.bf16.msra.mxu0 0
        %4388 = vmatprep.mubr.bf16.mxu0 0
        %4389 = vmatmul.mubr.bf16.gmra.mxu0 %v4348
        %v4390 = vpop.f32.mrf.mxu0
        %v4391 = vadd.f32 0.0, %v4390
        %v4392 = vpop.f32.mrf.mxu0
        %v4393 = vpop.f32.mrf.mxu0
        %v4394 = vadd.f32 0.0, %v4393
        %v4395 = vpop.f32.mrf.mxu0
        %4396 = vmatprep.mubr.bf16.mxu0 0
        %4397 = vmatmul.mubr.bf16.gmra.mxu0 %v4349
        %v4398 = vpop.f32.mrf.mxu0
        %v4399 = vadd.f32 0.0, %v4398
        %v4400 = vpop.f32.mrf.mxu0
        %v4401 = vpop.f32.mrf.mxu0
        %v4402 = vadd.f32 0.0, %v4401
        %v4403 = vpop.f32.mrf.mxu0
        %4404 = vmatprep.mubr.bf16.mxu0 0
        %4405 = vmatmul.mubr.bf16.gmra.mxu0 %v4350
        %v4406 = vpop.f32.mrf.mxu0
        %v4407 = vadd.f32 0.0, %v4406
        %v4408 = vpop.f32.mrf.mxu0
        %v4409 = vpop.f32.mrf.mxu0
        %v4410 = vadd.f32 0.0, %v4409
        %v4411 = vpop.f32.mrf.mxu0
        %4412 = vmatprep.mubr.bf16.mxu0 0
        %4413 = vmatmul.mubr.bf16.gmra.mxu0 %v4351
        %v4414 = vpop.f32.mrf.mxu0
        %v4415 = vadd.f32 0.0, %v4414
        %v4416 = vpop.f32.mrf.mxu0
        %v4417 = vpop.f32.mrf.mxu0
        %v4418 = vadd.f32 0.0, %v4417
        %v4419 = vpop.f32.mrf.mxu0
        %4420 = vmatprep.mubr.bf16.mxu0 0
        %4421 = vmatmul.mubr.bf16.gmra.mxu0 %v4352
        %v4422 = vpop.f32.mrf.mxu0
        %v4423 = vadd.f32 0.0, %v4422
        %v4424 = vpop.f32.mrf.mxu0
        %v4425 = vpop.f32.mrf.mxu0
        %v4426 = vadd.f32 0.0, %v4425
        %v4427 = vpop.f32.mrf.mxu0
        %4428 = vmatprep.mubr.bf16.mxu0 0
        %4429 = vmatmul.mubr.bf16.gmra.mxu0 %v4353
        %v4430 = vpop.f32.mrf.mxu0
        %v4431 = vadd.f32 0.0, %v4430
        %v4432 = vpop.f32.mrf.mxu0
        %v4433 = vpop.f32.mrf.mxu0
        %v4434 = vadd.f32 0.0, %v4433
        %v4435 = vpop.f32.mrf.mxu0
        %4436 = vmatprep.mubr.bf16.mxu0 0
        %4437 = vmatmul.mubr.bf16.gmra.mxu0 %v4354
        %v4438 = vpop.f32.mrf.mxu0
        %v4439 = vadd.f32 0.0, %v4438
        %v4440 = vpop.f32.mrf.mxu0
        %v4441 = vpop.f32.mrf.mxu0
        %v4442 = vadd.f32 0.0, %v4441
        %v4443 = vpop.f32.mrf.mxu0
        %4444 = vmatprep.mubr.bf16.mxu0 0
        %4445 = vmatmul.mubr.bf16.gmra.mxu0 %v4355
        %v4446 = vpop.f32.mrf.mxu0
        %v4447 = vadd.f32 0.0, %v4446
        %v4448 = vpop.f32.mrf.mxu0
        %v4449 = vpop.f32.mrf.mxu0
        %v4450 = vadd.f32 0.0, %v4449
        %v4451 = vpop.f32.mrf.mxu0
        %4452 = vdwg.mxu0
        %v4453 = vmul.f32 %v4391, %v4332
        %v4454 = vmul.f32 %v4394, %v4333
        %v4455 = vmul.f32 %v4399, %v4334
        %v4456 = vmul.f32 %v4402, %v4335
        %v4457 = vmul.f32 %v4407, %v4336
        %v4458 = vmul.f32 %v4410, %v4337
        %v4459 = vmul.f32 %v4415, %v4338
        %v4460 = vmul.f32 %v4418, %v4339
        %v4461 = vmul.f32 %v4423, %v4340
        %v4462 = vmul.f32 %v4426, %v4341
        %v4463 = vmul.f32 %v4431, %v4342
        %v4464 = vmul.f32 %v4434, %v4343
        %v4465 = vmul.f32 %v4439, %v4344
        %v4466 = vmul.f32 %v4442, %v4345
        %v4467 = vmul.f32 %v4447, %v4346
        %v4468 = vmul.f32 %v4450, %v4347
        %v4469 = vpack.c.bf16 %v4454, %v4453
        %v4470 = vpack.c.bf16 %v4456, %v4455
        %v4471 = vpack.c.bf16 %v4458, %v4457
        %v4472 = vpack.c.bf16 %v4460, %v4459
        %v4473 = vpack.c.bf16 %v4462, %v4461
        %v4474 = vpack.c.bf16 %v4464, %v4463
        %v4475 = vpack.c.bf16 %v4466, %v4465
        %v4476 = vpack.c.bf16 %v4468, %v4467
        %v4485 = vunpack.c.l.b16 %v4469
        %v4486 = vunpack.c.h.b16 %v4469
        %v4487 = vunpack.c.l.b16 %v4470
        %v4488 = vunpack.c.h.b16 %v4470
        %v4489 = vunpack.c.l.b16 %v4471
        %v4490 = vunpack.c.h.b16 %v4471
        %v4491 = vunpack.c.l.b16 %v4472
        %v4492 = vunpack.c.h.b16 %v4472
        %v4493 = vunpack.c.l.b16 %v4473
        %v4494 = vunpack.c.h.b16 %v4473
        %v4495 = vunpack.c.l.b16 %v4474
        %v4496 = vunpack.c.h.b16 %v4474
        %v4497 = vunpack.c.l.b16 %v4475
        %v4498 = vunpack.c.h.b16 %v4475
        %v4499 = vunpack.c.l.b16 %v4476
        %v4500 = vunpack.c.h.b16 %v4476
        %v4501 = vpack.c.b16 %v4485, %v4485
        %v4502 = vpack.c.b16 %v4486, %v4486
        %v4503 = vpack.c.b16 %v4487, %v4487
        %v4504 = vpack.c.b16 %v4488, %v4488
        %v4505 = vpack.c.b16 %v4489, %v4489
        %v4506 = vpack.c.b16 %v4490, %v4490
        %v4507 = vpack.c.b16 %v4491, %v4491
        %v4508 = vpack.c.b16 %v4492, %v4492
        %v4509 = vpack.c.b16 %v4493, %v4493
        %v4510 = vpack.c.b16 %v4494, %v4494
        %v4511 = vpack.c.b16 %v4495, %v4495
        %v4512 = vpack.c.b16 %v4496, %v4496
        %v4513 = vpack.c.b16 %v4497, %v4497
        %v4514 = vpack.c.b16 %v4498, %v4498
        %v4515 = vpack.c.b16 %v4499, %v4499
        %v4516 = vpack.c.b16 %v4500, %v4500
        %4533 = vst.msk [vmem:[#allocation2 + $0x40] sm:$0xf] %vm2225, %v4501
        %4534 = vst.msk [vmem:[#allocation2 + $0x44] sm:$0xf] %vm2225, %v4502
        %4535 = vst.msk [vmem:[#allocation2 + $0x48] sm:$0xf] %vm2225, %v4503
        %4536 = vst.msk [vmem:[#allocation2 + $0x4c] sm:$0xf] %vm2225, %v4504
        %4537 = vst.msk [vmem:[#allocation2 + $0x50] sm:$0xf] %vm2225, %v4505
        %4538 = vst.msk [vmem:[#allocation2 + $0x54] sm:$0xf] %vm2225, %v4506
        %4539 = vst.msk [vmem:[#allocation2 + $0x58] sm:$0xf] %vm2225, %v4507
        %4540 = vst.msk [vmem:[#allocation2 + $0x5c] sm:$0xf] %vm2225, %v4508
        %4541 = vst.msk [vmem:[#allocation2 + $0x60] sm:$0xf] %vm2225, %v4509
        %4542 = vst.msk [vmem:[#allocation2 + $0x64] sm:$0xf] %vm2225, %v4510
        %4543 = vst.msk [vmem:[#allocation2 + $0x68] sm:$0xf] %vm2225, %v4511
        %4544 = vst.msk [vmem:[#allocation2 + $0x6c] sm:$0xf] %vm2225, %v4512
        %4545 = vst.msk [vmem:[#allocation2 + $0x70] sm:$0xf] %vm2225, %v4513
        %4546 = vst.msk [vmem:[#allocation2 + $0x74] sm:$0xf] %vm2225, %v4514
        %4547 = vst.msk [vmem:[#allocation2 + $0x78] sm:$0xf] %vm2225, %v4515
        %4548 = vst.msk [vmem:[#allocation2 + $0x7c] sm:$0xf] %vm2225, %v4516
        %4557 = vrot.lane.b32.xlu0 %v4003, 96
        %v4558 = vpop.permute.xlu0 %4557
        %4559 = vrot.lane.b32.xlu0 %v4004, 96
        %v4560 = vpop.permute.xlu0 %4559
        %4561 = vrot.lane.b32.xlu0 %v4005, 96
        %v4562 = vpop.permute.xlu0 %4561
        %4563 = vrot.lane.b32.xlu0 %v4006, 96
        %v4564 = vpop.permute.xlu0 %4563
        %4565 = vrot.lane.b32.xlu0 %v4007, 96
        %v4566 = vpop.permute.xlu0 %4565
        %4567 = vrot.lane.b32.xlu0 %v4008, 96
        %v4568 = vpop.permute.xlu0 %4567
        %4569 = vrot.lane.b32.xlu0 %v4009, 96
        %v4570 = vpop.permute.xlu0 %4569
        %4571 = vrot.lane.b32.xlu0 %v4010, 96
        %v4572 = vpop.permute.xlu0 %4571
        %4581 = vrot.lane.b32.xlu0 %v4059, 96
        %v4582 = vpop.permute.xlu0 %4581
        %4583 = vrot.lane.b32.xlu0 %v4060, 96
        %v4584 = vpop.permute.xlu0 %4583
        %4585 = vrot.lane.b32.xlu0 %v4061, 96
        %v4586 = vpop.permute.xlu0 %4585
        %4587 = vrot.lane.b32.xlu0 %v4062, 96
        %v4588 = vpop.permute.xlu0 %4587
        %4589 = vrot.lane.b32.xlu0 %v4063, 96
        %v4590 = vpop.permute.xlu0 %4589
        %4591 = vrot.lane.b32.xlu0 %v4064, 96
        %v4592 = vpop.permute.xlu0 %4591
        %4593 = vrot.lane.b32.xlu0 %v4065, 96
        %v4594 = vpop.permute.xlu0 %4593
        %4595 = vrot.lane.b32.xlu0 %v4066, 96
        %v4596 = vpop.permute.xlu0 %4595
        %v4598 = vsel %vm1766, %v4558, 0
        %v4601 = vsel %vm1766, %v4560, 0
        %v4604 = vsel %vm1766, %v4562, 0
        %v4607 = vsel %vm1766, %v4564, 0
        %v4610 = vsel %vm1766, %v4566, 0
        %v4613 = vsel %vm1766, %v4568, 0
        %v4616 = vsel %vm1766, %v4570, 0
        %v4619 = vsel %vm1766, %v4572, 0
        %v4622 = vsel %vm1766, %v4582, 0
        %v4625 = vsel %vm1766, %v4584, 0
        %v4628 = vsel %vm1766, %v4586, 0
        %v4631 = vsel %vm1766, %v4588, 0
        %v4634 = vsel %vm1766, %v4590, 0
        %v4637 = vsel %vm1766, %v4592, 0
        %v4640 = vsel %vm1766, %v4594, 0
        %v4643 = vsel %vm1766, %v4596, 0
        %4645 = vmatprep.subr.bf16.mxu0 0
        %4646 = vmatpush1.bf16.xpose.msra.mxu0 %v4643
        %4647 = vmatprep.subr.bf16.mxu0 0
        %4648 = vmatpush1.bf16.xpose.msra.mxu0 %v4640
        %4649 = vmatprep.subr.bf16.mxu0 0
        %4650 = vmatpush1.bf16.xpose.msra.mxu0 %v4637
        %4651 = vmatprep.subr.bf16.mxu0 0
        %4652 = vmatpush1.bf16.xpose.msra.mxu0 %v4634
        %4653 = vmatprep.subr.bf16.mxu0 0
        %4654 = vmatpush1.bf16.xpose.msra.mxu0 %v4631
        %4655 = vmatprep.subr.bf16.mxu0 0
        %4656 = vmatpush1.bf16.xpose.msra.mxu0 %v4628
        %4657 = vmatprep.subr.bf16.mxu0 0
        %4658 = vmatpush1.bf16.xpose.msra.mxu0 %v4625
        %4659 = vmatprep.subr.bf16.mxu0 0
        %4660 = vmatpush1.bf16.xpose.msra.mxu0 %v4622
        %4661 = vmatprep.subr.bf16.mxu0 0
        %4662 = vmatpush2.bf16.xpose.msra.mxu0 0
        %4663 = vmatprep.subr.bf16.mxu0 0
        %4664 = vmatpush2.bf16.xpose.msra.mxu0 0
        %4665 = vmatprep.subr.bf16.mxu0 0
        %4666 = vmatpush2.bf16.xpose.msra.mxu0 0
        %4667 = vmatprep.subr.bf16.mxu0 0
        %4668 = vmatpush2.bf16.xpose.msra.mxu0 0
        %4669 = vmatprep.subr.bf16.mxu0 0
        %4670 = vmatpush2.bf16.xpose.msra.mxu0 0
        %4671 = vmatprep.subr.bf16.mxu0 0
        %4672 = vmatpush2.bf16.xpose.msra.mxu0 0
        %4673 = vmatprep.subr.bf16.mxu0 0
        %4674 = vmatpush2.bf16.xpose.msra.mxu0 0
        %4675 = vmatprep.subr.bf16.mxu0 0
        %4676 = vmatpush2.bf16.xpose.msra.mxu0 0
        %4677 = vmatprep.mubr.bf16.mxu0 0
        %4678 = vmatmul.mubr.bf16.gmra.mxu0 %v4598
        %v4679 = vpop.f32.mrf.mxu0
        %v4680 = vadd.f32 %v1630, %v4679
        %v4681 = vpop.f32.mrf.mxu0
        %v4682 = vpop.f32.mrf.mxu0
        %v4683 = vadd.f32 %v1631, %v4682
        %v4684 = vpop.f32.mrf.mxu0
        %4685 = vmatprep.mubr.bf16.mxu0 0
        %4686 = vmatmul.mubr.bf16.gmra.mxu0 %v4601
        %v4687 = vpop.f32.mrf.mxu0
        %v4688 = vadd.f32 %v1632, %v4687
        %v4689 = vpop.f32.mrf.mxu0
        %v4690 = vpop.f32.mrf.mxu0
        %v4691 = vadd.f32 %v1633, %v4690
        %v4692 = vpop.f32.mrf.mxu0
        %4693 = vmatprep.mubr.bf16.mxu0 0
        %4694 = vmatmul.mubr.bf16.gmra.mxu0 %v4604
        %v4695 = vpop.f32.mrf.mxu0
        %v4696 = vadd.f32 %v1634, %v4695
        %v4697 = vpop.f32.mrf.mxu0
        %v4698 = vpop.f32.mrf.mxu0
        %v4699 = vadd.f32 %v1635, %v4698
        %v4700 = vpop.f32.mrf.mxu0
        %4701 = vmatprep.mubr.bf16.mxu0 0
        %4702 = vmatmul.mubr.bf16.gmra.mxu0 %v4607
        %v4703 = vpop.f32.mrf.mxu0
        %v4704 = vadd.f32 %v1636, %v4703
        %v4705 = vpop.f32.mrf.mxu0
        %v4706 = vpop.f32.mrf.mxu0
        %v4707 = vadd.f32 %v1637, %v4706
        %v4708 = vpop.f32.mrf.mxu0
        %4709 = vmatprep.mubr.bf16.mxu0 0
        %4710 = vmatmul.mubr.bf16.gmra.mxu0 %v4610
        %v4711 = vpop.f32.mrf.mxu0
        %v4712 = vadd.f32 %v1638, %v4711
        %v4713 = vpop.f32.mrf.mxu0
        %v4714 = vpop.f32.mrf.mxu0
        %v4715 = vadd.f32 %v1639, %v4714
        %v4716 = vpop.f32.mrf.mxu0
        %4717 = vmatprep.mubr.bf16.mxu0 0
        %4718 = vmatmul.mubr.bf16.gmra.mxu0 %v4613
        %v4719 = vpop.f32.mrf.mxu0
        %v4720 = vadd.f32 %v1640, %v4719
        %v4721 = vpop.f32.mrf.mxu0
        %v4722 = vpop.f32.mrf.mxu0
        %v4723 = vadd.f32 %v1641, %v4722
        %v4724 = vpop.f32.mrf.mxu0
        %4725 = vmatprep.mubr.bf16.mxu0 0
        %4726 = vmatmul.mubr.bf16.gmra.mxu0 %v4616
        %v4727 = vpop.f32.mrf.mxu0
        %v4728 = vadd.f32 %v1642, %v4727
        %v4729 = vpop.f32.mrf.mxu0
        %v4730 = vpop.f32.mrf.mxu0
        %v4731 = vadd.f32 %v1643, %v4730
        %v4732 = vpop.f32.mrf.mxu0
        %4733 = vmatprep.mubr.bf16.mxu0 0
        %4734 = vmatmul.mubr.bf16.gmra.mxu0 %v4619
        %v4735 = vpop.f32.mrf.mxu0
        %v4736 = vadd.f32 %v1644, %v4735
        %v4737 = vpop.f32.mrf.mxu0
        %v4738 = vpop.f32.mrf.mxu0
        %v4739 = vadd.f32 %v1645, %v4738
        %v4740 = vpop.f32.mrf.mxu0
        %4741 = vdwg.mxu0
        %4742 = vmax.xlane.f32.xlu0 %v4680
        %v4743 = vpop.xlane.xlu0 %4742
        %4744 = vmax.xlane.f32.xlu0 %v4683
        %v4745 = vpop.xlane.xlu0 %4744
        %4746 = vmax.xlane.f32.xlu0 %v4688
        %v4747 = vpop.xlane.xlu0 %4746
        %4748 = vmax.xlane.f32.xlu0 %v4691
        %v4749 = vpop.xlane.xlu0 %4748
        %4750 = vmax.xlane.f32.xlu0 %v4696
        %v4751 = vpop.xlane.xlu0 %4750
        %4752 = vmax.xlane.f32.xlu0 %v4699
        %v4753 = vpop.xlane.xlu0 %4752
        %4754 = vmax.xlane.f32.xlu0 %v4704
        %v4755 = vpop.xlane.xlu0 %4754
        %4756 = vmax.xlane.f32.xlu0 %v4707
        %v4757 = vpop.xlane.xlu0 %4756
        %4758 = vmax.xlane.f32.xlu0 %v4712
        %v4759 = vpop.xlane.xlu0 %4758
        %4760 = vmax.xlane.f32.xlu0 %v4715
        %v4761 = vpop.xlane.xlu0 %4760
        %4762 = vmax.xlane.f32.xlu0 %v4720
        %v4763 = vpop.xlane.xlu0 %4762
        %4764 = vmax.xlane.f32.xlu0 %v4723
        %v4765 = vpop.xlane.xlu0 %4764
        %4766 = vmax.xlane.f32.xlu0 %v4728
        %v4767 = vpop.xlane.xlu0 %4766
        %4768 = vmax.xlane.f32.xlu0 %v4731
        %v4769 = vpop.xlane.xlu0 %4768
        %4770 = vmax.xlane.f32.xlu0 %v4736
        %v4771 = vpop.xlane.xlu0 %4770
        %4772 = vmax.xlane.f32.xlu0 %v4739
        %v4773 = vpop.xlane.xlu0 %4772
        %v4774 = vsub.f32 %v4680, %v4743
        %v4775 = vsub.f32 %v4683, %v4745
        %v4776 = vsub.f32 %v4688, %v4747
        %v4777 = vsub.f32 %v4691, %v4749
        %v4778 = vsub.f32 %v4696, %v4751
        %v4779 = vsub.f32 %v4699, %v4753
        %v4780 = vsub.f32 %v4704, %v4755
        %v4781 = vsub.f32 %v4707, %v4757
        %v4782 = vsub.f32 %v4712, %v4759
        %v4783 = vsub.f32 %v4715, %v4761
        %v4784 = vsub.f32 %v4720, %v4763
        %v4785 = vsub.f32 %v4723, %v4765
        %v4786 = vsub.f32 %v4728, %v4767
        %v4787 = vsub.f32 %v4731, %v4769
        %v4788 = vsub.f32 %v4736, %v4771
        %v4789 = vsub.f32 %v4739, %v4773
        %v4790 = vmul.f32 %v4774, 1.442695
        %v4791 = vpow.pop %v4790
        %v4792 = vmul.f32 %v4775, 1.442695
        %v4793 = vpow.pop %v4792
        %v4794 = vmul.f32 %v4776, 1.442695
        %v4795 = vpow.pop %v4794
        %v4796 = vmul.f32 %v4777, 1.442695
        %v4797 = vpow.pop %v4796
        %v4798 = vmul.f32 %v4778, 1.442695
        %v4799 = vpow.pop %v4798
        %v4800 = vmul.f32 %v4779, 1.442695
        %v4801 = vpow.pop %v4800
        %v4802 = vmul.f32 %v4780, 1.442695
        %v4803 = vpow.pop %v4802
        %v4804 = vmul.f32 %v4781, 1.442695
        %v4805 = vpow.pop %v4804
        %v4806 = vmul.f32 %v4782, 1.442695
        %v4807 = vpow.pop %v4806
        %v4808 = vmul.f32 %v4783, 1.442695
        %v4809 = vpow.pop %v4808
        %v4810 = vmul.f32 %v4784, 1.442695
        %v4811 = vpow.pop %v4810
        %v4812 = vmul.f32 %v4785, 1.442695
        %v4813 = vpow.pop %v4812
        %v4814 = vmul.f32 %v4786, 1.442695
        %v4815 = vpow.pop %v4814
        %v4816 = vmul.f32 %v4787, 1.442695
        %v4817 = vpow.pop %v4816
        %v4818 = vmul.f32 %v4788, 1.442695
        %v4819 = vpow.pop %v4818
        %v4820 = vmul.f32 %v4789, 1.442695
        %v4821 = vpow.pop %v4820
        %4822 = vadd.xlane.f32.xlu0 %v4791
        %v4823 = vpop.xlane.xlu0 %4822
        %4824 = vadd.xlane.f32.xlu0 %v4793
        %v4825 = vpop.xlane.xlu0 %4824
        %4826 = vadd.xlane.f32.xlu0 %v4795
        %v4827 = vpop.xlane.xlu0 %4826
        %4828 = vadd.xlane.f32.xlu0 %v4797
        %v4829 = vpop.xlane.xlu0 %4828
        %4830 = vadd.xlane.f32.xlu0 %v4799
        %v4831 = vpop.xlane.xlu0 %4830
        %4832 = vadd.xlane.f32.xlu0 %v4801
        %v4833 = vpop.xlane.xlu0 %4832
        %4834 = vadd.xlane.f32.xlu0 %v4803
        %v4835 = vpop.xlane.xlu0 %4834
        %4836 = vadd.xlane.f32.xlu0 %v4805
        %v4837 = vpop.xlane.xlu0 %4836
        %4838 = vadd.xlane.f32.xlu0 %v4807
        %v4839 = vpop.xlane.xlu0 %4838
        %4840 = vadd.xlane.f32.xlu0 %v4809
        %v4841 = vpop.xlane.xlu0 %4840
        %4842 = vadd.xlane.f32.xlu0 %v4811
        %v4843 = vpop.xlane.xlu0 %4842
        %4844 = vadd.xlane.f32.xlu0 %v4813
        %v4845 = vpop.xlane.xlu0 %4844
        %4846 = vadd.xlane.f32.xlu0 %v4815
        %v4847 = vpop.xlane.xlu0 %4846
        %4848 = vadd.xlane.f32.xlu0 %v4817
        %v4849 = vpop.xlane.xlu0 %4848
        %4850 = vadd.xlane.f32.xlu0 %v4819
        %v4851 = vpop.xlane.xlu0 %4850
        %4852 = vadd.xlane.f32.xlu0 %v4821
        %v4853 = vpop.xlane.xlu0 %4852
        %v4854 = vrcp.pop %v4823
        %v4855 = vrcp.pop %v4825
        %v4856 = vrcp.pop %v4827
        %v4857 = vrcp.pop %v4829
        %v4858 = vrcp.pop %v4831
        %v4859 = vrcp.pop %v4833
        %v4860 = vrcp.pop %v4835
        %v4861 = vrcp.pop %v4837
        %v4862 = vrcp.pop %v4839
        %v4863 = vrcp.pop %v4841
        %v4864 = vrcp.pop %v4843
        %v4865 = vrcp.pop %v4845
        %v4866 = vrcp.pop %v4847
        %v4867 = vrcp.pop %v4849
        %v4868 = vrcp.pop %v4851
        %v4869 = vrcp.pop %v4853
        %v4870 = vpack.c.bf16 %v4793, %v4791
        %v4871 = vpack.c.bf16 %v4797, %v4795
        %v4872 = vpack.c.bf16 %v4801, %v4799
        %v4873 = vpack.c.bf16 %v4805, %v4803
        %v4874 = vpack.c.bf16 %v4809, %v4807
        %v4875 = vpack.c.bf16 %v4813, %v4811
        %v4876 = vpack.c.bf16 %v4817, %v4815
        %v4877 = vpack.c.bf16 %v4821, %v4819
        %4886 = vrot.lane.b32.xlu0 %v4067, 96
        %v4887 = vpop.permute.xlu0 %4886
        %4888 = vrot.lane.b32.xlu0 %v4068, 96
        %v4889 = vpop.permute.xlu0 %4888
        %4890 = vrot.lane.b32.xlu0 %v4069, 96
        %v4891 = vpop.permute.xlu0 %4890
        %4892 = vrot.lane.b32.xlu0 %v4070, 96
        %v4893 = vpop.permute.xlu0 %4892
        %4894 = vrot.lane.b32.xlu0 %v4071, 96
        %v4895 = vpop.permute.xlu0 %4894
        %4896 = vrot.lane.b32.xlu0 %v4072, 96
        %v4897 = vpop.permute.xlu0 %4896
        %4898 = vrot.lane.b32.xlu0 %v4073, 96
        %v4899 = vpop.permute.xlu0 %4898
        %4900 = vrot.lane.b32.xlu0 %v4074, 96
        %v4901 = vpop.permute.xlu0 %4900
        %4910 = vmatprep.subr.bf16.mxu0 0
        %4911 = vmatpush1.bf16.msra.mxu0 %v4901
        %4912 = vmatprep.subr.bf16.mxu0 0
        %4913 = vmatpush1.bf16.msra.mxu0 %v4899
        %4914 = vmatprep.subr.bf16.mxu0 0
        %4915 = vmatpush1.bf16.msra.mxu0 %v4897
        %4916 = vmatprep.subr.bf16.mxu0 0
        %4917 = vmatpush1.bf16.msra.mxu0 %v4895
        %4918 = vmatprep.subr.bf16.mxu0 0
        %4919 = vmatpush1.bf16.msra.mxu0 %v4893
        %4920 = vmatprep.subr.bf16.mxu0 0
        %4921 = vmatpush1.bf16.msra.mxu0 %v4891
        %4922 = vmatprep.subr.bf16.mxu0 0
        %4923 = vmatpush1.bf16.msra.mxu0 %v4889
        %4924 = vmatprep.subr.bf16.mxu0 0
        %4925 = vmatpush1.bf16.msra.mxu0 %v4887
        %4926 = vmatprep.subr.bf16.mxu0 0
        %4927 = vmatpush2.bf16.msra.mxu0 0
        %4928 = vmatprep.subr.bf16.mxu0 0
        %4929 = vmatpush2.bf16.msra.mxu0 0
        %4930 = vmatprep.subr.bf16.mxu0 0
        %4931 = vmatpush2.bf16.msra.mxu0 0
        %4932 = vmatprep.subr.bf16.mxu0 0
        %4933 = vmatpush2.bf16.msra.mxu0 0
        %4934 = vmatprep.subr.bf16.mxu0 0
        %4935 = vmatpush2.bf16.msra.mxu0 0
        %4936 = vmatprep.subr.bf16.mxu0 0
        %4937 = vmatpush2.bf16.msra.mxu0 0
        %4938 = vmatprep.subr.bf16.mxu0 0
        %4939 = vmatpush2.bf16.msra.mxu0 0
        %4940 = vmatprep.subr.bf16.mxu0 0
        %4941 = vmatpush2.bf16.msra.mxu0 0
        %4942 = vmatprep.mubr.bf16.mxu0 0
        %4943 = vmatmul.mubr.bf16.gmra.mxu0 %v4870
        %v4944 = vpop.f32.mrf.mxu0
        %v4945 = vadd.f32 0.0, %v4944
        %v4946 = vpop.f32.mrf.mxu0
        %v4947 = vpop.f32.mrf.mxu0
        %v4948 = vadd.f32 0.0, %v4947
        %v4949 = vpop.f32.mrf.mxu0
        %4950 = vmatprep.mubr.bf16.mxu0 0
        %4951 = vmatmul.mubr.bf16.gmra.mxu0 %v4871
        %v4952 = vpop.f32.mrf.mxu0
        %v4953 = vadd.f32 0.0, %v4952
        %v4954 = vpop.f32.mrf.mxu0
        %v4955 = vpop.f32.mrf.mxu0
        %v4956 = vadd.f32 0.0, %v4955
        %v4957 = vpop.f32.mrf.mxu0
        %4958 = vmatprep.mubr.bf16.mxu0 0
        %4959 = vmatmul.mubr.bf16.gmra.mxu0 %v4872
        %v4960 = vpop.f32.mrf.mxu0
        %v4961 = vadd.f32 0.0, %v4960
        %v4962 = vpop.f32.mrf.mxu0
        %v4963 = vpop.f32.mrf.mxu0
        %v4964 = vadd.f32 0.0, %v4963
        %v4965 = vpop.f32.mrf.mxu0
        %4966 = vmatprep.mubr.bf16.mxu0 0
        %4967 = vmatmul.mubr.bf16.gmra.mxu0 %v4873
        %v4968 = vpop.f32.mrf.mxu0
        %v4969 = vadd.f32 0.0, %v4968
        %v4970 = vpop.f32.mrf.mxu0
        %v4971 = vpop.f32.mrf.mxu0
        %v4972 = vadd.f32 0.0, %v4971
        %v4973 = vpop.f32.mrf.mxu0
        %4974 = vmatprep.mubr.bf16.mxu0 0
        %4975 = vmatmul.mubr.bf16.gmra.mxu0 %v4874
        %v4976 = vpop.f32.mrf.mxu0
        %v4977 = vadd.f32 0.0, %v4976
        %v4978 = vpop.f32.mrf.mxu0
        %v4979 = vpop.f32.mrf.mxu0
        %v4980 = vadd.f32 0.0, %v4979
        %v4981 = vpop.f32.mrf.mxu0
        %4982 = vmatprep.mubr.bf16.mxu0 0
        %4983 = vmatmul.mubr.bf16.gmra.mxu0 %v4875
        %v4984 = vpop.f32.mrf.mxu0
        %v4985 = vadd.f32 0.0, %v4984
        %v4986 = vpop.f32.mrf.mxu0
        %v4987 = vpop.f32.mrf.mxu0
        %v4988 = vadd.f32 0.0, %v4987
        %v4989 = vpop.f32.mrf.mxu0
        %4990 = vmatprep.mubr.bf16.mxu0 0
        %4991 = vmatmul.mubr.bf16.gmra.mxu0 %v4876
        %v4992 = vpop.f32.mrf.mxu0
        %v4993 = vadd.f32 0.0, %v4992
        %v4994 = vpop.f32.mrf.mxu0
        %v4995 = vpop.f32.mrf.mxu0
        %v4996 = vadd.f32 0.0, %v4995
        %v4997 = vpop.f32.mrf.mxu0
        %4998 = vmatprep.mubr.bf16.mxu0 0
        %4999 = vmatmul.mubr.bf16.gmra.mxu0 %v4877
        %v5000 = vpop.f32.mrf.mxu0
        %v5001 = vadd.f32 0.0, %v5000
        %v5002 = vpop.f32.mrf.mxu0
        %v5003 = vpop.f32.mrf.mxu0
        %v5004 = vadd.f32 0.0, %v5003
        %v5005 = vpop.f32.mrf.mxu0
        %5006 = vdwg.mxu0
        %v5007 = vmul.f32 %v4945, %v4854
        %v5008 = vmul.f32 %v4948, %v4855
        %v5009 = vmul.f32 %v4953, %v4856
        %v5010 = vmul.f32 %v4956, %v4857
        %v5011 = vmul.f32 %v4961, %v4858
        %v5012 = vmul.f32 %v4964, %v4859
        %v5013 = vmul.f32 %v4969, %v4860
        %v5014 = vmul.f32 %v4972, %v4861
        %v5015 = vmul.f32 %v4977, %v4862
        %v5016 = vmul.f32 %v4980, %v4863
        %v5017 = vmul.f32 %v4985, %v4864
        %v5018 = vmul.f32 %v4988, %v4865
        %v5019 = vmul.f32 %v4993, %v4866
        %v5020 = vmul.f32 %v4996, %v4867
        %v5021 = vmul.f32 %v5001, %v4868
        %v5022 = vmul.f32 %v5004, %v4869
        %v5023 = vpack.c.bf16 %v5008, %v5007
        %v5024 = vpack.c.bf16 %v5010, %v5009
        %v5025 = vpack.c.bf16 %v5012, %v5011
        %v5026 = vpack.c.bf16 %v5014, %v5013
        %v5027 = vpack.c.bf16 %v5016, %v5015
        %v5028 = vpack.c.bf16 %v5018, %v5017
        %v5029 = vpack.c.bf16 %v5020, %v5019
        %v5030 = vpack.c.bf16 %v5022, %v5021
        %v5039 = vunpack.c.l.b16 %v5023
        %v5040 = vunpack.c.h.b16 %v5023
        %v5041 = vunpack.c.l.b16 %v5024
        %v5042 = vunpack.c.h.b16 %v5024
        %v5043 = vunpack.c.l.b16 %v5025
        %v5044 = vunpack.c.h.b16 %v5025
        %v5045 = vunpack.c.l.b16 %v5026
        %v5046 = vunpack.c.h.b16 %v5026
        %v5047 = vunpack.c.l.b16 %v5027
        %v5048 = vunpack.c.h.b16 %v5027
        %v5049 = vunpack.c.l.b16 %v5028
        %v5050 = vunpack.c.h.b16 %v5028
        %v5051 = vunpack.c.l.b16 %v5029
        %v5052 = vunpack.c.h.b16 %v5029
        %v5053 = vunpack.c.l.b16 %v5030
        %v5054 = vunpack.c.h.b16 %v5030
        %v5055 = vpack.c.b16 %v5039, %v5039
        %v5056 = vpack.c.b16 %v5040, %v5040
        %v5057 = vpack.c.b16 %v5041, %v5041
        %v5058 = vpack.c.b16 %v5042, %v5042
        %v5059 = vpack.c.b16 %v5043, %v5043
        %v5060 = vpack.c.b16 %v5044, %v5044
        %v5061 = vpack.c.b16 %v5045, %v5045
        %v5062 = vpack.c.b16 %v5046, %v5046
        %v5063 = vpack.c.b16 %v5047, %v5047
        %v5064 = vpack.c.b16 %v5048, %v5048
        %v5065 = vpack.c.b16 %v5049, %v5049
        %v5066 = vpack.c.b16 %v5050, %v5050
        %v5067 = vpack.c.b16 %v5051, %v5051
        %v5068 = vpack.c.b16 %v5052, %v5052
        %v5069 = vpack.c.b16 %v5053, %v5053
        %v5070 = vpack.c.b16 %v5054, %v5054
        %5071 = vrot.lane.b32.xlu0 %v5055, 32
        %v5072 = vpop.permute.xlu0 %5071
        %5073 = vrot.lane.b32.xlu0 %v5056, 32
        %v5074 = vpop.permute.xlu0 %5073
        %5075 = vrot.lane.b32.xlu0 %v5057, 32
        %v5076 = vpop.permute.xlu0 %5075
        %5077 = vrot.lane.b32.xlu0 %v5058, 32
        %v5078 = vpop.permute.xlu0 %5077
        %5079 = vrot.lane.b32.xlu0 %v5059, 32
        %v5080 = vpop.permute.xlu0 %5079
        %5081 = vrot.lane.b32.xlu0 %v5060, 32
        %v5082 = vpop.permute.xlu0 %5081
        %5083 = vrot.lane.b32.xlu0 %v5061, 32
        %v5084 = vpop.permute.xlu0 %5083
        %5085 = vrot.lane.b32.xlu0 %v5062, 32
        %v5086 = vpop.permute.xlu0 %5085
        %5087 = vrot.lane.b32.xlu0 %v5063, 32
        %v5088 = vpop.permute.xlu0 %5087
        %5089 = vrot.lane.b32.xlu0 %v5064, 32
        %v5090 = vpop.permute.xlu0 %5089
        %5091 = vrot.lane.b32.xlu0 %v5065, 32
        %v5092 = vpop.permute.xlu0 %5091
        %5093 = vrot.lane.b32.xlu0 %v5066, 32
        %v5094 = vpop.permute.xlu0 %5093
        %5095 = vrot.lane.b32.xlu0 %v5067, 32
        %v5096 = vpop.permute.xlu0 %5095
        %5097 = vrot.lane.b32.xlu0 %v5068, 32
        %v5098 = vpop.permute.xlu0 %5097
        %5099 = vrot.lane.b32.xlu0 %v5069, 32
        %v5100 = vpop.permute.xlu0 %5099
        %5101 = vrot.lane.b32.xlu0 %v5070, 32
        %v5102 = vpop.permute.xlu0 %5101
        %5119 = vst.msk [vmem:[#allocation2 + $0x40] sm:$0xf] %vm2812, %v5072
        %5120 = vst.msk [vmem:[#allocation2 + $0x44] sm:$0xf] %vm2812, %v5074
        %5121 = vst.msk [vmem:[#allocation2 + $0x48] sm:$0xf] %vm2812, %v5076
        %5122 = vst.msk [vmem:[#allocation2 + $0x4c] sm:$0xf] %vm2812, %v5078
        %5123 = vst.msk [vmem:[#allocation2 + $0x50] sm:$0xf] %vm2812, %v5080
        %5124 = vst.msk [vmem:[#allocation2 + $0x54] sm:$0xf] %vm2812, %v5082
        %5125 = vst.msk [vmem:[#allocation2 + $0x58] sm:$0xf] %vm2812, %v5084
        %5126 = vst.msk [vmem:[#allocation2 + $0x5c] sm:$0xf] %vm2812, %v5086
        %5127 = vst.msk [vmem:[#allocation2 + $0x60] sm:$0xf] %vm2812, %v5088
        %5128 = vst.msk [vmem:[#allocation2 + $0x64] sm:$0xf] %vm2812, %v5090
        %5129 = vst.msk [vmem:[#allocation2 + $0x68] sm:$0xf] %vm2812, %v5092
        %5130 = vst.msk [vmem:[#allocation2 + $0x6c] sm:$0xf] %vm2812, %v5094
        %5131 = vst.msk [vmem:[#allocation2 + $0x70] sm:$0xf] %vm2812, %v5096
        %5132 = vst.msk [vmem:[#allocation2 + $0x74] sm:$0xf] %vm2812, %v5098
        %5133 = vst.msk [vmem:[#allocation2 + $0x78] sm:$0xf] %vm2812, %v5100
        %5134 = vst.msk [vmem:[#allocation2 + $0x7c] sm:$0xf] %vm2812, %v5102
        %5135 = vrot.lane.b32.xlu0 %v4003, 64
        %v5136 = vpop.permute.xlu0 %5135
        %5137 = vrot.lane.b32.xlu0 %v4004, 64
        %v5138 = vpop.permute.xlu0 %5137
        %5139 = vrot.lane.b32.xlu0 %v4005, 64
        %v5140 = vpop.permute.xlu0 %5139
        %5141 = vrot.lane.b32.xlu0 %v4006, 64
        %v5142 = vpop.permute.xlu0 %5141
        %5143 = vrot.lane.b32.xlu0 %v4007, 64
        %v5144 = vpop.permute.xlu0 %5143
        %5145 = vrot.lane.b32.xlu0 %v4008, 64
        %v5146 = vpop.permute.xlu0 %5145
        %5147 = vrot.lane.b32.xlu0 %v4009, 64
        %v5148 = vpop.permute.xlu0 %5147
        %5149 = vrot.lane.b32.xlu0 %v4010, 64
        %v5150 = vpop.permute.xlu0 %5149
        %5151 = vrot.lane.b32.xlu0 %v4059, 64
        %v5152 = vpop.permute.xlu0 %5151
        %5153 = vrot.lane.b32.xlu0 %v4060, 64
        %v5154 = vpop.permute.xlu0 %5153
        %5155 = vrot.lane.b32.xlu0 %v4061, 64
        %v5156 = vpop.permute.xlu0 %5155
        %5157 = vrot.lane.b32.xlu0 %v4062, 64
        %v5158 = vpop.permute.xlu0 %5157
        %5159 = vrot.lane.b32.xlu0 %v4063, 64
        %v5160 = vpop.permute.xlu0 %5159
        %5161 = vrot.lane.b32.xlu0 %v4064, 64
        %v5162 = vpop.permute.xlu0 %5161
        %5163 = vrot.lane.b32.xlu0 %v4065, 64
        %v5164 = vpop.permute.xlu0 %5163
        %5165 = vrot.lane.b32.xlu0 %v4066, 64
        %v5166 = vpop.permute.xlu0 %5165
        %v5168 = vsel %vm1766, %v5136, 0
        %v5171 = vsel %vm1766, %v5138, 0
        %v5174 = vsel %vm1766, %v5140, 0
        %v5177 = vsel %vm1766, %v5142, 0
        %v5180 = vsel %vm1766, %v5144, 0
        %v5183 = vsel %vm1766, %v5146, 0
        %v5186 = vsel %vm1766, %v5148, 0
        %v5189 = vsel %vm1766, %v5150, 0
        %v5192 = vsel %vm1766, %v5152, 0
        %v5195 = vsel %vm1766, %v5154, 0
        %v5198 = vsel %vm1766, %v5156, 0
        %v5201 = vsel %vm1766, %v5158, 0
        %v5204 = vsel %vm1766, %v5160, 0
        %v5207 = vsel %vm1766, %v5162, 0
        %v5210 = vsel %vm1766, %v5164, 0
        %v5213 = vsel %vm1766, %v5166, 0
        %5215 = vmatprep.subr.bf16.mxu0 0
        %5216 = vmatpush1.bf16.xpose.msra.mxu0 %v5213
        %5217 = vmatprep.subr.bf16.mxu0 0
        %5218 = vmatpush1.bf16.xpose.msra.mxu0 %v5210
        %5219 = vmatprep.subr.bf16.mxu0 0
        %5220 = vmatpush1.bf16.xpose.msra.mxu0 %v5207
        %5221 = vmatprep.subr.bf16.mxu0 0
        %5222 = vmatpush1.bf16.xpose.msra.mxu0 %v5204
        %5223 = vmatprep.subr.bf16.mxu0 0
        %5224 = vmatpush1.bf16.xpose.msra.mxu0 %v5201
        %5225 = vmatprep.subr.bf16.mxu0 0
        %5226 = vmatpush1.bf16.xpose.msra.mxu0 %v5198
        %5227 = vmatprep.subr.bf16.mxu0 0
        %5228 = vmatpush1.bf16.xpose.msra.mxu0 %v5195
        %5229 = vmatprep.subr.bf16.mxu0 0
        %5230 = vmatpush1.bf16.xpose.msra.mxu0 %v5192
        %5231 = vmatprep.subr.bf16.mxu0 0
        %5232 = vmatpush2.bf16.xpose.msra.mxu0 0
        %5233 = vmatprep.subr.bf16.mxu0 0
        %5234 = vmatpush2.bf16.xpose.msra.mxu0 0
        %5235 = vmatprep.subr.bf16.mxu0 0
        %5236 = vmatpush2.bf16.xpose.msra.mxu0 0
        %5237 = vmatprep.subr.bf16.mxu0 0
        %5238 = vmatpush2.bf16.xpose.msra.mxu0 0
        %5239 = vmatprep.subr.bf16.mxu0 0
        %5240 = vmatpush2.bf16.xpose.msra.mxu0 0
        %5241 = vmatprep.subr.bf16.mxu0 0
        %5242 = vmatpush2.bf16.xpose.msra.mxu0 0
        %5243 = vmatprep.subr.bf16.mxu0 0
        %5244 = vmatpush2.bf16.xpose.msra.mxu0 0
        %5245 = vmatprep.subr.bf16.mxu0 0
        %5246 = vmatpush2.bf16.xpose.msra.mxu0 0
        %5247 = vmatprep.mubr.bf16.mxu0 0
        %5248 = vmatmul.mubr.bf16.gmra.mxu0 %v5168
        %v5249 = vpop.f32.mrf.mxu0
        %v5250 = vadd.f32 %v1630, %v5249
        %v5251 = vpop.f32.mrf.mxu0
        %v5252 = vpop.f32.mrf.mxu0
        %v5253 = vadd.f32 %v1631, %v5252
        %v5254 = vpop.f32.mrf.mxu0
        %5255 = vmatprep.mubr.bf16.mxu0 0
        %5256 = vmatmul.mubr.bf16.gmra.mxu0 %v5171
        %v5257 = vpop.f32.mrf.mxu0
        %v5258 = vadd.f32 %v1632, %v5257
        %v5259 = vpop.f32.mrf.mxu0
        %v5260 = vpop.f32.mrf.mxu0
        %v5261 = vadd.f32 %v1633, %v5260
        %v5262 = vpop.f32.mrf.mxu0
        %5263 = vmatprep.mubr.bf16.mxu0 0
        %5264 = vmatmul.mubr.bf16.gmra.mxu0 %v5174
        %v5265 = vpop.f32.mrf.mxu0
        %v5266 = vadd.f32 %v1634, %v5265
        %v5267 = vpop.f32.mrf.mxu0
        %v5268 = vpop.f32.mrf.mxu0
        %v5269 = vadd.f32 %v1635, %v5268
        %v5270 = vpop.f32.mrf.mxu0
        %5271 = vmatprep.mubr.bf16.mxu0 0
        %5272 = vmatmul.mubr.bf16.gmra.mxu0 %v5177
        %v5273 = vpop.f32.mrf.mxu0
        %v5274 = vadd.f32 %v1636, %v5273
        %v5275 = vpop.f32.mrf.mxu0
        %v5276 = vpop.f32.mrf.mxu0
        %v5277 = vadd.f32 %v1637, %v5276
        %v5278 = vpop.f32.mrf.mxu0
        %5279 = vmatprep.mubr.bf16.mxu0 0
        %5280 = vmatmul.mubr.bf16.gmra.mxu0 %v5180
        %v5281 = vpop.f32.mrf.mxu0
        %v5282 = vadd.f32 %v1638, %v5281
        %v5283 = vpop.f32.mrf.mxu0
        %v5284 = vpop.f32.mrf.mxu0
        %v5285 = vadd.f32 %v1639, %v5284
        %v5286 = vpop.f32.mrf.mxu0
        %5287 = vmatprep.mubr.bf16.mxu0 0
        %5288 = vmatmul.mubr.bf16.gmra.mxu0 %v5183
        %v5289 = vpop.f32.mrf.mxu0
        %v5290 = vadd.f32 %v1640, %v5289
        %v5291 = vpop.f32.mrf.mxu0
        %v5292 = vpop.f32.mrf.mxu0
        %v5293 = vadd.f32 %v1641, %v5292
        %v5294 = vpop.f32.mrf.mxu0
        %5295 = vmatprep.mubr.bf16.mxu0 0
        %5296 = vmatmul.mubr.bf16.gmra.mxu0 %v5186
        %v5297 = vpop.f32.mrf.mxu0
        %v5298 = vadd.f32 %v1642, %v5297
        %v5299 = vpop.f32.mrf.mxu0
        %v5300 = vpop.f32.mrf.mxu0
        %v5301 = vadd.f32 %v1643, %v5300
        %v5302 = vpop.f32.mrf.mxu0
        %5303 = vmatprep.mubr.bf16.mxu0 0
        %5304 = vmatmul.mubr.bf16.gmra.mxu0 %v5189
        %v5305 = vpop.f32.mrf.mxu0
        %v5306 = vadd.f32 %v1644, %v5305
        %v5307 = vpop.f32.mrf.mxu0
        %v5308 = vpop.f32.mrf.mxu0
        %v5309 = vadd.f32 %v1645, %v5308
        %v5310 = vpop.f32.mrf.mxu0
        %5311 = vdwg.mxu0
        %5312 = vmax.xlane.f32.xlu0 %v5250
        %v5313 = vpop.xlane.xlu0 %5312
        %5314 = vmax.xlane.f32.xlu0 %v5253
        %v5315 = vpop.xlane.xlu0 %5314
        %5316 = vmax.xlane.f32.xlu0 %v5258
        %v5317 = vpop.xlane.xlu0 %5316
        %5318 = vmax.xlane.f32.xlu0 %v5261
        %v5319 = vpop.xlane.xlu0 %5318
        %5320 = vmax.xlane.f32.xlu0 %v5266
        %v5321 = vpop.xlane.xlu0 %5320
        %5322 = vmax.xlane.f32.xlu0 %v5269
        %v5323 = vpop.xlane.xlu0 %5322
        %5324 = vmax.xlane.f32.xlu0 %v5274
        %v5325 = vpop.xlane.xlu0 %5324
        %5326 = vmax.xlane.f32.xlu0 %v5277
        %v5327 = vpop.xlane.xlu0 %5326
        %5328 = vmax.xlane.f32.xlu0 %v5282
        %v5329 = vpop.xlane.xlu0 %5328
        %5330 = vmax.xlane.f32.xlu0 %v5285
        %v5331 = vpop.xlane.xlu0 %5330
        %5332 = vmax.xlane.f32.xlu0 %v5290
        %v5333 = vpop.xlane.xlu0 %5332
        %5334 = vmax.xlane.f32.xlu0 %v5293
        %v5335 = vpop.xlane.xlu0 %5334
        %5336 = vmax.xlane.f32.xlu0 %v5298
        %v5337 = vpop.xlane.xlu0 %5336
        %5338 = vmax.xlane.f32.xlu0 %v5301
        %v5339 = vpop.xlane.xlu0 %5338
        %5340 = vmax.xlane.f32.xlu0 %v5306
        %v5341 = vpop.xlane.xlu0 %5340
        %5342 = vmax.xlane.f32.xlu0 %v5309
        %v5343 = vpop.xlane.xlu0 %5342
        %v5344 = vsub.f32 %v5250, %v5313
        %v5345 = vsub.f32 %v5253, %v5315
        %v5346 = vsub.f32 %v5258, %v5317
        %v5347 = vsub.f32 %v5261, %v5319
        %v5348 = vsub.f32 %v5266, %v5321
        %v5349 = vsub.f32 %v5269, %v5323
        %v5350 = vsub.f32 %v5274, %v5325
        %v5351 = vsub.f32 %v5277, %v5327
        %v5352 = vsub.f32 %v5282, %v5329
        %v5353 = vsub.f32 %v5285, %v5331
        %v5354 = vsub.f32 %v5290, %v5333
        %v5355 = vsub.f32 %v5293, %v5335
        %v5356 = vsub.f32 %v5298, %v5337
        %v5357 = vsub.f32 %v5301, %v5339
        %v5358 = vsub.f32 %v5306, %v5341
        %v5359 = vsub.f32 %v5309, %v5343
        %v5360 = vmul.f32 %v5344, 1.442695
        %v5361 = vpow.pop %v5360
        %v5362 = vmul.f32 %v5345, 1.442695
        %v5363 = vpow.pop %v5362
        %v5364 = vmul.f32 %v5346, 1.442695
        %v5365 = vpow.pop %v5364
        %v5366 = vmul.f32 %v5347, 1.442695
        %v5367 = vpow.pop %v5366
        %v5368 = vmul.f32 %v5348, 1.442695
        %v5369 = vpow.pop %v5368
        %v5370 = vmul.f32 %v5349, 1.442695
        %v5371 = vpow.pop %v5370
        %v5372 = vmul.f32 %v5350, 1.442695
        %v5373 = vpow.pop %v5372
        %v5374 = vmul.f32 %v5351, 1.442695
        %v5375 = vpow.pop %v5374
        %v5376 = vmul.f32 %v5352, 1.442695
        %v5377 = vpow.pop %v5376
        %v5378 = vmul.f32 %v5353, 1.442695
        %v5379 = vpow.pop %v5378
        %v5380 = vmul.f32 %v5354, 1.442695
        %v5381 = vpow.pop %v5380
        %v5382 = vmul.f32 %v5355, 1.442695
        %v5383 = vpow.pop %v5382
        %v5384 = vmul.f32 %v5356, 1.442695
        %v5385 = vpow.pop %v5384
        %v5386 = vmul.f32 %v5357, 1.442695
        %v5387 = vpow.pop %v5386
        %v5388 = vmul.f32 %v5358, 1.442695
        %v5389 = vpow.pop %v5388
        %v5390 = vmul.f32 %v5359, 1.442695
        %v5391 = vpow.pop %v5390
        %5392 = vadd.xlane.f32.xlu0 %v5361
        %v5393 = vpop.xlane.xlu0 %5392
        %5394 = vadd.xlane.f32.xlu0 %v5363
        %v5395 = vpop.xlane.xlu0 %5394
        %5396 = vadd.xlane.f32.xlu0 %v5365
        %v5397 = vpop.xlane.xlu0 %5396
        %5398 = vadd.xlane.f32.xlu0 %v5367
        %v5399 = vpop.xlane.xlu0 %5398
        %5400 = vadd.xlane.f32.xlu0 %v5369
        %v5401 = vpop.xlane.xlu0 %5400
        %5402 = vadd.xlane.f32.xlu0 %v5371
        %v5403 = vpop.xlane.xlu0 %5402
        %5404 = vadd.xlane.f32.xlu0 %v5373
        %v5405 = vpop.xlane.xlu0 %5404
        %5406 = vadd.xlane.f32.xlu0 %v5375
        %v5407 = vpop.xlane.xlu0 %5406
        %5408 = vadd.xlane.f32.xlu0 %v5377
        %v5409 = vpop.xlane.xlu0 %5408
        %5410 = vadd.xlane.f32.xlu0 %v5379
        %v5411 = vpop.xlane.xlu0 %5410
        %5412 = vadd.xlane.f32.xlu0 %v5381
        %v5413 = vpop.xlane.xlu0 %5412
        %5414 = vadd.xlane.f32.xlu0 %v5383
        %v5415 = vpop.xlane.xlu0 %5414
        %5416 = vadd.xlane.f32.xlu0 %v5385
        %v5417 = vpop.xlane.xlu0 %5416
        %5418 = vadd.xlane.f32.xlu0 %v5387
        %v5419 = vpop.xlane.xlu0 %5418
        %5420 = vadd.xlane.f32.xlu0 %v5389
        %v5421 = vpop.xlane.xlu0 %5420
        %5422 = vadd.xlane.f32.xlu0 %v5391
        %v5423 = vpop.xlane.xlu0 %5422
        %v5424 = vrcp.pop %v5393
        %v5425 = vrcp.pop %v5395
        %v5426 = vrcp.pop %v5397
        %v5427 = vrcp.pop %v5399
        %v5428 = vrcp.pop %v5401
        %v5429 = vrcp.pop %v5403
        %v5430 = vrcp.pop %v5405
        %v5431 = vrcp.pop %v5407
        %v5432 = vrcp.pop %v5409
        %v5433 = vrcp.pop %v5411
        %v5434 = vrcp.pop %v5413
        %v5435 = vrcp.pop %v5415
        %v5436 = vrcp.pop %v5417
        %v5437 = vrcp.pop %v5419
        %v5438 = vrcp.pop %v5421
        %v5439 = vrcp.pop %v5423
        %v5440 = vpack.c.bf16 %v5363, %v5361
        %v5441 = vpack.c.bf16 %v5367, %v5365
        %v5442 = vpack.c.bf16 %v5371, %v5369
        %v5443 = vpack.c.bf16 %v5375, %v5373
        %v5444 = vpack.c.bf16 %v5379, %v5377
        %v5445 = vpack.c.bf16 %v5383, %v5381
        %v5446 = vpack.c.bf16 %v5387, %v5385
        %v5447 = vpack.c.bf16 %v5391, %v5389
        %5448 = vrot.lane.b32.xlu0 %v4067, 64
        %v5449 = vpop.permute.xlu0 %5448
        %5450 = vrot.lane.b32.xlu0 %v4068, 64
        %v5451 = vpop.permute.xlu0 %5450
        %5452 = vrot.lane.b32.xlu0 %v4069, 64
        %v5453 = vpop.permute.xlu0 %5452
        %5454 = vrot.lane.b32.xlu0 %v4070, 64
        %v5455 = vpop.permute.xlu0 %5454
        %5456 = vrot.lane.b32.xlu0 %v4071, 64
        %v5457 = vpop.permute.xlu0 %5456
        %5458 = vrot.lane.b32.xlu0 %v4072, 64
        %v5459 = vpop.permute.xlu0 %5458
        %5460 = vrot.lane.b32.xlu0 %v4073, 64
        %v5461 = vpop.permute.xlu0 %5460
        %5462 = vrot.lane.b32.xlu0 %v4074, 64
        %v5463 = vpop.permute.xlu0 %5462
        %5472 = vmatprep.subr.bf16.mxu0 0
        %5473 = vmatpush1.bf16.msra.mxu0 %v5463
        %5474 = vmatprep.subr.bf16.mxu0 0
        %5475 = vmatpush1.bf16.msra.mxu0 %v5461
        %5476 = vmatprep.subr.bf16.mxu0 0
        %5477 = vmatpush1.bf16.msra.mxu0 %v5459
        %5478 = vmatprep.subr.bf16.mxu0 0
        %5479 = vmatpush1.bf16.msra.mxu0 %v5457
        %5480 = vmatprep.subr.bf16.mxu0 0
        %5481 = vmatpush1.bf16.msra.mxu0 %v5455
        %5482 = vmatprep.subr.bf16.mxu0 0
        %5483 = vmatpush1.bf16.msra.mxu0 %v5453
        %5484 = vmatprep.subr.bf16.mxu0 0
        %5485 = vmatpush1.bf16.msra.mxu0 %v5451
        %5486 = vmatprep.subr.bf16.mxu0 0
        %5487 = vmatpush1.bf16.msra.mxu0 %v5449
        %5488 = vmatprep.subr.bf16.mxu0 0
        %5489 = vmatpush2.bf16.msra.mxu0 0
        %5490 = vmatprep.subr.bf16.mxu0 0
        %5491 = vmatpush2.bf16.msra.mxu0 0
        %5492 = vmatprep.subr.bf16.mxu0 0
        %5493 = vmatpush2.bf16.msra.mxu0 0
        %5494 = vmatprep.subr.bf16.mxu0 0
        %5495 = vmatpush2.bf16.msra.mxu0 0
        %5496 = vmatprep.subr.bf16.mxu0 0
        %5497 = vmatpush2.bf16.msra.mxu0 0
        %5498 = vmatprep.subr.bf16.mxu0 0
        %5499 = vmatpush2.bf16.msra.mxu0 0
        %5500 = vmatprep.subr.bf16.mxu0 0
        %5501 = vmatpush2.bf16.msra.mxu0 0
        %5502 = vmatprep.subr.bf16.mxu0 0
        %5503 = vmatpush2.bf16.msra.mxu0 0
        %5504 = vmatprep.mubr.bf16.mxu0 0
        %5505 = vmatmul.mubr.bf16.gmra.mxu0 %v5440
        %v5506 = vpop.f32.mrf.mxu0
        %v5507 = vadd.f32 0.0, %v5506
        %v5508 = vpop.f32.mrf.mxu0
        %v5509 = vpop.f32.mrf.mxu0
        %v5510 = vadd.f32 0.0, %v5509
        %v5511 = vpop.f32.mrf.mxu0
        %5512 = vmatprep.mubr.bf16.mxu0 0
        %5513 = vmatmul.mubr.bf16.gmra.mxu0 %v5441
        %v5514 = vpop.f32.mrf.mxu0
        %v5515 = vadd.f32 0.0, %v5514
        %v5516 = vpop.f32.mrf.mxu0
        %v5517 = vpop.f32.mrf.mxu0
        %v5518 = vadd.f32 0.0, %v5517
        %v5519 = vpop.f32.mrf.mxu0
        %5520 = vmatprep.mubr.bf16.mxu0 0
        %5521 = vmatmul.mubr.bf16.gmra.mxu0 %v5442
        %v5522 = vpop.f32.mrf.mxu0
        %v5523 = vadd.f32 0.0, %v5522
        %v5524 = vpop.f32.mrf.mxu0
        %v5525 = vpop.f32.mrf.mxu0
        %v5526 = vadd.f32 0.0, %v5525
        %v5527 = vpop.f32.mrf.mxu0
        %5528 = vmatprep.mubr.bf16.mxu0 0
        %5529 = vmatmul.mubr.bf16.gmra.mxu0 %v5443
        %v5530 = vpop.f32.mrf.mxu0
        %v5531 = vadd.f32 0.0, %v5530
        %v5532 = vpop.f32.mrf.mxu0
        %v5533 = vpop.f32.mrf.mxu0
        %v5534 = vadd.f32 0.0, %v5533
        %v5535 = vpop.f32.mrf.mxu0
        %5536 = vmatprep.mubr.bf16.mxu0 0
        %5537 = vmatmul.mubr.bf16.gmra.mxu0 %v5444
        %v5538 = vpop.f32.mrf.mxu0
        %v5539 = vadd.f32 0.0, %v5538
        %v5540 = vpop.f32.mrf.mxu0
        %v5541 = vpop.f32.mrf.mxu0
        %v5542 = vadd.f32 0.0, %v5541
        %v5543 = vpop.f32.mrf.mxu0
        %5544 = vmatprep.mubr.bf16.mxu0 0
        %5545 = vmatmul.mubr.bf16.gmra.mxu0 %v5445
        %v5546 = vpop.f32.mrf.mxu0
        %v5547 = vadd.f32 0.0, %v5546
        %v5548 = vpop.f32.mrf.mxu0
        %v5549 = vpop.f32.mrf.mxu0
        %v5550 = vadd.f32 0.0, %v5549
        %v5551 = vpop.f32.mrf.mxu0
        %5552 = vmatprep.mubr.bf16.mxu0 0
        %5553 = vmatmul.mubr.bf16.gmra.mxu0 %v5446
        %v5554 = vpop.f32.mrf.mxu0
        %v5555 = vadd.f32 0.0, %v5554
        %v5556 = vpop.f32.mrf.mxu0
        %v5557 = vpop.f32.mrf.mxu0
        %v5558 = vadd.f32 0.0, %v5557
        %v5559 = vpop.f32.mrf.mxu0
        %5560 = vmatprep.mubr.bf16.mxu0 0
        %5561 = vmatmul.mubr.bf16.gmra.mxu0 %v5447
        %v5562 = vpop.f32.mrf.mxu0
        %v5563 = vadd.f32 0.0, %v5562
        %v5564 = vpop.f32.mrf.mxu0
        %v5565 = vpop.f32.mrf.mxu0
        %v5566 = vadd.f32 0.0, %v5565
        %v5567 = vpop.f32.mrf.mxu0
        %5568 = vdwg.mxu0
        %v5569 = vmul.f32 %v5507, %v5424
        %v5570 = vmul.f32 %v5510, %v5425
        %v5571 = vmul.f32 %v5515, %v5426
        %v5572 = vmul.f32 %v5518, %v5427
        %v5573 = vmul.f32 %v5523, %v5428
        %v5574 = vmul.f32 %v5526, %v5429
        %v5575 = vmul.f32 %v5531, %v5430
        %v5576 = vmul.f32 %v5534, %v5431
        %v5577 = vmul.f32 %v5539, %v5432
        %v5578 = vmul.f32 %v5542, %v5433
        %v5579 = vmul.f32 %v5547, %v5434
        %v5580 = vmul.f32 %v5550, %v5435
        %v5581 = vmul.f32 %v5555, %v5436
        %v5582 = vmul.f32 %v5558, %v5437
        %v5583 = vmul.f32 %v5563, %v5438
        %v5584 = vmul.f32 %v5566, %v5439
        %v5585 = vpack.c.bf16 %v5570, %v5569
        %v5586 = vpack.c.bf16 %v5572, %v5571
        %v5587 = vpack.c.bf16 %v5574, %v5573
        %v5588 = vpack.c.bf16 %v5576, %v5575
        %v5589 = vpack.c.bf16 %v5578, %v5577
        %v5590 = vpack.c.bf16 %v5580, %v5579
        %v5591 = vpack.c.bf16 %v5582, %v5581
        %v5592 = vpack.c.bf16 %v5584, %v5583
        %v5601 = vunpack.c.l.b16 %v5585
        %v5602 = vunpack.c.h.b16 %v5585
        %v5603 = vunpack.c.l.b16 %v5586
        %v5604 = vunpack.c.h.b16 %v5586
        %v5605 = vunpack.c.l.b16 %v5587
        %v5606 = vunpack.c.h.b16 %v5587
        %v5607 = vunpack.c.l.b16 %v5588
        %v5608 = vunpack.c.h.b16 %v5588
        %v5609 = vunpack.c.l.b16 %v5589
        %v5610 = vunpack.c.h.b16 %v5589
        %v5611 = vunpack.c.l.b16 %v5590
        %v5612 = vunpack.c.h.b16 %v5590
        %v5613 = vunpack.c.l.b16 %v5591
        %v5614 = vunpack.c.h.b16 %v5591
        %v5615 = vunpack.c.l.b16 %v5592
        %v5616 = vunpack.c.h.b16 %v5592
        %v5617 = vpack.c.b16 %v5601, %v5601
        %v5618 = vpack.c.b16 %v5602, %v5602
        %v5619 = vpack.c.b16 %v5603, %v5603
        %v5620 = vpack.c.b16 %v5604, %v5604
        %v5621 = vpack.c.b16 %v5605, %v5605
        %v5622 = vpack.c.b16 %v5606, %v5606
        %v5623 = vpack.c.b16 %v5607, %v5607
        %v5624 = vpack.c.b16 %v5608, %v5608
        %v5625 = vpack.c.b16 %v5609, %v5609
        %v5626 = vpack.c.b16 %v5610, %v5610
        %v5627 = vpack.c.b16 %v5611, %v5611
        %v5628 = vpack.c.b16 %v5612, %v5612
        %v5629 = vpack.c.b16 %v5613, %v5613
        %v5630 = vpack.c.b16 %v5614, %v5614
        %v5631 = vpack.c.b16 %v5615, %v5615
        %v5632 = vpack.c.b16 %v5616, %v5616
        %5633 = vrot.lane.b32.xlu0 %v5617, 64
        %v5634 = vpop.permute.xlu0 %5633
        %5635 = vrot.lane.b32.xlu0 %v5618, 64
        %v5636 = vpop.permute.xlu0 %5635
        %5637 = vrot.lane.b32.xlu0 %v5619, 64
        %v5638 = vpop.permute.xlu0 %5637
        %5639 = vrot.lane.b32.xlu0 %v5620, 64
        %v5640 = vpop.permute.xlu0 %5639
        %5641 = vrot.lane.b32.xlu0 %v5621, 64
        %v5642 = vpop.permute.xlu0 %5641
        %5643 = vrot.lane.b32.xlu0 %v5622, 64
        %v5644 = vpop.permute.xlu0 %5643
        %5645 = vrot.lane.b32.xlu0 %v5623, 64
        %v5646 = vpop.permute.xlu0 %5645
        %5647 = vrot.lane.b32.xlu0 %v5624, 64
        %v5648 = vpop.permute.xlu0 %5647
        %5649 = vrot.lane.b32.xlu0 %v5625, 64
        %v5650 = vpop.permute.xlu0 %5649
        %5651 = vrot.lane.b32.xlu0 %v5626, 64
        %v5652 = vpop.permute.xlu0 %5651
        %5653 = vrot.lane.b32.xlu0 %v5627, 64
        %v5654 = vpop.permute.xlu0 %5653
        %5655 = vrot.lane.b32.xlu0 %v5628, 64
        %v5656 = vpop.permute.xlu0 %5655
        %5657 = vrot.lane.b32.xlu0 %v5629, 64
        %v5658 = vpop.permute.xlu0 %5657
        %5659 = vrot.lane.b32.xlu0 %v5630, 64
        %v5660 = vpop.permute.xlu0 %5659
        %5661 = vrot.lane.b32.xlu0 %v5631, 64
        %v5662 = vpop.permute.xlu0 %5661
        %5663 = vrot.lane.b32.xlu0 %v5632, 64
        %v5664 = vpop.permute.xlu0 %5663
        %5681 = vst.msk [vmem:[#allocation2 + $0x40] sm:$0xf] %vm3375, %v5634
        %5682 = vst.msk [vmem:[#allocation2 + $0x44] sm:$0xf] %vm3375, %v5636
        %5683 = vst.msk [vmem:[#allocation2 + $0x48] sm:$0xf] %vm3375, %v5638
        %5684 = vst.msk [vmem:[#allocation2 + $0x4c] sm:$0xf] %vm3375, %v5640
        %5685 = vst.msk [vmem:[#allocation2 + $0x50] sm:$0xf] %vm3375, %v5642
        %5686 = vst.msk [vmem:[#allocation2 + $0x54] sm:$0xf] %vm3375, %v5644
        %5687 = vst.msk [vmem:[#allocation2 + $0x58] sm:$0xf] %vm3375, %v5646
        %5688 = vst.msk [vmem:[#allocation2 + $0x5c] sm:$0xf] %vm3375, %v5648
        %5689 = vst.msk [vmem:[#allocation2 + $0x60] sm:$0xf] %vm3375, %v5650
        %5690 = vst.msk [vmem:[#allocation2 + $0x64] sm:$0xf] %vm3375, %v5652
        %5691 = vst.msk [vmem:[#allocation2 + $0x68] sm:$0xf] %vm3375, %v5654
        %5692 = vst.msk [vmem:[#allocation2 + $0x6c] sm:$0xf] %vm3375, %v5656
        %5693 = vst.msk [vmem:[#allocation2 + $0x70] sm:$0xf] %vm3375, %v5658
        %5694 = vst.msk [vmem:[#allocation2 + $0x74] sm:$0xf] %vm3375, %v5660
        %5695 = vst.msk [vmem:[#allocation2 + $0x78] sm:$0xf] %vm3375, %v5662
        %5696 = vst.msk [vmem:[#allocation2 + $0x7c] sm:$0xf] %vm3375, %v5664
        %5697 = vrot.lane.b32.xlu0 %v4003, 32
        %v5698 = vpop.permute.xlu0 %5697
        %5699 = vrot.lane.b32.xlu0 %v4004, 32
        %v5700 = vpop.permute.xlu0 %5699
        %5701 = vrot.lane.b32.xlu0 %v4005, 32
        %v5702 = vpop.permute.xlu0 %5701
        %5703 = vrot.lane.b32.xlu0 %v4006, 32
        %v5704 = vpop.permute.xlu0 %5703
        %5705 = vrot.lane.b32.xlu0 %v4007, 32
        %v5706 = vpop.permute.xlu0 %5705
        %5707 = vrot.lane.b32.xlu0 %v4008, 32
        %v5708 = vpop.permute.xlu0 %5707
        %5709 = vrot.lane.b32.xlu0 %v4009, 32
        %v5710 = vpop.permute.xlu0 %5709
        %5711 = vrot.lane.b32.xlu0 %v4010, 32
        %v5712 = vpop.permute.xlu0 %5711
        %5713 = vrot.lane.b32.xlu0 %v4059, 32
        %v5714 = vpop.permute.xlu0 %5713
        %5715 = vrot.lane.b32.xlu0 %v4060, 32
        %v5716 = vpop.permute.xlu0 %5715
        %5717 = vrot.lane.b32.xlu0 %v4061, 32
        %v5718 = vpop.permute.xlu0 %5717
        %5719 = vrot.lane.b32.xlu0 %v4062, 32
        %v5720 = vpop.permute.xlu0 %5719
        %5721 = vrot.lane.b32.xlu0 %v4063, 32
        %v5722 = vpop.permute.xlu0 %5721
        %5723 = vrot.lane.b32.xlu0 %v4064, 32
        %v5724 = vpop.permute.xlu0 %5723
        %5725 = vrot.lane.b32.xlu0 %v4065, 32
        %v5726 = vpop.permute.xlu0 %5725
        %5727 = vrot.lane.b32.xlu0 %v4066, 32
        %v5728 = vpop.permute.xlu0 %5727
        %v5730 = vsel %vm1766, %v5698, 0
        %v5733 = vsel %vm1766, %v5700, 0
        %v5736 = vsel %vm1766, %v5702, 0
        %v5739 = vsel %vm1766, %v5704, 0
        %v5742 = vsel %vm1766, %v5706, 0
        %v5745 = vsel %vm1766, %v5708, 0
        %v5748 = vsel %vm1766, %v5710, 0
        %v5751 = vsel %vm1766, %v5712, 0
        %v5754 = vsel %vm1766, %v5714, 0
        %v5757 = vsel %vm1766, %v5716, 0
        %v5760 = vsel %vm1766, %v5718, 0
        %v5763 = vsel %vm1766, %v5720, 0
        %v5766 = vsel %vm1766, %v5722, 0
        %v5769 = vsel %vm1766, %v5724, 0
        %v5772 = vsel %vm1766, %v5726, 0
        %v5775 = vsel %vm1766, %v5728, 0
        %5777 = vmatprep.subr.bf16.mxu0 0
        %5778 = vmatpush1.bf16.xpose.msra.mxu0 %v5775
        %5779 = vmatprep.subr.bf16.mxu0 0
        %5780 = vmatpush1.bf16.xpose.msra.mxu0 %v5772
        %5781 = vmatprep.subr.bf16.mxu0 0
        %5782 = vmatpush1.bf16.xpose.msra.mxu0 %v5769
        %5783 = vmatprep.subr.bf16.mxu0 0
        %5784 = vmatpush1.bf16.xpose.msra.mxu0 %v5766
        %5785 = vmatprep.subr.bf16.mxu0 0
        %5786 = vmatpush1.bf16.xpose.msra.mxu0 %v5763
        %5787 = vmatprep.subr.bf16.mxu0 0
        %5788 = vmatpush1.bf16.xpose.msra.mxu0 %v5760
        %5789 = vmatprep.subr.bf16.mxu0 0
        %5790 = vmatpush1.bf16.xpose.msra.mxu0 %v5757
        %5791 = vmatprep.subr.bf16.mxu0 0
        %5792 = vmatpush1.bf16.xpose.msra.mxu0 %v5754
        %5793 = vmatprep.subr.bf16.mxu0 0
        %5794 = vmatpush2.bf16.xpose.msra.mxu0 0
        %5795 = vmatprep.subr.bf16.mxu0 0
        %5796 = vmatpush2.bf16.xpose.msra.mxu0 0
        %5797 = vmatprep.subr.bf16.mxu0 0
        %5798 = vmatpush2.bf16.xpose.msra.mxu0 0
        %5799 = vmatprep.subr.bf16.mxu0 0
        %5800 = vmatpush2.bf16.xpose.msra.mxu0 0
        %5801 = vmatprep.subr.bf16.mxu0 0
        %5802 = vmatpush2.bf16.xpose.msra.mxu0 0
        %5803 = vmatprep.subr.bf16.mxu0 0
        %5804 = vmatpush2.bf16.xpose.msra.mxu0 0
        %5805 = vmatprep.subr.bf16.mxu0 0
        %5806 = vmatpush2.bf16.xpose.msra.mxu0 0
        %5807 = vmatprep.subr.bf16.mxu0 0
        %5808 = vmatpush2.bf16.xpose.msra.mxu0 0
        %5809 = vmatprep.mubr.bf16.mxu0 0
        %5810 = vmatmul.mubr.bf16.gmra.mxu0 %v5730
        %v5811 = vpop.f32.mrf.mxu0
        %v5812 = vadd.f32 %v1630, %v5811
        %v5813 = vpop.f32.mrf.mxu0
        %v5814 = vpop.f32.mrf.mxu0
        %v5815 = vadd.f32 %v1631, %v5814
        %v5816 = vpop.f32.mrf.mxu0
        %5817 = vmatprep.mubr.bf16.mxu0 0
        %5818 = vmatmul.mubr.bf16.gmra.mxu0 %v5733
        %v5819 = vpop.f32.mrf.mxu0
        %v5820 = vadd.f32 %v1632, %v5819
        %v5821 = vpop.f32.mrf.mxu0
        %v5822 = vpop.f32.mrf.mxu0
        %v5823 = vadd.f32 %v1633, %v5822
        %v5824 = vpop.f32.mrf.mxu0
        %5825 = vmatprep.mubr.bf16.mxu0 0
        %5826 = vmatmul.mubr.bf16.gmra.mxu0 %v5736
        %v5827 = vpop.f32.mrf.mxu0
        %v5828 = vadd.f32 %v1634, %v5827
        %v5829 = vpop.f32.mrf.mxu0
        %v5830 = vpop.f32.mrf.mxu0
        %v5831 = vadd.f32 %v1635, %v5830
        %v5832 = vpop.f32.mrf.mxu0
        %5833 = vmatprep.mubr.bf16.mxu0 0
        %5834 = vmatmul.mubr.bf16.gmra.mxu0 %v5739
        %v5835 = vpop.f32.mrf.mxu0
        %v5836 = vadd.f32 %v1636, %v5835
        %v5837 = vpop.f32.mrf.mxu0
        %v5838 = vpop.f32.mrf.mxu0
        %v5839 = vadd.f32 %v1637, %v5838
        %v5840 = vpop.f32.mrf.mxu0
        %5841 = vmatprep.mubr.bf16.mxu0 0
        %5842 = vmatmul.mubr.bf16.gmra.mxu0 %v5742
        %v5843 = vpop.f32.mrf.mxu0
        %v5844 = vadd.f32 %v1638, %v5843
        %v5845 = vpop.f32.mrf.mxu0
        %v5846 = vpop.f32.mrf.mxu0
        %v5847 = vadd.f32 %v1639, %v5846
        %v5848 = vpop.f32.mrf.mxu0
        %5849 = vmatprep.mubr.bf16.mxu0 0
        %5850 = vmatmul.mubr.bf16.gmra.mxu0 %v5745
        %v5851 = vpop.f32.mrf.mxu0
        %v5852 = vadd.f32 %v1640, %v5851
        %v5853 = vpop.f32.mrf.mxu0
        %v5854 = vpop.f32.mrf.mxu0
        %v5855 = vadd.f32 %v1641, %v5854
        %v5856 = vpop.f32.mrf.mxu0
        %5857 = vmatprep.mubr.bf16.mxu0 0
        %5858 = vmatmul.mubr.bf16.gmra.mxu0 %v5748
        %v5859 = vpop.f32.mrf.mxu0
        %v5860 = vadd.f32 %v1642, %v5859
        %v5861 = vpop.f32.mrf.mxu0
        %v5862 = vpop.f32.mrf.mxu0
        %v5863 = vadd.f32 %v1643, %v5862
        %v5864 = vpop.f32.mrf.mxu0
        %5865 = vmatprep.mubr.bf16.mxu0 0
        %5866 = vmatmul.mubr.bf16.gmra.mxu0 %v5751
        %v5867 = vpop.f32.mrf.mxu0
        %v5868 = vadd.f32 %v1644, %v5867
        %v5869 = vpop.f32.mrf.mxu0
        %v5870 = vpop.f32.mrf.mxu0
        %v5871 = vadd.f32 %v1645, %v5870
        %v5872 = vpop.f32.mrf.mxu0
        %5873 = vdwg.mxu0
        %5874 = vmax.xlane.f32.xlu0 %v5812
        %v5875 = vpop.xlane.xlu0 %5874
        %5876 = vmax.xlane.f32.xlu0 %v5815
        %v5877 = vpop.xlane.xlu0 %5876
        %5878 = vmax.xlane.f32.xlu0 %v5820
        %v5879 = vpop.xlane.xlu0 %5878
        %5880 = vmax.xlane.f32.xlu0 %v5823
        %v5881 = vpop.xlane.xlu0 %5880
        %5882 = vmax.xlane.f32.xlu0 %v5828
        %v5883 = vpop.xlane.xlu0 %5882
        %5884 = vmax.xlane.f32.xlu0 %v5831
        %v5885 = vpop.xlane.xlu0 %5884
        %5886 = vmax.xlane.f32.xlu0 %v5836
        %v5887 = vpop.xlane.xlu0 %5886
        %5888 = vmax.xlane.f32.xlu0 %v5839
        %v5889 = vpop.xlane.xlu0 %5888
        %5890 = vmax.xlane.f32.xlu0 %v5844
        %v5891 = vpop.xlane.xlu0 %5890
        %5892 = vmax.xlane.f32.xlu0 %v5847
        %v5893 = vpop.xlane.xlu0 %5892
        %5894 = vmax.xlane.f32.xlu0 %v5852
        %v5895 = vpop.xlane.xlu0 %5894
        %5896 = vmax.xlane.f32.xlu0 %v5855
        %v5897 = vpop.xlane.xlu0 %5896
        %5898 = vmax.xlane.f32.xlu0 %v5860
        %v5899 = vpop.xlane.xlu0 %5898
        %5900 = vmax.xlane.f32.xlu0 %v5863
        %v5901 = vpop.xlane.xlu0 %5900
        %5902 = vmax.xlane.f32.xlu0 %v5868
        %v5903 = vpop.xlane.xlu0 %5902
        %5904 = vmax.xlane.f32.xlu0 %v5871
        %v5905 = vpop.xlane.xlu0 %5904
        %v5906 = vsub.f32 %v5812, %v5875
        %v5907 = vsub.f32 %v5815, %v5877
        %v5908 = vsub.f32 %v5820, %v5879
        %v5909 = vsub.f32 %v5823, %v5881
        %v5910 = vsub.f32 %v5828, %v5883
        %v5911 = vsub.f32 %v5831, %v5885
        %v5912 = vsub.f32 %v5836, %v5887
        %v5913 = vsub.f32 %v5839, %v5889
        %v5914 = vsub.f32 %v5844, %v5891
        %v5915 = vsub.f32 %v5847, %v5893
        %v5916 = vsub.f32 %v5852, %v5895
        %v5917 = vsub.f32 %v5855, %v5897
        %v5918 = vsub.f32 %v5860, %v5899
        %v5919 = vsub.f32 %v5863, %v5901
        %v5920 = vsub.f32 %v5868, %v5903
        %v5921 = vsub.f32 %v5871, %v5905
        %v5922 = vmul.f32 %v5906, 1.442695
        %v5923 = vpow.pop %v5922
        %v5924 = vmul.f32 %v5907, 1.442695
        %v5925 = vpow.pop %v5924
        %v5926 = vmul.f32 %v5908, 1.442695
        %v5927 = vpow.pop %v5926
        %v5928 = vmul.f32 %v5909, 1.442695
        %v5929 = vpow.pop %v5928
        %v5930 = vmul.f32 %v5910, 1.442695
        %v5931 = vpow.pop %v5930
        %v5932 = vmul.f32 %v5911, 1.442695
        %v5933 = vpow.pop %v5932
        %v5934 = vmul.f32 %v5912, 1.442695
        %v5935 = vpow.pop %v5934
        %v5936 = vmul.f32 %v5913, 1.442695
        %v5937 = vpow.pop %v5936
        %v5938 = vmul.f32 %v5914, 1.442695
        %v5939 = vpow.pop %v5938
        %v5940 = vmul.f32 %v5915, 1.442695
        %v5941 = vpow.pop %v5940
        %v5942 = vmul.f32 %v5916, 1.442695
        %v5943 = vpow.pop %v5942
        %v5944 = vmul.f32 %v5917, 1.442695
        %v5945 = vpow.pop %v5944
        %v5946 = vmul.f32 %v5918, 1.442695
        %v5947 = vpow.pop %v5946
        %v5948 = vmul.f32 %v5919, 1.442695
        %v5949 = vpow.pop %v5948
        %v5950 = vmul.f32 %v5920, 1.442695
        %v5951 = vpow.pop %v5950
        %v5952 = vmul.f32 %v5921, 1.442695
        %v5953 = vpow.pop %v5952
        %5954 = vadd.xlane.f32.xlu0 %v5923
        %v5955 = vpop.xlane.xlu0 %5954
        %5956 = vadd.xlane.f32.xlu0 %v5925
        %v5957 = vpop.xlane.xlu0 %5956
        %5958 = vadd.xlane.f32.xlu0 %v5927
        %v5959 = vpop.xlane.xlu0 %5958
        %5960 = vadd.xlane.f32.xlu0 %v5929
        %v5961 = vpop.xlane.xlu0 %5960
        %5962 = vadd.xlane.f32.xlu0 %v5931
        %v5963 = vpop.xlane.xlu0 %5962
        %5964 = vadd.xlane.f32.xlu0 %v5933
        %v5965 = vpop.xlane.xlu0 %5964
        %5966 = vadd.xlane.f32.xlu0 %v5935
        %v5967 = vpop.xlane.xlu0 %5966
        %5968 = vadd.xlane.f32.xlu0 %v5937
        %v5969 = vpop.xlane.xlu0 %5968
        %5970 = vadd.xlane.f32.xlu0 %v5939
        %v5971 = vpop.xlane.xlu0 %5970
        %5972 = vadd.xlane.f32.xlu0 %v5941
        %v5973 = vpop.xlane.xlu0 %5972
        %5974 = vadd.xlane.f32.xlu0 %v5943
        %v5975 = vpop.xlane.xlu0 %5974
        %5976 = vadd.xlane.f32.xlu0 %v5945
        %v5977 = vpop.xlane.xlu0 %5976
        %5978 = vadd.xlane.f32.xlu0 %v5947
        %v5979 = vpop.xlane.xlu0 %5978
        %5980 = vadd.xlane.f32.xlu0 %v5949
        %v5981 = vpop.xlane.xlu0 %5980
        %5982 = vadd.xlane.f32.xlu0 %v5951
        %v5983 = vpop.xlane.xlu0 %5982
        %5984 = vadd.xlane.f32.xlu0 %v5953
        %v5985 = vpop.xlane.xlu0 %5984
        %v5986 = vrcp.pop %v5955
        %v5987 = vrcp.pop %v5957
        %v5988 = vrcp.pop %v5959
        %v5989 = vrcp.pop %v5961
        %v5990 = vrcp.pop %v5963
        %v5991 = vrcp.pop %v5965
        %v5992 = vrcp.pop %v5967
        %v5993 = vrcp.pop %v5969
        %v5994 = vrcp.pop %v5971
        %v5995 = vrcp.pop %v5973
        %v5996 = vrcp.pop %v5975
        %v5997 = vrcp.pop %v5977
        %v5998 = vrcp.pop %v5979
        %v5999 = vrcp.pop %v5981
        %v6000 = vrcp.pop %v5983
        %v6001 = vrcp.pop %v5985
        %v6002 = vpack.c.bf16 %v5925, %v5923
        %v6003 = vpack.c.bf16 %v5929, %v5927
        %v6004 = vpack.c.bf16 %v5933, %v5931
        %v6005 = vpack.c.bf16 %v5937, %v5935
        %v6006 = vpack.c.bf16 %v5941, %v5939
        %v6007 = vpack.c.bf16 %v5945, %v5943
        %v6008 = vpack.c.bf16 %v5949, %v5947
        %v6009 = vpack.c.bf16 %v5953, %v5951
        %6010 = vrot.lane.b32.xlu0 %v4067, 32
        %v6011 = vpop.permute.xlu0 %6010
        %6012 = vrot.lane.b32.xlu0 %v4068, 32
        %v6013 = vpop.permute.xlu0 %6012
        %6014 = vrot.lane.b32.xlu0 %v4069, 32
        %v6015 = vpop.permute.xlu0 %6014
        %6016 = vrot.lane.b32.xlu0 %v4070, 32
        %v6017 = vpop.permute.xlu0 %6016
        %6018 = vrot.lane.b32.xlu0 %v4071, 32
        %v6019 = vpop.permute.xlu0 %6018
        %6020 = vrot.lane.b32.xlu0 %v4072, 32
        %v6021 = vpop.permute.xlu0 %6020
        %6022 = vrot.lane.b32.xlu0 %v4073, 32
        %v6023 = vpop.permute.xlu0 %6022
        %6024 = vrot.lane.b32.xlu0 %v4074, 32
        %v6025 = vpop.permute.xlu0 %6024
        %6034 = vmatprep.subr.bf16.mxu0 0
        %6035 = vmatpush1.bf16.msra.mxu0 %v6025
        %6036 = vmatprep.subr.bf16.mxu0 0
        %6037 = vmatpush1.bf16.msra.mxu0 %v6023
        %6038 = vmatprep.subr.bf16.mxu0 0
        %6039 = vmatpush1.bf16.msra.mxu0 %v6021
        %6040 = vmatprep.subr.bf16.mxu0 0
        %6041 = vmatpush1.bf16.msra.mxu0 %v6019
        %6042 = vmatprep.subr.bf16.mxu0 0
        %6043 = vmatpush1.bf16.msra.mxu0 %v6017
        %6044 = vmatprep.subr.bf16.mxu0 0
        %6045 = vmatpush1.bf16.msra.mxu0 %v6015
        %6046 = vmatprep.subr.bf16.mxu0 0
        %6047 = vmatpush1.bf16.msra.mxu0 %v6013
        %6048 = vmatprep.subr.bf16.mxu0 0
        %6049 = vmatpush1.bf16.msra.mxu0 %v6011
        %6050 = vmatprep.subr.bf16.mxu0 0
        %6051 = vmatpush2.bf16.msra.mxu0 0
        %6052 = vmatprep.subr.bf16.mxu0 0
        %6053 = vmatpush2.bf16.msra.mxu0 0
        %6054 = vmatprep.subr.bf16.mxu0 0
        %6055 = vmatpush2.bf16.msra.mxu0 0
        %6056 = vmatprep.subr.bf16.mxu0 0
        %6057 = vmatpush2.bf16.msra.mxu0 0
        %6058 = vmatprep.subr.bf16.mxu0 0
        %6059 = vmatpush2.bf16.msra.mxu0 0
        %6060 = vmatprep.subr.bf16.mxu0 0
        %6061 = vmatpush2.bf16.msra.mxu0 0
        %6062 = vmatprep.subr.bf16.mxu0 0
        %6063 = vmatpush2.bf16.msra.mxu0 0
        %6064 = vmatprep.subr.bf16.mxu0 0
        %6065 = vmatpush2.bf16.msra.mxu0 0
        %6066 = vmatprep.mubr.bf16.mxu0 0
        %6067 = vmatmul.mubr.bf16.gmra.mxu0 %v6002
        %v6068 = vpop.f32.mrf.mxu0
        %v6069 = vadd.f32 0.0, %v6068
        %v6070 = vpop.f32.mrf.mxu0
        %v6071 = vpop.f32.mrf.mxu0
        %v6072 = vadd.f32 0.0, %v6071
        %v6073 = vpop.f32.mrf.mxu0
        %6074 = vmatprep.mubr.bf16.mxu0 0
        %6075 = vmatmul.mubr.bf16.gmra.mxu0 %v6003
        %v6076 = vpop.f32.mrf.mxu0
        %v6077 = vadd.f32 0.0, %v6076
        %v6078 = vpop.f32.mrf.mxu0
        %v6079 = vpop.f32.mrf.mxu0
        %v6080 = vadd.f32 0.0, %v6079
        %v6081 = vpop.f32.mrf.mxu0
        %6082 = vmatprep.mubr.bf16.mxu0 0
        %6083 = vmatmul.mubr.bf16.gmra.mxu0 %v6004
        %v6084 = vpop.f32.mrf.mxu0
        %v6085 = vadd.f32 0.0, %v6084
        %v6086 = vpop.f32.mrf.mxu0
        %v6087 = vpop.f32.mrf.mxu0
        %v6088 = vadd.f32 0.0, %v6087
        %v6089 = vpop.f32.mrf.mxu0
        %6090 = vmatprep.mubr.bf16.mxu0 0
        %6091 = vmatmul.mubr.bf16.gmra.mxu0 %v6005
        %v6092 = vpop.f32.mrf.mxu0
        %v6093 = vadd.f32 0.0, %v6092
        %v6094 = vpop.f32.mrf.mxu0
        %v6095 = vpop.f32.mrf.mxu0
        %v6096 = vadd.f32 0.0, %v6095
        %v6097 = vpop.f32.mrf.mxu0
        %6098 = vmatprep.mubr.bf16.mxu0 0
        %6099 = vmatmul.mubr.bf16.gmra.mxu0 %v6006
        %v6100 = vpop.f32.mrf.mxu0
        %v6101 = vadd.f32 0.0, %v6100
        %v6102 = vpop.f32.mrf.mxu0
        %v6103 = vpop.f32.mrf.mxu0
        %v6104 = vadd.f32 0.0, %v6103
        %v6105 = vpop.f32.mrf.mxu0
        %6106 = vmatprep.mubr.bf16.mxu0 0
        %6107 = vmatmul.mubr.bf16.gmra.mxu0 %v6007
        %v6108 = vpop.f32.mrf.mxu0
        %v6109 = vadd.f32 0.0, %v6108
        %v6110 = vpop.f32.mrf.mxu0
        %v6111 = vpop.f32.mrf.mxu0
        %v6112 = vadd.f32 0.0, %v6111
        %v6113 = vpop.f32.mrf.mxu0
        %6114 = vmatprep.mubr.bf16.mxu0 0
        %6115 = vmatmul.mubr.bf16.gmra.mxu0 %v6008
        %v6116 = vpop.f32.mrf.mxu0
        %v6117 = vadd.f32 0.0, %v6116
        %v6118 = vpop.f32.mrf.mxu0
        %v6119 = vpop.f32.mrf.mxu0
        %v6120 = vadd.f32 0.0, %v6119
        %v6121 = vpop.f32.mrf.mxu0
        %6122 = vmatprep.mubr.bf16.mxu0 0
        %6123 = vmatmul.mubr.bf16.gmra.mxu0 %v6009
        %v6124 = vpop.f32.mrf.mxu0
        %v6125 = vadd.f32 0.0, %v6124
        %v6126 = vpop.f32.mrf.mxu0
        %v6127 = vpop.f32.mrf.mxu0
        %v6128 = vadd.f32 0.0, %v6127
        %v6129 = vpop.f32.mrf.mxu0
        %6130 = vdwg.mxu0
        %v6131 = vmul.f32 %v6069, %v5986
        %v6132 = vmul.f32 %v6072, %v5987
        %v6133 = vmul.f32 %v6077, %v5988
        %v6134 = vmul.f32 %v6080, %v5989
        %v6135 = vmul.f32 %v6085, %v5990
        %v6136 = vmul.f32 %v6088, %v5991
        %v6137 = vmul.f32 %v6093, %v5992
        %v6138 = vmul.f32 %v6096, %v5993
        %v6139 = vmul.f32 %v6101, %v5994
        %v6140 = vmul.f32 %v6104, %v5995
        %v6141 = vmul.f32 %v6109, %v5996
        %v6142 = vmul.f32 %v6112, %v5997
        %v6143 = vmul.f32 %v6117, %v5998
        %v6144 = vmul.f32 %v6120, %v5999
        %v6145 = vmul.f32 %v6125, %v6000
        %v6146 = vmul.f32 %v6128, %v6001
        %v6147 = vpack.c.bf16 %v6132, %v6131
        %v6148 = vpack.c.bf16 %v6134, %v6133
        %v6149 = vpack.c.bf16 %v6136, %v6135
        %v6150 = vpack.c.bf16 %v6138, %v6137
        %v6151 = vpack.c.bf16 %v6140, %v6139
        %v6152 = vpack.c.bf16 %v6142, %v6141
        %v6153 = vpack.c.bf16 %v6144, %v6143
        %v6154 = vpack.c.bf16 %v6146, %v6145
        %v6163 = vunpack.c.l.b16 %v6147
        %v6164 = vunpack.c.h.b16 %v6147
        %v6165 = vunpack.c.l.b16 %v6148
        %v6166 = vunpack.c.h.b16 %v6148
        %v6167 = vunpack.c.l.b16 %v6149
        %v6168 = vunpack.c.h.b16 %v6149
        %v6169 = vunpack.c.l.b16 %v6150
        %v6170 = vunpack.c.h.b16 %v6150
        %v6171 = vunpack.c.l.b16 %v6151
        %v6172 = vunpack.c.h.b16 %v6151
        %v6173 = vunpack.c.l.b16 %v6152
        %v6174 = vunpack.c.h.b16 %v6152
        %v6175 = vunpack.c.l.b16 %v6153
        %v6176 = vunpack.c.h.b16 %v6153
        %v6177 = vunpack.c.l.b16 %v6154
        %v6178 = vunpack.c.h.b16 %v6154
        %v6179 = vpack.c.b16 %v6163, %v6163
        %v6180 = vpack.c.b16 %v6164, %v6164
        %v6181 = vpack.c.b16 %v6165, %v6165
        %v6182 = vpack.c.b16 %v6166, %v6166
        %v6183 = vpack.c.b16 %v6167, %v6167
        %v6184 = vpack.c.b16 %v6168, %v6168
        %v6185 = vpack.c.b16 %v6169, %v6169
        %v6186 = vpack.c.b16 %v6170, %v6170
        %v6187 = vpack.c.b16 %v6171, %v6171
        %v6188 = vpack.c.b16 %v6172, %v6172
        %v6189 = vpack.c.b16 %v6173, %v6173
        %v6190 = vpack.c.b16 %v6174, %v6174
        %v6191 = vpack.c.b16 %v6175, %v6175
        %v6192 = vpack.c.b16 %v6176, %v6176
        %v6193 = vpack.c.b16 %v6177, %v6177
        %v6194 = vpack.c.b16 %v6178, %v6178
        %6195 = vrot.lane.b32.xlu0 %v6179, 96
        %v6196 = vpop.permute.xlu0 %6195
        %6197 = vrot.lane.b32.xlu0 %v6180, 96
        %v6198 = vpop.permute.xlu0 %6197
        %6199 = vrot.lane.b32.xlu0 %v6181, 96
        %v6200 = vpop.permute.xlu0 %6199
        %6201 = vrot.lane.b32.xlu0 %v6182, 96
        %v6202 = vpop.permute.xlu0 %6201
        %6203 = vrot.lane.b32.xlu0 %v6183, 96
        %v6204 = vpop.permute.xlu0 %6203
        %6205 = vrot.lane.b32.xlu0 %v6184, 96
        %v6206 = vpop.permute.xlu0 %6205
        %6207 = vrot.lane.b32.xlu0 %v6185, 96
        %v6208 = vpop.permute.xlu0 %6207
        %6209 = vrot.lane.b32.xlu0 %v6186, 96
        %v6210 = vpop.permute.xlu0 %6209
        %6211 = vrot.lane.b32.xlu0 %v6187, 96
        %v6212 = vpop.permute.xlu0 %6211
        %6213 = vrot.lane.b32.xlu0 %v6188, 96
        %v6214 = vpop.permute.xlu0 %6213
        %6215 = vrot.lane.b32.xlu0 %v6189, 96
        %v6216 = vpop.permute.xlu0 %6215
        %6217 = vrot.lane.b32.xlu0 %v6190, 96
        %v6218 = vpop.permute.xlu0 %6217
        %6219 = vrot.lane.b32.xlu0 %v6191, 96
        %v6220 = vpop.permute.xlu0 %6219
        %6221 = vrot.lane.b32.xlu0 %v6192, 96
        %v6222 = vpop.permute.xlu0 %6221
        %6223 = vrot.lane.b32.xlu0 %v6193, 96
        %v6224 = vpop.permute.xlu0 %6223
        %6225 = vrot.lane.b32.xlu0 %v6194, 96
        %v6226 = vpop.permute.xlu0 %6225
        %6243 = vst.msk [vmem:[#allocation2 + $0x40] sm:$0xf] %vm3938, %v6196
        %6244 = vst.msk [vmem:[#allocation2 + $0x44] sm:$0xf] %vm3938, %v6198
        %6245 = vst.msk [vmem:[#allocation2 + $0x48] sm:$0xf] %vm3938, %v6200
        %6246 = vst.msk [vmem:[#allocation2 + $0x4c] sm:$0xf] %vm3938, %v6202
        %6247 = vst.msk [vmem:[#allocation2 + $0x50] sm:$0xf] %vm3938, %v6204
        %6248 = vst.msk [vmem:[#allocation2 + $0x54] sm:$0xf] %vm3938, %v6206
        %6249 = vst.msk [vmem:[#allocation2 + $0x58] sm:$0xf] %vm3938, %v6208
        %6250 = vst.msk [vmem:[#allocation2 + $0x5c] sm:$0xf] %vm3938, %v6210
        %6251 = vst.msk [vmem:[#allocation2 + $0x60] sm:$0xf] %vm3938, %v6212
        %6252 = vst.msk [vmem:[#allocation2 + $0x64] sm:$0xf] %vm3938, %v6214
        %6253 = vst.msk [vmem:[#allocation2 + $0x68] sm:$0xf] %vm3938, %v6216
        %6254 = vst.msk [vmem:[#allocation2 + $0x6c] sm:$0xf] %vm3938, %v6218
        %6255 = vst.msk [vmem:[#allocation2 + $0x70] sm:$0xf] %vm3938, %v6220
        %6256 = vst.msk [vmem:[#allocation2 + $0x74] sm:$0xf] %vm3938, %v6222
        %6257 = vst.msk [vmem:[#allocation2 + $0x78] sm:$0xf] %vm3938, %v6224
        %6258 = vst.msk [vmem:[#allocation2 + $0x7c] sm:$0xf] %vm3938, %v6226
        %v6259 = vld [vmem:[#allocation2] sm:$0xf]
        %v6260 = vld [vmem:[#allocation2 + $0x4] sm:$0xf]
        %v6261 = vld [vmem:[#allocation2 + $0x8] sm:$0xf]
        %v6262 = vld [vmem:[#allocation2 + $0xc] sm:$0xf]
        %v6263 = vld [vmem:[#allocation2 + $0x10] sm:$0xf]
        %v6264 = vld [vmem:[#allocation2 + $0x14] sm:$0xf]
        %v6265 = vld [vmem:[#allocation2 + $0x18] sm:$0xf]
        %v6266 = vld [vmem:[#allocation2 + $0x1c] sm:$0xf]
        %v6267 = vld [vmem:[#allocation2 + $0x20] sm:$0xf]
        %v6268 = vld [vmem:[#allocation2 + $0x24] sm:$0xf]
        %v6269 = vld [vmem:[#allocation2 + $0x28] sm:$0xf]
        %v6270 = vld [vmem:[#allocation2 + $0x2c] sm:$0xf]
        %v6271 = vld [vmem:[#allocation2 + $0x30] sm:$0xf]
        %v6272 = vld [vmem:[#allocation2 + $0x34] sm:$0xf]
        %v6273 = vld [vmem:[#allocation2 + $0x38] sm:$0xf]
        %v6274 = vld [vmem:[#allocation2 + $0x3c] sm:$0xf]
        %v6275 = vld [vmem:[#allocation2 + $0x40] sm:$0xf]
        %v6276 = vld [vmem:[#allocation2 + $0x44] sm:$0xf]
        %v6277 = vld [vmem:[#allocation2 + $0x48] sm:$0xf]
        %v6278 = vld [vmem:[#allocation2 + $0x4c] sm:$0xf]
        %v6279 = vld [vmem:[#allocation2 + $0x50] sm:$0xf]
        %v6280 = vld [vmem:[#allocation2 + $0x54] sm:$0xf]
        %v6281 = vld [vmem:[#allocation2 + $0x58] sm:$0xf]
        %v6282 = vld [vmem:[#allocation2 + $0x5c] sm:$0xf]
        %v6283 = vld [vmem:[#allocation2 + $0x60] sm:$0xf]
        %v6284 = vld [vmem:[#allocation2 + $0x64] sm:$0xf]
        %v6285 = vld [vmem:[#allocation2 + $0x68] sm:$0xf]
        %v6286 = vld [vmem:[#allocation2 + $0x6c] sm:$0xf]
        %v6287 = vld [vmem:[#allocation2 + $0x70] sm:$0xf]
        %v6288 = vld [vmem:[#allocation2 + $0x74] sm:$0xf]
        %v6289 = vld [vmem:[#allocation2 + $0x78] sm:$0xf]
        %v6290 = vld [vmem:[#allocation2 + $0x7c] sm:$0xf]
        %v6291 = vld [vmem:[#allocation12] sm:$0xf]
        %v6292 = vld [vmem:[#allocation12 + $0x4] sm:$0xf]
        %v6293 = vld [vmem:[#allocation12 + $0x8] sm:$0xf]
        %v6294 = vld [vmem:[#allocation12 + $0xc] sm:$0xf]
        %v6295 = vld [vmem:[#allocation12 + $0x10] sm:$0xf]
        %v6296 = vld [vmem:[#allocation12 + $0x14] sm:$0xf]
        %v6297 = vld [vmem:[#allocation12 + $0x18] sm:$0xf]
        %v6298 = vld [vmem:[#allocation12 + $0x1c] sm:$0xf]
        %v6299 = vld [vmem:[#allocation12 + $0x20] sm:$0xf]
        %v6300 = vld [vmem:[#allocation12 + $0x24] sm:$0xf]
        %v6301 = vld [vmem:[#allocation12 + $0x28] sm:$0xf]
        %v6302 = vld [vmem:[#allocation12 + $0x2c] sm:$0xf]
        %v6303 = vld [vmem:[#allocation12 + $0x30] sm:$0xf]
        %v6304 = vld [vmem:[#allocation12 + $0x34] sm:$0xf]
        %v6305 = vld [vmem:[#allocation12 + $0x38] sm:$0xf]
        %v6306 = vld [vmem:[#allocation12 + $0x3c] sm:$0xf]
        %v6339 = vunpack.c.l.b16 %v6259
        %v6340 = vunpack.c.l.b16 %v6260
        %v6341 = vunpack.c.l.b16 %v6261
        %v6342 = vunpack.c.l.b16 %v6262
        %v6343 = vunpack.c.l.b16 %v6263
        %v6344 = vunpack.c.l.b16 %v6264
        %v6345 = vunpack.c.l.b16 %v6265
        %v6346 = vunpack.c.l.b16 %v6266
        %v6347 = vunpack.c.l.b16 %v6267
        %v6348 = vunpack.c.l.b16 %v6268
        %v6349 = vunpack.c.l.b16 %v6269
        %v6350 = vunpack.c.l.b16 %v6270
        %v6351 = vunpack.c.l.b16 %v6271
        %v6352 = vunpack.c.l.b16 %v6272
        %v6353 = vunpack.c.l.b16 %v6273
        %v6354 = vunpack.c.l.b16 %v6274
        %v6355 = vunpack.c.l.b16 %v6275
        %v6356 = vunpack.c.l.b16 %v6276
        %v6357 = vunpack.c.l.b16 %v6277
        %v6358 = vunpack.c.l.b16 %v6278
        %v6359 = vunpack.c.l.b16 %v6279
        %v6360 = vunpack.c.l.b16 %v6280
        %v6361 = vunpack.c.l.b16 %v6281
        %v6362 = vunpack.c.l.b16 %v6282
        %v6363 = vunpack.c.l.b16 %v6283
        %v6364 = vunpack.c.l.b16 %v6284
        %v6365 = vunpack.c.l.b16 %v6285
        %v6366 = vunpack.c.l.b16 %v6286
        %v6367 = vunpack.c.l.b16 %v6287
        %v6368 = vunpack.c.l.b16 %v6288
        %v6369 = vunpack.c.l.b16 %v6289
        %v6370 = vunpack.c.l.b16 %v6290
        %v6371 = vpack.c.b16 %v6340, %v6339
        %v6372 = vpack.c.b16 %v6342, %v6341
        %v6373 = vpack.c.b16 %v6344, %v6343
        %v6374 = vpack.c.b16 %v6346, %v6345
        %v6375 = vpack.c.b16 %v6348, %v6347
        %v6376 = vpack.c.b16 %v6350, %v6349
        %v6377 = vpack.c.b16 %v6352, %v6351
        %v6378 = vpack.c.b16 %v6354, %v6353
        %v6379 = vpack.c.b16 %v6356, %v6355
        %v6380 = vpack.c.b16 %v6358, %v6357
        %v6381 = vpack.c.b16 %v6360, %v6359
        %v6382 = vpack.c.b16 %v6362, %v6361
        %v6383 = vpack.c.b16 %v6364, %v6363
        %v6384 = vpack.c.b16 %v6366, %v6365
        %v6385 = vpack.c.b16 %v6368, %v6367
        %v6386 = vpack.c.b16 %v6370, %v6369
        %v6419 = vunpack.c.l.b16 %v6291
        %v6420 = vunpack.c.l.b16 %v6292
        %v6421 = vunpack.c.l.b16 %v6293
        %v6422 = vunpack.c.l.b16 %v6294
        %v6423 = vunpack.c.l.b16 %v6295
        %v6424 = vunpack.c.l.b16 %v6296
        %v6425 = vunpack.c.l.b16 %v6297
        %v6426 = vunpack.c.l.b16 %v6298
        %v6427 = vunpack.c.l.b16 %v6299
        %v6428 = vunpack.c.l.b16 %v6300
        %v6429 = vunpack.c.l.b16 %v6301
        %v6430 = vunpack.c.l.b16 %v6302
        %v6431 = vunpack.c.l.b16 %v6303
        %v6432 = vunpack.c.l.b16 %v6304
        %v6433 = vunpack.c.l.b16 %v6305
        %v6434 = vunpack.c.l.b16 %v6306
        %v6435 = vpack.c.b16 %v6420, %v6419
        %v6436 = vpack.c.b16 %v6422, %v6421
        %v6437 = vpack.c.b16 %v6424, %v6423
        %v6438 = vpack.c.b16 %v6426, %v6425
        %v6439 = vpack.c.b16 %v6428, %v6427
        %v6440 = vpack.c.b16 %v6430, %v6429
        %v6441 = vpack.c.b16 %v6432, %v6431
        %v6442 = vpack.c.b16 %v6434, %v6433
        %6451 = vmatprep.subr.bf16.mxu0 0
        %6452 = vmatpush1.bf16.msra.mxu0 %v6442
        %6453 = vmatprep.subr.bf16.mxu0 0
        %6454 = vmatpush1.bf16.msra.mxu0 %v6441
        %6455 = vmatprep.subr.bf16.mxu0 0
        %6456 = vmatpush1.bf16.msra.mxu0 %v6440
        %6457 = vmatprep.subr.bf16.mxu0 0
        %6458 = vmatpush1.bf16.msra.mxu0 %v6439
        %6459 = vmatprep.subr.bf16.mxu0 0
        %6460 = vmatpush1.bf16.msra.mxu0 %v6438
        %6461 = vmatprep.subr.bf16.mxu0 0
        %6462 = vmatpush1.bf16.msra.mxu0 %v6437
        %6463 = vmatprep.subr.bf16.mxu0 0
        %6464 = vmatpush1.bf16.msra.mxu0 %v6436
        %6465 = vmatprep.subr.bf16.mxu0 0
        %6466 = vmatpush1.bf16.msra.mxu0 %v6435
        %6467 = vmatprep.subr.bf16.mxu0 0
        %6468 = vmatpush2.bf16.msra.mxu0 0
        %6469 = vmatprep.subr.bf16.mxu0 0
        %6470 = vmatpush2.bf16.msra.mxu0 0
        %6471 = vmatprep.subr.bf16.mxu0 0
        %6472 = vmatpush2.bf16.msra.mxu0 0
        %6473 = vmatprep.subr.bf16.mxu0 0
        %6474 = vmatpush2.bf16.msra.mxu0 0
        %6475 = vmatprep.subr.bf16.mxu0 0
        %6476 = vmatpush2.bf16.msra.mxu0 0
        %6477 = vmatprep.subr.bf16.mxu0 0
        %6478 = vmatpush2.bf16.msra.mxu0 0
        %6479 = vmatprep.subr.bf16.mxu0 0
        %6480 = vmatpush2.bf16.msra.mxu0 0
        %6481 = vmatprep.subr.bf16.mxu0 0
        %6482 = vmatpush2.bf16.msra.mxu0 0
        %6483 = vmatprep.mubr.bf16.mxu0 0
        %6484 = vmatmul.mubr.bf16.gmra.mxu0 %v6371
        %v6485 = vpop.f32.mrf.mxu0
        %v6486 = vadd.f32 0.0, %v6485
        %v6487 = vpop.f32.mrf.mxu0
        %v6488 = vpop.f32.mrf.mxu0
        %v6489 = vadd.f32 0.0, %v6488
        %v6490 = vpop.f32.mrf.mxu0
        %6491 = vmatprep.mubr.bf16.mxu0 0
        %6492 = vmatmul.mubr.bf16.gmra.mxu0 %v6372
        %v6493 = vpop.f32.mrf.mxu0
        %v6494 = vadd.f32 0.0, %v6493
        %v6495 = vpop.f32.mrf.mxu0
        %v6496 = vpop.f32.mrf.mxu0
        %v6497 = vadd.f32 0.0, %v6496
        %v6498 = vpop.f32.mrf.mxu0
        %6499 = vmatprep.mubr.bf16.mxu0 0
        %6500 = vmatmul.mubr.bf16.gmra.mxu0 %v6373
        %v6501 = vpop.f32.mrf.mxu0
        %v6502 = vadd.f32 0.0, %v6501
        %v6503 = vpop.f32.mrf.mxu0
        %v6504 = vpop.f32.mrf.mxu0
        %v6505 = vadd.f32 0.0, %v6504
        %v6506 = vpop.f32.mrf.mxu0
        %6507 = vmatprep.mubr.bf16.mxu0 0
        %6508 = vmatmul.mubr.bf16.gmra.mxu0 %v6374
        %v6509 = vpop.f32.mrf.mxu0
        %v6510 = vadd.f32 0.0, %v6509
        %v6511 = vpop.f32.mrf.mxu0
        %v6512 = vpop.f32.mrf.mxu0
        %v6513 = vadd.f32 0.0, %v6512
        %v6514 = vpop.f32.mrf.mxu0
        %6515 = vmatprep.mubr.bf16.mxu0 0
        %6516 = vmatmul.mubr.bf16.gmra.mxu0 %v6375
        %v6517 = vpop.f32.mrf.mxu0
        %v6518 = vadd.f32 0.0, %v6517
        %v6519 = vpop.f32.mrf.mxu0
        %v6520 = vpop.f32.mrf.mxu0
        %v6521 = vadd.f32 0.0, %v6520
        %v6522 = vpop.f32.mrf.mxu0
        %6523 = vmatprep.mubr.bf16.mxu0 0
        %6524 = vmatmul.mubr.bf16.gmra.mxu0 %v6376
        %v6525 = vpop.f32.mrf.mxu0
        %v6526 = vadd.f32 0.0, %v6525
        %v6527 = vpop.f32.mrf.mxu0
        %v6528 = vpop.f32.mrf.mxu0
        %v6529 = vadd.f32 0.0, %v6528
        %v6530 = vpop.f32.mrf.mxu0
        %6531 = vmatprep.mubr.bf16.mxu0 0
        %6532 = vmatmul.mubr.bf16.gmra.mxu0 %v6377
        %v6533 = vpop.f32.mrf.mxu0
        %v6534 = vadd.f32 0.0, %v6533
        %v6535 = vpop.f32.mrf.mxu0
        %v6536 = vpop.f32.mrf.mxu0
        %v6537 = vadd.f32 0.0, %v6536
        %v6538 = vpop.f32.mrf.mxu0
        %6539 = vmatprep.mubr.bf16.mxu0 0
        %6540 = vmatmul.mubr.bf16.gmra.mxu0 %v6378
        %v6541 = vpop.f32.mrf.mxu0
        %v6542 = vadd.f32 0.0, %v6541
        %v6543 = vpop.f32.mrf.mxu0
        %v6544 = vpop.f32.mrf.mxu0
        %v6545 = vadd.f32 0.0, %v6544
        %v6546 = vpop.f32.mrf.mxu0
        %6547 = vmatprep.mubr.bf16.mxu0 0
        %6548 = vmatmul.mubr.bf16.gmra.mxu0 %v6379
        %v6549 = vpop.f32.mrf.mxu0
        %v6550 = vadd.f32 0.0, %v6549
        %v6551 = vpop.f32.mrf.mxu0
        %v6552 = vpop.f32.mrf.mxu0
        %v6553 = vadd.f32 0.0, %v6552
        %v6554 = vpop.f32.mrf.mxu0
        %6555 = vmatprep.mubr.bf16.mxu0 0
        %6556 = vmatmul.mubr.bf16.gmra.mxu0 %v6380
        %v6557 = vpop.f32.mrf.mxu0
        %v6558 = vadd.f32 0.0, %v6557
        %v6559 = vpop.f32.mrf.mxu0
        %v6560 = vpop.f32.mrf.mxu0
        %v6561 = vadd.f32 0.0, %v6560
        %v6562 = vpop.f32.mrf.mxu0
        %6563 = vmatprep.mubr.bf16.mxu0 0
        %6564 = vmatmul.mubr.bf16.gmra.mxu0 %v6381
        %v6565 = vpop.f32.mrf.mxu0
        %v6566 = vadd.f32 0.0, %v6565
        %v6567 = vpop.f32.mrf.mxu0
        %v6568 = vpop.f32.mrf.mxu0
        %v6569 = vadd.f32 0.0, %v6568
        %v6570 = vpop.f32.mrf.mxu0
        %6571 = vmatprep.mubr.bf16.mxu0 0
        %6572 = vmatmul.mubr.bf16.gmra.mxu0 %v6382
        %v6573 = vpop.f32.mrf.mxu0
        %v6574 = vadd.f32 0.0, %v6573
        %v6575 = vpop.f32.mrf.mxu0
        %v6576 = vpop.f32.mrf.mxu0
        %v6577 = vadd.f32 0.0, %v6576
        %v6578 = vpop.f32.mrf.mxu0
        %6579 = vmatprep.mubr.bf16.mxu0 0
        %6580 = vmatmul.mubr.bf16.gmra.mxu0 %v6383
        %v6581 = vpop.f32.mrf.mxu0
        %v6582 = vadd.f32 0.0, %v6581
        %v6583 = vpop.f32.mrf.mxu0
        %v6584 = vpop.f32.mrf.mxu0
        %v6585 = vadd.f32 0.0, %v6584
        %v6586 = vpop.f32.mrf.mxu0
        %6587 = vmatprep.mubr.bf16.mxu0 0
        %6588 = vmatmul.mubr.bf16.gmra.mxu0 %v6384
        %v6589 = vpop.f32.mrf.mxu0
        %v6590 = vadd.f32 0.0, %v6589
        %v6591 = vpop.f32.mrf.mxu0
        %v6592 = vpop.f32.mrf.mxu0
        %v6593 = vadd.f32 0.0, %v6592
        %v6594 = vpop.f32.mrf.mxu0
        %6595 = vmatprep.mubr.bf16.mxu0 0
        %6596 = vmatmul.mubr.bf16.gmra.mxu0 %v6385
        %v6597 = vpop.f32.mrf.mxu0
        %v6598 = vadd.f32 0.0, %v6597
        %v6599 = vpop.f32.mrf.mxu0
        %v6600 = vpop.f32.mrf.mxu0
        %v6601 = vadd.f32 0.0, %v6600
        %v6602 = vpop.f32.mrf.mxu0
        %6603 = vmatprep.mubr.bf16.mxu0 0
        %6604 = vmatmul.mubr.bf16.gmra.mxu0 %v6386
        %v6605 = vpop.f32.mrf.mxu0
        %v6606 = vadd.f32 0.0, %v6605
        %v6607 = vpop.f32.mrf.mxu0
        %v6608 = vpop.f32.mrf.mxu0
        %v6609 = vadd.f32 0.0, %v6608
        %v6610 = vpop.f32.mrf.mxu0
        %6611 = vdwg.mxu0
        %v6612 = vld [vmem:[%s415] sm:$0xff]
        %v6613 = vld [vmem:[%s415 + $0x8] sm:$0xff]
        %v6614 = vld [vmem:[%s415 + $0x10] sm:$0xff]
        %v6615 = vld [vmem:[%s415 + $0x18] sm:$0xff]
        %v6616 = vld [vmem:[%s415 + $0x20] sm:$0xff]
        %v6617 = vld [vmem:[%s415 + $0x28] sm:$0xff]
        %v6618 = vld [vmem:[%s415 + $0x30] sm:$0xff]
        %v6619 = vld [vmem:[%s415 + $0x38] sm:$0xff]
        %v6620 = vld [vmem:[%s415 + $0x40] sm:$0xff]
        %v6621 = vld [vmem:[%s415 + $0x48] sm:$0xff]
        %v6622 = vld [vmem:[%s415 + $0x50] sm:$0xff]
        %v6623 = vld [vmem:[%s415 + $0x58] sm:$0xff]
        %v6624 = vld [vmem:[%s415 + $0x60] sm:$0xff]
        %v6625 = vld [vmem:[%s415 + $0x68] sm:$0xff]
        %v6626 = vld [vmem:[%s415 + $0x70] sm:$0xff]
        %v6627 = vld [vmem:[%s415 + $0x78] sm:$0xff]
        %v6628 = vld [vmem:[%s415 + $0x80] sm:$0xff]
        %v6629 = vld [vmem:[%s415 + $0x88] sm:$0xff]
        %v6630 = vld [vmem:[%s415 + $0x90] sm:$0xff]
        %v6631 = vld [vmem:[%s415 + $0x98] sm:$0xff]
        %v6632 = vld [vmem:[%s415 + $0xa0] sm:$0xff]
        %v6633 = vld [vmem:[%s415 + $0xa8] sm:$0xff]
        %v6634 = vld [vmem:[%s415 + $0xb0] sm:$0xff]
        %v6635 = vld [vmem:[%s415 + $0xb8] sm:$0xff]
        %v6636 = vld [vmem:[%s415 + $0xc0] sm:$0xff]
        %v6637 = vld [vmem:[%s415 + $0xc8] sm:$0xff]
        %v6638 = vld [vmem:[%s415 + $0xd0] sm:$0xff]
        %v6639 = vld [vmem:[%s415 + $0xd8] sm:$0xff]
        %v6640 = vld [vmem:[%s415 + $0xe0] sm:$0xff]
        %v6641 = vld [vmem:[%s415 + $0xe8] sm:$0xff]
        %v6642 = vld [vmem:[%s415 + $0xf0] sm:$0xff]
        %v6643 = vld [vmem:[%s415 + $0xf8] sm:$0xff]
        %v6644 = vadd.f32 %v6612, %v6486
        %v6645 = vadd.f32 %v6613, %v6489
        %v6646 = vadd.f32 %v6614, %v6494
        %v6647 = vadd.f32 %v6615, %v6497
        %v6648 = vadd.f32 %v6616, %v6502
        %v6649 = vadd.f32 %v6617, %v6505
        %v6650 = vadd.f32 %v6618, %v6510
        %v6651 = vadd.f32 %v6619, %v6513
        %v6652 = vadd.f32 %v6620, %v6518
        %v6653 = vadd.f32 %v6621, %v6521
        %v6654 = vadd.f32 %v6622, %v6526
        %v6655 = vadd.f32 %v6623, %v6529
        %v6656 = vadd.f32 %v6624, %v6534
        %v6657 = vadd.f32 %v6625, %v6537
        %v6658 = vadd.f32 %v6626, %v6542
        %v6659 = vadd.f32 %v6627, %v6545
        %v6660 = vadd.f32 %v6628, %v6550
        %v6661 = vadd.f32 %v6629, %v6553
        %v6662 = vadd.f32 %v6630, %v6558
        %v6663 = vadd.f32 %v6631, %v6561
        %v6664 = vadd.f32 %v6632, %v6566
        %v6665 = vadd.f32 %v6633, %v6569
        %v6666 = vadd.f32 %v6634, %v6574
        %v6667 = vadd.f32 %v6635, %v6577
        %v6668 = vadd.f32 %v6636, %v6582
        %v6669 = vadd.f32 %v6637, %v6585
        %v6670 = vadd.f32 %v6638, %v6590
        %v6671 = vadd.f32 %v6639, %v6593
        %v6672 = vadd.f32 %v6640, %v6598
        %v6673 = vadd.f32 %v6641, %v6601
        %v6674 = vadd.f32 %v6642, %v6606
        %v6675 = vadd.f32 %v6643, %v6609
        %6676 = vst [vmem:[%s479] sm:$0xff] %v6644
        %6677 = vst [vmem:[%s479 + $0x8] sm:$0xff] %v6645
        %6678 = vst [vmem:[%s479 + $0x10] sm:$0xff] %v6646
        %6679 = vst [vmem:[%s479 + $0x18] sm:$0xff] %v6647
        %6680 = vst [vmem:[%s479 + $0x20] sm:$0xff] %v6648
        %6681 = vst [vmem:[%s479 + $0x28] sm:$0xff] %v6649
        %6682 = vst [vmem:[%s479 + $0x30] sm:$0xff] %v6650
        %6683 = vst [vmem:[%s479 + $0x38] sm:$0xff] %v6651
        %6684 = vst [vmem:[%s479 + $0x40] sm:$0xff] %v6652
        %6685 = vst [vmem:[%s479 + $0x48] sm:$0xff] %v6653
        %6686 = vst [vmem:[%s479 + $0x50] sm:$0xff] %v6654
        %6687 = vst [vmem:[%s479 + $0x58] sm:$0xff] %v6655
        %6688 = vst [vmem:[%s479 + $0x60] sm:$0xff] %v6656
        %6689 = vst [vmem:[%s479 + $0x68] sm:$0xff] %v6657
        %6690 = vst [vmem:[%s479 + $0x70] sm:$0xff] %v6658
        %6691 = vst [vmem:[%s479 + $0x78] sm:$0xff] %v6659
        %6692 = vst [vmem:[%s479 + $0x80] sm:$0xff] %v6660
        %6693 = vst [vmem:[%s479 + $0x88] sm:$0xff] %v6661
        %6694 = vst [vmem:[%s479 + $0x90] sm:$0xff] %v6662
        %6695 = vst [vmem:[%s479 + $0x98] sm:$0xff] %v6663
        %6696 = vst [vmem:[%s479 + $0xa0] sm:$0xff] %v6664
        %6697 = vst [vmem:[%s479 + $0xa8] sm:$0xff] %v6665
        %6698 = vst [vmem:[%s479 + $0xb0] sm:$0xff] %v6666
        %6699 = vst [vmem:[%s479 + $0xb8] sm:$0xff] %v6667
        %6700 = vst [vmem:[%s479 + $0xc0] sm:$0xff] %v6668
        %6701 = vst [vmem:[%s479 + $0xc8] sm:$0xff] %v6669
        %6702 = vst [vmem:[%s479 + $0xd0] sm:$0xff] %v6670
        %6703 = vst [vmem:[%s479 + $0xd8] sm:$0xff] %v6671
        %6704 = vst [vmem:[%s479 + $0xe0] sm:$0xff] %v6672
        %6705 = vst [vmem:[%s479 + $0xe8] sm:$0xff] %v6673
        %6706 = vst [vmem:[%s479 + $0xf0] sm:$0xff] %v6674
        %6707 = vst [vmem:[%s479 + $0xf8] sm:$0xff] %v6675
        %v6708 = vmul.f32 %v6644, %v6644
        %v6709 = vmul.f32 %v6645, %v6645
        %v6710 = vmul.f32 %v6646, %v6646
        %v6711 = vmul.f32 %v6647, %v6647
        %v6712 = vmul.f32 %v6648, %v6648
        %v6713 = vmul.f32 %v6649, %v6649
        %v6714 = vmul.f32 %v6650, %v6650
        %v6715 = vmul.f32 %v6651, %v6651
        %v6716 = vmul.f32 %v6652, %v6652
        %v6717 = vmul.f32 %v6653, %v6653
        %v6718 = vmul.f32 %v6654, %v6654
        %v6719 = vmul.f32 %v6655, %v6655
        %v6720 = vmul.f32 %v6656, %v6656
        %v6721 = vmul.f32 %v6657, %v6657
        %v6722 = vmul.f32 %v6658, %v6658
        %v6723 = vmul.f32 %v6659, %v6659
        %v6724 = vmul.f32 %v6660, %v6660
        %v6725 = vmul.f32 %v6661, %v6661
        %v6726 = vmul.f32 %v6662, %v6662
        %v6727 = vmul.f32 %v6663, %v6663
        %v6728 = vmul.f32 %v6664, %v6664
        %v6729 = vmul.f32 %v6665, %v6665
        %v6730 = vmul.f32 %v6666, %v6666
        %v6731 = vmul.f32 %v6667, %v6667
        %v6732 = vmul.f32 %v6668, %v6668
        %v6733 = vmul.f32 %v6669, %v6669
        %v6734 = vmul.f32 %v6670, %v6670
        %v6735 = vmul.f32 %v6671, %v6671
        %v6736 = vmul.f32 %v6672, %v6672
        %v6737 = vmul.f32 %v6673, %v6673
        %v6738 = vmul.f32 %v6674, %v6674
        %v6739 = vmul.f32 %v6675, %v6675
        %6740 = vadd.xlane.f32.xlu0 %v6708
        %v6741 = vpop.xlane.xlu0 %6740
        %6742 = vadd.xlane.f32.xlu0 %v6709
        %v6743 = vpop.xlane.xlu0 %6742
        %6744 = vadd.xlane.f32.xlu0 %v6710
        %v6745 = vpop.xlane.xlu0 %6744
        %6746 = vadd.xlane.f32.xlu0 %v6711
        %v6747 = vpop.xlane.xlu0 %6746
        %6748 = vadd.xlane.f32.xlu0 %v6712
        %v6749 = vpop.xlane.xlu0 %6748
        %6750 = vadd.xlane.f32.xlu0 %v6713
        %v6751 = vpop.xlane.xlu0 %6750
        %6752 = vadd.xlane.f32.xlu0 %v6714
        %v6753 = vpop.xlane.xlu0 %6752
        %6754 = vadd.xlane.f32.xlu0 %v6715
        %v6755 = vpop.xlane.xlu0 %6754
        %6756 = vadd.xlane.f32.xlu0 %v6716
        %v6757 = vpop.xlane.xlu0 %6756
        %6758 = vadd.xlane.f32.xlu0 %v6717
        %v6759 = vpop.xlane.xlu0 %6758
        %6760 = vadd.xlane.f32.xlu0 %v6718
        %v6761 = vpop.xlane.xlu0 %6760
        %6762 = vadd.xlane.f32.xlu0 %v6719
        %v6763 = vpop.xlane.xlu0 %6762
        %6764 = vadd.xlane.f32.xlu0 %v6720
        %v6765 = vpop.xlane.xlu0 %6764
        %6766 = vadd.xlane.f32.xlu0 %v6721
        %v6767 = vpop.xlane.xlu0 %6766
        %6768 = vadd.xlane.f32.xlu0 %v6722
        %v6769 = vpop.xlane.xlu0 %6768
        %6770 = vadd.xlane.f32.xlu0 %v6723
        %v6771 = vpop.xlane.xlu0 %6770
        %6772 = vadd.xlane.f32.xlu0 %v6724
        %v6773 = vpop.xlane.xlu0 %6772
        %6774 = vadd.xlane.f32.xlu0 %v6725
        %v6775 = vpop.xlane.xlu0 %6774
        %6776 = vadd.xlane.f32.xlu0 %v6726
        %v6777 = vpop.xlane.xlu0 %6776
        %6778 = vadd.xlane.f32.xlu0 %v6727
        %v6779 = vpop.xlane.xlu0 %6778
        %6780 = vadd.xlane.f32.xlu0 %v6728
        %v6781 = vpop.xlane.xlu0 %6780
        %6782 = vadd.xlane.f32.xlu0 %v6729
        %v6783 = vpop.xlane.xlu0 %6782
        %6784 = vadd.xlane.f32.xlu0 %v6730
        %v6785 = vpop.xlane.xlu0 %6784
        %6786 = vadd.xlane.f32.xlu0 %v6731
        %v6787 = vpop.xlane.xlu0 %6786
        %6788 = vadd.xlane.f32.xlu0 %v6732
        %v6789 = vpop.xlane.xlu0 %6788
        %6790 = vadd.xlane.f32.xlu0 %v6733
        %v6791 = vpop.xlane.xlu0 %6790
        %6792 = vadd.xlane.f32.xlu0 %v6734
        %v6793 = vpop.xlane.xlu0 %6792
        %6794 = vadd.xlane.f32.xlu0 %v6735
        %v6795 = vpop.xlane.xlu0 %6794
        %6796 = vadd.xlane.f32.xlu0 %v6736
        %v6797 = vpop.xlane.xlu0 %6796
        %6798 = vadd.xlane.f32.xlu0 %v6737
        %v6799 = vpop.xlane.xlu0 %6798
        %6800 = vadd.xlane.f32.xlu0 %v6738
        %v6801 = vpop.xlane.xlu0 %6800
        %6802 = vadd.xlane.f32.xlu0 %v6739
        %v6803 = vpop.xlane.xlu0 %6802
        %v6804 = vmul.f32 %v6741, %v611
        %v6805 = vmul.f32 %v6743, %v611
        %v6806 = vmul.f32 %v6745, %v611
        %v6807 = vmul.f32 %v6747, %v611
        %v6808 = vmul.f32 %v6749, %v611
        %v6809 = vmul.f32 %v6751, %v611
        %v6810 = vmul.f32 %v6753, %v611
        %v6811 = vmul.f32 %v6755, %v611
        %v6812 = vmul.f32 %v6757, %v611
        %v6813 = vmul.f32 %v6759, %v611
        %v6814 = vmul.f32 %v6761, %v611
        %v6815 = vmul.f32 %v6763, %v611
        %v6816 = vmul.f32 %v6765, %v611
        %v6817 = vmul.f32 %v6767, %v611
        %v6818 = vmul.f32 %v6769, %v611
        %v6819 = vmul.f32 %v6771, %v611
        %v6820 = vmul.f32 %v6773, %v611
        %v6821 = vmul.f32 %v6775, %v611
        %v6822 = vmul.f32 %v6777, %v611
        %v6823 = vmul.f32 %v6779, %v611
        %v6824 = vmul.f32 %v6781, %v611
        %v6825 = vmul.f32 %v6783, %v611
        %v6826 = vmul.f32 %v6785, %v611
        %v6827 = vmul.f32 %v6787, %v611
        %v6828 = vmul.f32 %v6789, %v611
        %v6829 = vmul.f32 %v6791, %v611
        %v6830 = vmul.f32 %v6793, %v611
        %v6831 = vmul.f32 %v6795, %v611
        %v6832 = vmul.f32 %v6797, %v611
        %v6833 = vmul.f32 %v6799, %v611
        %v6834 = vmul.f32 %v6801, %v611
        %v6835 = vmul.f32 %v6803, %v611
        %v6836 = vadd.f32 %v6804, 1e-08
        %v6837 = vadd.f32 %v6805, 1e-08
        %v6838 = vadd.f32 %v6806, 1e-08
        %v6839 = vadd.f32 %v6807, 1e-08
        %v6840 = vadd.f32 %v6808, 1e-08
        %v6841 = vadd.f32 %v6809, 1e-08
        %v6842 = vadd.f32 %v6810, 1e-08
        %v6843 = vadd.f32 %v6811, 1e-08
        %v6844 = vadd.f32 %v6812, 1e-08
        %v6845 = vadd.f32 %v6813, 1e-08
        %v6846 = vadd.f32 %v6814, 1e-08
        %v6847 = vadd.f32 %v6815, 1e-08
        %v6848 = vadd.f32 %v6816, 1e-08
        %v6849 = vadd.f32 %v6817, 1e-08
        %v6850 = vadd.f32 %v6818, 1e-08
        %v6851 = vadd.f32 %v6819, 1e-08
        %v6852 = vadd.f32 %v6820, 1e-08
        %v6853 = vadd.f32 %v6821, 1e-08
        %v6854 = vadd.f32 %v6822, 1e-08
        %v6855 = vadd.f32 %v6823, 1e-08
        %v6856 = vadd.f32 %v6824, 1e-08
        %v6857 = vadd.f32 %v6825, 1e-08
        %v6858 = vadd.f32 %v6826, 1e-08
        %v6859 = vadd.f32 %v6827, 1e-08
        %v6860 = vadd.f32 %v6828, 1e-08
        %v6861 = vadd.f32 %v6829, 1e-08
        %v6862 = vadd.f32 %v6830, 1e-08
        %v6863 = vadd.f32 %v6831, 1e-08
        %v6864 = vadd.f32 %v6832, 1e-08
        %v6865 = vadd.f32 %v6833, 1e-08
        %v6866 = vadd.f32 %v6834, 1e-08
        %v6867 = vadd.f32 %v6835, 1e-08
        %v6868 = vrsqrt.pop %v6836
        %v6869 = vrsqrt.pop %v6837
        %v6870 = vrsqrt.pop %v6838
        %v6871 = vrsqrt.pop %v6839
        %v6872 = vrsqrt.pop %v6840
        %v6873 = vrsqrt.pop %v6841
        %v6874 = vrsqrt.pop %v6842
        %v6875 = vrsqrt.pop %v6843
        %v6876 = vrsqrt.pop %v6844
        %v6877 = vrsqrt.pop %v6845
        %v6878 = vrsqrt.pop %v6846
        %v6879 = vrsqrt.pop %v6847
        %v6880 = vrsqrt.pop %v6848
        %v6881 = vrsqrt.pop %v6849
        %v6882 = vrsqrt.pop %v6850
        %v6883 = vrsqrt.pop %v6851
        %v6884 = vrsqrt.pop %v6852
        %v6885 = vrsqrt.pop %v6853
        %v6886 = vrsqrt.pop %v6854
        %v6887 = vrsqrt.pop %v6855
        %v6888 = vrsqrt.pop %v6856
        %v6889 = vrsqrt.pop %v6857
        %v6890 = vrsqrt.pop %v6858
        %v6891 = vrsqrt.pop %v6859
        %v6892 = vrsqrt.pop %v6860
        %v6893 = vrsqrt.pop %v6861
        %v6894 = vrsqrt.pop %v6862
        %v6895 = vrsqrt.pop %v6863
        %v6896 = vrsqrt.pop %v6864
        %v6897 = vrsqrt.pop %v6865
        %v6898 = vrsqrt.pop %v6866
        %v6899 = vrsqrt.pop %v6867
        %v6900 = vmul.f32 %v6644, %v6868
        %v6901 = vmul.f32 %v6645, %v6869
        %v6902 = vmul.f32 %v6646, %v6870
        %v6903 = vmul.f32 %v6647, %v6871
        %v6904 = vmul.f32 %v6648, %v6872
        %v6905 = vmul.f32 %v6649, %v6873
        %v6906 = vmul.f32 %v6650, %v6874
        %v6907 = vmul.f32 %v6651, %v6875
        %v6908 = vmul.f32 %v6652, %v6876
        %v6909 = vmul.f32 %v6653, %v6877
        %v6910 = vmul.f32 %v6654, %v6878
        %v6911 = vmul.f32 %v6655, %v6879
        %v6912 = vmul.f32 %v6656, %v6880
        %v6913 = vmul.f32 %v6657, %v6881
        %v6914 = vmul.f32 %v6658, %v6882
        %v6915 = vmul.f32 %v6659, %v6883
        %v6916 = vmul.f32 %v6660, %v6884
        %v6917 = vmul.f32 %v6661, %v6885
        %v6918 = vmul.f32 %v6662, %v6886
        %v6919 = vmul.f32 %v6663, %v6887
        %v6920 = vmul.f32 %v6664, %v6888
        %v6921 = vmul.f32 %v6665, %v6889
        %v6922 = vmul.f32 %v6666, %v6890
        %v6923 = vmul.f32 %v6667, %v6891
        %v6924 = vmul.f32 %v6668, %v6892
        %v6925 = vmul.f32 %v6669, %v6893
        %v6926 = vmul.f32 %v6670, %v6894
        %v6927 = vmul.f32 %v6671, %v6895
        %v6928 = vmul.f32 %v6672, %v6896
        %v6929 = vmul.f32 %v6673, %v6897
        %v6930 = vmul.f32 %v6674, %v6898
        %v6931 = vmul.f32 %v6675, %v6899
        %v6932 = vld [vmem:[%s2] sm:$0x1]
        %v6934 = vlaneseq
        %v6935 = vshrl.u32 %v6934, 7
        %v6936 = vsub.s32 0, %v6935
        %v6937 = vrot.slane %v6932, %v6936
        %v6939 = vmul.f32 %v6900, %v6937
        %v6940 = vmul.f32 %v6901, %v6937
        %v6941 = vmul.f32 %v6902, %v6937
        %v6942 = vmul.f32 %v6903, %v6937
        %v6943 = vmul.f32 %v6904, %v6937
        %v6944 = vmul.f32 %v6905, %v6937
        %v6945 = vmul.f32 %v6906, %v6937
        %v6946 = vmul.f32 %v6907, %v6937
        %v6947 = vmul.f32 %v6908, %v6937
        %v6948 = vmul.f32 %v6909, %v6937
        %v6949 = vmul.f32 %v6910, %v6937
        %v6950 = vmul.f32 %v6911, %v6937
        %v6951 = vmul.f32 %v6912, %v6937
        %v6952 = vmul.f32 %v6913, %v6937
        %v6953 = vmul.f32 %v6914, %v6937
        %v6954 = vmul.f32 %v6915, %v6937
        %v6955 = vmul.f32 %v6916, %v6937
        %v6956 = vmul.f32 %v6917, %v6937
        %v6957 = vmul.f32 %v6918, %v6937
        %v6958 = vmul.f32 %v6919, %v6937
        %v6959 = vmul.f32 %v6920, %v6937
        %v6960 = vmul.f32 %v6921, %v6937
        %v6961 = vmul.f32 %v6922, %v6937
        %v6962 = vmul.f32 %v6923, %v6937
        %v6963 = vmul.f32 %v6924, %v6937
        %v6964 = vmul.f32 %v6925, %v6937
        %v6965 = vmul.f32 %v6926, %v6937
        %v6966 = vmul.f32 %v6927, %v6937
        %v6967 = vmul.f32 %v6928, %v6937
        %v6968 = vmul.f32 %v6929, %v6937
        %v6969 = vmul.f32 %v6930, %v6937
        %v6970 = vmul.f32 %v6931, %v6937
        %v6971 = vpack.c.bf16 %v6940, %v6939
        %v6972 = vpack.c.bf16 %v6942, %v6941
        %v6973 = vpack.c.bf16 %v6944, %v6943
        %v6974 = vpack.c.bf16 %v6946, %v6945
        %v6975 = vpack.c.bf16 %v6948, %v6947
        %v6976 = vpack.c.bf16 %v6950, %v6949
        %v6977 = vpack.c.bf16 %v6952, %v6951
        %v6978 = vpack.c.bf16 %v6954, %v6953
        %v6979 = vpack.c.bf16 %v6956, %v6955
        %v6980 = vpack.c.bf16 %v6958, %v6957
        %v6981 = vpack.c.bf16 %v6960, %v6959
        %v6982 = vpack.c.bf16 %v6962, %v6961
        %v6983 = vpack.c.bf16 %v6964, %v6963
        %v6984 = vpack.c.bf16 %v6966, %v6965
        %v6985 = vpack.c.bf16 %v6968, %v6967
        %v6986 = vpack.c.bf16 %v6970, %v6969
        %v6987 = vld [vmem:[#allocation14] sm:$0xff]
        %v6988 = vld [vmem:[#allocation14 + $0x8] sm:$0xff]
        %v6989 = vld [vmem:[#allocation14 + $0x10] sm:$0xff]
        %v6990 = vld [vmem:[#allocation14 + $0x18] sm:$0xff]
        %v6991 = vld [vmem:[#allocation14 + $0x20] sm:$0xff]
        %v6992 = vld [vmem:[#allocation14 + $0x28] sm:$0xff]
        %v6993 = vld [vmem:[#allocation14 + $0x30] sm:$0xff]
        %v6994 = vld [vmem:[#allocation14 + $0x38] sm:$0xff]
        %v6995 = vld [vmem:[#allocation14 + $0x40] sm:$0xff]
        %v6996 = vld [vmem:[#allocation14 + $0x48] sm:$0xff]
        %v6997 = vld [vmem:[#allocation14 + $0x50] sm:$0xff]
        %v6998 = vld [vmem:[#allocation14 + $0x58] sm:$0xff]
        %v6999 = vld [vmem:[#allocation14 + $0x60] sm:$0xff]
        %v7000 = vld [vmem:[#allocation14 + $0x68] sm:$0xff]
        %v7001 = vld [vmem:[#allocation14 + $0x70] sm:$0xff]
        %v7002 = vld [vmem:[#allocation14 + $0x78] sm:$0xff]
        %v7003 = vld [vmem:[#allocation14 + $0x80] sm:$0xff]
        %v7004 = vld [vmem:[#allocation14 + $0x88] sm:$0xff]
        %v7005 = vld [vmem:[#allocation14 + $0x90] sm:$0xff]
        %v7006 = vld [vmem:[#allocation14 + $0x98] sm:$0xff]
        %v7007 = vld [vmem:[#allocation14 + $0xa0] sm:$0xff]
        %v7008 = vld [vmem:[#allocation14 + $0xa8] sm:$0xff]
        %v7009 = vld [vmem:[#allocation14 + $0xb0] sm:$0xff]
        %v7010 = vld [vmem:[#allocation14 + $0xb8] sm:$0xff]
        %v7011 = vld [vmem:[#allocation14 + $0xc0] sm:$0xff]
        %v7012 = vld [vmem:[#allocation14 + $0xc8] sm:$0xff]
        %v7013 = vld [vmem:[#allocation14 + $0xd0] sm:$0xff]
        %v7014 = vld [vmem:[#allocation14 + $0xd8] sm:$0xff]
        %v7015 = vld [vmem:[#allocation14 + $0xe0] sm:$0xff]
        %v7016 = vld [vmem:[#allocation14 + $0xe8] sm:$0xff]
        %v7017 = vld [vmem:[#allocation14 + $0xf0] sm:$0xff]
        %v7018 = vld [vmem:[#allocation14 + $0xf8] sm:$0xff]
        %v7019 = vld [vmem:[#allocation14 + $0x100] sm:$0xff]
        %v7020 = vld [vmem:[#allocation14 + $0x108] sm:$0xff]
        %v7021 = vld [vmem:[#allocation14 + $0x110] sm:$0xff]
        %v7022 = vld [vmem:[#allocation14 + $0x118] sm:$0xff]
        %v7023 = vld [vmem:[#allocation14 + $0x120] sm:$0xff]
        %v7024 = vld [vmem:[#allocation14 + $0x128] sm:$0xff]
        %v7025 = vld [vmem:[#allocation14 + $0x130] sm:$0xff]
        %v7026 = vld [vmem:[#allocation14 + $0x138] sm:$0xff]
        %v7027 = vld [vmem:[#allocation14 + $0x140] sm:$0xff]
        %v7028 = vld [vmem:[#allocation14 + $0x148] sm:$0xff]
        %v7029 = vld [vmem:[#allocation14 + $0x150] sm:$0xff]
        %v7030 = vld [vmem:[#allocation14 + $0x158] sm:$0xff]
        %v7031 = vld [vmem:[#allocation14 + $0x160] sm:$0xff]
        %v7032 = vld [vmem:[#allocation14 + $0x168] sm:$0xff]
        %v7033 = vld [vmem:[#allocation14 + $0x170] sm:$0xff]
        %v7034 = vld [vmem:[#allocation14 + $0x178] sm:$0xff]
        %v7035 = vld [vmem:[#allocation14 + $0x180] sm:$0xff]
        %v7036 = vld [vmem:[#allocation14 + $0x188] sm:$0xff]
        %v7037 = vld [vmem:[#allocation14 + $0x190] sm:$0xff]
        %v7038 = vld [vmem:[#allocation14 + $0x198] sm:$0xff]
        %v7039 = vld [vmem:[#allocation14 + $0x1a0] sm:$0xff]
        %v7040 = vld [vmem:[#allocation14 + $0x1a8] sm:$0xff]
        %v7041 = vld [vmem:[#allocation14 + $0x1b0] sm:$0xff]
        %v7042 = vld [vmem:[#allocation14 + $0x1b8] sm:$0xff]
        %v7043 = vld [vmem:[#allocation14 + $0x1c0] sm:$0xff]
        %v7044 = vld [vmem:[#allocation14 + $0x1c8] sm:$0xff]
        %v7045 = vld [vmem:[#allocation14 + $0x1d0] sm:$0xff]
        %v7046 = vld [vmem:[#allocation14 + $0x1d8] sm:$0xff]
        %v7047 = vld [vmem:[#allocation14 + $0x1e0] sm:$0xff]
        %v7048 = vld [vmem:[#allocation14 + $0x1e8] sm:$0xff]
        %v7049 = vld [vmem:[#allocation14 + $0x1f0] sm:$0xff]
        %v7050 = vld [vmem:[#allocation14 + $0x1f8] sm:$0xff]
        %v7115 = vunpack.c.l.b16 %v6987
        %v7116 = vunpack.c.h.b16 %v6987
        %v7117 = vunpack.c.l.b16 %v6988
        %v7118 = vunpack.c.h.b16 %v6988
        %v7119 = vunpack.c.l.b16 %v6989
        %v7120 = vunpack.c.h.b16 %v6989
        %v7121 = vunpack.c.l.b16 %v6990
        %v7122 = vunpack.c.h.b16 %v6990
        %v7123 = vunpack.c.l.b16 %v6991
        %v7124 = vunpack.c.h.b16 %v6991
        %v7125 = vunpack.c.l.b16 %v6992
        %v7126 = vunpack.c.h.b16 %v6992
        %v7127 = vunpack.c.l.b16 %v6993
        %v7128 = vunpack.c.h.b16 %v6993
        %v7129 = vunpack.c.l.b16 %v6994
        %v7130 = vunpack.c.h.b16 %v6994
        %v7131 = vunpack.c.l.b16 %v6995
        %v7132 = vunpack.c.h.b16 %v6995
        %v7133 = vunpack.c.l.b16 %v6996
        %v7134 = vunpack.c.h.b16 %v6996
        %v7135 = vunpack.c.l.b16 %v6997
        %v7136 = vunpack.c.h.b16 %v6997
        %v7137 = vunpack.c.l.b16 %v6998
        %v7138 = vunpack.c.h.b16 %v6998
        %v7139 = vunpack.c.l.b16 %v6999
        %v7140 = vunpack.c.h.b16 %v6999
        %v7141 = vunpack.c.l.b16 %v7000
        %v7142 = vunpack.c.h.b16 %v7000
        %v7143 = vunpack.c.l.b16 %v7001
        %v7144 = vunpack.c.h.b16 %v7001
        %v7145 = vunpack.c.l.b16 %v7002
        %v7146 = vunpack.c.h.b16 %v7002
        %v7147 = vunpack.c.l.b16 %v7003
        %v7148 = vunpack.c.h.b16 %v7003
        %v7149 = vunpack.c.l.b16 %v7004
        %v7150 = vunpack.c.h.b16 %v7004
        %v7151 = vunpack.c.l.b16 %v7005
        %v7152 = vunpack.c.h.b16 %v7005
        %v7153 = vunpack.c.l.b16 %v7006
        %v7154 = vunpack.c.h.b16 %v7006
        %v7155 = vunpack.c.l.b16 %v7007
        %v7156 = vunpack.c.h.b16 %v7007
        %v7157 = vunpack.c.l.b16 %v7008
        %v7158 = vunpack.c.h.b16 %v7008
        %v7159 = vunpack.c.l.b16 %v7009
        %v7160 = vunpack.c.h.b16 %v7009
        %v7161 = vunpack.c.l.b16 %v7010
        %v7162 = vunpack.c.h.b16 %v7010
        %v7163 = vunpack.c.l.b16 %v7011
        %v7164 = vunpack.c.h.b16 %v7011
        %v7165 = vunpack.c.l.b16 %v7012
        %v7166 = vunpack.c.h.b16 %v7012
        %v7167 = vunpack.c.l.b16 %v7013
        %v7168 = vunpack.c.h.b16 %v7013
        %v7169 = vunpack.c.l.b16 %v7014
        %v7170 = vunpack.c.h.b16 %v7014
        %v7171 = vunpack.c.l.b16 %v7015
        %v7172 = vunpack.c.h.b16 %v7015
        %v7173 = vunpack.c.l.b16 %v7016
        %v7174 = vunpack.c.h.b16 %v7016
        %v7175 = vunpack.c.l.b16 %v7017
        %v7176 = vunpack.c.h.b16 %v7017
        %v7177 = vunpack.c.l.b16 %v7018
        %v7178 = vunpack.c.h.b16 %v7018
        %v7179 = vunpack.c.l.b16 %v7019
        %v7180 = vunpack.c.h.b16 %v7019
        %v7181 = vunpack.c.l.b16 %v7020
        %v7182 = vunpack.c.h.b16 %v7020
        %v7183 = vunpack.c.l.b16 %v7021
        %v7184 = vunpack.c.h.b16 %v7021
        %v7185 = vunpack.c.l.b16 %v7022
        %v7186 = vunpack.c.h.b16 %v7022
        %v7187 = vunpack.c.l.b16 %v7023
        %v7188 = vunpack.c.h.b16 %v7023
        %v7189 = vunpack.c.l.b16 %v7024
        %v7190 = vunpack.c.h.b16 %v7024
        %v7191 = vunpack.c.l.b16 %v7025
        %v7192 = vunpack.c.h.b16 %v7025
        %v7193 = vunpack.c.l.b16 %v7026
        %v7194 = vunpack.c.h.b16 %v7026
        %v7195 = vunpack.c.l.b16 %v7027
        %v7196 = vunpack.c.h.b16 %v7027
        %v7197 = vunpack.c.l.b16 %v7028
        %v7198 = vunpack.c.h.b16 %v7028
        %v7199 = vunpack.c.l.b16 %v7029
        %v7200 = vunpack.c.h.b16 %v7029
        %v7201 = vunpack.c.l.b16 %v7030
        %v7202 = vunpack.c.h.b16 %v7030
        %v7203 = vunpack.c.l.b16 %v7031
        %v7204 = vunpack.c.h.b16 %v7031
        %v7205 = vunpack.c.l.b16 %v7032
        %v7206 = vunpack.c.h.b16 %v7032
        %v7207 = vunpack.c.l.b16 %v7033
        %v7208 = vunpack.c.h.b16 %v7033
        %v7209 = vunpack.c.l.b16 %v7034
        %v7210 = vunpack.c.h.b16 %v7034
        %v7211 = vunpack.c.l.b16 %v7035
        %v7212 = vunpack.c.h.b16 %v7035
        %v7213 = vunpack.c.l.b16 %v7036
        %v7214 = vunpack.c.h.b16 %v7036
        %v7215 = vunpack.c.l.b16 %v7037
        %v7216 = vunpack.c.h.b16 %v7037
        %v7217 = vunpack.c.l.b16 %v7038
        %v7218 = vunpack.c.h.b16 %v7038
        %v7219 = vunpack.c.l.b16 %v7039
        %v7220 = vunpack.c.h.b16 %v7039
        %v7221 = vunpack.c.l.b16 %v7040
        %v7222 = vunpack.c.h.b16 %v7040
        %v7223 = vunpack.c.l.b16 %v7041
        %v7224 = vunpack.c.h.b16 %v7041
        %v7225 = vunpack.c.l.b16 %v7042
        %v7226 = vunpack.c.h.b16 %v7042
        %v7227 = vunpack.c.l.b16 %v7043
        %v7228 = vunpack.c.h.b16 %v7043
        %v7229 = vunpack.c.l.b16 %v7044
        %v7230 = vunpack.c.h.b16 %v7044
        %v7231 = vunpack.c.l.b16 %v7045
        %v7232 = vunpack.c.h.b16 %v7045
        %v7233 = vunpack.c.l.b16 %v7046
        %v7234 = vunpack.c.h.b16 %v7046
        %v7235 = vunpack.c.l.b16 %v7047
        %v7236 = vunpack.c.h.b16 %v7047
        %v7237 = vunpack.c.l.b16 %v7048
        %v7238 = vunpack.c.h.b16 %v7048
        %v7239 = vunpack.c.l.b16 %v7049
        %v7240 = vunpack.c.h.b16 %v7049
        %v7241 = vunpack.c.l.b16 %v7050
        %v7242 = vunpack.c.h.b16 %v7050
        %v7243 = vpack.c.b16 %v7123, %v7115
        %v7244 = vpack.c.b16 %v7124, %v7116
        %v7245 = vpack.c.b16 %v7125, %v7117
        %v7246 = vpack.c.b16 %v7126, %v7118
        %v7247 = vpack.c.b16 %v7127, %v7119
        %v7248 = vpack.c.b16 %v7128, %v7120
        %v7249 = vpack.c.b16 %v7129, %v7121
        %v7250 = vpack.c.b16 %v7130, %v7122
        %v7251 = vpack.c.b16 %v7139, %v7131
        %v7252 = vpack.c.b16 %v7140, %v7132
        %v7253 = vpack.c.b16 %v7141, %v7133
        %v7254 = vpack.c.b16 %v7142, %v7134
        %v7255 = vpack.c.b16 %v7143, %v7135
        %v7256 = vpack.c.b16 %v7144, %v7136
        %v7257 = vpack.c.b16 %v7145, %v7137
        %v7258 = vpack.c.b16 %v7146, %v7138
        %v7259 = vpack.c.b16 %v7155, %v7147
        %v7260 = vpack.c.b16 %v7156, %v7148
        %v7261 = vpack.c.b16 %v7157, %v7149
        %v7262 = vpack.c.b16 %v7158, %v7150
        %v7263 = vpack.c.b16 %v7159, %v7151
        %v7264 = vpack.c.b16 %v7160, %v7152
        %v7265 = vpack.c.b16 %v7161, %v7153
        %v7266 = vpack.c.b16 %v7162, %v7154
        %v7267 = vpack.c.b16 %v7171, %v7163
        %v7268 = vpack.c.b16 %v7172, %v7164
        %v7269 = vpack.c.b16 %v7173, %v7165
        %v7270 = vpack.c.b16 %v7174, %v7166
        %v7271 = vpack.c.b16 %v7175, %v7167
        %v7272 = vpack.c.b16 %v7176, %v7168
        %v7273 = vpack.c.b16 %v7177, %v7169
        %v7274 = vpack.c.b16 %v7178, %v7170
        %v7275 = vpack.c.b16 %v7187, %v7179
        %v7276 = vpack.c.b16 %v7188, %v7180
        %v7277 = vpack.c.b16 %v7189, %v7181
        %v7278 = vpack.c.b16 %v7190, %v7182
        %v7279 = vpack.c.b16 %v7191, %v7183
        %v7280 = vpack.c.b16 %v7192, %v7184
        %v7281 = vpack.c.b16 %v7193, %v7185
        %v7282 = vpack.c.b16 %v7194, %v7186
        %v7283 = vpack.c.b16 %v7203, %v7195
        %v7284 = vpack.c.b16 %v7204, %v7196
        %v7285 = vpack.c.b16 %v7205, %v7197
        %v7286 = vpack.c.b16 %v7206, %v7198
        %v7287 = vpack.c.b16 %v7207, %v7199
        %v7288 = vpack.c.b16 %v7208, %v7200
        %v7289 = vpack.c.b16 %v7209, %v7201
        %v7290 = vpack.c.b16 %v7210, %v7202
        %v7291 = vpack.c.b16 %v7219, %v7211
        %v7292 = vpack.c.b16 %v7220, %v7212
        %v7293 = vpack.c.b16 %v7221, %v7213
        %v7294 = vpack.c.b16 %v7222, %v7214
        %v7295 = vpack.c.b16 %v7223, %v7215
        %v7296 = vpack.c.b16 %v7224, %v7216
        %v7297 = vpack.c.b16 %v7225, %v7217
        %v7298 = vpack.c.b16 %v7226, %v7218
        %v7299 = vpack.c.b16 %v7235, %v7227
        %v7300 = vpack.c.b16 %v7236, %v7228
        %v7301 = vpack.c.b16 %v7237, %v7229
        %v7302 = vpack.c.b16 %v7238, %v7230
        %v7303 = vpack.c.b16 %v7239, %v7231
        %v7304 = vpack.c.b16 %v7240, %v7232
        %v7305 = vpack.c.b16 %v7241, %v7233
        %v7306 = vpack.c.b16 %v7242, %v7234
        %7371 = vmatprep.subr.bf16.mxu0 %v7300
        %7372 = vmatpush1.bf16.msra.mxu0 %v7299
        %7373 = vmatprep.subr.bf16.mxu0 %v7292
        %7374 = vmatpush1.bf16.msra.mxu0 %v7291
        %7375 = vmatprep.subr.bf16.mxu0 %v7284
        %7376 = vmatpush1.bf16.msra.mxu0 %v7283
        %7377 = vmatprep.subr.bf16.mxu0 %v7276
        %7378 = vmatpush1.bf16.msra.mxu0 %v7275
        %7379 = vmatprep.subr.bf16.mxu0 %v7268
        %7380 = vmatpush1.bf16.msra.mxu0 %v7267
        %7381 = vmatprep.subr.bf16.mxu0 %v7260
        %7382 = vmatpush1.bf16.msra.mxu0 %v7259
        %7383 = vmatprep.subr.bf16.mxu0 %v7252
        %7384 = vmatpush1.bf16.msra.mxu0 %v7251
        %7385 = vmatprep.subr.bf16.mxu0 %v7244
        %7386 = vmatpush1.bf16.msra.mxu0 %v7243
        %7387 = vmatprep.subr.bf16.mxu0 0
        %7388 = vmatpush2.bf16.msra.mxu0 0
        %7389 = vmatprep.subr.bf16.mxu0 0
        %7390 = vmatpush2.bf16.msra.mxu0 0
        %7391 = vmatprep.subr.bf16.mxu0 0
        %7392 = vmatpush2.bf16.msra.mxu0 0
        %7393 = vmatprep.subr.bf16.mxu0 0
        %7394 = vmatpush2.bf16.msra.mxu0 0
        %7395 = vmatprep.subr.bf16.mxu0 0
        %7396 = vmatpush2.bf16.msra.mxu0 0
        %7397 = vmatprep.subr.bf16.mxu0 0
        %7398 = vmatpush2.bf16.msra.mxu0 0
        %7399 = vmatprep.subr.bf16.mxu0 0
        %7400 = vmatpush2.bf16.msra.mxu0 0
        %7401 = vmatprep.subr.bf16.mxu0 0
        %7402 = vmatpush2.bf16.msra.mxu0 0
        %7403 = vmatprep.mubr.bf16.mxu0 0
        %7404 = vmatmul.mubr.bf16.gmra.mxu0 %v6971
        %v7405 = vpop.f32.mrf.mxu0
        %v7406 = vadd.f32 0.0, %v7405
        %v7407 = vpop.f32.mrf.mxu0
        %v7408 = vadd.f32 0.0, %v7407
        %v7409 = vpop.f32.mrf.mxu0
        %v7410 = vadd.f32 0.0, %v7409
        %v7411 = vpop.f32.mrf.mxu0
        %v7412 = vadd.f32 0.0, %v7411
        %7413 = vmatprep.mubr.bf16.mxu0 0
        %7414 = vmatmul.mubr.bf16.gmra.mxu0 %v6972
        %v7415 = vpop.f32.mrf.mxu0
        %v7416 = vadd.f32 0.0, %v7415
        %v7417 = vpop.f32.mrf.mxu0
        %v7418 = vadd.f32 0.0, %v7417
        %v7419 = vpop.f32.mrf.mxu0
        %v7420 = vadd.f32 0.0, %v7419
        %v7421 = vpop.f32.mrf.mxu0
        %v7422 = vadd.f32 0.0, %v7421
        %7423 = vmatprep.mubr.bf16.mxu0 0
        %7424 = vmatmul.mubr.bf16.gmra.mxu0 %v6973
        %v7425 = vpop.f32.mrf.mxu0
        %v7426 = vadd.f32 0.0, %v7425
        %v7427 = vpop.f32.mrf.mxu0
        %v7428 = vadd.f32 0.0, %v7427
        %v7429 = vpop.f32.mrf.mxu0
        %v7430 = vadd.f32 0.0, %v7429
        %v7431 = vpop.f32.mrf.mxu0
        %v7432 = vadd.f32 0.0, %v7431
        %7433 = vmatprep.mubr.bf16.mxu0 0
        %7434 = vmatmul.mubr.bf16.gmra.mxu0 %v6974
        %v7435 = vpop.f32.mrf.mxu0
        %v7436 = vadd.f32 0.0, %v7435
        %v7437 = vpop.f32.mrf.mxu0
        %v7438 = vadd.f32 0.0, %v7437
        %v7439 = vpop.f32.mrf.mxu0
        %v7440 = vadd.f32 0.0, %v7439
        %v7441 = vpop.f32.mrf.mxu0
        %v7442 = vadd.f32 0.0, %v7441
        %7443 = vmatprep.mubr.bf16.mxu0 0
        %7444 = vmatmul.mubr.bf16.gmra.mxu0 %v6975
        %v7445 = vpop.f32.mrf.mxu0
        %v7446 = vadd.f32 0.0, %v7445
        %v7447 = vpop.f32.mrf.mxu0
        %v7448 = vadd.f32 0.0, %v7447
        %v7449 = vpop.f32.mrf.mxu0
        %v7450 = vadd.f32 0.0, %v7449
        %v7451 = vpop.f32.mrf.mxu0
        %v7452 = vadd.f32 0.0, %v7451
        %7453 = vmatprep.mubr.bf16.mxu0 0
        %7454 = vmatmul.mubr.bf16.gmra.mxu0 %v6976
        %v7455 = vpop.f32.mrf.mxu0
        %v7456 = vadd.f32 0.0, %v7455
        %v7457 = vpop.f32.mrf.mxu0
        %v7458 = vadd.f32 0.0, %v7457
        %v7459 = vpop.f32.mrf.mxu0
        %v7460 = vadd.f32 0.0, %v7459
        %v7461 = vpop.f32.mrf.mxu0
        %v7462 = vadd.f32 0.0, %v7461
        %7463 = vmatprep.mubr.bf16.mxu0 0
        %7464 = vmatmul.mubr.bf16.gmra.mxu0 %v6977
        %v7465 = vpop.f32.mrf.mxu0
        %v7466 = vadd.f32 0.0, %v7465
        %v7467 = vpop.f32.mrf.mxu0
        %v7468 = vadd.f32 0.0, %v7467
        %v7469 = vpop.f32.mrf.mxu0
        %v7470 = vadd.f32 0.0, %v7469
        %v7471 = vpop.f32.mrf.mxu0
        %v7472 = vadd.f32 0.0, %v7471
        %7473 = vmatprep.mubr.bf16.mxu0 0
        %7474 = vmatmul.mubr.bf16.gmra.mxu0 %v6978
        %v7475 = vpop.f32.mrf.mxu0
        %v7476 = vadd.f32 0.0, %v7475
        %v7477 = vpop.f32.mrf.mxu0
        %v7478 = vadd.f32 0.0, %v7477
        %v7479 = vpop.f32.mrf.mxu0
        %v7480 = vadd.f32 0.0, %v7479
        %v7481 = vpop.f32.mrf.mxu0
        %v7482 = vadd.f32 0.0, %v7481
        %7483 = vmatprep.mubr.bf16.mxu0 0
        %7484 = vmatmul.mubr.bf16.gmra.mxu0 %v6979
        %v7485 = vpop.f32.mrf.mxu0
        %v7486 = vadd.f32 0.0, %v7485
        %v7487 = vpop.f32.mrf.mxu0
        %v7488 = vadd.f32 0.0, %v7487
        %v7489 = vpop.f32.mrf.mxu0
        %v7490 = vadd.f32 0.0, %v7489
        %v7491 = vpop.f32.mrf.mxu0
        %v7492 = vadd.f32 0.0, %v7491
        %7493 = vmatprep.mubr.bf16.mxu0 0
        %7494 = vmatmul.mubr.bf16.gmra.mxu0 %v6980
        %v7495 = vpop.f32.mrf.mxu0
        %v7496 = vadd.f32 0.0, %v7495
        %v7497 = vpop.f32.mrf.mxu0
        %v7498 = vadd.f32 0.0, %v7497
        %v7499 = vpop.f32.mrf.mxu0
        %v7500 = vadd.f32 0.0, %v7499
        %v7501 = vpop.f32.mrf.mxu0
        %v7502 = vadd.f32 0.0, %v7501
        %7503 = vmatprep.mubr.bf16.mxu0 0
        %7504 = vmatmul.mubr.bf16.gmra.mxu0 %v6981
        %v7505 = vpop.f32.mrf.mxu0
        %v7506 = vadd.f32 0.0, %v7505
        %v7507 = vpop.f32.mrf.mxu0
        %v7508 = vadd.f32 0.0, %v7507
        %v7509 = vpop.f32.mrf.mxu0
        %v7510 = vadd.f32 0.0, %v7509
        %v7511 = vpop.f32.mrf.mxu0
        %v7512 = vadd.f32 0.0, %v7511
        %7513 = vmatprep.mubr.bf16.mxu0 0
        %7514 = vmatmul.mubr.bf16.gmra.mxu0 %v6982
        %v7515 = vpop.f32.mrf.mxu0
        %v7516 = vadd.f32 0.0, %v7515
        %v7517 = vpop.f32.mrf.mxu0
        %v7518 = vadd.f32 0.0, %v7517
        %v7519 = vpop.f32.mrf.mxu0
        %v7520 = vadd.f32 0.0, %v7519
        %v7521 = vpop.f32.mrf.mxu0
        %v7522 = vadd.f32 0.0, %v7521
        %7523 = vmatprep.mubr.bf16.mxu0 0
        %7524 = vmatmul.mubr.bf16.gmra.mxu0 %v6983
        %v7525 = vpop.f32.mrf.mxu0
        %v7526 = vadd.f32 0.0, %v7525
        %v7527 = vpop.f32.mrf.mxu0
        %v7528 = vadd.f32 0.0, %v7527
        %v7529 = vpop.f32.mrf.mxu0
        %v7530 = vadd.f32 0.0, %v7529
        %v7531 = vpop.f32.mrf.mxu0
        %v7532 = vadd.f32 0.0, %v7531
        %7533 = vmatprep.mubr.bf16.mxu0 0
        %7534 = vmatmul.mubr.bf16.gmra.mxu0 %v6984
        %v7535 = vpop.f32.mrf.mxu0
        %v7536 = vadd.f32 0.0, %v7535
        %v7537 = vpop.f32.mrf.mxu0
        %v7538 = vadd.f32 0.0, %v7537
        %v7539 = vpop.f32.mrf.mxu0
        %v7540 = vadd.f32 0.0, %v7539
        %v7541 = vpop.f32.mrf.mxu0
        %v7542 = vadd.f32 0.0, %v7541
        %7543 = vmatprep.mubr.bf16.mxu0 0
        %7544 = vmatmul.mubr.bf16.gmra.mxu0 %v6985
        %v7545 = vpop.f32.mrf.mxu0
        %v7546 = vadd.f32 0.0, %v7545
        %v7547 = vpop.f32.mrf.mxu0
        %v7548 = vadd.f32 0.0, %v7547
        %v7549 = vpop.f32.mrf.mxu0
        %v7550 = vadd.f32 0.0, %v7549
        %v7551 = vpop.f32.mrf.mxu0
        %v7552 = vadd.f32 0.0, %v7551
        %7553 = vmatprep.mubr.bf16.mxu0 0
        %7554 = vmatmul.mubr.bf16.gmra.mxu0 %v6986
        %v7555 = vpop.f32.mrf.mxu0
        %v7556 = vadd.f32 0.0, %v7555
        %v7557 = vpop.f32.mrf.mxu0
        %v7558 = vadd.f32 0.0, %v7557
        %v7559 = vpop.f32.mrf.mxu0
        %v7560 = vadd.f32 0.0, %v7559
        %v7561 = vpop.f32.mrf.mxu0
        %v7562 = vadd.f32 0.0, %v7561
        %7563 = vdwg.mxu0
        %7564 = vmatprep.subr.bf16.mxu0 %v7302
        %7565 = vmatpush1.bf16.msra.mxu0 %v7301
        %7566 = vmatprep.subr.bf16.mxu0 %v7294
        %7567 = vmatpush1.bf16.msra.mxu0 %v7293
        %7568 = vmatprep.subr.bf16.mxu0 %v7286
        %7569 = vmatpush1.bf16.msra.mxu0 %v7285
        %7570 = vmatprep.subr.bf16.mxu0 %v7278
        %7571 = vmatpush1.bf16.msra.mxu0 %v7277
        %7572 = vmatprep.subr.bf16.mxu0 %v7270
        %7573 = vmatpush1.bf16.msra.mxu0 %v7269
        %7574 = vmatprep.subr.bf16.mxu0 %v7262
        %7575 = vmatpush1.bf16.msra.mxu0 %v7261
        %7576 = vmatprep.subr.bf16.mxu0 %v7254
        %7577 = vmatpush1.bf16.msra.mxu0 %v7253
        %7578 = vmatprep.subr.bf16.mxu0 %v7246
        %7579 = vmatpush1.bf16.msra.mxu0 %v7245
        %7580 = vmatprep.subr.bf16.mxu0 0
        %7581 = vmatpush2.bf16.msra.mxu0 0
        %7582 = vmatprep.subr.bf16.mxu0 0
        %7583 = vmatpush2.bf16.msra.mxu0 0
        %7584 = vmatprep.subr.bf16.mxu0 0
        %7585 = vmatpush2.bf16.msra.mxu0 0
        %7586 = vmatprep.subr.bf16.mxu0 0
        %7587 = vmatpush2.bf16.msra.mxu0 0
        %7588 = vmatprep.subr.bf16.mxu0 0
        %7589 = vmatpush2.bf16.msra.mxu0 0
        %7590 = vmatprep.subr.bf16.mxu0 0
        %7591 = vmatpush2.bf16.msra.mxu0 0
        %7592 = vmatprep.subr.bf16.mxu0 0
        %7593 = vmatpush2.bf16.msra.mxu0 0
        %7594 = vmatprep.subr.bf16.mxu0 0
        %7595 = vmatpush2.bf16.msra.mxu0 0
        %7596 = vmatprep.mubr.bf16.mxu0 0
        %7597 = vmatmul.mubr.bf16.gmra.mxu0 %v6971
        %v7598 = vpop.f32.mrf.mxu0
        %v7599 = vadd.f32 0.0, %v7598
        %v7600 = vpop.f32.mrf.mxu0
        %v7601 = vadd.f32 0.0, %v7600
        %v7602 = vpop.f32.mrf.mxu0
        %v7603 = vadd.f32 0.0, %v7602
        %v7604 = vpop.f32.mrf.mxu0
        %v7605 = vadd.f32 0.0, %v7604
        %7606 = vmatprep.mubr.bf16.mxu0 0
        %7607 = vmatmul.mubr.bf16.gmra.mxu0 %v6972
        %v7608 = vpop.f32.mrf.mxu0
        %v7609 = vadd.f32 0.0, %v7608
        %v7610 = vpop.f32.mrf.mxu0
        %v7611 = vadd.f32 0.0, %v7610
        %v7612 = vpop.f32.mrf.mxu0
        %v7613 = vadd.f32 0.0, %v7612
        %v7614 = vpop.f32.mrf.mxu0
        %v7615 = vadd.f32 0.0, %v7614
        %7616 = vmatprep.mubr.bf16.mxu0 0
        %7617 = vmatmul.mubr.bf16.gmra.mxu0 %v6973
        %v7618 = vpop.f32.mrf.mxu0
        %v7619 = vadd.f32 0.0, %v7618
        %v7620 = vpop.f32.mrf.mxu0
        %v7621 = vadd.f32 0.0, %v7620
        %v7622 = vpop.f32.mrf.mxu0
        %v7623 = vadd.f32 0.0, %v7622
        %v7624 = vpop.f32.mrf.mxu0
        %v7625 = vadd.f32 0.0, %v7624
        %7626 = vmatprep.mubr.bf16.mxu0 0
        %7627 = vmatmul.mubr.bf16.gmra.mxu0 %v6974
        %v7628 = vpop.f32.mrf.mxu0
        %v7629 = vadd.f32 0.0, %v7628
        %v7630 = vpop.f32.mrf.mxu0
        %v7631 = vadd.f32 0.0, %v7630
        %v7632 = vpop.f32.mrf.mxu0
        %v7633 = vadd.f32 0.0, %v7632
        %v7634 = vpop.f32.mrf.mxu0
        %v7635 = vadd.f32 0.0, %v7634
        %7636 = vmatprep.mubr.bf16.mxu0 0
        %7637 = vmatmul.mubr.bf16.gmra.mxu0 %v6975
        %v7638 = vpop.f32.mrf.mxu0
        %v7639 = vadd.f32 0.0, %v7638
        %v7640 = vpop.f32.mrf.mxu0
        %v7641 = vadd.f32 0.0, %v7640
        %v7642 = vpop.f32.mrf.mxu0
        %v7643 = vadd.f32 0.0, %v7642
        %v7644 = vpop.f32.mrf.mxu0
        %v7645 = vadd.f32 0.0, %v7644
        %7646 = vmatprep.mubr.bf16.mxu0 0
        %7647 = vmatmul.mubr.bf16.gmra.mxu0 %v6976
        %v7648 = vpop.f32.mrf.mxu0
        %v7649 = vadd.f32 0.0, %v7648
        %v7650 = vpop.f32.mrf.mxu0
        %v7651 = vadd.f32 0.0, %v7650
        %v7652 = vpop.f32.mrf.mxu0
        %v7653 = vadd.f32 0.0, %v7652
        %v7654 = vpop.f32.mrf.mxu0
        %v7655 = vadd.f32 0.0, %v7654
        %7656 = vmatprep.mubr.bf16.mxu0 0
        %7657 = vmatmul.mubr.bf16.gmra.mxu0 %v6977
        %v7658 = vpop.f32.mrf.mxu0
        %v7659 = vadd.f32 0.0, %v7658
        %v7660 = vpop.f32.mrf.mxu0
        %v7661 = vadd.f32 0.0, %v7660
        %v7662 = vpop.f32.mrf.mxu0
        %v7663 = vadd.f32 0.0, %v7662
        %v7664 = vpop.f32.mrf.mxu0
        %v7665 = vadd.f32 0.0, %v7664
        %7666 = vmatprep.mubr.bf16.mxu0 0
        %7667 = vmatmul.mubr.bf16.gmra.mxu0 %v6978
        %v7668 = vpop.f32.mrf.mxu0
        %v7669 = vadd.f32 0.0, %v7668
        %v7670 = vpop.f32.mrf.mxu0
        %v7671 = vadd.f32 0.0, %v7670
        %v7672 = vpop.f32.mrf.mxu0
        %v7673 = vadd.f32 0.0, %v7672
        %v7674 = vpop.f32.mrf.mxu0
        %v7675 = vadd.f32 0.0, %v7674
        %7676 = vmatprep.mubr.bf16.mxu0 0
        %7677 = vmatmul.mubr.bf16.gmra.mxu0 %v6979
        %v7678 = vpop.f32.mrf.mxu0
        %v7679 = vadd.f32 0.0, %v7678
        %v7680 = vpop.f32.mrf.mxu0
        %v7681 = vadd.f32 0.0, %v7680
        %v7682 = vpop.f32.mrf.mxu0
        %v7683 = vadd.f32 0.0, %v7682
        %v7684 = vpop.f32.mrf.mxu0
        %v7685 = vadd.f32 0.0, %v7684
        %7686 = vmatprep.mubr.bf16.mxu0 0
        %7687 = vmatmul.mubr.bf16.gmra.mxu0 %v6980
        %v7688 = vpop.f32.mrf.mxu0
        %v7689 = vadd.f32 0.0, %v7688
        %v7690 = vpop.f32.mrf.mxu0
        %v7691 = vadd.f32 0.0, %v7690
        %v7692 = vpop.f32.mrf.mxu0
        %v7693 = vadd.f32 0.0, %v7692
        %v7694 = vpop.f32.mrf.mxu0
        %v7695 = vadd.f32 0.0, %v7694
        %7696 = vmatprep.mubr.bf16.mxu0 0
        %7697 = vmatmul.mubr.bf16.gmra.mxu0 %v6981
        %v7698 = vpop.f32.mrf.mxu0
        %v7699 = vadd.f32 0.0, %v7698
        %v7700 = vpop.f32.mrf.mxu0
        %v7701 = vadd.f32 0.0, %v7700
        %v7702 = vpop.f32.mrf.mxu0
        %v7703 = vadd.f32 0.0, %v7702
        %v7704 = vpop.f32.mrf.mxu0
        %v7705 = vadd.f32 0.0, %v7704
        %7706 = vmatprep.mubr.bf16.mxu0 0
        %7707 = vmatmul.mubr.bf16.gmra.mxu0 %v6982
        %v7708 = vpop.f32.mrf.mxu0
        %v7709 = vadd.f32 0.0, %v7708
        %v7710 = vpop.f32.mrf.mxu0
        %v7711 = vadd.f32 0.0, %v7710
        %v7712 = vpop.f32.mrf.mxu0
        %v7713 = vadd.f32 0.0, %v7712
        %v7714 = vpop.f32.mrf.mxu0
        %v7715 = vadd.f32 0.0, %v7714
        %7716 = vmatprep.mubr.bf16.mxu0 0
        %7717 = vmatmul.mubr.bf16.gmra.mxu0 %v6983
        %v7718 = vpop.f32.mrf.mxu0
        %v7719 = vadd.f32 0.0, %v7718
        %v7720 = vpop.f32.mrf.mxu0
        %v7721 = vadd.f32 0.0, %v7720
        %v7722 = vpop.f32.mrf.mxu0
        %v7723 = vadd.f32 0.0, %v7722
        %v7724 = vpop.f32.mrf.mxu0
        %v7725 = vadd.f32 0.0, %v7724
        %7726 = vmatprep.mubr.bf16.mxu0 0
        %7727 = vmatmul.mubr.bf16.gmra.mxu0 %v6984
        %v7728 = vpop.f32.mrf.mxu0
        %v7729 = vadd.f32 0.0, %v7728
        %v7730 = vpop.f32.mrf.mxu0
        %v7731 = vadd.f32 0.0, %v7730
        %v7732 = vpop.f32.mrf.mxu0
        %v7733 = vadd.f32 0.0, %v7732
        %v7734 = vpop.f32.mrf.mxu0
        %v7735 = vadd.f32 0.0, %v7734
        %7736 = vmatprep.mubr.bf16.mxu0 0
        %7737 = vmatmul.mubr.bf16.gmra.mxu0 %v6985
        %v7738 = vpop.f32.mrf.mxu0
        %v7739 = vadd.f32 0.0, %v7738
        %v7740 = vpop.f32.mrf.mxu0
        %v7741 = vadd.f32 0.0, %v7740
        %v7742 = vpop.f32.mrf.mxu0
        %v7743 = vadd.f32 0.0, %v7742
        %v7744 = vpop.f32.mrf.mxu0
        %v7745 = vadd.f32 0.0, %v7744
        %7746 = vmatprep.mubr.bf16.mxu0 0
        %7747 = vmatmul.mubr.bf16.gmra.mxu0 %v6986
        %v7748 = vpop.f32.mrf.mxu0
        %v7749 = vadd.f32 0.0, %v7748
        %v7750 = vpop.f32.mrf.mxu0
        %v7751 = vadd.f32 0.0, %v7750
        %v7752 = vpop.f32.mrf.mxu0
        %v7753 = vadd.f32 0.0, %v7752
        %v7754 = vpop.f32.mrf.mxu0
        %v7755 = vadd.f32 0.0, %v7754
        %7756 = vdwg.mxu0
        %7757 = vmatprep.subr.bf16.mxu0 %v7304
        %7758 = vmatpush1.bf16.msra.mxu0 %v7303
        %7759 = vmatprep.subr.bf16.mxu0 %v7296
        %7760 = vmatpush1.bf16.msra.mxu0 %v7295
        %7761 = vmatprep.subr.bf16.mxu0 %v7288
        %7762 = vmatpush1.bf16.msra.mxu0 %v7287
        %7763 = vmatprep.subr.bf16.mxu0 %v7280
        %7764 = vmatpush1.bf16.msra.mxu0 %v7279
        %7765 = vmatprep.subr.bf16.mxu0 %v7272
        %7766 = vmatpush1.bf16.msra.mxu0 %v7271
        %7767 = vmatprep.subr.bf16.mxu0 %v7264
        %7768 = vmatpush1.bf16.msra.mxu0 %v7263
        %7769 = vmatprep.subr.bf16.mxu0 %v7256
        %7770 = vmatpush1.bf16.msra.mxu0 %v7255
        %7771 = vmatprep.subr.bf16.mxu0 %v7248
        %7772 = vmatpush1.bf16.msra.mxu0 %v7247
        %7773 = vmatprep.subr.bf16.mxu0 0
        %7774 = vmatpush2.bf16.msra.mxu0 0
        %7775 = vmatprep.subr.bf16.mxu0 0
        %7776 = vmatpush2.bf16.msra.mxu0 0
        %7777 = vmatprep.subr.bf16.mxu0 0
        %7778 = vmatpush2.bf16.msra.mxu0 0
        %7779 = vmatprep.subr.bf16.mxu0 0
        %7780 = vmatpush2.bf16.msra.mxu0 0
        %7781 = vmatprep.subr.bf16.mxu0 0
        %7782 = vmatpush2.bf16.msra.mxu0 0
        %7783 = vmatprep.subr.bf16.mxu0 0
        %7784 = vmatpush2.bf16.msra.mxu0 0
        %7785 = vmatprep.subr.bf16.mxu0 0
        %7786 = vmatpush2.bf16.msra.mxu0 0
        %7787 = vmatprep.subr.bf16.mxu0 0
        %7788 = vmatpush2.bf16.msra.mxu0 0
        %7789 = vmatprep.mubr.bf16.mxu0 0
        %7790 = vmatmul.mubr.bf16.gmra.mxu0 %v6971
        %v7791 = vpop.f32.mrf.mxu0
        %v7792 = vadd.f32 0.0, %v7791
        %v7793 = vpop.f32.mrf.mxu0
        %v7794 = vadd.f32 0.0, %v7793
        %v7795 = vpop.f32.mrf.mxu0
        %v7796 = vadd.f32 0.0, %v7795
        %v7797 = vpop.f32.mrf.mxu0
        %v7798 = vadd.f32 0.0, %v7797
        %7799 = vmatprep.mubr.bf16.mxu0 0
        %7800 = vmatmul.mubr.bf16.gmra.mxu0 %v6972
        %v7801 = vpop.f32.mrf.mxu0
        %v7802 = vadd.f32 0.0, %v7801
        %v7803 = vpop.f32.mrf.mxu0
        %v7804 = vadd.f32 0.0, %v7803
        %v7805 = vpop.f32.mrf.mxu0
        %v7806 = vadd.f32 0.0, %v7805
        %v7807 = vpop.f32.mrf.mxu0
        %v7808 = vadd.f32 0.0, %v7807
        %7809 = vmatprep.mubr.bf16.mxu0 0
        %7810 = vmatmul.mubr.bf16.gmra.mxu0 %v6973
        %v7811 = vpop.f32.mrf.mxu0
        %v7812 = vadd.f32 0.0, %v7811
        %v7813 = vpop.f32.mrf.mxu0
        %v7814 = vadd.f32 0.0, %v7813
        %v7815 = vpop.f32.mrf.mxu0
        %v7816 = vadd.f32 0.0, %v7815
        %v7817 = vpop.f32.mrf.mxu0
        %v7818 = vadd.f32 0.0, %v7817
        %7819 = vmatprep.mubr.bf16.mxu0 0
        %7820 = vmatmul.mubr.bf16.gmra.mxu0 %v6974
        %v7821 = vpop.f32.mrf.mxu0
        %v7822 = vadd.f32 0.0, %v7821
        %v7823 = vpop.f32.mrf.mxu0
        %v7824 = vadd.f32 0.0, %v7823
        %v7825 = vpop.f32.mrf.mxu0
        %v7826 = vadd.f32 0.0, %v7825
        %v7827 = vpop.f32.mrf.mxu0
        %v7828 = vadd.f32 0.0, %v7827
        %7829 = vmatprep.mubr.bf16.mxu0 0
        %7830 = vmatmul.mubr.bf16.gmra.mxu0 %v6975
        %v7831 = vpop.f32.mrf.mxu0
        %v7832 = vadd.f32 0.0, %v7831
        %v7833 = vpop.f32.mrf.mxu0
        %v7834 = vadd.f32 0.0, %v7833
        %v7835 = vpop.f32.mrf.mxu0
        %v7836 = vadd.f32 0.0, %v7835
        %v7837 = vpop.f32.mrf.mxu0
        %v7838 = vadd.f32 0.0, %v7837
        %7839 = vmatprep.mubr.bf16.mxu0 0
        %7840 = vmatmul.mubr.bf16.gmra.mxu0 %v6976
        %v7841 = vpop.f32.mrf.mxu0
        %v7842 = vadd.f32 0.0, %v7841
        %v7843 = vpop.f32.mrf.mxu0
        %v7844 = vadd.f32 0.0, %v7843
        %v7845 = vpop.f32.mrf.mxu0
        %v7846 = vadd.f32 0.0, %v7845
        %v7847 = vpop.f32.mrf.mxu0
        %v7848 = vadd.f32 0.0, %v7847
        %7849 = vmatprep.mubr.bf16.mxu0 0
        %7850 = vmatmul.mubr.bf16.gmra.mxu0 %v6977
        %v7851 = vpop.f32.mrf.mxu0
        %v7852 = vadd.f32 0.0, %v7851
        %v7853 = vpop.f32.mrf.mxu0
        %v7854 = vadd.f32 0.0, %v7853
        %v7855 = vpop.f32.mrf.mxu0
        %v7856 = vadd.f32 0.0, %v7855
        %v7857 = vpop.f32.mrf.mxu0
        %v7858 = vadd.f32 0.0, %v7857
        %7859 = vmatprep.mubr.bf16.mxu0 0
        %7860 = vmatmul.mubr.bf16.gmra.mxu0 %v6978
        %v7861 = vpop.f32.mrf.mxu0
        %v7862 = vadd.f32 0.0, %v7861
        %v7863 = vpop.f32.mrf.mxu0
        %v7864 = vadd.f32 0.0, %v7863
        %v7865 = vpop.f32.mrf.mxu0
        %v7866 = vadd.f32 0.0, %v7865
        %v7867 = vpop.f32.mrf.mxu0
        %v7868 = vadd.f32 0.0, %v7867
        %7869 = vmatprep.mubr.bf16.mxu0 0
        %7870 = vmatmul.mubr.bf16.gmra.mxu0 %v6979
        %v7871 = vpop.f32.mrf.mxu0
        %v7872 = vadd.f32 0.0, %v7871
        %v7873 = vpop.f32.mrf.mxu0
        %v7874 = vadd.f32 0.0, %v7873
        %v7875 = vpop.f32.mrf.mxu0
        %v7876 = vadd.f32 0.0, %v7875
        %v7877 = vpop.f32.mrf.mxu0
        %v7878 = vadd.f32 0.0, %v7877
        %7879 = vmatprep.mubr.bf16.mxu0 0
        %7880 = vmatmul.mubr.bf16.gmra.mxu0 %v6980
        %v7881 = vpop.f32.mrf.mxu0
        %v7882 = vadd.f32 0.0, %v7881
        %v7883 = vpop.f32.mrf.mxu0
        %v7884 = vadd.f32 0.0, %v7883
        %v7885 = vpop.f32.mrf.mxu0
        %v7886 = vadd.f32 0.0, %v7885
        %v7887 = vpop.f32.mrf.mxu0
        %v7888 = vadd.f32 0.0, %v7887
        %7889 = vmatprep.mubr.bf16.mxu0 0
        %7890 = vmatmul.mubr.bf16.gmra.mxu0 %v6981
        %v7891 = vpop.f32.mrf.mxu0
        %v7892 = vadd.f32 0.0, %v7891
        %v7893 = vpop.f32.mrf.mxu0
        %v7894 = vadd.f32 0.0, %v7893
        %v7895 = vpop.f32.mrf.mxu0
        %v7896 = vadd.f32 0.0, %v7895
        %v7897 = vpop.f32.mrf.mxu0
        %v7898 = vadd.f32 0.0, %v7897
        %7899 = vmatprep.mubr.bf16.mxu0 0
        %7900 = vmatmul.mubr.bf16.gmra.mxu0 %v6982
        %v7901 = vpop.f32.mrf.mxu0
        %v7902 = vadd.f32 0.0, %v7901
        %v7903 = vpop.f32.mrf.mxu0
        %v7904 = vadd.f32 0.0, %v7903
        %v7905 = vpop.f32.mrf.mxu0
        %v7906 = vadd.f32 0.0, %v7905
        %v7907 = vpop.f32.mrf.mxu0
        %v7908 = vadd.f32 0.0, %v7907
        %7909 = vmatprep.mubr.bf16.mxu0 0
        %7910 = vmatmul.mubr.bf16.gmra.mxu0 %v6983
        %v7911 = vpop.f32.mrf.mxu0
        %v7912 = vadd.f32 0.0, %v7911
        %v7913 = vpop.f32.mrf.mxu0
        %v7914 = vadd.f32 0.0, %v7913
        %v7915 = vpop.f32.mrf.mxu0
        %v7916 = vadd.f32 0.0, %v7915
        %v7917 = vpop.f32.mrf.mxu0
        %v7918 = vadd.f32 0.0, %v7917
        %7919 = vmatprep.mubr.bf16.mxu0 0
        %7920 = vmatmul.mubr.bf16.gmra.mxu0 %v6984
        %v7921 = vpop.f32.mrf.mxu0
        %v7922 = vadd.f32 0.0, %v7921
        %v7923 = vpop.f32.mrf.mxu0
        %v7924 = vadd.f32 0.0, %v7923
        %v7925 = vpop.f32.mrf.mxu0
        %v7926 = vadd.f32 0.0, %v7925
        %v7927 = vpop.f32.mrf.mxu0
        %v7928 = vadd.f32 0.0, %v7927
        %7929 = vmatprep.mubr.bf16.mxu0 0
        %7930 = vmatmul.mubr.bf16.gmra.mxu0 %v6985
        %v7931 = vpop.f32.mrf.mxu0
        %v7932 = vadd.f32 0.0, %v7931
        %v7933 = vpop.f32.mrf.mxu0
        %v7934 = vadd.f32 0.0, %v7933
        %v7935 = vpop.f32.mrf.mxu0
        %v7936 = vadd.f32 0.0, %v7935
        %v7937 = vpop.f32.mrf.mxu0
        %v7938 = vadd.f32 0.0, %v7937
        %7939 = vmatprep.mubr.bf16.mxu0 0
        %7940 = vmatmul.mubr.bf16.gmra.mxu0 %v6986
        %v7941 = vpop.f32.mrf.mxu0
        %v7942 = vadd.f32 0.0, %v7941
        %v7943 = vpop.f32.mrf.mxu0
        %v7944 = vadd.f32 0.0, %v7943
        %v7945 = vpop.f32.mrf.mxu0
        %v7946 = vadd.f32 0.0, %v7945
        %v7947 = vpop.f32.mrf.mxu0
        %v7948 = vadd.f32 0.0, %v7947
        %7949 = vdwg.mxu0
        %7950 = vmatprep.subr.bf16.mxu0 %v7306
        %7951 = vmatpush1.bf16.msra.mxu0 %v7305
        %7952 = vmatprep.subr.bf16.mxu0 %v7298
        %7953 = vmatpush1.bf16.msra.mxu0 %v7297
        %7954 = vmatprep.subr.bf16.mxu0 %v7290
        %7955 = vmatpush1.bf16.msra.mxu0 %v7289
        %7956 = vmatprep.subr.bf16.mxu0 %v7282
        %7957 = vmatpush1.bf16.msra.mxu0 %v7281
        %7958 = vmatprep.subr.bf16.mxu0 %v7274
        %7959 = vmatpush1.bf16.msra.mxu0 %v7273
        %7960 = vmatprep.subr.bf16.mxu0 %v7266
        %7961 = vmatpush1.bf16.msra.mxu0 %v7265
        %7962 = vmatprep.subr.bf16.mxu0 %v7258
        %7963 = vmatpush1.bf16.msra.mxu0 %v7257
        %7964 = vmatprep.subr.bf16.mxu0 %v7250
        %7965 = vmatpush1.bf16.msra.mxu0 %v7249
        %7966 = vmatprep.subr.bf16.mxu0 0
        %7967 = vmatpush2.bf16.msra.mxu0 0
        %7968 = vmatprep.subr.bf16.mxu0 0
        %7969 = vmatpush2.bf16.msra.mxu0 0
        %7970 = vmatprep.subr.bf16.mxu0 0
        %7971 = vmatpush2.bf16.msra.mxu0 0
        %7972 = vmatprep.subr.bf16.mxu0 0
        %7973 = vmatpush2.bf16.msra.mxu0 0
        %7974 = vmatprep.subr.bf16.mxu0 0
        %7975 = vmatpush2.bf16.msra.mxu0 0
        %7976 = vmatprep.subr.bf16.mxu0 0
        %7977 = vmatpush2.bf16.msra.mxu0 0
        %7978 = vmatprep.subr.bf16.mxu0 0
        %7979 = vmatpush2.bf16.msra.mxu0 0
        %7980 = vmatprep.subr.bf16.mxu0 0
        %7981 = vmatpush2.bf16.msra.mxu0 0
        %7982 = vmatprep.mubr.bf16.mxu0 0
        %7983 = vmatmul.mubr.bf16.gmra.mxu0 %v6971
        %v7984 = vpop.f32.mrf.mxu0
        %v7985 = vadd.f32 0.0, %v7984
        %v7986 = vpop.f32.mrf.mxu0
        %v7987 = vadd.f32 0.0, %v7986
        %v7988 = vpop.f32.mrf.mxu0
        %v7989 = vadd.f32 0.0, %v7988
        %v7990 = vpop.f32.mrf.mxu0
        %v7991 = vadd.f32 0.0, %v7990
        %7992 = vmatprep.mubr.bf16.mxu0 0
        %7993 = vmatmul.mubr.bf16.gmra.mxu0 %v6972
        %v7994 = vpop.f32.mrf.mxu0
        %v7995 = vadd.f32 0.0, %v7994
        %v7996 = vpop.f32.mrf.mxu0
        %v7997 = vadd.f32 0.0, %v7996
        %v7998 = vpop.f32.mrf.mxu0
        %v7999 = vadd.f32 0.0, %v7998
        %v8000 = vpop.f32.mrf.mxu0
        %v8001 = vadd.f32 0.0, %v8000
        %8002 = vmatprep.mubr.bf16.mxu0 0
        %8003 = vmatmul.mubr.bf16.gmra.mxu0 %v6973
        %v8004 = vpop.f32.mrf.mxu0
        %v8005 = vadd.f32 0.0, %v8004
        %v8006 = vpop.f32.mrf.mxu0
        %v8007 = vadd.f32 0.0, %v8006
        %v8008 = vpop.f32.mrf.mxu0
        %v8009 = vadd.f32 0.0, %v8008
        %v8010 = vpop.f32.mrf.mxu0
        %v8011 = vadd.f32 0.0, %v8010
        %8012 = vmatprep.mubr.bf16.mxu0 0
        %8013 = vmatmul.mubr.bf16.gmra.mxu0 %v6974
        %v8014 = vpop.f32.mrf.mxu0
        %v8015 = vadd.f32 0.0, %v8014
        %v8016 = vpop.f32.mrf.mxu0
        %v8017 = vadd.f32 0.0, %v8016
        %v8018 = vpop.f32.mrf.mxu0
        %v8019 = vadd.f32 0.0, %v8018
        %v8020 = vpop.f32.mrf.mxu0
        %v8021 = vadd.f32 0.0, %v8020
        %8022 = vmatprep.mubr.bf16.mxu0 0
        %8023 = vmatmul.mubr.bf16.gmra.mxu0 %v6975
        %v8024 = vpop.f32.mrf.mxu0
        %v8025 = vadd.f32 0.0, %v8024
        %v8026 = vpop.f32.mrf.mxu0
        %v8027 = vadd.f32 0.0, %v8026
        %v8028 = vpop.f32.mrf.mxu0
        %v8029 = vadd.f32 0.0, %v8028
        %v8030 = vpop.f32.mrf.mxu0
        %v8031 = vadd.f32 0.0, %v8030
        %8032 = vmatprep.mubr.bf16.mxu0 0
        %8033 = vmatmul.mubr.bf16.gmra.mxu0 %v6976
        %v8034 = vpop.f32.mrf.mxu0
        %v8035 = vadd.f32 0.0, %v8034
        %v8036 = vpop.f32.mrf.mxu0
        %v8037 = vadd.f32 0.0, %v8036
        %v8038 = vpop.f32.mrf.mxu0
        %v8039 = vadd.f32 0.0, %v8038
        %v8040 = vpop.f32.mrf.mxu0
        %v8041 = vadd.f32 0.0, %v8040
        %8042 = vmatprep.mubr.bf16.mxu0 0
        %8043 = vmatmul.mubr.bf16.gmra.mxu0 %v6977
        %v8044 = vpop.f32.mrf.mxu0
        %v8045 = vadd.f32 0.0, %v8044
        %v8046 = vpop.f32.mrf.mxu0
        %v8047 = vadd.f32 0.0, %v8046
        %v8048 = vpop.f32.mrf.mxu0
        %v8049 = vadd.f32 0.0, %v8048
        %v8050 = vpop.f32.mrf.mxu0
        %v8051 = vadd.f32 0.0, %v8050
        %8052 = vmatprep.mubr.bf16.mxu0 0
        %8053 = vmatmul.mubr.bf16.gmra.mxu0 %v6978
        %v8054 = vpop.f32.mrf.mxu0
        %v8055 = vadd.f32 0.0, %v8054
        %v8056 = vpop.f32.mrf.mxu0
        %v8057 = vadd.f32 0.0, %v8056
        %v8058 = vpop.f32.mrf.mxu0
        %v8059 = vadd.f32 0.0, %v8058
        %v8060 = vpop.f32.mrf.mxu0
        %v8061 = vadd.f32 0.0, %v8060
        %8062 = vmatprep.mubr.bf16.mxu0 0
        %8063 = vmatmul.mubr.bf16.gmra.mxu0 %v6979
        %v8064 = vpop.f32.mrf.mxu0
        %v8065 = vadd.f32 0.0, %v8064
        %v8066 = vpop.f32.mrf.mxu0
        %v8067 = vadd.f32 0.0, %v8066
        %v8068 = vpop.f32.mrf.mxu0
        %v8069 = vadd.f32 0.0, %v8068
        %v8070 = vpop.f32.mrf.mxu0
        %v8071 = vadd.f32 0.0, %v8070
        %8072 = vmatprep.mubr.bf16.mxu0 0
        %8073 = vmatmul.mubr.bf16.gmra.mxu0 %v6980
        %v8074 = vpop.f32.mrf.mxu0
        %v8075 = vadd.f32 0.0, %v8074
        %v8076 = vpop.f32.mrf.mxu0
        %v8077 = vadd.f32 0.0, %v8076
        %v8078 = vpop.f32.mrf.mxu0
        %v8079 = vadd.f32 0.0, %v8078
        %v8080 = vpop.f32.mrf.mxu0
        %v8081 = vadd.f32 0.0, %v8080
        %8082 = vmatprep.mubr.bf16.mxu0 0
        %8083 = vmatmul.mubr.bf16.gmra.mxu0 %v6981
        %v8084 = vpop.f32.mrf.mxu0
        %v8085 = vadd.f32 0.0, %v8084
        %v8086 = vpop.f32.mrf.mxu0
        %v8087 = vadd.f32 0.0, %v8086
        %v8088 = vpop.f32.mrf.mxu0
        %v8089 = vadd.f32 0.0, %v8088
        %v8090 = vpop.f32.mrf.mxu0
        %v8091 = vadd.f32 0.0, %v8090
        %8092 = vmatprep.mubr.bf16.mxu0 0
        %8093 = vmatmul.mubr.bf16.gmra.mxu0 %v6982
        %v8094 = vpop.f32.mrf.mxu0
        %v8095 = vadd.f32 0.0, %v8094
        %v8096 = vpop.f32.mrf.mxu0
        %v8097 = vadd.f32 0.0, %v8096
        %v8098 = vpop.f32.mrf.mxu0
        %v8099 = vadd.f32 0.0, %v8098
        %v8100 = vpop.f32.mrf.mxu0
        %v8101 = vadd.f32 0.0, %v8100
        %8102 = vmatprep.mubr.bf16.mxu0 0
        %8103 = vmatmul.mubr.bf16.gmra.mxu0 %v6983
        %v8104 = vpop.f32.mrf.mxu0
        %v8105 = vadd.f32 0.0, %v8104
        %v8106 = vpop.f32.mrf.mxu0
        %v8107 = vadd.f32 0.0, %v8106
        %v8108 = vpop.f32.mrf.mxu0
        %v8109 = vadd.f32 0.0, %v8108
        %v8110 = vpop.f32.mrf.mxu0
        %v8111 = vadd.f32 0.0, %v8110
        %8112 = vmatprep.mubr.bf16.mxu0 0
        %8113 = vmatmul.mubr.bf16.gmra.mxu0 %v6984
        %v8114 = vpop.f32.mrf.mxu0
        %v8115 = vadd.f32 0.0, %v8114
        %v8116 = vpop.f32.mrf.mxu0
        %v8117 = vadd.f32 0.0, %v8116
        %v8118 = vpop.f32.mrf.mxu0
        %v8119 = vadd.f32 0.0, %v8118
        %v8120 = vpop.f32.mrf.mxu0
        %v8121 = vadd.f32 0.0, %v8120
        %8122 = vmatprep.mubr.bf16.mxu0 0
        %8123 = vmatmul.mubr.bf16.gmra.mxu0 %v6985
        %v8124 = vpop.f32.mrf.mxu0
        %v8125 = vadd.f32 0.0, %v8124
        %v8126 = vpop.f32.mrf.mxu0
        %v8127 = vadd.f32 0.0, %v8126
        %v8128 = vpop.f32.mrf.mxu0
        %v8129 = vadd.f32 0.0, %v8128
        %v8130 = vpop.f32.mrf.mxu0
        %v8131 = vadd.f32 0.0, %v8130
        %8132 = vmatprep.mubr.bf16.mxu0 0
        %8133 = vmatmul.mubr.bf16.gmra.mxu0 %v6986
        %v8134 = vpop.f32.mrf.mxu0
        %v8135 = vadd.f32 0.0, %v8134
        %v8136 = vpop.f32.mrf.mxu0
        %v8137 = vadd.f32 0.0, %v8136
        %v8138 = vpop.f32.mrf.mxu0
        %v8139 = vadd.f32 0.0, %v8138
        %v8140 = vpop.f32.mrf.mxu0
        %v8141 = vadd.f32 0.0, %v8140
        %8142 = vdwg.mxu0
        %v8143 = vmul.f32 %v7406, 0.5
        %v8144 = vmul.f32 %v7408, 0.5
        %v8145 = vmul.f32 %v7599, 0.5
        %v8146 = vmul.f32 %v7601, 0.5
        %v8147 = vmul.f32 %v7410, 0.5
        %v8148 = vmul.f32 %v7412, 0.5
        %v8149 = vmul.f32 %v7603, 0.5
        %v8150 = vmul.f32 %v7605, 0.5
        %v8151 = vmul.f32 %v7416, 0.5
        %v8152 = vmul.f32 %v7418, 0.5
        %v8153 = vmul.f32 %v7609, 0.5
        %v8154 = vmul.f32 %v7611, 0.5
        %v8155 = vmul.f32 %v7420, 0.5
        %v8156 = vmul.f32 %v7422, 0.5
        %v8157 = vmul.f32 %v7613, 0.5
        %v8158 = vmul.f32 %v7615, 0.5
        %v8159 = vmul.f32 %v7426, 0.5
        %v8160 = vmul.f32 %v7428, 0.5
        %v8161 = vmul.f32 %v7619, 0.5
        %v8162 = vmul.f32 %v7621, 0.5
        %v8163 = vmul.f32 %v7430, 0.5
        %v8164 = vmul.f32 %v7432, 0.5
        %v8165 = vmul.f32 %v7623, 0.5
        %v8166 = vmul.f32 %v7625, 0.5
        %v8167 = vmul.f32 %v7436, 0.5
        %v8168 = vmul.f32 %v7438, 0.5
        %v8169 = vmul.f32 %v7629, 0.5
        %v8170 = vmul.f32 %v7631, 0.5
        %v8171 = vmul.f32 %v7440, 0.5
        %v8172 = vmul.f32 %v7442, 0.5
        %v8173 = vmul.f32 %v7633, 0.5
        %v8174 = vmul.f32 %v7635, 0.5
        %v8175 = vmul.f32 %v7446, 0.5
        %v8176 = vmul.f32 %v7448, 0.5
        %v8177 = vmul.f32 %v7639, 0.5
        %v8178 = vmul.f32 %v7641, 0.5
        %v8179 = vmul.f32 %v7450, 0.5
        %v8180 = vmul.f32 %v7452, 0.5
        %v8181 = vmul.f32 %v7643, 0.5
        %v8182 = vmul.f32 %v7645, 0.5
        %v8183 = vmul.f32 %v7456, 0.5
        %v8184 = vmul.f32 %v7458, 0.5
        %v8185 = vmul.f32 %v7649, 0.5
        %v8186 = vmul.f32 %v7651, 0.5
        %v8187 = vmul.f32 %v7460, 0.5
        %v8188 = vmul.f32 %v7462, 0.5
        %v8189 = vmul.f32 %v7653, 0.5
        %v8190 = vmul.f32 %v7655, 0.5
        %v8191 = vmul.f32 %v7466, 0.5
        %v8192 = vmul.f32 %v7468, 0.5
        %v8193 = vmul.f32 %v7659, 0.5
        %v8194 = vmul.f32 %v7661, 0.5
        %v8195 = vmul.f32 %v7470, 0.5
        %v8196 = vmul.f32 %v7472, 0.5
        %v8197 = vmul.f32 %v7663, 0.5
        %v8198 = vmul.f32 %v7665, 0.5
        %v8199 = vmul.f32 %v7476, 0.5
        %v8200 = vmul.f32 %v7478, 0.5
        %v8201 = vmul.f32 %v7669, 0.5
        %v8202 = vmul.f32 %v7671, 0.5
        %v8203 = vmul.f32 %v7480, 0.5
        %v8204 = vmul.f32 %v7482, 0.5
        %v8205 = vmul.f32 %v7673, 0.5
        %v8206 = vmul.f32 %v7675, 0.5
        %v8207 = vmul.f32 %v7486, 0.5
        %v8208 = vmul.f32 %v7488, 0.5
        %v8209 = vmul.f32 %v7679, 0.5
        %v8210 = vmul.f32 %v7681, 0.5
        %v8211 = vmul.f32 %v7490, 0.5
        %v8212 = vmul.f32 %v7492, 0.5
        %v8213 = vmul.f32 %v7683, 0.5
        %v8214 = vmul.f32 %v7685, 0.5
        %v8215 = vmul.f32 %v7496, 0.5
        %v8216 = vmul.f32 %v7498, 0.5
        %v8217 = vmul.f32 %v7689, 0.5
        %v8218 = vmul.f32 %v7691, 0.5
        %v8219 = vmul.f32 %v7500, 0.5
        %v8220 = vmul.f32 %v7502, 0.5
        %v8221 = vmul.f32 %v7693, 0.5
        %v8222 = vmul.f32 %v7695, 0.5
        %v8223 = vmul.f32 %v7506, 0.5
        %v8224 = vmul.f32 %v7508, 0.5
        %v8225 = vmul.f32 %v7699, 0.5
        %v8226 = vmul.f32 %v7701, 0.5
        %v8227 = vmul.f32 %v7510, 0.5
        %v8228 = vmul.f32 %v7512, 0.5
        %v8229 = vmul.f32 %v7703, 0.5
        %v8230 = vmul.f32 %v7705, 0.5
        %v8231 = vmul.f32 %v7516, 0.5
        %v8232 = vmul.f32 %v7518, 0.5
        %v8233 = vmul.f32 %v7709, 0.5
        %v8234 = vmul.f32 %v7711, 0.5
        %v8235 = vmul.f32 %v7520, 0.5
        %v8236 = vmul.f32 %v7522, 0.5
        %v8237 = vmul.f32 %v7713, 0.5
        %v8238 = vmul.f32 %v7715, 0.5
        %v8239 = vmul.f32 %v7526, 0.5
        %v8240 = vmul.f32 %v7528, 0.5
        %v8241 = vmul.f32 %v7719, 0.5
        %v8242 = vmul.f32 %v7721, 0.5
        %v8243 = vmul.f32 %v7530, 0.5
        %v8244 = vmul.f32 %v7532, 0.5
        %v8245 = vmul.f32 %v7723, 0.5
        %v8246 = vmul.f32 %v7725, 0.5
        %v8247 = vmul.f32 %v7536, 0.5
        %v8248 = vmul.f32 %v7538, 0.5
        %v8249 = vmul.f32 %v7729, 0.5
        %v8250 = vmul.f32 %v7731, 0.5
        %v8251 = vmul.f32 %v7540, 0.5
        %v8252 = vmul.f32 %v7542, 0.5
        %v8253 = vmul.f32 %v7733, 0.5
        %v8254 = vmul.f32 %v7735, 0.5
        %v8255 = vmul.f32 %v7546, 0.5
        %v8256 = vmul.f32 %v7548, 0.5
        %v8257 = vmul.f32 %v7739, 0.5
        %v8258 = vmul.f32 %v7741, 0.5
        %v8259 = vmul.f32 %v7550, 0.5
        %v8260 = vmul.f32 %v7552, 0.5
        %v8261 = vmul.f32 %v7743, 0.5
        %v8262 = vmul.f32 %v7745, 0.5
        %v8263 = vmul.f32 %v7556, 0.5
        %v8264 = vmul.f32 %v7558, 0.5
        %v8265 = vmul.f32 %v7749, 0.5
        %v8266 = vmul.f32 %v7751, 0.5
        %v8267 = vmul.f32 %v7560, 0.5
        %v8268 = vmul.f32 %v7562, 0.5
        %v8269 = vmul.f32 %v7753, 0.5
        %v8270 = vmul.f32 %v7755, 0.5
        %v8271 = vmul.f32 %v7406, 0.70710677
        %v8272 = vmul.f32 %v7408, 0.70710677
        %v8273 = vmul.f32 %v7599, 0.70710677
        %v8274 = vmul.f32 %v7601, 0.70710677
        %v8275 = vmul.f32 %v7410, 0.70710677
        %v8276 = vmul.f32 %v7412, 0.70710677
        %v8277 = vmul.f32 %v7603, 0.70710677
        %v8278 = vmul.f32 %v7605, 0.70710677
        %v8279 = vmul.f32 %v7416, 0.70710677
        %v8280 = vmul.f32 %v7418, 0.70710677
        %v8281 = vmul.f32 %v7609, 0.70710677
        %v8282 = vmul.f32 %v7611, 0.70710677
        %v8283 = vmul.f32 %v7420, 0.70710677
        %v8284 = vmul.f32 %v7422, 0.70710677
        %v8285 = vmul.f32 %v7613, 0.70710677
        %v8286 = vmul.f32 %v7615, 0.70710677
        %v8287 = vmul.f32 %v7426, 0.70710677
        %v8288 = vmul.f32 %v7428, 0.70710677
        %v8289 = vmul.f32 %v7619, 0.70710677
        %v8290 = vmul.f32 %v7621, 0.70710677
        %v8291 = vmul.f32 %v7430, 0.70710677
        %v8292 = vmul.f32 %v7432, 0.70710677
        %v8293 = vmul.f32 %v7623, 0.70710677
        %v8294 = vmul.f32 %v7625, 0.70710677
        %v8295 = vmul.f32 %v7436, 0.70710677
        %v8296 = vmul.f32 %v7438, 0.70710677
        %v8297 = vmul.f32 %v7629, 0.70710677
        %v8298 = vmul.f32 %v7631, 0.70710677
        %v8299 = vmul.f32 %v7440, 0.70710677
        %v8300 = vmul.f32 %v7442, 0.70710677
        %v8301 = vmul.f32 %v7633, 0.70710677
        %v8302 = vmul.f32 %v7635, 0.70710677
        %v8303 = vmul.f32 %v7446, 0.70710677
        %v8304 = vmul.f32 %v7448, 0.70710677
        %v8305 = vmul.f32 %v7639, 0.70710677
        %v8306 = vmul.f32 %v7641, 0.70710677
        %v8307 = vmul.f32 %v7450, 0.70710677
        %v8308 = vmul.f32 %v7452, 0.70710677
        %v8309 = vmul.f32 %v7643, 0.70710677
        %v8310 = vmul.f32 %v7645, 0.70710677
        %v8311 = vmul.f32 %v7456, 0.70710677
        %v8312 = vmul.f32 %v7458, 0.70710677
        %v8313 = vmul.f32 %v7649, 0.70710677
        %v8314 = vmul.f32 %v7651, 0.70710677
        %v8315 = vmul.f32 %v7460, 0.70710677
        %v8316 = vmul.f32 %v7462, 0.70710677
        %v8317 = vmul.f32 %v7653, 0.70710677
        %v8318 = vmul.f32 %v7655, 0.70710677
        %v8319 = vmul.f32 %v7466, 0.70710677
        %v8320 = vmul.f32 %v7468, 0.70710677
        %v8321 = vmul.f32 %v7659, 0.70710677
        %v8322 = vmul.f32 %v7661, 0.70710677
        %v8323 = vmul.f32 %v7470, 0.70710677
        %v8324 = vmul.f32 %v7472, 0.70710677
        %v8325 = vmul.f32 %v7663, 0.70710677
        %v8326 = vmul.f32 %v7665, 0.70710677
        %v8327 = vmul.f32 %v7476, 0.70710677
        %v8328 = vmul.f32 %v7478, 0.70710677
        %v8329 = vmul.f32 %v7669, 0.70710677
        %v8330 = vmul.f32 %v7671, 0.70710677
        %v8331 = vmul.f32 %v7480, 0.70710677
        %v8332 = vmul.f32 %v7482, 0.70710677
        %v8333 = vmul.f32 %v7673, 0.70710677
        %v8334 = vmul.f32 %v7675, 0.70710677
        %v8335 = vmul.f32 %v7486, 0.70710677
        %v8336 = vmul.f32 %v7488, 0.70710677
        %v8337 = vmul.f32 %v7679, 0.70710677
        %v8338 = vmul.f32 %v7681, 0.70710677
        %v8339 = vmul.f32 %v7490, 0.70710677
        %v8340 = vmul.f32 %v7492, 0.70710677
        %v8341 = vmul.f32 %v7683, 0.70710677
        %v8342 = vmul.f32 %v7685, 0.70710677
        %v8343 = vmul.f32 %v7496, 0.70710677
        %v8344 = vmul.f32 %v7498, 0.70710677
        %v8345 = vmul.f32 %v7689, 0.70710677
        %v8346 = vmul.f32 %v7691, 0.70710677
        %v8347 = vmul.f32 %v7500, 0.70710677
        %v8348 = vmul.f32 %v7502, 0.70710677
        %v8349 = vmul.f32 %v7693, 0.70710677
        %v8350 = vmul.f32 %v7695, 0.70710677
        %v8351 = vmul.f32 %v7506, 0.70710677
        %v8352 = vmul.f32 %v7508, 0.70710677
        %v8353 = vmul.f32 %v7699, 0.70710677
        %v8354 = vmul.f32 %v7701, 0.70710677
        %v8355 = vmul.f32 %v7510, 0.70710677
        %v8356 = vmul.f32 %v7512, 0.70710677
        %v8357 = vmul.f32 %v7703, 0.70710677
        %v8358 = vmul.f32 %v7705, 0.70710677
        %v8359 = vmul.f32 %v7516, 0.70710677
        %v8360 = vmul.f32 %v7518, 0.70710677
        %v8361 = vmul.f32 %v7709, 0.70710677
        %v8362 = vmul.f32 %v7711, 0.70710677
        %v8363 = vmul.f32 %v7520, 0.70710677
        %v8364 = vmul.f32 %v7522, 0.70710677
        %v8365 = vmul.f32 %v7713, 0.70710677
        %v8366 = vmul.f32 %v7715, 0.70710677
        %v8367 = vmul.f32 %v7526, 0.70710677
        %v8368 = vmul.f32 %v7528, 0.70710677
        %v8369 = vmul.f32 %v7719, 0.70710677
        %v8370 = vmul.f32 %v7721, 0.70710677
        %v8371 = vmul.f32 %v7530, 0.70710677
        %v8372 = vmul.f32 %v7532, 0.70710677
        %v8373 = vmul.f32 %v7723, 0.70710677
        %v8374 = vmul.f32 %v7725, 0.70710677
        %v8375 = vmul.f32 %v7536, 0.70710677
        %v8376 = vmul.f32 %v7538, 0.70710677
        %v8377 = vmul.f32 %v7729, 0.70710677
        %v8378 = vmul.f32 %v7731, 0.70710677
        %v8379 = vmul.f32 %v7540, 0.70710677
        %v8380 = vmul.f32 %v7542, 0.70710677
        %v8381 = vmul.f32 %v7733, 0.70710677
        %v8382 = vmul.f32 %v7735, 0.70710677
        %v8383 = vmul.f32 %v7546, 0.70710677
        %v8384 = vmul.f32 %v7548, 0.70710677
        %v8385 = vmul.f32 %v7739, 0.70710677
        %v8386 = vmul.f32 %v7741, 0.70710677
        %v8387 = vmul.f32 %v7550, 0.70710677
        %v8388 = vmul.f32 %v7552, 0.70710677
        %v8389 = vmul.f32 %v7743, 0.70710677
        %v8390 = vmul.f32 %v7745, 0.70710677
        %v8391 = vmul.f32 %v7556, 0.70710677
        %v8392 = vmul.f32 %v7558, 0.70710677
        %v8393 = vmul.f32 %v7749, 0.70710677
        %v8394 = vmul.f32 %v7751, 0.70710677
        %v8395 = vmul.f32 %v7560, 0.70710677
        %v8396 = vmul.f32 %v7562, 0.70710677
        %v8397 = vmul.f32 %v7753, 0.70710677
        %v8398 = vmul.f32 %v7755, 0.70710677
        %v8399 = verf.f32.pop %v8271
        %v8400 = verf.f32.pop %v8272
        %v8401 = verf.f32.pop %v8273
        %v8402 = verf.f32.pop %v8274
        %v8403 = verf.f32.pop %v8275
        %v8404 = verf.f32.pop %v8276
        %v8405 = verf.f32.pop %v8277
        %v8406 = verf.f32.pop %v8278
        %v8407 = verf.f32.pop %v8279
        %v8408 = verf.f32.pop %v8280
        %v8409 = verf.f32.pop %v8281
        %v8410 = verf.f32.pop %v8282
        %v8411 = verf.f32.pop %v8283
        %v8412 = verf.f32.pop %v8284
        %v8413 = verf.f32.pop %v8285
        %v8414 = verf.f32.pop %v8286
        %v8415 = verf.f32.pop %v8287
        %v8416 = verf.f32.pop %v8288
        %v8417 = verf.f32.pop %v8289
        %v8418 = verf.f32.pop %v8290
        %v8419 = verf.f32.pop %v8291
        %v8420 = verf.f32.pop %v8292
        %v8421 = verf.f32.pop %v8293
        %v8422 = verf.f32.pop %v8294
        %v8423 = verf.f32.pop %v8295
        %v8424 = verf.f32.pop %v8296
        %v8425 = verf.f32.pop %v8297
        %v8426 = verf.f32.pop %v8298
        %v8427 = verf.f32.pop %v8299
        %v8428 = verf.f32.pop %v8300
        %v8429 = verf.f32.pop %v8301
        %v8430 = verf.f32.pop %v8302
        %v8431 = verf.f32.pop %v8303
        %v8432 = verf.f32.pop %v8304
        %v8433 = verf.f32.pop %v8305
        %v8434 = verf.f32.pop %v8306
        %v8435 = verf.f32.pop %v8307
        %v8436 = verf.f32.pop %v8308
        %v8437 = verf.f32.pop %v8309
        %v8438 = verf.f32.pop %v8310
        %v8439 = verf.f32.pop %v8311
        %v8440 = verf.f32.pop %v8312
        %v8441 = verf.f32.pop %v8313
        %v8442 = verf.f32.pop %v8314
        %v8443 = verf.f32.pop %v8315
        %v8444 = verf.f32.pop %v8316
        %v8445 = verf.f32.pop %v8317
        %v8446 = verf.f32.pop %v8318
        %v8447 = verf.f32.pop %v8319
        %v8448 = verf.f32.pop %v8320
        %v8449 = verf.f32.pop %v8321
        %v8450 = verf.f32.pop %v8322
        %v8451 = verf.f32.pop %v8323
        %v8452 = verf.f32.pop %v8324
        %v8453 = verf.f32.pop %v8325
        %v8454 = verf.f32.pop %v8326
        %v8455 = verf.f32.pop %v8327
        %v8456 = verf.f32.pop %v8328
        %v8457 = verf.f32.pop %v8329
        %v8458 = verf.f32.pop %v8330
        %v8459 = verf.f32.pop %v8331
        %v8460 = verf.f32.pop %v8332
        %v8461 = verf.f32.pop %v8333
        %v8462 = verf.f32.pop %v8334
        %v8463 = verf.f32.pop %v8335
        %v8464 = verf.f32.pop %v8336
        %v8465 = verf.f32.pop %v8337
        %v8466 = verf.f32.pop %v8338
        %v8467 = verf.f32.pop %v8339
        %v8468 = verf.f32.pop %v8340
        %v8469 = verf.f32.pop %v8341
        %v8470 = verf.f32.pop %v8342
        %v8471 = verf.f32.pop %v8343
        %v8472 = verf.f32.pop %v8344
        %v8473 = verf.f32.pop %v8345
        %v8474 = verf.f32.pop %v8346
        %v8475 = verf.f32.pop %v8347
        %v8476 = verf.f32.pop %v8348
        %v8477 = verf.f32.pop %v8349
        %v8478 = verf.f32.pop %v8350
        %v8479 = verf.f32.pop %v8351
        %v8480 = verf.f32.pop %v8352
        %v8481 = verf.f32.pop %v8353
        %v8482 = verf.f32.pop %v8354
        %v8483 = verf.f32.pop %v8355
        %v8484 = verf.f32.pop %v8356
        %v8485 = verf.f32.pop %v8357
        %v8486 = verf.f32.pop %v8358
        %v8487 = verf.f32.pop %v8359
        %v8488 = verf.f32.pop %v8360
        %v8489 = verf.f32.pop %v8361
        %v8490 = verf.f32.pop %v8362
        %v8491 = verf.f32.pop %v8363
        %v8492 = verf.f32.pop %v8364
        %v8493 = verf.f32.pop %v8365
        %v8494 = verf.f32.pop %v8366
        %v8495 = verf.f32.pop %v8367
        %v8496 = verf.f32.pop %v8368
        %v8497 = verf.f32.pop %v8369
        %v8498 = verf.f32.pop %v8370
        %v8499 = verf.f32.pop %v8371
        %v8500 = verf.f32.pop %v8372
        %v8501 = verf.f32.pop %v8373
        %v8502 = verf.f32.pop %v8374
        %v8503 = verf.f32.pop %v8375
        %v8504 = verf.f32.pop %v8376
        %v8505 = verf.f32.pop %v8377
        %v8506 = verf.f32.pop %v8378
        %v8507 = verf.f32.pop %v8379
        %v8508 = verf.f32.pop %v8380
        %v8509 = verf.f32.pop %v8381
        %v8510 = verf.f32.pop %v8382
        %v8511 = verf.f32.pop %v8383
        %v8512 = verf.f32.pop %v8384
        %v8513 = verf.f32.pop %v8385
        %v8514 = verf.f32.pop %v8386
        %v8515 = verf.f32.pop %v8387
        %v8516 = verf.f32.pop %v8388
        %v8517 = verf.f32.pop %v8389
        %v8518 = verf.f32.pop %v8390
        %v8519 = verf.f32.pop %v8391
        %v8520 = verf.f32.pop %v8392
        %v8521 = verf.f32.pop %v8393
        %v8522 = verf.f32.pop %v8394
        %v8523 = verf.f32.pop %v8395
        %v8524 = verf.f32.pop %v8396
        %v8525 = verf.f32.pop %v8397
        %v8526 = verf.f32.pop %v8398
        %v8527 = vadd.f32 %v8399, 1.0
        %v8528 = vadd.f32 %v8400, 1.0
        %v8529 = vadd.f32 %v8401, 1.0
        %v8530 = vadd.f32 %v8402, 1.0
        %v8531 = vadd.f32 %v8403, 1.0
        %v8532 = vadd.f32 %v8404, 1.0
        %v8533 = vadd.f32 %v8405, 1.0
        %v8534 = vadd.f32 %v8406, 1.0
        %v8535 = vadd.f32 %v8407, 1.0
        %v8536 = vadd.f32 %v8408, 1.0
        %v8537 = vadd.f32 %v8409, 1.0
        %v8538 = vadd.f32 %v8410, 1.0
        %v8539 = vadd.f32 %v8411, 1.0
        %v8540 = vadd.f32 %v8412, 1.0
        %v8541 = vadd.f32 %v8413, 1.0
        %v8542 = vadd.f32 %v8414, 1.0
        %v8543 = vadd.f32 %v8415, 1.0
        %v8544 = vadd.f32 %v8416, 1.0
        %v8545 = vadd.f32 %v8417, 1.0
        %v8546 = vadd.f32 %v8418, 1.0
        %v8547 = vadd.f32 %v8419, 1.0
        %v8548 = vadd.f32 %v8420, 1.0
        %v8549 = vadd.f32 %v8421, 1.0
        %v8550 = vadd.f32 %v8422, 1.0
        %v8551 = vadd.f32 %v8423, 1.0
        %v8552 = vadd.f32 %v8424, 1.0
        %v8553 = vadd.f32 %v8425, 1.0
        %v8554 = vadd.f32 %v8426, 1.0
        %v8555 = vadd.f32 %v8427, 1.0
        %v8556 = vadd.f32 %v8428, 1.0
        %v8557 = vadd.f32 %v8429, 1.0
        %v8558 = vadd.f32 %v8430, 1.0
        %v8559 = vadd.f32 %v8431, 1.0
        %v8560 = vadd.f32 %v8432, 1.0
        %v8561 = vadd.f32 %v8433, 1.0
        %v8562 = vadd.f32 %v8434, 1.0
        %v8563 = vadd.f32 %v8435, 1.0
        %v8564 = vadd.f32 %v8436, 1.0
        %v8565 = vadd.f32 %v8437, 1.0
        %v8566 = vadd.f32 %v8438, 1.0
        %v8567 = vadd.f32 %v8439, 1.0
        %v8568 = vadd.f32 %v8440, 1.0
        %v8569 = vadd.f32 %v8441, 1.0
        %v8570 = vadd.f32 %v8442, 1.0
        %v8571 = vadd.f32 %v8443, 1.0
        %v8572 = vadd.f32 %v8444, 1.0
        %v8573 = vadd.f32 %v8445, 1.0
        %v8574 = vadd.f32 %v8446, 1.0
        %v8575 = vadd.f32 %v8447, 1.0
        %v8576 = vadd.f32 %v8448, 1.0
        %v8577 = vadd.f32 %v8449, 1.0
        %v8578 = vadd.f32 %v8450, 1.0
        %v8579 = vadd.f32 %v8451, 1.0
        %v8580 = vadd.f32 %v8452, 1.0
        %v8581 = vadd.f32 %v8453, 1.0
        %v8582 = vadd.f32 %v8454, 1.0
        %v8583 = vadd.f32 %v8455, 1.0
        %v8584 = vadd.f32 %v8456, 1.0
        %v8585 = vadd.f32 %v8457, 1.0
        %v8586 = vadd.f32 %v8458, 1.0
        %v8587 = vadd.f32 %v8459, 1.0
        %v8588 = vadd.f32 %v8460, 1.0
        %v8589 = vadd.f32 %v8461, 1.0
        %v8590 = vadd.f32 %v8462, 1.0
        %v8591 = vadd.f32 %v8463, 1.0
        %v8592 = vadd.f32 %v8464, 1.0
        %v8593 = vadd.f32 %v8465, 1.0
        %v8594 = vadd.f32 %v8466, 1.0
        %v8595 = vadd.f32 %v8467, 1.0
        %v8596 = vadd.f32 %v8468, 1.0
        %v8597 = vadd.f32 %v8469, 1.0
        %v8598 = vadd.f32 %v8470, 1.0
        %v8599 = vadd.f32 %v8471, 1.0
        %v8600 = vadd.f32 %v8472, 1.0
        %v8601 = vadd.f32 %v8473, 1.0
        %v8602 = vadd.f32 %v8474, 1.0
        %v8603 = vadd.f32 %v8475, 1.0
        %v8604 = vadd.f32 %v8476, 1.0
        %v8605 = vadd.f32 %v8477, 1.0
        %v8606 = vadd.f32 %v8478, 1.0
        %v8607 = vadd.f32 %v8479, 1.0
        %v8608 = vadd.f32 %v8480, 1.0
        %v8609 = vadd.f32 %v8481, 1.0
        %v8610 = vadd.f32 %v8482, 1.0
        %v8611 = vadd.f32 %v8483, 1.0
        %v8612 = vadd.f32 %v8484, 1.0
        %v8613 = vadd.f32 %v8485, 1.0
        %v8614 = vadd.f32 %v8486, 1.0
        %v8615 = vadd.f32 %v8487, 1.0
        %v8616 = vadd.f32 %v8488, 1.0
        %v8617 = vadd.f32 %v8489, 1.0
        %v8618 = vadd.f32 %v8490, 1.0
        %v8619 = vadd.f32 %v8491, 1.0
        %v8620 = vadd.f32 %v8492, 1.0
        %v8621 = vadd.f32 %v8493, 1.0
        %v8622 = vadd.f32 %v8494, 1.0
        %v8623 = vadd.f32 %v8495, 1.0
        %v8624 = vadd.f32 %v8496, 1.0
        %v8625 = vadd.f32 %v8497, 1.0
        %v8626 = vadd.f32 %v8498, 1.0
        %v8627 = vadd.f32 %v8499, 1.0
        %v8628 = vadd.f32 %v8500, 1.0
        %v8629 = vadd.f32 %v8501, 1.0
        %v8630 = vadd.f32 %v8502, 1.0
        %v8631 = vadd.f32 %v8503, 1.0
        %v8632 = vadd.f32 %v8504, 1.0
        %v8633 = vadd.f32 %v8505, 1.0
        %v8634 = vadd.f32 %v8506, 1.0
        %v8635 = vadd.f32 %v8507, 1.0
        %v8636 = vadd.f32 %v8508, 1.0
        %v8637 = vadd.f32 %v8509, 1.0
        %v8638 = vadd.f32 %v8510, 1.0
        %v8639 = vadd.f32 %v8511, 1.0
        %v8640 = vadd.f32 %v8512, 1.0
        %v8641 = vadd.f32 %v8513, 1.0
        %v8642 = vadd.f32 %v8514, 1.0
        %v8643 = vadd.f32 %v8515, 1.0
        %v8644 = vadd.f32 %v8516, 1.0
        %v8645 = vadd.f32 %v8517, 1.0
        %v8646 = vadd.f32 %v8518, 1.0
        %v8647 = vadd.f32 %v8519, 1.0
        %v8648 = vadd.f32 %v8520, 1.0
        %v8649 = vadd.f32 %v8521, 1.0
        %v8650 = vadd.f32 %v8522, 1.0
        %v8651 = vadd.f32 %v8523, 1.0
        %v8652 = vadd.f32 %v8524, 1.0
        %v8653 = vadd.f32 %v8525, 1.0
        %v8654 = vadd.f32 %v8526, 1.0
        %v8655 = vmul.f32 %v8143, %v8527
        %v8656 = vmul.f32 %v8144, %v8528
        %v8657 = vmul.f32 %v8145, %v8529
        %v8658 = vmul.f32 %v8146, %v8530
        %v8659 = vmul.f32 %v8147, %v8531
        %v8660 = vmul.f32 %v8148, %v8532
        %v8661 = vmul.f32 %v8149, %v8533
        %v8662 = vmul.f32 %v8150, %v8534
        %v8663 = vmul.f32 %v8151, %v8535
        %v8664 = vmul.f32 %v8152, %v8536
        %v8665 = vmul.f32 %v8153, %v8537
        %v8666 = vmul.f32 %v8154, %v8538
        %v8667 = vmul.f32 %v8155, %v8539
        %v8668 = vmul.f32 %v8156, %v8540
        %v8669 = vmul.f32 %v8157, %v8541
        %v8670 = vmul.f32 %v8158, %v8542
        %v8671 = vmul.f32 %v8159, %v8543
        %v8672 = vmul.f32 %v8160, %v8544
        %v8673 = vmul.f32 %v8161, %v8545
        %v8674 = vmul.f32 %v8162, %v8546
        %v8675 = vmul.f32 %v8163, %v8547
        %v8676 = vmul.f32 %v8164, %v8548
        %v8677 = vmul.f32 %v8165, %v8549
        %v8678 = vmul.f32 %v8166, %v8550
        %v8679 = vmul.f32 %v8167, %v8551
        %v8680 = vmul.f32 %v8168, %v8552
        %v8681 = vmul.f32 %v8169, %v8553
        %v8682 = vmul.f32 %v8170, %v8554
        %v8683 = vmul.f32 %v8171, %v8555
        %v8684 = vmul.f32 %v8172, %v8556
        %v8685 = vmul.f32 %v8173, %v8557
        %v8686 = vmul.f32 %v8174, %v8558
        %v8687 = vmul.f32 %v8175, %v8559
        %v8688 = vmul.f32 %v8176, %v8560
        %v8689 = vmul.f32 %v8177, %v8561
        %v8690 = vmul.f32 %v8178, %v8562
        %v8691 = vmul.f32 %v8179, %v8563
        %v8692 = vmul.f32 %v8180, %v8564
        %v8693 = vmul.f32 %v8181, %v8565
        %v8694 = vmul.f32 %v8182, %v8566
        %v8695 = vmul.f32 %v8183, %v8567
        %v8696 = vmul.f32 %v8184, %v8568
        %v8697 = vmul.f32 %v8185, %v8569
        %v8698 = vmul.f32 %v8186, %v8570
        %v8699 = vmul.f32 %v8187, %v8571
        %v8700 = vmul.f32 %v8188, %v8572
        %v8701 = vmul.f32 %v8189, %v8573
        %v8702 = vmul.f32 %v8190, %v8574
        %v8703 = vmul.f32 %v8191, %v8575
        %v8704 = vmul.f32 %v8192, %v8576
        %v8705 = vmul.f32 %v8193, %v8577
        %v8706 = vmul.f32 %v8194, %v8578
        %v8707 = vmul.f32 %v8195, %v8579
        %v8708 = vmul.f32 %v8196, %v8580
        %v8709 = vmul.f32 %v8197, %v8581
        %v8710 = vmul.f32 %v8198, %v8582
        %v8711 = vmul.f32 %v8199, %v8583
        %v8712 = vmul.f32 %v8200, %v8584
        %v8713 = vmul.f32 %v8201, %v8585
        %v8714 = vmul.f32 %v8202, %v8586
        %v8715 = vmul.f32 %v8203, %v8587
        %v8716 = vmul.f32 %v8204, %v8588
        %v8717 = vmul.f32 %v8205, %v8589
        %v8718 = vmul.f32 %v8206, %v8590
        %v8719 = vmul.f32 %v8207, %v8591
        %v8720 = vmul.f32 %v8208, %v8592
        %v8721 = vmul.f32 %v8209, %v8593
        %v8722 = vmul.f32 %v8210, %v8594
        %v8723 = vmul.f32 %v8211, %v8595
        %v8724 = vmul.f32 %v8212, %v8596
        %v8725 = vmul.f32 %v8213, %v8597
        %v8726 = vmul.f32 %v8214, %v8598
        %v8727 = vmul.f32 %v8215, %v8599
        %v8728 = vmul.f32 %v8216, %v8600
        %v8729 = vmul.f32 %v8217, %v8601
        %v8730 = vmul.f32 %v8218, %v8602
        %v8731 = vmul.f32 %v8219, %v8603
        %v8732 = vmul.f32 %v8220, %v8604
        %v8733 = vmul.f32 %v8221, %v8605
        %v8734 = vmul.f32 %v8222, %v8606
        %v8735 = vmul.f32 %v8223, %v8607
        %v8736 = vmul.f32 %v8224, %v8608
        %v8737 = vmul.f32 %v8225, %v8609
        %v8738 = vmul.f32 %v8226, %v8610
        %v8739 = vmul.f32 %v8227, %v8611
        %v8740 = vmul.f32 %v8228, %v8612
        %v8741 = vmul.f32 %v8229, %v8613
        %v8742 = vmul.f32 %v8230, %v8614
        %v8743 = vmul.f32 %v8231, %v8615
        %v8744 = vmul.f32 %v8232, %v8616
        %v8745 = vmul.f32 %v8233, %v8617
        %v8746 = vmul.f32 %v8234, %v8618
        %v8747 = vmul.f32 %v8235, %v8619
        %v8748 = vmul.f32 %v8236, %v8620
        %v8749 = vmul.f32 %v8237, %v8621
        %v8750 = vmul.f32 %v8238, %v8622
        %v8751 = vmul.f32 %v8239, %v8623
        %v8752 = vmul.f32 %v8240, %v8624
        %v8753 = vmul.f32 %v8241, %v8625
        %v8754 = vmul.f32 %v8242, %v8626
        %v8755 = vmul.f32 %v8243, %v8627
        %v8756 = vmul.f32 %v8244, %v8628
        %v8757 = vmul.f32 %v8245, %v8629
        %v8758 = vmul.f32 %v8246, %v8630
        %v8759 = vmul.f32 %v8247, %v8631
        %v8760 = vmul.f32 %v8248, %v8632
        %v8761 = vmul.f32 %v8249, %v8633
        %v8762 = vmul.f32 %v8250, %v8634
        %v8763 = vmul.f32 %v8251, %v8635
        %v8764 = vmul.f32 %v8252, %v8636
        %v8765 = vmul.f32 %v8253, %v8637
        %v8766 = vmul.f32 %v8254, %v8638
        %v8767 = vmul.f32 %v8255, %v8639
        %v8768 = vmul.f32 %v8256, %v8640
        %v8769 = vmul.f32 %v8257, %v8641
        %v8770 = vmul.f32 %v8258, %v8642
        %v8771 = vmul.f32 %v8259, %v8643
        %v8772 = vmul.f32 %v8260, %v8644
        %v8773 = vmul.f32 %v8261, %v8645
        %v8774 = vmul.f32 %v8262, %v8646
        %v8775 = vmul.f32 %v8263, %v8647
        %v8776 = vmul.f32 %v8264, %v8648
        %v8777 = vmul.f32 %v8265, %v8649
        %v8778 = vmul.f32 %v8266, %v8650
        %v8779 = vmul.f32 %v8267, %v8651
        %v8780 = vmul.f32 %v8268, %v8652
        %v8781 = vmul.f32 %v8269, %v8653
        %v8782 = vmul.f32 %v8270, %v8654
        %v8783 = vmul.f32 %v8655, %v7792
        %v8784 = vmul.f32 %v8656, %v7794
        %v8785 = vmul.f32 %v8657, %v7985
        %v8786 = vmul.f32 %v8658, %v7987
        %v8787 = vmul.f32 %v8659, %v7796
        %v8788 = vmul.f32 %v8660, %v7798
        %v8789 = vmul.f32 %v8661, %v7989
        %v8790 = vmul.f32 %v8662, %v7991
        %v8791 = vmul.f32 %v8663, %v7802
        %v8792 = vmul.f32 %v8664, %v7804
        %v8793 = vmul.f32 %v8665, %v7995
        %v8794 = vmul.f32 %v8666, %v7997
        %v8795 = vmul.f32 %v8667, %v7806
        %v8796 = vmul.f32 %v8668, %v7808
        %v8797 = vmul.f32 %v8669, %v7999
        %v8798 = vmul.f32 %v8670, %v8001
        %v8799 = vmul.f32 %v8671, %v7812
        %v8800 = vmul.f32 %v8672, %v7814
        %v8801 = vmul.f32 %v8673, %v8005
        %v8802 = vmul.f32 %v8674, %v8007
        %v8803 = vmul.f32 %v8675, %v7816
        %v8804 = vmul.f32 %v8676, %v7818
        %v8805 = vmul.f32 %v8677, %v8009
        %v8806 = vmul.f32 %v8678, %v8011
        %v8807 = vmul.f32 %v8679, %v7822
        %v8808 = vmul.f32 %v8680, %v7824
        %v8809 = vmul.f32 %v8681, %v8015
        %v8810 = vmul.f32 %v8682, %v8017
        %v8811 = vmul.f32 %v8683, %v7826
        %v8812 = vmul.f32 %v8684, %v7828
        %v8813 = vmul.f32 %v8685, %v8019
        %v8814 = vmul.f32 %v8686, %v8021
        %v8815 = vmul.f32 %v8687, %v7832
        %v8816 = vmul.f32 %v8688, %v7834
        %v8817 = vmul.f32 %v8689, %v8025
        %v8818 = vmul.f32 %v8690, %v8027
        %v8819 = vmul.f32 %v8691, %v7836
        %v8820 = vmul.f32 %v8692, %v7838
        %v8821 = vmul.f32 %v8693, %v8029
        %v8822 = vmul.f32 %v8694, %v8031
        %v8823 = vmul.f32 %v8695, %v7842
        %v8824 = vmul.f32 %v8696, %v7844
        %v8825 = vmul.f32 %v8697, %v8035
        %v8826 = vmul.f32 %v8698, %v8037
        %v8827 = vmul.f32 %v8699, %v7846
        %v8828 = vmul.f32 %v8700, %v7848
        %v8829 = vmul.f32 %v8701, %v8039
        %v8830 = vmul.f32 %v8702, %v8041
        %v8831 = vmul.f32 %v8703, %v7852
        %v8832 = vmul.f32 %v8704, %v7854
        %v8833 = vmul.f32 %v8705, %v8045
        %v8834 = vmul.f32 %v8706, %v8047
        %v8835 = vmul.f32 %v8707, %v7856
        %v8836 = vmul.f32 %v8708, %v7858
        %v8837 = vmul.f32 %v8709, %v8049
        %v8838 = vmul.f32 %v8710, %v8051
        %v8839 = vmul.f32 %v8711, %v7862
        %v8840 = vmul.f32 %v8712, %v7864
        %v8841 = vmul.f32 %v8713, %v8055
        %v8842 = vmul.f32 %v8714, %v8057
        %v8843 = vmul.f32 %v8715, %v7866
        %v8844 = vmul.f32 %v8716, %v7868
        %v8845 = vmul.f32 %v8717, %v8059
        %v8846 = vmul.f32 %v8718, %v8061
        %v8847 = vmul.f32 %v8719, %v7872
        %v8848 = vmul.f32 %v8720, %v7874
        %v8849 = vmul.f32 %v8721, %v8065
        %v8850 = vmul.f32 %v8722, %v8067
        %v8851 = vmul.f32 %v8723, %v7876
        %v8852 = vmul.f32 %v8724, %v7878
        %v8853 = vmul.f32 %v8725, %v8069
        %v8854 = vmul.f32 %v8726, %v8071
        %v8855 = vmul.f32 %v8727, %v7882
        %v8856 = vmul.f32 %v8728, %v7884
        %v8857 = vmul.f32 %v8729, %v8075
        %v8858 = vmul.f32 %v8730, %v8077
        %v8859 = vmul.f32 %v8731, %v7886
        %v8860 = vmul.f32 %v8732, %v7888
        %v8861 = vmul.f32 %v8733, %v8079
        %v8862 = vmul.f32 %v8734, %v8081
        %v8863 = vmul.f32 %v8735, %v7892
        %v8864 = vmul.f32 %v8736, %v7894
        %v8865 = vmul.f32 %v8737, %v8085
        %v8866 = vmul.f32 %v8738, %v8087
        %v8867 = vmul.f32 %v8739, %v7896
        %v8868 = vmul.f32 %v8740, %v7898
        %v8869 = vmul.f32 %v8741, %v8089
        %v8870 = vmul.f32 %v8742, %v8091
        %v8871 = vmul.f32 %v8743, %v7902
        %v8872 = vmul.f32 %v8744, %v7904
        %v8873 = vmul.f32 %v8745, %v8095
        %v8874 = vmul.f32 %v8746, %v8097
        %v8875 = vmul.f32 %v8747, %v7906
        %v8876 = vmul.f32 %v8748, %v7908
        %v8877 = vmul.f32 %v8749, %v8099
        %v8878 = vmul.f32 %v8750, %v8101
        %v8879 = vmul.f32 %v8751, %v7912
        %v8880 = vmul.f32 %v8752, %v7914
        %v8881 = vmul.f32 %v8753, %v8105
        %v8882 = vmul.f32 %v8754, %v8107
        %v8883 = vmul.f32 %v8755, %v7916
        %v8884 = vmul.f32 %v8756, %v7918
        %v8885 = vmul.f32 %v8757, %v8109
        %v8886 = vmul.f32 %v8758, %v8111
        %v8887 = vmul.f32 %v8759, %v7922
        %v8888 = vmul.f32 %v8760, %v7924
        %v8889 = vmul.f32 %v8761, %v8115
        %v8890 = vmul.f32 %v8762, %v8117
        %v8891 = vmul.f32 %v8763, %v7926
        %v8892 = vmul.f32 %v8764, %v7928
        %v8893 = vmul.f32 %v8765, %v8119
        %v8894 = vmul.f32 %v8766, %v8121
        %v8895 = vmul.f32 %v8767, %v7932
        %v8896 = vmul.f32 %v8768, %v7934
        %v8897 = vmul.f32 %v8769, %v8125
        %v8898 = vmul.f32 %v8770, %v8127
        %v8899 = vmul.f32 %v8771, %v7936
        %v8900 = vmul.f32 %v8772, %v7938
        %v8901 = vmul.f32 %v8773, %v8129
        %v8902 = vmul.f32 %v8774, %v8131
        %v8903 = vmul.f32 %v8775, %v7942
        %v8904 = vmul.f32 %v8776, %v7944
        %v8905 = vmul.f32 %v8777, %v8135
        %v8906 = vmul.f32 %v8778, %v8137
        %v8907 = vmul.f32 %v8779, %v7946
        %v8908 = vmul.f32 %v8780, %v7948
        %v8909 = vmul.f32 %v8781, %v8139
        %v8910 = vmul.f32 %v8782, %v8141
        %v8911 = vpack.c.bf16 %v8787, %v8783
        %v8912 = vpack.c.bf16 %v8788, %v8784
        %v8913 = vpack.c.bf16 %v8789, %v8785
        %v8914 = vpack.c.bf16 %v8790, %v8786
        %v8915 = vpack.c.bf16 %v8795, %v8791
        %v8916 = vpack.c.bf16 %v8796, %v8792
        %v8917 = vpack.c.bf16 %v8797, %v8793
        %v8918 = vpack.c.bf16 %v8798, %v8794
        %v8919 = vpack.c.bf16 %v8803, %v8799
        %v8920 = vpack.c.bf16 %v8804, %v8800
        %v8921 = vpack.c.bf16 %v8805, %v8801
        %v8922 = vpack.c.bf16 %v8806, %v8802
        %v8923 = vpack.c.bf16 %v8811, %v8807
        %v8924 = vpack.c.bf16 %v8812, %v8808
        %v8925 = vpack.c.bf16 %v8813, %v8809
        %v8926 = vpack.c.bf16 %v8814, %v8810
        %v8927 = vpack.c.bf16 %v8819, %v8815
        %v8928 = vpack.c.bf16 %v8820, %v8816
        %v8929 = vpack.c.bf16 %v8821, %v8817
        %v8930 = vpack.c.bf16 %v8822, %v8818
        %v8931 = vpack.c.bf16 %v8827, %v8823
        %v8932 = vpack.c.bf16 %v8828, %v8824
        %v8933 = vpack.c.bf16 %v8829, %v8825
        %v8934 = vpack.c.bf16 %v8830, %v8826
        %v8935 = vpack.c.bf16 %v8835, %v8831
        %v8936 = vpack.c.bf16 %v8836, %v8832
        %v8937 = vpack.c.bf16 %v8837, %v8833
        %v8938 = vpack.c.bf16 %v8838, %v8834
        %v8939 = vpack.c.bf16 %v8843, %v8839
        %v8940 = vpack.c.bf16 %v8844, %v8840
        %v8941 = vpack.c.bf16 %v8845, %v8841
        %v8942 = vpack.c.bf16 %v8846, %v8842
        %v8943 = vpack.c.bf16 %v8851, %v8847
        %v8944 = vpack.c.bf16 %v8852, %v8848
        %v8945 = vpack.c.bf16 %v8853, %v8849
        %v8946 = vpack.c.bf16 %v8854, %v8850
        %v8947 = vpack.c.bf16 %v8859, %v8855
        %v8948 = vpack.c.bf16 %v8860, %v8856
        %v8949 = vpack.c.bf16 %v8861, %v8857
        %v8950 = vpack.c.bf16 %v8862, %v8858
        %v8951 = vpack.c.bf16 %v8867, %v8863
        %v8952 = vpack.c.bf16 %v8868, %v8864
        %v8953 = vpack.c.bf16 %v8869, %v8865
        %v8954 = vpack.c.bf16 %v8870, %v8866
        %v8955 = vpack.c.bf16 %v8875, %v8871
        %v8956 = vpack.c.bf16 %v8876, %v8872
        %v8957 = vpack.c.bf16 %v8877, %v8873
        %v8958 = vpack.c.bf16 %v8878, %v8874
        %v8959 = vpack.c.bf16 %v8883, %v8879
        %v8960 = vpack.c.bf16 %v8884, %v8880
        %v8961 = vpack.c.bf16 %v8885, %v8881
        %v8962 = vpack.c.bf16 %v8886, %v8882
        %v8963 = vpack.c.bf16 %v8891, %v8887
        %v8964 = vpack.c.bf16 %v8892, %v8888
        %v8965 = vpack.c.bf16 %v8893, %v8889
        %v8966 = vpack.c.bf16 %v8894, %v8890
        %v8967 = vpack.c.bf16 %v8899, %v8895
        %v8968 = vpack.c.bf16 %v8900, %v8896
        %v8969 = vpack.c.bf16 %v8901, %v8897
        %v8970 = vpack.c.bf16 %v8902, %v8898
        %v8971 = vpack.c.bf16 %v8907, %v8903
        %v8972 = vpack.c.bf16 %v8908, %v8904
        %v8973 = vpack.c.bf16 %v8909, %v8905
        %v8974 = vpack.c.bf16 %v8910, %v8906
        %v8975 = vld [vmem:[#allocation15] sm:$0xf]
        %v8976 = vld [vmem:[#allocation15 + $0x4] sm:$0xf]
        %v8977 = vld [vmem:[#allocation15 + $0x8] sm:$0xf]
        %v8978 = vld [vmem:[#allocation15 + $0xc] sm:$0xf]
        %v8979 = vld [vmem:[#allocation15 + $0x10] sm:$0xf]
        %v8980 = vld [vmem:[#allocation15 + $0x14] sm:$0xf]
        %v8981 = vld [vmem:[#allocation15 + $0x18] sm:$0xf]
        %v8982 = vld [vmem:[#allocation15 + $0x1c] sm:$0xf]
        %v8983 = vld [vmem:[#allocation15 + $0x20] sm:$0xf]
        %v8984 = vld [vmem:[#allocation15 + $0x24] sm:$0xf]
        %v8985 = vld [vmem:[#allocation15 + $0x28] sm:$0xf]
        %v8986 = vld [vmem:[#allocation15 + $0x2c] sm:$0xf]
        %v8987 = vld [vmem:[#allocation15 + $0x30] sm:$0xf]
        %v8988 = vld [vmem:[#allocation15 + $0x34] sm:$0xf]
        %v8989 = vld [vmem:[#allocation15 + $0x38] sm:$0xf]
        %v8990 = vld [vmem:[#allocation15 + $0x3c] sm:$0xf]
        %v8991 = vld [vmem:[#allocation15 + $0x40] sm:$0xf]
        %v8992 = vld [vmem:[#allocation15 + $0x44] sm:$0xf]
        %v8993 = vld [vmem:[#allocation15 + $0x48] sm:$0xf]
        %v8994 = vld [vmem:[#allocation15 + $0x4c] sm:$0xf]
        %v8995 = vld [vmem:[#allocation15 + $0x50] sm:$0xf]
        %v8996 = vld [vmem:[#allocation15 + $0x54] sm:$0xf]
        %v8997 = vld [vmem:[#allocation15 + $0x58] sm:$0xf]
        %v8998 = vld [vmem:[#allocation15 + $0x5c] sm:$0xf]
        %v8999 = vld [vmem:[#allocation15 + $0x60] sm:$0xf]
        %v9000 = vld [vmem:[#allocation15 + $0x64] sm:$0xf]
        %v9001 = vld [vmem:[#allocation15 + $0x68] sm:$0xf]
        %v9002 = vld [vmem:[#allocation15 + $0x6c] sm:$0xf]
        %v9003 = vld [vmem:[#allocation15 + $0x70] sm:$0xf]
        %v9004 = vld [vmem:[#allocation15 + $0x74] sm:$0xf]
        %v9005 = vld [vmem:[#allocation15 + $0x78] sm:$0xf]
        %v9006 = vld [vmem:[#allocation15 + $0x7c] sm:$0xf]
        %v9007 = vld [vmem:[#allocation15 + $0x80] sm:$0xf]
        %v9008 = vld [vmem:[#allocation15 + $0x84] sm:$0xf]
        %v9009 = vld [vmem:[#allocation15 + $0x88] sm:$0xf]
        %v9010 = vld [vmem:[#allocation15 + $0x8c] sm:$0xf]
        %v9011 = vld [vmem:[#allocation15 + $0x90] sm:$0xf]
        %v9012 = vld [vmem:[#allocation15 + $0x94] sm:$0xf]
        %v9013 = vld [vmem:[#allocation15 + $0x98] sm:$0xf]
        %v9014 = vld [vmem:[#allocation15 + $0x9c] sm:$0xf]
        %v9015 = vld [vmem:[#allocation15 + $0xa0] sm:$0xf]
        %v9016 = vld [vmem:[#allocation15 + $0xa4] sm:$0xf]
        %v9017 = vld [vmem:[#allocation15 + $0xa8] sm:$0xf]
        %v9018 = vld [vmem:[#allocation15 + $0xac] sm:$0xf]
        %v9019 = vld [vmem:[#allocation15 + $0xb0] sm:$0xf]
        %v9020 = vld [vmem:[#allocation15 + $0xb4] sm:$0xf]
        %v9021 = vld [vmem:[#allocation15 + $0xb8] sm:$0xf]
        %v9022 = vld [vmem:[#allocation15 + $0xbc] sm:$0xf]
        %v9023 = vld [vmem:[#allocation15 + $0xc0] sm:$0xf]
        %v9024 = vld [vmem:[#allocation15 + $0xc4] sm:$0xf]
        %v9025 = vld [vmem:[#allocation15 + $0xc8] sm:$0xf]
        %v9026 = vld [vmem:[#allocation15 + $0xcc] sm:$0xf]
        %v9027 = vld [vmem:[#allocation15 + $0xd0] sm:$0xf]
        %v9028 = vld [vmem:[#allocation15 + $0xd4] sm:$0xf]
        %v9029 = vld [vmem:[#allocation15 + $0xd8] sm:$0xf]
        %v9030 = vld [vmem:[#allocation15 + $0xdc] sm:$0xf]
        %v9031 = vld [vmem:[#allocation15 + $0xe0] sm:$0xf]
        %v9032 = vld [vmem:[#allocation15 + $0xe4] sm:$0xf]
        %v9033 = vld [vmem:[#allocation15 + $0xe8] sm:$0xf]
        %v9034 = vld [vmem:[#allocation15 + $0xec] sm:$0xf]
        %v9035 = vld [vmem:[#allocation15 + $0xf0] sm:$0xf]
        %v9036 = vld [vmem:[#allocation15 + $0xf4] sm:$0xf]
        %v9037 = vld [vmem:[#allocation15 + $0xf8] sm:$0xf]
        %v9038 = vld [vmem:[#allocation15 + $0xfc] sm:$0xf]
        %v9103 = vunpack.c.l.b16 %v8975
        %v9104 = vunpack.c.l.b16 %v8976
        %v9105 = vunpack.c.l.b16 %v8977
        %v9106 = vunpack.c.l.b16 %v8978
        %v9107 = vunpack.c.l.b16 %v8979
        %v9108 = vunpack.c.l.b16 %v8980
        %v9109 = vunpack.c.l.b16 %v8981
        %v9110 = vunpack.c.l.b16 %v8982
        %v9111 = vunpack.c.l.b16 %v8983
        %v9112 = vunpack.c.l.b16 %v8984
        %v9113 = vunpack.c.l.b16 %v8985
        %v9114 = vunpack.c.l.b16 %v8986
        %v9115 = vunpack.c.l.b16 %v8987
        %v9116 = vunpack.c.l.b16 %v8988
        %v9117 = vunpack.c.l.b16 %v8989
        %v9118 = vunpack.c.l.b16 %v8990
        %v9119 = vunpack.c.l.b16 %v8991
        %v9120 = vunpack.c.l.b16 %v8992
        %v9121 = vunpack.c.l.b16 %v8993
        %v9122 = vunpack.c.l.b16 %v8994
        %v9123 = vunpack.c.l.b16 %v8995
        %v9124 = vunpack.c.l.b16 %v8996
        %v9125 = vunpack.c.l.b16 %v8997
        %v9126 = vunpack.c.l.b16 %v8998
        %v9127 = vunpack.c.l.b16 %v8999
        %v9128 = vunpack.c.l.b16 %v9000
        %v9129 = vunpack.c.l.b16 %v9001
        %v9130 = vunpack.c.l.b16 %v9002
        %v9131 = vunpack.c.l.b16 %v9003
        %v9132 = vunpack.c.l.b16 %v9004
        %v9133 = vunpack.c.l.b16 %v9005
        %v9134 = vunpack.c.l.b16 %v9006
        %v9135 = vunpack.c.l.b16 %v9007
        %v9136 = vunpack.c.l.b16 %v9008
        %v9137 = vunpack.c.l.b16 %v9009
        %v9138 = vunpack.c.l.b16 %v9010
        %v9139 = vunpack.c.l.b16 %v9011
        %v9140 = vunpack.c.l.b16 %v9012
        %v9141 = vunpack.c.l.b16 %v9013
        %v9142 = vunpack.c.l.b16 %v9014
        %v9143 = vunpack.c.l.b16 %v9015
        %v9144 = vunpack.c.l.b16 %v9016
        %v9145 = vunpack.c.l.b16 %v9017
        %v9146 = vunpack.c.l.b16 %v9018
        %v9147 = vunpack.c.l.b16 %v9019
        %v9148 = vunpack.c.l.b16 %v9020
        %v9149 = vunpack.c.l.b16 %v9021
        %v9150 = vunpack.c.l.b16 %v9022
        %v9151 = vunpack.c.l.b16 %v9023
        %v9152 = vunpack.c.l.b16 %v9024
        %v9153 = vunpack.c.l.b16 %v9025
        %v9154 = vunpack.c.l.b16 %v9026
        %v9155 = vunpack.c.l.b16 %v9027
        %v9156 = vunpack.c.l.b16 %v9028
        %v9157 = vunpack.c.l.b16 %v9029
        %v9158 = vunpack.c.l.b16 %v9030
        %v9159 = vunpack.c.l.b16 %v9031
        %v9160 = vunpack.c.l.b16 %v9032
        %v9161 = vunpack.c.l.b16 %v9033
        %v9162 = vunpack.c.l.b16 %v9034
        %v9163 = vunpack.c.l.b16 %v9035
        %v9164 = vunpack.c.l.b16 %v9036
        %v9165 = vunpack.c.l.b16 %v9037
        %v9166 = vunpack.c.l.b16 %v9038
        %v9167 = vpack.c.b16 %v9104, %v9103
        %v9168 = vpack.c.b16 %v9106, %v9105
        %v9169 = vpack.c.b16 %v9108, %v9107
        %v9170 = vpack.c.b16 %v9110, %v9109
        %v9171 = vpack.c.b16 %v9112, %v9111
        %v9172 = vpack.c.b16 %v9114, %v9113
        %v9173 = vpack.c.b16 %v9116, %v9115
        %v9174 = vpack.c.b16 %v9118, %v9117
        %v9175 = vpack.c.b16 %v9120, %v9119
        %v9176 = vpack.c.b16 %v9122, %v9121
        %v9177 = vpack.c.b16 %v9124, %v9123
        %v9178 = vpack.c.b16 %v9126, %v9125
        %v9179 = vpack.c.b16 %v9128, %v9127
        %v9180 = vpack.c.b16 %v9130, %v9129
        %v9181 = vpack.c.b16 %v9132, %v9131
        %v9182 = vpack.c.b16 %v9134, %v9133
        %v9183 = vpack.c.b16 %v9136, %v9135
        %v9184 = vpack.c.b16 %v9138, %v9137
        %v9185 = vpack.c.b16 %v9140, %v9139
        %v9186 = vpack.c.b16 %v9142, %v9141
        %v9187 = vpack.c.b16 %v9144, %v9143
        %v9188 = vpack.c.b16 %v9146, %v9145
        %v9189 = vpack.c.b16 %v9148, %v9147
        %v9190 = vpack.c.b16 %v9150, %v9149
        %v9191 = vpack.c.b16 %v9152, %v9151
        %v9192 = vpack.c.b16 %v9154, %v9153
        %v9193 = vpack.c.b16 %v9156, %v9155
        %v9194 = vpack.c.b16 %v9158, %v9157
        %v9195 = vpack.c.b16 %v9160, %v9159
        %v9196 = vpack.c.b16 %v9162, %v9161
        %v9197 = vpack.c.b16 %v9164, %v9163
        %v9198 = vpack.c.b16 %v9166, %v9165
        %9231 = vmatprep.subr.bf16.mxu0 0
        %9232 = vmatpush1.bf16.msra.mxu0 %v9174
        %9233 = vmatprep.subr.bf16.mxu0 0
        %9234 = vmatpush1.bf16.msra.mxu0 %v9173
        %9235 = vmatprep.subr.bf16.mxu0 0
        %9236 = vmatpush1.bf16.msra.mxu0 %v9172
        %9237 = vmatprep.subr.bf16.mxu0 0
        %9238 = vmatpush1.bf16.msra.mxu0 %v9171
        %9239 = vmatprep.subr.bf16.mxu0 0
        %9240 = vmatpush1.bf16.msra.mxu0 %v9170
        %9241 = vmatprep.subr.bf16.mxu0 0
        %9242 = vmatpush1.bf16.msra.mxu0 %v9169
        %9243 = vmatprep.subr.bf16.mxu0 0
        %9244 = vmatpush1.bf16.msra.mxu0 %v9168
        %9245 = vmatprep.subr.bf16.mxu0 0
        %9246 = vmatpush1.bf16.msra.mxu0 %v9167
        %9247 = vmatprep.subr.bf16.mxu0 0
        %9248 = vmatpush2.bf16.msra.mxu0 %v9182
        %9249 = vmatprep.subr.bf16.mxu0 0
        %9250 = vmatpush2.bf16.msra.mxu0 %v9181
        %9251 = vmatprep.subr.bf16.mxu0 0
        %9252 = vmatpush2.bf16.msra.mxu0 %v9180
        %9253 = vmatprep.subr.bf16.mxu0 0
        %9254 = vmatpush2.bf16.msra.mxu0 %v9179
        %9255 = vmatprep.subr.bf16.mxu0 0
        %9256 = vmatpush2.bf16.msra.mxu0 %v9178
        %9257 = vmatprep.subr.bf16.mxu0 0
        %9258 = vmatpush2.bf16.msra.mxu0 %v9177
        %9259 = vmatprep.subr.bf16.mxu0 0
        %9260 = vmatpush2.bf16.msra.mxu0 %v9176
        %9261 = vmatprep.subr.bf16.mxu0 0
        %9262 = vmatpush2.bf16.msra.mxu0 %v9175
        %9263 = vmatprep.mubr.bf16.mxu0 %v8912
        %9264 = vmatmul.mubr.bf16.gmra.mxu0 %v8911
        %v9265 = vpop.f32.mrf.mxu0
        %v9266 = vadd.f32 0.0, %v9265
        %v9267 = vpop.f32.mrf.mxu0
        %v9268 = vpop.f32.mrf.mxu0
        %v9269 = vadd.f32 0.0, %v9268
        %v9270 = vpop.f32.mrf.mxu0
        %9271 = vmatprep.mubr.bf16.mxu0 %v8916
        %9272 = vmatmul.mubr.bf16.gmra.mxu0 %v8915
        %v9273 = vpop.f32.mrf.mxu0
        %v9274 = vadd.f32 0.0, %v9273
        %v9275 = vpop.f32.mrf.mxu0
        %v9276 = vpop.f32.mrf.mxu0
        %v9277 = vadd.f32 0.0, %v9276
        %v9278 = vpop.f32.mrf.mxu0
        %9279 = vmatprep.mubr.bf16.mxu0 %v8920
        %9280 = vmatmul.mubr.bf16.gmra.mxu0 %v8919
        %v9281 = vpop.f32.mrf.mxu0
        %v9282 = vadd.f32 0.0, %v9281
        %v9283 = vpop.f32.mrf.mxu0
        %v9284 = vpop.f32.mrf.mxu0
        %v9285 = vadd.f32 0.0, %v9284
        %v9286 = vpop.f32.mrf.mxu0
        %9287 = vmatprep.mubr.bf16.mxu0 %v8924
        %9288 = vmatmul.mubr.bf16.gmra.mxu0 %v8923
        %v9289 = vpop.f32.mrf.mxu0
        %v9290 = vadd.f32 0.0, %v9289
        %v9291 = vpop.f32.mrf.mxu0
        %v9292 = vpop.f32.mrf.mxu0
        %v9293 = vadd.f32 0.0, %v9292
        %v9294 = vpop.f32.mrf.mxu0
        %9295 = vmatprep.mubr.bf16.mxu0 %v8928
        %9296 = vmatmul.mubr.bf16.gmra.mxu0 %v8927
        %v9297 = vpop.f32.mrf.mxu0
        %v9298 = vadd.f32 0.0, %v9297
        %v9299 = vpop.f32.mrf.mxu0
        %v9300 = vpop.f32.mrf.mxu0
        %v9301 = vadd.f32 0.0, %v9300
        %v9302 = vpop.f32.mrf.mxu0
        %9303 = vmatprep.mubr.bf16.mxu0 %v8932
        %9304 = vmatmul.mubr.bf16.gmra.mxu0 %v8931
        %v9305 = vpop.f32.mrf.mxu0
        %v9306 = vadd.f32 0.0, %v9305
        %v9307 = vpop.f32.mrf.mxu0
        %v9308 = vpop.f32.mrf.mxu0
        %v9309 = vadd.f32 0.0, %v9308
        %v9310 = vpop.f32.mrf.mxu0
        %9311 = vmatprep.mubr.bf16.mxu0 %v8936
        %9312 = vmatmul.mubr.bf16.gmra.mxu0 %v8935
        %v9313 = vpop.f32.mrf.mxu0
        %v9314 = vadd.f32 0.0, %v9313
        %v9315 = vpop.f32.mrf.mxu0
        %v9316 = vpop.f32.mrf.mxu0
        %v9317 = vadd.f32 0.0, %v9316
        %v9318 = vpop.f32.mrf.mxu0
        %9319 = vmatprep.mubr.bf16.mxu0 %v8940
        %9320 = vmatmul.mubr.bf16.gmra.mxu0 %v8939
        %v9321 = vpop.f32.mrf.mxu0
        %v9322 = vadd.f32 0.0, %v9321
        %v9323 = vpop.f32.mrf.mxu0
        %v9324 = vpop.f32.mrf.mxu0
        %v9325 = vadd.f32 0.0, %v9324
        %v9326 = vpop.f32.mrf.mxu0
        %9327 = vmatprep.mubr.bf16.mxu0 %v8944
        %9328 = vmatmul.mubr.bf16.gmra.mxu0 %v8943
        %v9329 = vpop.f32.mrf.mxu0
        %v9330 = vadd.f32 0.0, %v9329
        %v9331 = vpop.f32.mrf.mxu0
        %v9332 = vpop.f32.mrf.mxu0
        %v9333 = vadd.f32 0.0, %v9332
        %v9334 = vpop.f32.mrf.mxu0
        %9335 = vmatprep.mubr.bf16.mxu0 %v8948
        %9336 = vmatmul.mubr.bf16.gmra.mxu0 %v8947
        %v9337 = vpop.f32.mrf.mxu0
        %v9338 = vadd.f32 0.0, %v9337
        %v9339 = vpop.f32.mrf.mxu0
        %v9340 = vpop.f32.mrf.mxu0
        %v9341 = vadd.f32 0.0, %v9340
        %v9342 = vpop.f32.mrf.mxu0
        %9343 = vmatprep.mubr.bf16.mxu0 %v8952
        %9344 = vmatmul.mubr.bf16.gmra.mxu0 %v8951
        %v9345 = vpop.f32.mrf.mxu0
        %v9346 = vadd.f32 0.0, %v9345
        %v9347 = vpop.f32.mrf.mxu0
        %v9348 = vpop.f32.mrf.mxu0
        %v9349 = vadd.f32 0.0, %v9348
        %v9350 = vpop.f32.mrf.mxu0
        %9351 = vmatprep.mubr.bf16.mxu0 %v8956
        %9352 = vmatmul.mubr.bf16.gmra.mxu0 %v8955
        %v9353 = vpop.f32.mrf.mxu0
        %v9354 = vadd.f32 0.0, %v9353
        %v9355 = vpop.f32.mrf.mxu0
        %v9356 = vpop.f32.mrf.mxu0
        %v9357 = vadd.f32 0.0, %v9356
        %v9358 = vpop.f32.mrf.mxu0
        %9359 = vmatprep.mubr.bf16.mxu0 %v8960
        %9360 = vmatmul.mubr.bf16.gmra.mxu0 %v8959
        %v9361 = vpop.f32.mrf.mxu0
        %v9362 = vadd.f32 0.0, %v9361
        %v9363 = vpop.f32.mrf.mxu0
        %v9364 = vpop.f32.mrf.mxu0
        %v9365 = vadd.f32 0.0, %v9364
        %v9366 = vpop.f32.mrf.mxu0
        %9367 = vmatprep.mubr.bf16.mxu0 %v8964
        %9368 = vmatmul.mubr.bf16.gmra.mxu0 %v8963
        %v9369 = vpop.f32.mrf.mxu0
        %v9370 = vadd.f32 0.0, %v9369
        %v9371 = vpop.f32.mrf.mxu0
        %v9372 = vpop.f32.mrf.mxu0
        %v9373 = vadd.f32 0.0, %v9372
        %v9374 = vpop.f32.mrf.mxu0
        %9375 = vmatprep.mubr.bf16.mxu0 %v8968
        %9376 = vmatmul.mubr.bf16.gmra.mxu0 %v8967
        %v9377 = vpop.f32.mrf.mxu0
        %v9378 = vadd.f32 0.0, %v9377
        %v9379 = vpop.f32.mrf.mxu0
        %v9380 = vpop.f32.mrf.mxu0
        %v9381 = vadd.f32 0.0, %v9380
        %v9382 = vpop.f32.mrf.mxu0
        %9383 = vmatprep.mubr.bf16.mxu0 %v8972
        %9384 = vmatmul.mubr.bf16.gmra.mxu0 %v8971
        %v9385 = vpop.f32.mrf.mxu0
        %v9386 = vadd.f32 0.0, %v9385
        %v9387 = vpop.f32.mrf.mxu0
        %v9388 = vpop.f32.mrf.mxu0
        %v9389 = vadd.f32 0.0, %v9388
        %v9390 = vpop.f32.mrf.mxu0
        %9391 = vdwg.mxu0
        %9392 = vmatprep.subr.bf16.mxu0 0
        %9393 = vmatpush1.bf16.msra.mxu0 %v9190
        %9394 = vmatprep.subr.bf16.mxu0 0
        %9395 = vmatpush1.bf16.msra.mxu0 %v9189
        %9396 = vmatprep.subr.bf16.mxu0 0
        %9397 = vmatpush1.bf16.msra.mxu0 %v9188
        %9398 = vmatprep.subr.bf16.mxu0 0
        %9399 = vmatpush1.bf16.msra.mxu0 %v9187
        %9400 = vmatprep.subr.bf16.mxu0 0
        %9401 = vmatpush1.bf16.msra.mxu0 %v9186
        %9402 = vmatprep.subr.bf16.mxu0 0
        %9403 = vmatpush1.bf16.msra.mxu0 %v9185
        %9404 = vmatprep.subr.bf16.mxu0 0
        %9405 = vmatpush1.bf16.msra.mxu0 %v9184
        %9406 = vmatprep.subr.bf16.mxu0 0
        %9407 = vmatpush1.bf16.msra.mxu0 %v9183
        %9408 = vmatprep.subr.bf16.mxu0 0
        %9409 = vmatpush2.bf16.msra.mxu0 %v9198
        %9410 = vmatprep.subr.bf16.mxu0 0
        %9411 = vmatpush2.bf16.msra.mxu0 %v9197
        %9412 = vmatprep.subr.bf16.mxu0 0
        %9413 = vmatpush2.bf16.msra.mxu0 %v9196
        %9414 = vmatprep.subr.bf16.mxu0 0
        %9415 = vmatpush2.bf16.msra.mxu0 %v9195
        %9416 = vmatprep.subr.bf16.mxu0 0
        %9417 = vmatpush2.bf16.msra.mxu0 %v9194
        %9418 = vmatprep.subr.bf16.mxu0 0
        %9419 = vmatpush2.bf16.msra.mxu0 %v9193
        %9420 = vmatprep.subr.bf16.mxu0 0
        %9421 = vmatpush2.bf16.msra.mxu0 %v9192
        %9422 = vmatprep.subr.bf16.mxu0 0
        %9423 = vmatpush2.bf16.msra.mxu0 %v9191
        %9424 = vmatprep.mubr.bf16.mxu0 %v8914
        %9425 = vmatmul.mubr.bf16.gmra.mxu0 %v8913
        %v9426 = vpop.f32.mrf.mxu0
        %v9427 = vadd.f32 %v9266, %v9426
        %v9428 = vpop.f32.mrf.mxu0
        %v9429 = vpop.f32.mrf.mxu0
        %v9430 = vadd.f32 %v9269, %v9429
        %v9431 = vpop.f32.mrf.mxu0
        %9432 = vmatprep.mubr.bf16.mxu0 %v8918
        %9433 = vmatmul.mubr.bf16.gmra.mxu0 %v8917
        %v9434 = vpop.f32.mrf.mxu0
        %v9435 = vadd.f32 %v9274, %v9434
        %v9436 = vpop.f32.mrf.mxu0
        %v9437 = vpop.f32.mrf.mxu0
        %v9438 = vadd.f32 %v9277, %v9437
        %v9439 = vpop.f32.mrf.mxu0
        %9440 = vmatprep.mubr.bf16.mxu0 %v8922
        %9441 = vmatmul.mubr.bf16.gmra.mxu0 %v8921
        %v9442 = vpop.f32.mrf.mxu0
        %v9443 = vadd.f32 %v9282, %v9442
        %v9444 = vpop.f32.mrf.mxu0
        %v9445 = vpop.f32.mrf.mxu0
        %v9446 = vadd.f32 %v9285, %v9445
        %v9447 = vpop.f32.mrf.mxu0
        %9448 = vmatprep.mubr.bf16.mxu0 %v8926
        %9449 = vmatmul.mubr.bf16.gmra.mxu0 %v8925
        %v9450 = vpop.f32.mrf.mxu0
        %v9451 = vadd.f32 %v9290, %v9450
        %v9452 = vpop.f32.mrf.mxu0
        %v9453 = vpop.f32.mrf.mxu0
        %v9454 = vadd.f32 %v9293, %v9453
        %v9455 = vpop.f32.mrf.mxu0
        %9456 = vmatprep.mubr.bf16.mxu0 %v8930
        %9457 = vmatmul.mubr.bf16.gmra.mxu0 %v8929
        %v9458 = vpop.f32.mrf.mxu0
        %v9459 = vadd.f32 %v9298, %v9458
        %v9460 = vpop.f32.mrf.mxu0
        %v9461 = vpop.f32.mrf.mxu0
        %v9462 = vadd.f32 %v9301, %v9461
        %v9463 = vpop.f32.mrf.mxu0
        %9464 = vmatprep.mubr.bf16.mxu0 %v8934
        %9465 = vmatmul.mubr.bf16.gmra.mxu0 %v8933
        %v9466 = vpop.f32.mrf.mxu0
        %v9467 = vadd.f32 %v9306, %v9466
        %v9468 = vpop.f32.mrf.mxu0
        %v9469 = vpop.f32.mrf.mxu0
        %v9470 = vadd.f32 %v9309, %v9469
        %v9471 = vpop.f32.mrf.mxu0
        %9472 = vmatprep.mubr.bf16.mxu0 %v8938
        %9473 = vmatmul.mubr.bf16.gmra.mxu0 %v8937
        %v9474 = vpop.f32.mrf.mxu0
        %v9475 = vadd.f32 %v9314, %v9474
        %v9476 = vpop.f32.mrf.mxu0
        %v9477 = vpop.f32.mrf.mxu0
        %v9478 = vadd.f32 %v9317, %v9477
        %v9479 = vpop.f32.mrf.mxu0
        %9480 = vmatprep.mubr.bf16.mxu0 %v8942
        %9481 = vmatmul.mubr.bf16.gmra.mxu0 %v8941
        %v9482 = vpop.f32.mrf.mxu0
        %v9483 = vadd.f32 %v9322, %v9482
        %v9484 = vpop.f32.mrf.mxu0
        %v9485 = vpop.f32.mrf.mxu0
        %v9486 = vadd.f32 %v9325, %v9485
        %v9487 = vpop.f32.mrf.mxu0
        %9488 = vmatprep.mubr.bf16.mxu0 %v8946
        %9489 = vmatmul.mubr.bf16.gmra.mxu0 %v8945
        %v9490 = vpop.f32.mrf.mxu0
        %v9491 = vadd.f32 %v9330, %v9490
        %v9492 = vpop.f32.mrf.mxu0
        %v9493 = vpop.f32.mrf.mxu0
        %v9494 = vadd.f32 %v9333, %v9493
        %v9495 = vpop.f32.mrf.mxu0
        %9496 = vmatprep.mubr.bf16.mxu0 %v8950
        %9497 = vmatmul.mubr.bf16.gmra.mxu0 %v8949
        %v9498 = vpop.f32.mrf.mxu0
        %v9499 = vadd.f32 %v9338, %v9498
        %v9500 = vpop.f32.mrf.mxu0
        %v9501 = vpop.f32.mrf.mxu0
        %v9502 = vadd.f32 %v9341, %v9501
        %v9503 = vpop.f32.mrf.mxu0
        %9504 = vmatprep.mubr.bf16.mxu0 %v8954
        %9505 = vmatmul.mubr.bf16.gmra.mxu0 %v8953
        %v9506 = vpop.f32.mrf.mxu0
        %v9507 = vadd.f32 %v9346, %v9506
        %v9508 = vpop.f32.mrf.mxu0
        %v9509 = vpop.f32.mrf.mxu0
        %v9510 = vadd.f32 %v9349, %v9509
        %v9511 = vpop.f32.mrf.mxu0
        %9512 = vmatprep.mubr.bf16.mxu0 %v8958
        %9513 = vmatmul.mubr.bf16.gmra.mxu0 %v8957
        %v9514 = vpop.f32.mrf.mxu0
        %v9515 = vadd.f32 %v9354, %v9514
        %v9516 = vpop.f32.mrf.mxu0
        %v9517 = vpop.f32.mrf.mxu0
        %v9518 = vadd.f32 %v9357, %v9517
        %v9519 = vpop.f32.mrf.mxu0
        %9520 = vmatprep.mubr.bf16.mxu0 %v8962
        %9521 = vmatmul.mubr.bf16.gmra.mxu0 %v8961
        %v9522 = vpop.f32.mrf.mxu0
        %v9523 = vadd.f32 %v9362, %v9522
        %v9524 = vpop.f32.mrf.mxu0
        %v9525 = vpop.f32.mrf.mxu0
        %v9526 = vadd.f32 %v9365, %v9525
        %v9527 = vpop.f32.mrf.mxu0
        %9528 = vmatprep.mubr.bf16.mxu0 %v8966
        %9529 = vmatmul.mubr.bf16.gmra.mxu0 %v8965
        %v9530 = vpop.f32.mrf.mxu0
        %v9531 = vadd.f32 %v9370, %v9530
        %v9532 = vpop.f32.mrf.mxu0
        %v9533 = vpop.f32.mrf.mxu0
        %v9534 = vadd.f32 %v9373, %v9533
        %v9535 = vpop.f32.mrf.mxu0
        %9536 = vmatprep.mubr.bf16.mxu0 %v8970
        %9537 = vmatmul.mubr.bf16.gmra.mxu0 %v8969
        %v9538 = vpop.f32.mrf.mxu0
        %v9539 = vadd.f32 %v9378, %v9538
        %v9540 = vpop.f32.mrf.mxu0
        %v9541 = vpop.f32.mrf.mxu0
        %v9542 = vadd.f32 %v9381, %v9541
        %v9543 = vpop.f32.mrf.mxu0
        %9544 = vmatprep.mubr.bf16.mxu0 %v8974
        %9545 = vmatmul.mubr.bf16.gmra.mxu0 %v8973
        %v9546 = vpop.f32.mrf.mxu0
        %v9547 = vadd.f32 %v9386, %v9546
        %v9548 = vpop.f32.mrf.mxu0
        %v9549 = vpop.f32.mrf.mxu0
        %v9550 = vadd.f32 %v9389, %v9549
        %v9551 = vpop.f32.mrf.mxu0
        %9552 = vdwg.mxu0
        %v9553 = vld [vmem:[%s479] sm:$0xff]
        %v9554 = vld [vmem:[%s479 + $0x8] sm:$0xff]
        %v9555 = vld [vmem:[%s479 + $0x10] sm:$0xff]
        %v9556 = vld [vmem:[%s479 + $0x18] sm:$0xff]
        %v9557 = vld [vmem:[%s479 + $0x20] sm:$0xff]
        %v9558 = vld [vmem:[%s479 + $0x28] sm:$0xff]
        %v9559 = vld [vmem:[%s479 + $0x30] sm:$0xff]
        %v9560 = vld [vmem:[%s479 + $0x38] sm:$0xff]
        %v9561 = vld [vmem:[%s479 + $0x40] sm:$0xff]
        %v9562 = vld [vmem:[%s479 + $0x48] sm:$0xff]
        %v9563 = vld [vmem:[%s479 + $0x50] sm:$0xff]
        %v9564 = vld [vmem:[%s479 + $0x58] sm:$0xff]
        %v9565 = vld [vmem:[%s479 + $0x60] sm:$0xff]
        %v9566 = vld [vmem:[%s479 + $0x68] sm:$0xff]
        %v9567 = vld [vmem:[%s479 + $0x70] sm:$0xff]
        %v9568 = vld [vmem:[%s479 + $0x78] sm:$0xff]
        %v9569 = vld [vmem:[%s479 + $0x80] sm:$0xff]
        %v9570 = vld [vmem:[%s479 + $0x88] sm:$0xff]
        %v9571 = vld [vmem:[%s479 + $0x90] sm:$0xff]
        %v9572 = vld [vmem:[%s479 + $0x98] sm:$0xff]
        %v9573 = vld [vmem:[%s479 + $0xa0] sm:$0xff]
        %v9574 = vld [vmem:[%s479 + $0xa8] sm:$0xff]
        %v9575 = vld [vmem:[%s479 + $0xb0] sm:$0xff]
        %v9576 = vld [vmem:[%s479 + $0xb8] sm:$0xff]
        %v9577 = vld [vmem:[%s479 + $0xc0] sm:$0xff]
        %v9578 = vld [vmem:[%s479 + $0xc8] sm:$0xff]
        %v9579 = vld [vmem:[%s479 + $0xd0] sm:$0xff]
        %v9580 = vld [vmem:[%s479 + $0xd8] sm:$0xff]
        %v9581 = vld [vmem:[%s479 + $0xe0] sm:$0xff]
        %v9582 = vld [vmem:[%s479 + $0xe8] sm:$0xff]
        %v9583 = vld [vmem:[%s479 + $0xf0] sm:$0xff]
        %v9584 = vld [vmem:[%s479 + $0xf8] sm:$0xff]
        %v9585 = vadd.f32 %v9553, %v9427
        %v9586 = vadd.f32 %v9554, %v9430
        %v9587 = vadd.f32 %v9555, %v9435
        %v9588 = vadd.f32 %v9556, %v9438
        %v9589 = vadd.f32 %v9557, %v9443
        %v9590 = vadd.f32 %v9558, %v9446
        %v9591 = vadd.f32 %v9559, %v9451
        %v9592 = vadd.f32 %v9560, %v9454
        %v9593 = vadd.f32 %v9561, %v9459
        %v9594 = vadd.f32 %v9562, %v9462
        %v9595 = vadd.f32 %v9563, %v9467
        %v9596 = vadd.f32 %v9564, %v9470
        %v9597 = vadd.f32 %v9565, %v9475
        %v9598 = vadd.f32 %v9566, %v9478
        %v9599 = vadd.f32 %v9567, %v9483
        %v9600 = vadd.f32 %v9568, %v9486
        %v9601 = vadd.f32 %v9569, %v9491
        %v9602 = vadd.f32 %v9570, %v9494
        %v9603 = vadd.f32 %v9571, %v9499
        %v9604 = vadd.f32 %v9572, %v9502
        %v9605 = vadd.f32 %v9573, %v9507
        %v9606 = vadd.f32 %v9574, %v9510
        %v9607 = vadd.f32 %v9575, %v9515
        %v9608 = vadd.f32 %v9576, %v9518
        %v9609 = vadd.f32 %v9577, %v9523
        %v9610 = vadd.f32 %v9578, %v9526
        %v9611 = vadd.f32 %v9579, %v9531
        %v9612 = vadd.f32 %v9580, %v9534
        %v9613 = vadd.f32 %v9581, %v9539
        %v9614 = vadd.f32 %v9582, %v9542
        %v9615 = vadd.f32 %v9583, %v9547
        %v9616 = vadd.f32 %v9584, %v9550
        %9617 = vst [vmem:[%s479] sm:$0xff] %v9585
        %9618 = vst [vmem:[%s479 + $0x8] sm:$0xff] %v9586
        %9619 = vst [vmem:[%s479 + $0x10] sm:$0xff] %v9587
        %9620 = vst [vmem:[%s479 + $0x18] sm:$0xff] %v9588
        %9621 = vst [vmem:[%s479 + $0x20] sm:$0xff] %v9589
        %9622 = vst [vmem:[%s479 + $0x28] sm:$0xff] %v9590
        %9623 = vst [vmem:[%s479 + $0x30] sm:$0xff] %v9591
        %9624 = vst [vmem:[%s479 + $0x38] sm:$0xff] %v9592
        %9625 = vst [vmem:[%s479 + $0x40] sm:$0xff] %v9593
        %9626 = vst [vmem:[%s479 + $0x48] sm:$0xff] %v9594
        %9627 = vst [vmem:[%s479 + $0x50] sm:$0xff] %v9595
        %9628 = vst [vmem:[%s479 + $0x58] sm:$0xff] %v9596
        %9629 = vst [vmem:[%s479 + $0x60] sm:$0xff] %v9597
        %9630 = vst [vmem:[%s479 + $0x68] sm:$0xff] %v9598
        %9631 = vst [vmem:[%s479 + $0x70] sm:$0xff] %v9599
        %9632 = vst [vmem:[%s479 + $0x78] sm:$0xff] %v9600
        %9633 = vst [vmem:[%s479 + $0x80] sm:$0xff] %v9601
        %9634 = vst [vmem:[%s479 + $0x88] sm:$0xff] %v9602
        %9635 = vst [vmem:[%s479 + $0x90] sm:$0xff] %v9603
        %9636 = vst [vmem:[%s479 + $0x98] sm:$0xff] %v9604
        %9637 = vst [vmem:[%s479 + $0xa0] sm:$0xff] %v9605
        %9638 = vst [vmem:[%s479 + $0xa8] sm:$0xff] %v9606
        %9639 = vst [vmem:[%s479 + $0xb0] sm:$0xff] %v9607
        %9640 = vst [vmem:[%s479 + $0xb8] sm:$0xff] %v9608
        %9641 = vst [vmem:[%s479 + $0xc0] sm:$0xff] %v9609
        %9642 = vst [vmem:[%s479 + $0xc8] sm:$0xff] %v9610
        %9643 = vst [vmem:[%s479 + $0xd0] sm:$0xff] %v9611
        %9644 = vst [vmem:[%s479 + $0xd8] sm:$0xff] %v9612
        %9645 = vst [vmem:[%s479 + $0xe0] sm:$0xff] %v9613
        %9646 = vst [vmem:[%s479 + $0xe8] sm:$0xff] %v9614
        %9647 = vst [vmem:[%s479 + $0xf0] sm:$0xff] %v9615
        %9648 = vst [vmem:[%s479 + $0xf8] sm:$0xff] %v9616
        %s9649 = sand.u32 %s254, 1
        %s9650 = scalar_lea.sflag [#allocation5], %s9649
        %s9651 = sand.u32 %s254, 1
        %s9652 = smul.addr %s9651, 256
        %s9653 = scalar_lea.vmem [#allocation17], %s9652
        // Predicated region
        $region93: #{tpu_custom_call.1} parent=59 // pred_check
          %p9654 = pneg %p264
        $region94: #{tpu_custom_call.1} parent=59 // pred_check_branch
          %9656 = sbr.rel (%p9654) target = $region96
        $region95: #{tpu_custom_call.1} parent=59 // pred_region
          %s9657 = smul.u32 32, %s31
          %s9659 = ssub.s32 4096, 4096
          %9660 = vsyncadd %s9650, %s9659
          %s9661 = smul.addr %s9657, 128
          %s9662 = scalar_lea.hbm %s10, %s9661
          %s9663 = sshll.u32 %s9653, 4
          %s9664 = int_to_ptr.vmem [resolvable:$true] %s9663
          %9669 = dma.vmem_to_hbm [thread:$0]  %s9664, 4096, %s9662, %s9650, 128, 128, 8
        $region96: #{tpu_custom_call.1} parent=59 // pred_fallthru
          _
      $region60: #{tpu_custom_call.1} parent=5 // pred_fallthru
        _
      %p9670 = scmp.le.s32.totalorder 2, %s26
      // Predicated region
      $region97: #{tpu_custom_call.1} parent=5 // pred_check
        %p9671 = pneg %p9670
      $region98: #{tpu_custom_call.1} parent=5 // pred_check_branch
        %9673 = sbr.rel (%p9671) target = $region100
      $region99: #{tpu_custom_call.1} parent=5 // pred_region
        %s9674 = ssub.s32 %s26, 2
        // Predicated region
        $region101: #{tpu_custom_call.1} parent=99 // pred_check
          %p9675 = pneg %p270
        $region102: #{tpu_custom_call.1} parent=99 // pred_check_branch
          %9677 = sbr.rel (%p9675) target = $region104
        $region103: #{tpu_custom_call.1} parent=99 // pred_region
          %s9678 = sand.u32 %s255, 1
          %s9679 = scalar_lea.sflag [#allocation5], %s9678
          %s9680 = sand.u32 %s255, 1
          %s9681 = smul.addr %s9680, 256
          %s9682 = scalar_lea.vmem [#allocation17], %s9681
          %9683 = dma.done %s9679, 4096
        $region104: #{tpu_custom_call.1} parent=99 // pred_fallthru
          _
      $region100: #{tpu_custom_call.1} parent=5 // pred_fallthru
        _
    $region6: #{tpu_custom_call.1} parent=1 // loop_footer
      %s30 = sadd.s32 1, %s26
    $region7: #{tpu_custom_call.1} parent=1 // loop_footer_branch
      %25 = sbr.rel target = $region3
    $region8: #{tpu_custom_call.1} parent=1 // loop_exit
      _
    %9684 = vsyncpa [#allocation4], 1
    %s9685 = scalar_lea.sflag [#allocation4], 1
    %9686 = vsyncpa %s9685, 1
    %9687 = vsyncpa [#allocation7], 1
    %9688 = vsyncpa [#allocation10], 1
    %9689 = vsyncpa [#allocation13], 1
    %9690 = vsyncpa [#allocation16], 1
    %9691 = vsyncpa [#allocation5], 1
    %s9692 = scalar_lea.sflag [#allocation5], 1
    %9693 = vsyncpa %s9692, 1

</llo_original>
